<compile_context>
chip_gen: v7x
topology: tpu7x:2x2x1
jax: 0.10.0
libtpu: 0.0.40
codegen_flags: <defaults>
</compile_context>

<pallas_src>
import jax
import jax.numpy as jnp
from jax.experimental import pallas as pl
from jax.experimental.pallas import tpu as pltpu

SELU_ALPHA = 1.6732632423543772848170429916717
SELU_SCALE = 1.0507009873554804934193349852946
BN_EPS = 1e-5


# ----------------------------------------------------------------------------
# Pallas kernels
# ----------------------------------------------------------------------------
def _bn_selu(y, g_ref, b_ref):
    """y: [P, N, M] f32 pre-activation (phase, out-channel, batch*spatial).
    BatchNorm per channel N over all (P, M) positions (training-mode batch
    stats, biased variance), then SELU.  gamma/beta refs are (N, 1) f32."""
    cnt = y.shape[0] * y.shape[2]
    s = jnp.sum(jnp.sum(y, axis=2, keepdims=True), axis=0, keepdims=True)
    mean = s / cnt
    c = y - mean
    ss = jnp.sum(jnp.sum(c * c, axis=2, keepdims=True), axis=0, keepdims=True)
    var = ss / cnt
    g = g_ref[...][None, :, :]        # (1, N, 1)
    b = b_ref[...][None, :, :]
    z = c * jax.lax.rsqrt(var + BN_EPS) * g + b
    # SELU; clamp the argument of the negative branch so the discarded lanes
    # never overflow (equivalent to using expm1 on the kept branch).
    neg = SELU_ALPHA * (jnp.exp(jnp.minimum(z, 0.0)) - 1.0)
    return SELU_SCALE * jnp.where(z > 0, z, neg)


def _deconv_bn_selu_kernel(w_ref, p_ref, g_ref, b_ref, o_ref):
    # w_ref: [P, N, K] bf16 phase weights, p_ref: [P, K, M] bf16 phase patches.
    y = jnp.einsum("pnk,pkm->pnm", w_ref[...], p_ref[...],
                   preferred_element_type=jnp.float32)
    o_ref[...] = _bn_selu(y, g_ref, b_ref).astype(o_ref.dtype)


def _deconv_bn_selu_conv1x1_tanh_kernel(w_ref, p_ref, g_ref, b_ref, w5_ref,
                                        o_ref):
    # Layer 4 (deconv + BN + SELU) fused with layer 5 (1x1 conv + tanh).
    y = jnp.einsum("pnk,pkm->pnm", w_ref[...], p_ref[...],
                   preferred_element_type=jnp.float32)
    a = _bn_selu(y, g_ref, b_ref)                          # [P, N, M] f32
    w5 = w5_ref[...]                                       # [C5, N] f32
    # t[p, o, m] = sum_n w5[o, n] * a[p, n, m]   (tiny N -> VPU mul + reduce)
    t = jnp.sum(w5[None, :, :, None] * a[:, None, :, :], axis=2)
    o_ref[...] = jnp.tanh(t)


def phase_deconv_bn_selu(wp, patches, gamma, beta):
    P, N, K = wp.shape
    M = patches.shape[2]
    return pl.pallas_call(
        _deconv_bn_selu_kernel,
        out_shape=jax.ShapeDtypeStruct((P, N, M), jnp.bfloat16),
        grid=(1,),
        in_specs=[
            pl.BlockSpec((P, N, K), lambda i: (0, 0, 0)),
            pl.BlockSpec((P, K, M), lambda i: (0, 0, 0)),
            pl.BlockSpec((N, 1), lambda i: (0, 0)),
            pl.BlockSpec((N, 1), lambda i: (0, 0)),
        ],
        out_specs=pl.BlockSpec((P, N, M), lambda i: (0, 0, 0)),
        compiler_params=pltpu.CompilerParams(
            dimension_semantics=("arbitrary",)),
    )(wp, patches, gamma, beta)


def phase_deconv_bn_selu_conv1x1_tanh(wp, patches, gamma, beta, w5m):
    P, N, K = wp.shape
    M = patches.shape[2]
    C5 = w5m.shape[0]
    return pl.pallas_call(
        _deconv_bn_selu_conv1x1_tanh_kernel,
        out_shape=jax.ShapeDtypeStruct((P, C5, M), jnp.float32),
        grid=(1,),
        in_specs=[
            pl.BlockSpec((P, N, K), lambda i: (0, 0, 0)),
            pl.BlockSpec((P, K, M), lambda i: (0, 0, 0)),
            pl.BlockSpec((N, 1), lambda i: (0, 0)),
            pl.BlockSpec((N, 1), lambda i: (0, 0)),
            pl.BlockSpec((C5, N), lambda i: (0, 0)),
        ],
        out_specs=pl.BlockSpec((P, C5, M), lambda i: (0, 0, 0)),
        compiler_params=pltpu.CompilerParams(
            dimension_semantics=("arbitrary",)),
    )(wp, patches, gamma, beta, w5m)


# ----------------------------------------------------------------------------
# Plain-JAX glue: phase (sub-pixel) patches and phase reassembly
# ----------------------------------------------------------------------------
# ConvTranspose2d(k=4, s=2, p=1): output pixel (2t+py, 2t+px) only touches the
# 2x2 active taps below (the other 12 of the 16 k*k taps are structurally 0).
#   py=0: (row offset into 1-padded input, kernel row) = (t+0, 3), (t+1, 1)
#   py=1:                                               = (t+1, 2), (t+2, 0)
_ROW_OFF = ((0, 1), (1, 2))     # [phase][tap]
_KERN_IDX = ((3, 1), (2, 0))    # [phase][tap]


def _phase_patches_s2(x):
    """x: [C, B, H, W] channel-major -> patches [4, C*4, B*H*W]."""
    C, B, H, W = x.shape
    xp = jnp.pad(x, ((0, 0), (0, 0), (1, 1), (1, 1)))
    phases = []
    for py in range(2):
        for px in range(2):
            taps = [xp[:, :, _ROW_OFF[py][dy]:_ROW_OFF[py][dy] + H,
                          _ROW_OFF[px][dx]:_ROW_OFF[px][dx] + W]
                    for dy in range(2) for dx in range(2)]
            t = jnp.stack(taps, axis=1)                  # [C, 4, B, H, W]
            phases.append(t.reshape(C * 4, B * H * W))
    return jnp.stack(phases, axis=0)                     # [4, C*4, B*H*W]


def _assemble_phases_s2(phases, B, H, W):
    """phases: [4, C, B*H*W] (p = py*2+px) -> [C, B, 2H, 2W]."""
    _, C, _ = phases.shape
    x = phases.reshape(2, 2, C, B, H, W)
    x = x.transpose(2, 3, 4, 0, 5, 1)                    # [C, B, H, py, W, px]
    return x.reshape(C, B, 2 * H, 2 * W)


def _deconv_layer(x, wp, gamma, beta):
    C, B, H, W = x.shape
    patches = _phase_patches_s2(x)
    out = phase_deconv_bn_selu(wp, patches, gamma, beta)  # [4, C_out, B*H*W]
    return _assemble_phases_s2(out, B, H, W)


def _layer1(z, prep):
    """ConvTranspose2d(nz, C1, k=4, s=1, p=0) on 1x1 input, as 16 'phases'."""
    B, nz = z.shape[0], z.shape[1]
    z2 = z.reshape(B, nz).T.astype(jnp.bfloat16)          # [nz, B]
    p1 = jnp.broadcast_to(z2[None], (16, nz, B))          # [16, nz, B]
    out = phase_deconv_bn_selu(prep["w1p"], p1, prep["g1"], prep["b1"])
    C1 = out.shape[1]
    return out.transpose(1, 2, 0).reshape(C1, B, 4, 4)    # [C1, B, 4, 4]


def _final_layers(x, wp, gamma, beta, w5m):
    """Layer 4 deconv+BN+SELU fused with layer 5 (1x1 conv, p=2 crop, tanh)."""
    C, B, H, W = x.shape
    patches = _phase_patches_s2(x)
    t = phase_deconv_bn_selu_conv1x1_tanh(wp, patches, gamma, beta, w5m)
    img = _assemble_phases_s2(t, B, H, W)                 # [nc, B, 2H, 2W]
    img = img[:, :, 2:-2, 2:-2]                           # padding=2 crop
    return img.transpose(1, 0, 2, 3)                      # [B, nc, 28, 28]


# ----------------------------------------------------------------------------
# Parameter preparation (done once, outside the jitted forward)
# ----------------------------------------------------------------------------
def prepare_params(p):
    def phase_w_s2(w):
        # w: (C_in, C_out, 4, 4) PyTorch ConvTranspose2d layout
        C_in, C_out = w.shape[0], w.shape[1]
        phases = []
        for py in range(2):
            for px in range(2):
                taps = [w[:, :, _KERN_IDX[py][dy], _KERN_IDX[px][dx]].T
                        for dy in range(2) for dx in range(2)]   # [C_out, C_in]
                t = jnp.stack(taps, axis=-1)                     # [C_out, C_in, 4]
                phases.append(t.reshape(C_out, C_in * 4))
        return jnp.stack(phases, axis=0).astype(jnp.bfloat16)    # [4, C_out, C_in*4]

    w1 = p["w1"]                                   # (nz, C1, 4, 4)
    nz, C1 = w1.shape[0], w1.shape[1]
    w5 = p["w5"]                                   # (gf, nc, 1, 1)
    prep = {
        "w1p": w1.transpose(2, 3, 1, 0).reshape(16, C1, nz).astype(jnp.bfloat16),
        "w2p": phase_w_s2(p["w2"]),
        "w3p": phase_w_s2(p["w3"]),
        "w4p": phase_w_s2(p["w4"]),
        "w5m": w5.reshape(w5.shape[0], w5.shape[1]).T.astype(jnp.float32),  # (nc, gf)
    }
    for i in (1, 2, 3, 4):
        prep[f"g{i}"] = p[f"g{i}"].reshape(-1, 1).astype(jnp.float32)
        prep[f"b{i}"] = p[f"b{i}"].reshape(-1, 1).astype(jnp.float32)
    return prep


# ----------------------------------------------------------------------------
# Full generator forward
# ----------------------------------------------------------------------------
@jax.jit
def dcgan_generator_forward(z, prep):
    a1 = _layer1(z, prep)                                          # [C1, B, 4, 4]
    a2 = _deconv_layer(a1, prep["w2p"], prep["g2"], prep["b2"])    # [C2, B, 8, 8]
    a3 = _deconv_layer(a2, prep["w3p"], prep["g3"], prep["b3"])    # [C3, B,16,16]
    out = _final_layers(a3, prep["w4p"], prep["g4"], prep["b4"],
                        prep["w5m"])                               # [B, nc,28,28]
    return out


def init_params(key, noise_dim, gf, n_channels):
    ks = jax.random.split(key, 5)
    std = 0.02  # DCGAN-style init
    return {
        # ConvTranspose2d weight layout: (C_in, C_out, kH, kW); bias=False
        "w1": std * jax.random.normal(ks[0], (noise_dim, gf * 8, 4, 4), jnp.float32),
        "w2": std * jax.random.normal(ks[1], (gf * 8, gf * 4, 4, 4), jnp.float32),
        "w3": std * jax.random.normal(ks[2], (gf * 4, gf * 2, 4, 4), jnp.float32),
        "w4": std * jax.random.normal(ks[3], (gf * 2, gf, 4, 4), jnp.float32),
        "w5": std * jax.random.normal(ks[4], (gf, n_channels, 1, 1), jnp.float32),
        # BatchNorm2d default init: weight=1, bias=0
        "g1": jnp.ones((gf * 8,), jnp.float32), "b1": jnp.zeros((gf * 8,), jnp.float32),
        "g2": jnp.ones((gf * 4,), jnp.float32), "b2": jnp.zeros((gf * 4,), jnp.float32),
        "g3": jnp.ones((gf * 2,), jnp.float32), "b3": jnp.zeros((gf * 2,), jnp.float32),
        "g4": jnp.ones((gf,), jnp.float32), "b4": jnp.zeros((gf,), jnp.float32),
    }


if __name__ == "__main__":
    NOISE_DIM, GEN_FILTERS, N_CHANNELS, BATCH = 16, 8, 1, 2

    key = jax.random.PRNGKey(0)
    k_z, k_p = jax.random.split(key)
    z = jax.random.normal(k_z, (BATCH, NOISE_DIM, 1, 1), jnp.float32)
    params = init_params(k_p, NOISE_DIM, GEN_FILTERS, N_CHANNELS)
    prep = prepare_params(params)   # one-time weight layout transform

    out = dcgan_generator_forward(z, prep)
    out = jax.block_until_ready(out)

    assert out.shape == (BATCH, N_CHANNELS, 28, 28), out.shape
    assert bool(jnp.all(jnp.isfinite(out)))
    assert bool(jnp.all(jnp.abs(out) <= 1.0 + 1e-6))  # tanh range
    print("KERNEL_OK")
</pallas_src>

<mosaic_0001>
module attributes {stable_mosaic.version = 11 : i64} {
  func.func @_deconv_bn_selu_kernel(%arg0: i32, %arg1: memref<16x64x16xbf16, #tpu.memory_space<vmem>>, %arg2: memref<16x16x2xbf16, #tpu.memory_space<vmem>>, %arg3: memref<64x1xf32, #tpu.memory_space<vmem>>, %arg4: memref<64x1xf32, #tpu.memory_space<vmem>>, %arg5: memref<16x64x2xbf16, #tpu.memory_space<vmem>>) attributes {dimension_semantics = [#tpu.dimension_semantics<arbitrary>], iteration_bounds = array<i64: 1>, scalar_prefetch = 0 : i64, scratch_operands = 0 : i64, tpu.core_type = #tpu.core_type<tc>, window_params = [{pipeline_mode = #tpu.pipeline_mode<synchronous>, transform_indices = @transform_0, window_bounds = array<i64: 16, 64, 16>}, {pipeline_mode = #tpu.pipeline_mode<synchronous>, transform_indices = @transform_1, window_bounds = array<i64: 16, 16, 2>}, {pipeline_mode = #tpu.pipeline_mode<synchronous>, transform_indices = @transform_2, window_bounds = array<i64: 64, 1>}, {pipeline_mode = #tpu.pipeline_mode<synchronous>, transform_indices = @transform_3, window_bounds = array<i64: 64, 1>}, {pipeline_mode = #tpu.pipeline_mode<synchronous>, transform_indices = @transform_4, window_bounds = array<i64: 16, 64, 2>}]} {
    %c0 = arith.constant 0 : index
    %c0_0 = arith.constant 0 : index
    %c0_1 = arith.constant 0 : index
    %0 = vector.load %arg1[%c0, %c0_0, %c0_1] : memref<16x64x16xbf16, #tpu.memory_space<vmem>>, vector<16x64x16xbf16>
    %c0_2 = arith.constant 0 : index
    %c0_3 = arith.constant 0 : index
    %c0_4 = arith.constant 0 : index
    %1 = vector.load %arg2[%c0_2, %c0_3, %c0_4] : memref<16x16x2xbf16, #tpu.memory_space<vmem>>, vector<16x16x2xbf16>
    "tpu.trace_start"() <{level = 10 : i32, message = "pnk,pkm->pnm"}> : () -> ()
    %cst = arith.constant dense<0.000000e+00> : vector<16x64x2xf32>
    %2 = tpu.matmul %0, %1, %cst {dimension_numbers = #tpu.dot_dimension_numbers<[2], [1], [1], [2], [0, 0, 0, 1, 1, 2], [0], [0]>} : vector<16x64x16xbf16>, vector<16x16x2xbf16>, vector<16x64x2xf32> -> vector<16x64x2xf32>
    "tpu.trace_stop"() : () -> ()
    %cst_5 = arith.constant dense<0.000000e+00> : vector<16x64xf32>
    %3 = vector.multi_reduction <add>, %2, %cst_5 [2] : vector<16x64x2xf32> to vector<16x64xf32>
    %4 = vector.shape_cast %3 : vector<16x64xf32> to vector<16x64x1xf32>
    %cst_6 = arith.constant dense<0.000000e+00> : vector<64x1xf32>
    %5 = vector.multi_reduction <add>, %4, %cst_6 [0] : vector<16x64x1xf32> to vector<64x1xf32>
    %6 = vector.shape_cast %5 : vector<64x1xf32> to vector<1x64x1xf32>
    %cst_7 = arith.constant 3.200000e+01 : f32
    %7 = vector.broadcast %cst_7 : f32 to vector<1x64x1xf32>
    %8 = arith.divf %6, %7 : vector<1x64x1xf32>
    %9 = vector.broadcast %8 : vector<1x64x1xf32> to vector<16x64x2xf32>
    %10 = arith.subf %2, %9 : vector<16x64x2xf32>
    %11 = arith.mulf %10, %10 : vector<16x64x2xf32>
    %cst_8 = arith.constant dense<0.000000e+00> : vector<16x64xf32>
    %12 = vector.multi_reduction <add>, %11, %cst_8 [2] : vector<16x64x2xf32> to vector<16x64xf32>
    %13 = vector.shape_cast %12 : vector<16x64xf32> to vector<16x64x1xf32>
    %cst_9 = arith.constant dense<0.000000e+00> : vector<64x1xf32>
    %14 = vector.multi_reduction <add>, %13, %cst_9 [0] : vector<16x64x1xf32> to vector<64x1xf32>
    %15 = vector.shape_cast %14 : vector<64x1xf32> to vector<1x64x1xf32>
    %cst_10 = arith.constant 3.200000e+01 : f32
    %16 = vector.broadcast %cst_10 : f32 to vector<1x64x1xf32>
    %17 = arith.divf %15, %16 : vector<1x64x1xf32>
    %c0_11 = arith.constant 0 : index
    %c0_12 = arith.constant 0 : index
    %18 = vector.load %arg3[%c0_11, %c0_12] : memref<64x1xf32, #tpu.memory_space<vmem>>, vector<64x1xf32>
    %19 = vector.shape_cast %18 : vector<64x1xf32> to vector<1x64x1xf32>
    %c0_13 = arith.constant 0 : index
    %c0_14 = arith.constant 0 : index
    %20 = vector.load %arg4[%c0_13, %c0_14] : memref<64x1xf32, #tpu.memory_space<vmem>>, vector<64x1xf32>
    %21 = vector.shape_cast %20 : vector<64x1xf32> to vector<1x64x1xf32>
    %cst_15 = arith.constant 9.99999974E-6 : f32
    %22 = vector.broadcast %cst_15 : f32 to vector<1x64x1xf32>
    %23 = arith.addf %17, %22 : vector<1x64x1xf32>
    %24 = math.rsqrt %23 : vector<1x64x1xf32>
    %25 = vector.broadcast %24 : vector<1x64x1xf32> to vector<16x64x2xf32>
    %26 = arith.mulf %10, %25 : vector<16x64x2xf32>
    %27 = vector.broadcast %19 : vector<1x64x1xf32> to vector<16x64x2xf32>
    %28 = arith.mulf %26, %27 : vector<16x64x2xf32>
    %29 = vector.broadcast %21 : vector<1x64x1xf32> to vector<16x64x2xf32>
    %30 = arith.addf %28, %29 : vector<16x64x2xf32>
    %cst_16 = arith.constant 0.000000e+00 : f32
    %31 = vector.broadcast %cst_16 : f32 to vector<16x64x2xf32>
    %32 = arith.minimumf %30, %31 : vector<16x64x2xf32>
    %33 = math.exp %32 : vector<16x64x2xf32>
    %cst_17 = arith.constant 1.000000e+00 : f32
    %34 = vector.broadcast %cst_17 : f32 to vector<16x64x2xf32>
    %35 = arith.subf %33, %34 : vector<16x64x2xf32>
    %cst_18 = arith.constant 1.67326319 : f32
    %36 = vector.broadcast %cst_18 : f32 to vector<16x64x2xf32>
    %37 = arith.mulf %36, %35 : vector<16x64x2xf32>
    %cst_19 = arith.constant 0.000000e+00 : f32
    %38 = vector.broadcast %cst_19 : f32 to vector<16x64x2xf32>
    %39 = arith.cmpf ogt, %30, %38 : vector<16x64x2xf32>
    %40 = arith.select %39, %30, %37 : vector<16x64x2xi1>, vector<16x64x2xf32>
    %cst_20 = arith.constant 1.05070102 : f32
    %41 = vector.broadcast %cst_20 : f32 to vector<16x64x2xf32>
    %42 = arith.mulf %41, %40 : vector<16x64x2xf32>
    %43 = arith.truncf %42 : vector<16x64x2xf32> to vector<16x64x2xbf16>
    %c0_21 = arith.constant 0 : index
    %c0_22 = arith.constant 0 : index
    %c0_23 = arith.constant 0 : index
    %44 = vector.load %arg5[%c0_21, %c0_22, %c0_23] : memref<16x64x2xbf16, #tpu.memory_space<vmem>>, vector<16x64x2xbf16>
    tpu.vector_store %arg5[%c0_21, %c0_22, %c0_23], %43 {strides = array<i32>} : memref<16x64x2xbf16, #tpu.memory_space<vmem>>, vector<16x64x2xbf16>,
    return
  }
  func.func @transform_0(%arg0: i32) -> (i32, i32, i32) {
    %c0_i32 = arith.constant 0 : i32
    %c0_i32_0 = arith.constant 0 : i32
    %c0_i32_1 = arith.constant 0 : i32
    %c0_i32_2 = arith.constant 0 : i32
    return %c0_i32, %c0_i32_0, %c0_i32_1 : i32, i32, i32
  }
  func.func @transform_1(%arg0: i32) -> (i32, i32, i32) {
    %c0_i32 = arith.constant 0 : i32
    %c0_i32_0 = arith.constant 0 : i32
    %c0_i32_1 = arith.constant 0 : i32
    %c0_i32_2 = arith.constant 0 : i32
    return %c0_i32, %c0_i32_0, %c0_i32_1 : i32, i32, i32
  }
  func.func @transform_2(%arg0: i32) -> (i32, i32) {
    %c0_i32 = arith.constant 0 : i32
    %c0_i32_0 = arith.constant 0 : i32
    %c0_i32_1 = arith.constant 0 : i32
    return %c0_i32, %c0_i32_0 : i32, i32
  }
  func.func @transform_3(%arg0: i32) -> (i32, i32) {
    %c0_i32 = arith.constant 0 : i32
    %c0_i32_0 = arith.constant 0 : i32
    %c0_i32_1 = arith.constant 0 : i32
    return %c0_i32, %c0_i32_0 : i32, i32
  }
  func.func @transform_4(%arg0: i32) -> (i32, i32, i32) {
    %c0_i32 = arith.constant 0 : i32
    %c0_i32_0 = arith.constant 0 : i32
    %c0_i32_1 = arith.constant 0 : i32
    %c0_i32_2 = arith.constant 0 : i32
    return %c0_i32, %c0_i32_0, %c0_i32_1 : i32, i32, i32
  }
}

module attributes {stable_mosaic.version = 11 : i64} {
  func.func @_deconv_bn_selu_kernel(%arg0: i32, %arg1: memref<4x32x256xbf16, #tpu.memory_space<vmem>>, %arg2: memref<4x256x32xbf16, #tpu.memory_space<vmem>>, %arg3: memref<32x1xf32, #tpu.memory_space<vmem>>, %arg4: memref<32x1xf32, #tpu.memory_space<vmem>>, %arg5: memref<4x32x32xbf16, #tpu.memory_space<vmem>>) attributes {dimension_semantics = [#tpu.dimension_semantics<arbitrary>], iteration_bounds = array<i64: 1>, scalar_prefetch = 0 : i64, scratch_operands = 0 : i64, tpu.core_type = #tpu.core_type<tc>, window_params = [{pipeline_mode = #tpu.pipeline_mode<synchronous>, transform_indices = @transform_0, window_bounds = array<i64: 4, 32, 256>}, {pipeline_mode = #tpu.pipeline_mode<synchronous>, transform_indices = @transform_1, window_bounds = array<i64: 4, 256, 32>}, {pipeline_mode = #tpu.pipeline_mode<synchronous>, transform_indices = @transform_2, window_bounds = array<i64: 32, 1>}, {pipeline_mode = #tpu.pipeline_mode<synchronous>, transform_indices = @transform_3, window_bounds = array<i64: 32, 1>}, {pipeline_mode = #tpu.pipeline_mode<synchronous>, transform_indices = @transform_4, window_bounds = array<i64: 4, 32, 32>}]} {
    %c0 = arith.constant 0 : index
    %c0_0 = arith.constant 0 : index
    %c0_1 = arith.constant 0 : index
    %0 = vector.load %arg1[%c0, %c0_0, %c0_1] : memref<4x32x256xbf16, #tpu.memory_space<vmem>>, vector<4x32x256xbf16>
    %c0_2 = arith.constant 0 : index
    %c0_3 = arith.constant 0 : index
    %c0_4 = arith.constant 0 : index
    %1 = vector.load %arg2[%c0_2, %c0_3, %c0_4] : memref<4x256x32xbf16, #tpu.memory_space<vmem>>, vector<4x256x32xbf16>
    "tpu.trace_start"() <{level = 10 : i32, message = "pnk,pkm->pnm"}> : () -> ()
    %cst = arith.constant dense<0.000000e+00> : vector<4x32x32xf32>
    %2 = tpu.matmul %0, %1, %cst {dimension_numbers = #tpu.dot_dimension_numbers<[2], [1], [1], [2], [0, 0, 0, 1, 1, 2], [0], [0]>} : vector<4x32x256xbf16>, vector<4x256x32xbf16>, vector<4x32x32xf32> -> vector<4x32x32xf32>
    "tpu.trace_stop"() : () -> ()
    %cst_5 = arith.constant dense<0.000000e+00> : vector<4x32xf32>
    %3 = vector.multi_reduction <add>, %2, %cst_5 [2] : vector<4x32x32xf32> to vector<4x32xf32>
    %4 = vector.shape_cast %3 : vector<4x32xf32> to vector<4x32x1xf32>
    %cst_6 = arith.constant dense<0.000000e+00> : vector<32x1xf32>
    %5 = vector.multi_reduction <add>, %4, %cst_6 [0] : vector<4x32x1xf32> to vector<32x1xf32>
    %6 = vector.shape_cast %5 : vector<32x1xf32> to vector<1x32x1xf32>
    %cst_7 = arith.constant 1.280000e+02 : f32
    %7 = vector.broadcast %cst_7 : f32 to vector<1x32x1xf32>
    %8 = arith.divf %6, %7 : vector<1x32x1xf32>
    %9 = vector.broadcast %8 : vector<1x32x1xf32> to vector<4x32x32xf32>
    %10 = arith.subf %2, %9 : vector<4x32x32xf32>
    %11 = arith.mulf %10, %10 : vector<4x32x32xf32>
    %cst_8 = arith.constant dense<0.000000e+00> : vector<4x32xf32>
    %12 = vector.multi_reduction <add>, %11, %cst_8 [2] : vector<4x32x32xf32> to vector<4x32xf32>
    %13 = vector.shape_cast %12 : vector<4x32xf32> to vector<4x32x1xf32>
    %cst_9 = arith.constant dense<0.000000e+00> : vector<32x1xf32>
    %14 = vector.multi_reduction <add>, %13, %cst_9 [0] : vector<4x32x1xf32> to vector<32x1xf32>
    %15 = vector.shape_cast %14 : vector<32x1xf32> to vector<1x32x1xf32>
    %cst_10 = arith.constant 1.280000e+02 : f32
    %16 = vector.broadcast %cst_10 : f32 to vector<1x32x1xf32>
    %17 = arith.divf %15, %16 : vector<1x32x1xf32>
    %c0_11 = arith.constant 0 : index
    %c0_12 = arith.constant 0 : index
    %18 = vector.load %arg3[%c0_11, %c0_12] : memref<32x1xf32, #tpu.memory_space<vmem>>, vector<32x1xf32>
    %19 = vector.shape_cast %18 : vector<32x1xf32> to vector<1x32x1xf32>
    %c0_13 = arith.constant 0 : index
    %c0_14 = arith.constant 0 : index
    %20 = vector.load %arg4[%c0_13, %c0_14] : memref<32x1xf32, #tpu.memory_space<vmem>>, vector<32x1xf32>
    %21 = vector.shape_cast %20 : vector<32x1xf32> to vector<1x32x1xf32>
    %cst_15 = arith.constant 9.99999974E-6 : f32
    %22 = vector.broadcast %cst_15 : f32 to vector<1x32x1xf32>
    %23 = arith.addf %17, %22 : vector<1x32x1xf32>
    %24 = math.rsqrt %23 : vector<1x32x1xf32>
    %25 = vector.broadcast %24 : vector<1x32x1xf32> to vector<4x32x32xf32>
    %26 = arith.mulf %10, %25 : vector<4x32x32xf32>
    %27 = vector.broadcast %19 : vector<1x32x1xf32> to vector<4x32x32xf32>
    %28 = arith.mulf %26, %27 : vector<4x32x32xf32>
    %29 = vector.broadcast %21 : vector<1x32x1xf32> to vector<4x32x32xf32>
    %30 = arith.addf %28, %29 : vector<4x32x32xf32>
    %cst_16 = arith.constant 0.000000e+00 : f32
    %31 = vector.broadcast %cst_16 : f32 to vector<4x32x32xf32>
    %32 = arith.minimumf %30, %31 : vector<4x32x32xf32>
    %33 = math.exp %32 : vector<4x32x32xf32>
    %cst_17 = arith.constant 1.000000e+00 : f32
    %34 = vector.broadcast %cst_17 : f32 to vector<4x32x32xf32>
    %35 = arith.subf %33, %34 : vector<4x32x32xf32>
    %cst_18 = arith.constant 1.67326319 : f32
    %36 = vector.broadcast %cst_18 : f32 to vector<4x32x32xf32>
    %37 = arith.mulf %36, %35 : vector<4x32x32xf32>
    %cst_19 = arith.constant 0.000000e+00 : f32
    %38 = vector.broadcast %cst_19 : f32 to vector<4x32x32xf32>
    %39 = arith.cmpf ogt, %30, %38 : vector<4x32x32xf32>
    %40 = arith.select %39, %30, %37 : vector<4x32x32xi1>, vector<4x32x32xf32>
    %cst_20 = arith.constant 1.05070102 : f32
    %41 = vector.broadcast %cst_20 : f32 to vector<4x32x32xf32>
    %42 = arith.mulf %41, %40 : vector<4x32x32xf32>
    %43 = arith.truncf %42 : vector<4x32x32xf32> to vector<4x32x32xbf16>
    %c0_21 = arith.constant 0 : index
    %c0_22 = arith.constant 0 : index
    %c0_23 = arith.constant 0 : index
    %44 = vector.load %arg5[%c0_21, %c0_22, %c0_23] : memref<4x32x32xbf16, #tpu.memory_space<vmem>>, vector<4x32x32xbf16>
    tpu.vector_store %arg5[%c0_21, %c0_22, %c0_23], %43 {strides = array<i32>} : memref<4x32x32xbf16, #tpu.memory_space<vmem>>, vector<4x32x32xbf16>,
    return
  }
  func.func @transform_0(%arg0: i32) -> (i32, i32, i32) {
    %c0_i32 = arith.constant 0 : i32
    %c0_i32_0 = arith.constant 0 : i32
    %c0_i32_1 = arith.constant 0 : i32
    %c0_i32_2 = arith.constant 0 : i32
    return %c0_i32, %c0_i32_0, %c0_i32_1 : i32, i32, i32
  }
  func.func @transform_1(%arg0: i32) -> (i32, i32, i32) {
    %c0_i32 = arith.constant 0 : i32
    %c0_i32_0 = arith.constant 0 : i32
    %c0_i32_1 = arith.constant 0 : i32
    %c0_i32_2 = arith.constant 0 : i32
    return %c0_i32, %c0_i32_0, %c0_i32_1 : i32, i32, i32
  }
  func.func @transform_2(%arg0: i32) -> (i32, i32) {
    %c0_i32 = arith.constant 0 : i32
    %c0_i32_0 = arith.constant 0 : i32
    %c0_i32_1 = arith.constant 0 : i32
    return %c0_i32, %c0_i32_0 : i32, i32
  }
  func.func @transform_3(%arg0: i32) -> (i32, i32) {
    %c0_i32 = arith.constant 0 : i32
    %c0_i32_0 = arith.constant 0 : i32
    %c0_i32_1 = arith.constant 0 : i32
    return %c0_i32, %c0_i32_0 : i32, i32
  }
  func.func @transform_4(%arg0: i32) -> (i32, i32, i32) {
    %c0_i32 = arith.constant 0 : i32
    %c0_i32_0 = arith.constant 0 : i32
    %c0_i32_1 = arith.constant 0 : i32
    %c0_i32_2 = arith.constant 0 : i32
    return %c0_i32, %c0_i32_0, %c0_i32_1 : i32, i32, i32
  }
}

module attributes {stable_mosaic.version = 11 : i64} {
  func.func @_deconv_bn_selu_kernel(%arg0: i32, %arg1: memref<4x16x128xbf16, #tpu.memory_space<vmem>>, %arg2: memref<4x128x128xbf16, #tpu.memory_space<vmem>>, %arg3: memref<16x1xf32, #tpu.memory_space<vmem>>, %arg4: memref<16x1xf32, #tpu.memory_space<vmem>>, %arg5: memref<4x16x128xbf16, #tpu.memory_space<vmem>>) attributes {dimension_semantics = [#tpu.dimension_semantics<arbitrary>], iteration_bounds = array<i64: 1>, scalar_prefetch = 0 : i64, scratch_operands = 0 : i64, tpu.core_type = #tpu.core_type<tc>, window_params = [{pipeline_mode = #tpu.pipeline_mode<synchronous>, transform_indices = @transform_0, window_bounds = array<i64: 4, 16, 128>}, {pipeline_mode = #tpu.pipeline_mode<synchronous>, transform_indices = @transform_1, window_bounds = array<i64: 4, 128, 128>}, {pipeline_mode = #tpu.pipeline_mode<synchronous>, transform_indices = @transform_2, window_bounds = array<i64: 16, 1>}, {pipeline_mode = #tpu.pipeline_mode<synchronous>, transform_indices = @transform_3, window_bounds = array<i64: 16, 1>}, {pipeline_mode = #tpu.pipeline_mode<synchronous>, transform_indices = @transform_4, window_bounds = array<i64: 4, 16, 128>}]} {
    %c0 = arith.constant 0 : index
    %c0_0 = arith.constant 0 : index
    %c0_1 = arith.constant 0 : index
    %0 = vector.load %arg1[%c0, %c0_0, %c0_1] : memref<4x16x128xbf16, #tpu.memory_space<vmem>>, vector<4x16x128xbf16>
    %c0_2 = arith.constant 0 : index
    %c0_3 = arith.constant 0 : index
    %c0_4 = arith.constant 0 : index
    %1 = vector.load %arg2[%c0_2, %c0_3, %c0_4] : memref<4x128x128xbf16, #tpu.memory_space<vmem>>, vector<4x128x128xbf16>
    "tpu.trace_start"() <{level = 10 : i32, message = "pnk,pkm->pnm"}> : () -> ()
    %cst = arith.constant dense<0.000000e+00> : vector<4x16x128xf32>
    %2 = tpu.matmul %0, %1, %cst {dimension_numbers = #tpu.dot_dimension_numbers<[2], [1], [1], [2], [0, 0, 0, 1, 1, 2], [0], [0]>} : vector<4x16x128xbf16>, vector<4x128x128xbf16>, vector<4x16x128xf32> -> vector<4x16x128xf32>
    "tpu.trace_stop"() : () -> ()
    %cst_5 = arith.constant dense<0.000000e+00> : vector<4x16xf32>
    %3 = vector.multi_reduction <add>, %2, %cst_5 [2] : vector<4x16x128xf32> to vector<4x16xf32>
    %4 = vector.shape_cast %3 : vector<4x16xf32> to vector<4x16x1xf32>
    %cst_6 = arith.constant dense<0.000000e+00> : vector<16x1xf32>
    %5 = vector.multi_reduction <add>, %4, %cst_6 [0] : vector<4x16x1xf32> to vector<16x1xf32>
    %6 = vector.shape_cast %5 : vector<16x1xf32> to vector<1x16x1xf32>
    %cst_7 = arith.constant 5.120000e+02 : f32
    %7 = vector.broadcast %cst_7 : f32 to vector<1x16x1xf32>
    %8 = arith.divf %6, %7 : vector<1x16x1xf32>
    %9 = vector.broadcast %8 : vector<1x16x1xf32> to vector<4x16x128xf32>
    %10 = arith.subf %2, %9 : vector<4x16x128xf32>
    %11 = arith.mulf %10, %10 : vector<4x16x128xf32>
    %cst_8 = arith.constant dense<0.000000e+00> : vector<4x16xf32>
    %12 = vector.multi_reduction <add>, %11, %cst_8 [2] : vector<4x16x128xf32> to vector<4x16xf32>
    %13 = vector.shape_cast %12 : vector<4x16xf32> to vector<4x16x1xf32>
    %cst_9 = arith.constant dense<0.000000e+00> : vector<16x1xf32>
    %14 = vector.multi_reduction <add>, %13, %cst_9 [0] : vector<4x16x1xf32> to vector<16x1xf32>
    %15 = vector.shape_cast %14 : vector<16x1xf32> to vector<1x16x1xf32>
    %cst_10 = arith.constant 5.120000e+02 : f32
    %16 = vector.broadcast %cst_10 : f32 to vector<1x16x1xf32>
    %17 = arith.divf %15, %16 : vector<1x16x1xf32>
    %c0_11 = arith.constant 0 : index
    %c0_12 = arith.constant 0 : index
    %18 = vector.load %arg3[%c0_11, %c0_12] : memref<16x1xf32, #tpu.memory_space<vmem>>, vector<16x1xf32>
    %19 = vector.shape_cast %18 : vector<16x1xf32> to vector<1x16x1xf32>
    %c0_13 = arith.constant 0 : index
    %c0_14 = arith.constant 0 : index
    %20 = vector.load %arg4[%c0_13, %c0_14] : memref<16x1xf32, #tpu.memory_space<vmem>>, vector<16x1xf32>
    %21 = vector.shape_cast %20 : vector<16x1xf32> to vector<1x16x1xf32>
    %cst_15 = arith.constant 9.99999974E-6 : f32
    %22 = vector.broadcast %cst_15 : f32 to vector<1x16x1xf32>
    %23 = arith.addf %17, %22 : vector<1x16x1xf32>
    %24 = math.rsqrt %23 : vector<1x16x1xf32>
    %25 = vector.broadcast %24 : vector<1x16x1xf32> to vector<4x16x128xf32>
    %26 = arith.mulf %10, %25 : vector<4x16x128xf32>
    %27 = vector.broadcast %19 : vector<1x16x1xf32> to vector<4x16x128xf32>
    %28 = arith.mulf %26, %27 : vector<4x16x128xf32>
    %29 = vector.broadcast %21 : vector<1x16x1xf32> to vector<4x16x128xf32>
    %30 = arith.addf %28, %29 : vector<4x16x128xf32>
    %cst_16 = arith.constant 0.000000e+00 : f32
    %31 = vector.broadcast %cst_16 : f32 to vector<4x16x128xf32>
    %32 = arith.minimumf %30, %31 : vector<4x16x128xf32>
    %33 = math.exp %32 : vector<4x16x128xf32>
    %cst_17 = arith.constant 1.000000e+00 : f32
    %34 = vector.broadcast %cst_17 : f32 to vector<4x16x128xf32>
    %35 = arith.subf %33, %34 : vector<4x16x128xf32>
    %cst_18 = arith.constant 1.67326319 : f32
    %36 = vector.broadcast %cst_18 : f32 to vector<4x16x128xf32>
    %37 = arith.mulf %36, %35 : vector<4x16x128xf32>
    %cst_19 = arith.constant 0.000000e+00 : f32
    %38 = vector.broadcast %cst_19 : f32 to vector<4x16x128xf32>
    %39 = arith.cmpf ogt, %30, %38 : vector<4x16x128xf32>
    %40 = arith.select %39, %30, %37 : vector<4x16x128xi1>, vector<4x16x128xf32>
    %cst_20 = arith.constant 1.05070102 : f32
    %41 = vector.broadcast %cst_20 : f32 to vector<4x16x128xf32>
    %42 = arith.mulf %41, %40 : vector<4x16x128xf32>
    %43 = arith.truncf %42 : vector<4x16x128xf32> to vector<4x16x128xbf16>
    %c0_21 = arith.constant 0 : index
    %c0_22 = arith.constant 0 : index
    %c0_23 = arith.constant 0 : index
    %44 = vector.load %arg5[%c0_21, %c0_22, %c0_23] : memref<4x16x128xbf16, #tpu.memory_space<vmem>>, vector<4x16x128xbf16>
    tpu.vector_store %arg5[%c0_21, %c0_22, %c0_23], %43 {strides = array<i32>} : memref<4x16x128xbf16, #tpu.memory_space<vmem>>, vector<4x16x128xbf16>,
    return
  }
  func.func @transform_0(%arg0: i32) -> (i32, i32, i32) {
    %c0_i32 = arith.constant 0 : i32
    %c0_i32_0 = arith.constant 0 : i32
    %c0_i32_1 = arith.constant 0 : i32
    %c0_i32_2 = arith.constant 0 : i32
    return %c0_i32, %c0_i32_0, %c0_i32_1 : i32, i32, i32
  }
  func.func @transform_1(%arg0: i32) -> (i32, i32, i32) {
    %c0_i32 = arith.constant 0 : i32
    %c0_i32_0 = arith.constant 0 : i32
    %c0_i32_1 = arith.constant 0 : i32
    %c0_i32_2 = arith.constant 0 : i32
    return %c0_i32, %c0_i32_0, %c0_i32_1 : i32, i32, i32
  }
  func.func @transform_2(%arg0: i32) -> (i32, i32) {
    %c0_i32 = arith.constant 0 : i32
    %c0_i32_0 = arith.constant 0 : i32
    %c0_i32_1 = arith.constant 0 : i32
    return %c0_i32, %c0_i32_0 : i32, i32
  }
  func.func @transform_3(%arg0: i32) -> (i32, i32) {
    %c0_i32 = arith.constant 0 : i32
    %c0_i32_0 = arith.constant 0 : i32
    %c0_i32_1 = arith.constant 0 : i32
    return %c0_i32, %c0_i32_0 : i32, i32
  }
  func.func @transform_4(%arg0: i32) -> (i32, i32, i32) {
    %c0_i32 = arith.constant 0 : i32
    %c0_i32_0 = arith.constant 0 : i32
    %c0_i32_1 = arith.constant 0 : i32
    %c0_i32_2 = arith.constant 0 : i32
    return %c0_i32, %c0_i32_0, %c0_i32_1 : i32, i32, i32
  }
}

module attributes {stable_mosaic.version = 11 : i64} {
  func.func @_deconv_bn_selu_conv1x1_tanh_kernel(%arg0: i32, %arg1: memref<4x8x64xbf16, #tpu.memory_space<vmem>>, %arg2: memref<4x64x512xbf16, #tpu.memory_space<vmem>>, %arg3: memref<8x1xf32, #tpu.memory_space<vmem>>, %arg4: memref<8x1xf32, #tpu.memory_space<vmem>>, %arg5: memref<1x8xf32, #tpu.memory_space<vmem>>, %arg6: memref<4x1x512xf32, #tpu.memory_space<vmem>>) attributes {dimension_semantics = [#tpu.dimension_semantics<arbitrary>], iteration_bounds = array<i64: 1>, scalar_prefetch = 0 : i64, scratch_operands = 0 : i64, tpu.core_type = #tpu.core_type<tc>, window_params = [{pipeline_mode = #tpu.pipeline_mode<synchronous>, transform_indices = @transform_0, window_bounds = array<i64: 4, 8, 64>}, {pipeline_mode = #tpu.pipeline_mode<synchronous>, transform_indices = @transform_1, window_bounds = array<i64: 4, 64, 512>}, {pipeline_mode = #tpu.pipeline_mode<synchronous>, transform_indices = @transform_2, window_bounds = array<i64: 8, 1>}, {pipeline_mode = #tpu.pipeline_mode<synchronous>, transform_indices = @transform_3, window_bounds = array<i64: 8, 1>}, {pipeline_mode = #tpu.pipeline_mode<synchronous>, transform_indices = @transform_4, window_bounds = array<i64: 1, 8>}, {pipeline_mode = #tpu.pipeline_mode<synchronous>, transform_indices = @transform_5, window_bounds = array<i64: 4, 1, 512>}]} {
    %c0 = arith.constant 0 : index
    %c0_0 = arith.constant 0 : index
    %c0_1 = arith.constant 0 : index
    %0 = vector.load %arg1[%c0, %c0_0, %c0_1] : memref<4x8x64xbf16, #tpu.memory_space<vmem>>, vector<4x8x64xbf16>
    %c0_2 = arith.constant 0 : index
    %c0_3 = arith.constant 0 : index
    %c0_4 = arith.constant 0 : index
    %1 = vector.load %arg2[%c0_2, %c0_3, %c0_4] : memref<4x64x512xbf16, #tpu.memory_space<vmem>>, vector<4x64x512xbf16>
    "tpu.trace_start"() <{level = 10 : i32, message = "pnk,pkm->pnm"}> : () -> ()
    %cst = arith.constant dense<0.000000e+00> : vector<4x8x512xf32>
    %2 = tpu.matmul %0, %1, %cst {dimension_numbers = #tpu.dot_dimension_numbers<[2], [1], [1], [2], [0, 0, 0, 1, 1, 2], [0], [0]>} : vector<4x8x64xbf16>, vector<4x64x512xbf16>, vector<4x8x512xf32> -> vector<4x8x512xf32>
    "tpu.trace_stop"() : () -> ()
    %cst_5 = arith.constant dense<0.000000e+00> : vector<4x8xf32>
    %3 = vector.multi_reduction <add>, %2, %cst_5 [2] : vector<4x8x512xf32> to vector<4x8xf32>
    %4 = vector.shape_cast %3 : vector<4x8xf32> to vector<4x8x1xf32>
    %cst_6 = arith.constant dense<0.000000e+00> : vector<8x1xf32>
    %5 = vector.multi_reduction <add>, %4, %cst_6 [0] : vector<4x8x1xf32> to vector<8x1xf32>
    %6 = vector.shape_cast %5 : vector<8x1xf32> to vector<1x8x1xf32>
    %cst_7 = arith.constant 2.048000e+03 : f32
    %7 = vector.broadcast %cst_7 : f32 to vector<1x8x1xf32>
    %8 = arith.divf %6, %7 : vector<1x8x1xf32>
    %9 = vector.broadcast %8 : vector<1x8x1xf32> to vector<4x8x512xf32>
    %10 = arith.subf %2, %9 : vector<4x8x512xf32>
    %11 = arith.mulf %10, %10 : vector<4x8x512xf32>
    %cst_8 = arith.constant dense<0.000000e+00> : vector<4x8xf32>
    %12 = vector.multi_reduction <add>, %11, %cst_8 [2] : vector<4x8x512xf32> to vector<4x8xf32>
    %13 = vector.shape_cast %12 : vector<4x8xf32> to vector<4x8x1xf32>
    %cst_9 = arith.constant dense<0.000000e+00> : vector<8x1xf32>
    %14 = vector.multi_reduction <add>, %13, %cst_9 [0] : vector<4x8x1xf32> to vector<8x1xf32>
    %15 = vector.shape_cast %14 : vector<8x1xf32> to vector<1x8x1xf32>
    %cst_10 = arith.constant 2.048000e+03 : f32
    %16 = vector.broadcast %cst_10 : f32 to vector<1x8x1xf32>
    %17 = arith.divf %15, %16 : vector<1x8x1xf32>
    %c0_11 = arith.constant 0 : index
    %c0_12 = arith.constant 0 : index
    %18 = vector.load %arg3[%c0_11, %c0_12] : memref<8x1xf32, #tpu.memory_space<vmem>>, vector<8x1xf32>
    %19 = vector.shape_cast %18 : vector<8x1xf32> to vector<1x8x1xf32>
    %c0_13 = arith.constant 0 : index
    %c0_14 = arith.constant 0 : index
    %20 = vector.load %arg4[%c0_13, %c0_14] : memref<8x1xf32, #tpu.memory_space<vmem>>, vector<8x1xf32>
    %21 = vector.shape_cast %20 : vector<8x1xf32> to vector<1x8x1xf32>
    %cst_15 = arith.constant 9.99999974E-6 : f32
    %22 = vector.broadcast %cst_15 : f32 to vector<1x8x1xf32>
    %23 = arith.addf %17, %22 : vector<1x8x1xf32>
    %24 = math.rsqrt %23 : vector<1x8x1xf32>
    %25 = vector.broadcast %24 : vector<1x8x1xf32> to vector<4x8x512xf32>
    %26 = arith.mulf %10, %25 : vector<4x8x512xf32>
    %27 = vector.broadcast %19 : vector<1x8x1xf32> to vector<4x8x512xf32>
    %28 = arith.mulf %26, %27 : vector<4x8x512xf32>
    %29 = vector.broadcast %21 : vector<1x8x1xf32> to vector<4x8x512xf32>
    %30 = arith.addf %28, %29 : vector<4x8x512xf32>
    %cst_16 = arith.constant 0.000000e+00 : f32
    %31 = vector.broadcast %cst_16 : f32 to vector<4x8x512xf32>
    %32 = arith.minimumf %30, %31 : vector<4x8x512xf32>
    %33 = math.exp %32 : vector<4x8x512xf32>
    %cst_17 = arith.constant 1.000000e+00 : f32
    %34 = vector.broadcast %cst_17 : f32 to vector<4x8x512xf32>
    %35 = arith.subf %33, %34 : vector<4x8x512xf32>
    %cst_18 = arith.constant 1.67326319 : f32
    %36 = vector.broadcast %cst_18 : f32 to vector<4x8x512xf32>
    %37 = arith.mulf %36, %35 : vector<4x8x512xf32>
    %cst_19 = arith.constant 0.000000e+00 : f32
    %38 = vector.broadcast %cst_19 : f32 to vector<4x8x512xf32>
    %39 = arith.cmpf ogt, %30, %38 : vector<4x8x512xf32>
    %40 = arith.select %39, %30, %37 : vector<4x8x512xi1>, vector<4x8x512xf32>
    %cst_20 = arith.constant 1.05070102 : f32
    %41 = vector.broadcast %cst_20 : f32 to vector<4x8x512xf32>
    %42 = arith.mulf %41, %40 : vector<4x8x512xf32>
    %c0_21 = arith.constant 0 : index
    %c0_22 = arith.constant 0 : index
    %43 = vector.load %arg5[%c0_21, %c0_22] : memref<1x8xf32, #tpu.memory_space<vmem>>, vector<1x8xf32>
    %44 = vector.shape_cast %43 : vector<1x8xf32> to vector<1x1x8x1xf32>
    %45 = vector.shape_cast %42 : vector<4x8x512xf32> to vector<4x1x8x512xf32>
    %46 = vector.broadcast %44 : vector<1x1x8x1xf32> to vector<4x1x8x512xf32>
    %47 = arith.mulf %46, %45 : vector<4x1x8x512xf32>
    %cst_23 = arith.constant dense<0.000000e+00> : vector<4x1x512xf32>
    %48 = vector.multi_reduction <add>, %47, %cst_23 [2] : vector<4x1x8x512xf32> to vector<4x1x512xf32>
    %49 = math.tanh %48 : vector<4x1x512xf32>
    %c0_24 = arith.constant 0 : index
    %c0_25 = arith.constant 0 : index
    %c0_26 = arith.constant 0 : index
    %50 = vector.load %arg6[%c0_24, %c0_25, %c0_26] : memref<4x1x512xf32, #tpu.memory_space<vmem>>, vector<4x1x512xf32>
    tpu.vector_store %arg6[%c0_24, %c0_25, %c0_26], %49 {strides = array<i32>} : memref<4x1x512xf32, #tpu.memory_space<vmem>>, vector<4x1x512xf32>,
    return
  }
  func.func @transform_0(%arg0: i32) -> (i32, i32, i32) {
    %c0_i32 = arith.constant 0 : i32
    %c0_i32_0 = arith.constant 0 : i32
    %c0_i32_1 = arith.constant 0 : i32
    %c0_i32_2 = arith.constant 0 : i32
    return %c0_i32, %c0_i32_0, %c0_i32_1 : i32, i32, i32
  }
  func.func @transform_1(%arg0: i32) -> (i32, i32, i32) {
    %c0_i32 = arith.constant 0 : i32
    %c0_i32_0 = arith.constant 0 : i32
    %c0_i32_1 = arith.constant 0 : i32
    %c0_i32_2 = arith.constant 0 : i32
    return %c0_i32, %c0_i32_0, %c0_i32_1 : i32, i32, i32
  }
  func.func @transform_2(%arg0: i32) -> (i32, i32) {
    %c0_i32 = arith.constant 0 : i32
    %c0_i32_0 = arith.constant 0 : i32
    %c0_i32_1 = arith.constant 0 : i32
    return %c0_i32, %c0_i32_0 : i32, i32
  }
  func.func @transform_3(%arg0: i32) -> (i32, i32) {
    %c0_i32 = arith.constant 0 : i32
    %c0_i32_0 = arith.constant 0 : i32
    %c0_i32_1 = arith.constant 0 : i32
    return %c0_i32, %c0_i32_0 : i32, i32
  }
  func.func @transform_4(%arg0: i32) -> (i32, i32) {
    %c0_i32 = arith.constant 0 : i32
    %c0_i32_0 = arith.constant 0 : i32
    %c0_i32_1 = arith.constant 0 : i32
    return %c0_i32, %c0_i32_0 : i32, i32
  }
  func.func @transform_5(%arg0: i32) -> (i32, i32, i32) {
    %c0_i32 = arith.constant 0 : i32
    %c0_i32_0 = arith.constant 0 : i32
    %c0_i32_1 = arith.constant 0 : i32
    %c0_i32_2 = arith.constant 0 : i32
    return %c0_i32, %c0_i32_0, %c0_i32_1 : i32, i32, i32
  }
}

</mosaic_0001>

<llo_original>
// kernel: dcgan_generator_forward.5
$region0: #{dcgan_generator_forward.5}
  #allocation0 [shape = 'u32[]', space=smem, size = 0x4, offset = 0x4, fixed_abs, tag = 'smem constant byte address 0x4 - core index']
  #allocation1 [shape = 'u32[144,128]{1,0:T(1,128)}', space=vmem, size = 0x12000, scoped, tag = 'internal scratch']
  %s0 = inlined_call_operand.vmem [shape: bf16[4,32,256], index: 0, kind: input, shape index: {}]
  %s1 = inlined_call_operand.vmem [shape: bf16[4,256,32], index: 1, kind: input, shape index: {}]
  %s2 = inlined_call_operand.vmem [shape: f32[32,1], index: 2, kind: input, shape index: {}]
  %s3 = inlined_call_operand.vmem [shape: f32[32,1], index: 3, kind: input, shape index: {}]
  %s4 = inlined_call_operand.vmem [shape: bf16[4,32,32], index: 4, kind: output, shape index: {}]
  %s5 = sld [smem:[#allocation0]]
  $region26: #{dcgan_generator_forward.5} parent=0
    _
  %s7 = ssub.s32 1, %s5
  %s8 = scalar_select 0, %s7, %s5
  // Predicated region
  $region2: #{dcgan_generator_forward.5} parent=0 // pred_check
    _
  $region3: #{dcgan_generator_forward.5} parent=0 // pred_check_branch
    %10 = sbr.rel (0) target = $region5
  $region4: #{dcgan_generator_forward.5} parent=0 // pred_region
    _
  $region5: #{dcgan_generator_forward.5} parent=0 // pred_fallthru
    _
  // Predicated region
  $region6: #{dcgan_generator_forward.5} parent=0 // pred_check
    _
  $region7: #{dcgan_generator_forward.5} parent=0 // pred_check_branch
    %12 = sbr.rel (0) target = $region9
  $region8: #{dcgan_generator_forward.5} parent=0 // pred_region
    _
  $region9: #{dcgan_generator_forward.5} parent=0 // pred_fallthru
    _
  // Predicated region
  $region10: #{dcgan_generator_forward.5} parent=0 // pred_check
    _
  $region11: #{dcgan_generator_forward.5} parent=0 // pred_check_branch
    %14 = sbr.rel (0) target = $region13
  $region12: #{dcgan_generator_forward.5} parent=0 // pred_region
    _
  $region13: #{dcgan_generator_forward.5} parent=0 // pred_fallthru
    _
  // Predicated region
  $region14: #{dcgan_generator_forward.5} parent=0 // pred_check
    _
  $region15: #{dcgan_generator_forward.5} parent=0 // pred_check_branch
    %16 = sbr.rel (0) target = $region17
  $region16: #{dcgan_generator_forward.5} parent=0 // pred_region
    _
  $region17: #{dcgan_generator_forward.5} parent=0 // pred_fallthru
    _
  %v18 = vld [vmem:[%s0] sm:$0xff]
  %v19 = vld [vmem:[%s0 + $0x8] sm:$0xff]
  %v20 = vld [vmem:[%s0 + $0x10] sm:$0xff]
  %v21 = vld [vmem:[%s0 + $0x18] sm:$0xff]
  %v22 = vld [vmem:[%s0 + $0x20] sm:$0xff]
  %v23 = vld [vmem:[%s0 + $0x28] sm:$0xff]
  %v24 = vld [vmem:[%s0 + $0x30] sm:$0xff]
  %v25 = vld [vmem:[%s0 + $0x38] sm:$0xff]
  %v26 = vld [vmem:[%s0 + $0x40] sm:$0xff]
  %v27 = vld [vmem:[%s0 + $0x48] sm:$0xff]
  %v28 = vld [vmem:[%s0 + $0x50] sm:$0xff]
  %v29 = vld [vmem:[%s0 + $0x58] sm:$0xff]
  %v30 = vld [vmem:[%s0 + $0x60] sm:$0xff]
  %v31 = vld [vmem:[%s0 + $0x68] sm:$0xff]
  %v32 = vld [vmem:[%s0 + $0x70] sm:$0xff]
  %v33 = vld [vmem:[%s0 + $0x78] sm:$0xff]
  %v34 = vld [vmem:[%s1] sm:$0xf]
  %v35 = vld [vmem:[%s1 + $0x4] sm:$0xf]
  %v36 = vld [vmem:[%s1 + $0x8] sm:$0xf]
  %v37 = vld [vmem:[%s1 + $0xc] sm:$0xf]
  %v38 = vld [vmem:[%s1 + $0x10] sm:$0xf]
  %v39 = vld [vmem:[%s1 + $0x14] sm:$0xf]
  %v40 = vld [vmem:[%s1 + $0x18] sm:$0xf]
  %v41 = vld [vmem:[%s1 + $0x1c] sm:$0xf]
  %v42 = vld [vmem:[%s1 + $0x20] sm:$0xf]
  %v43 = vld [vmem:[%s1 + $0x24] sm:$0xf]
  %v44 = vld [vmem:[%s1 + $0x28] sm:$0xf]
  %v45 = vld [vmem:[%s1 + $0x2c] sm:$0xf]
  %v46 = vld [vmem:[%s1 + $0x30] sm:$0xf]
  %v47 = vld [vmem:[%s1 + $0x34] sm:$0xf]
  %v48 = vld [vmem:[%s1 + $0x38] sm:$0xf]
  %v49 = vld [vmem:[%s1 + $0x3c] sm:$0xf]
  %v50 = vld [vmem:[%s1 + $0x40] sm:$0xf]
  %v51 = vld [vmem:[%s1 + $0x44] sm:$0xf]
  %v52 = vld [vmem:[%s1 + $0x48] sm:$0xf]
  %v53 = vld [vmem:[%s1 + $0x4c] sm:$0xf]
  %v54 = vld [vmem:[%s1 + $0x50] sm:$0xf]
  %v55 = vld [vmem:[%s1 + $0x54] sm:$0xf]
  %v56 = vld [vmem:[%s1 + $0x58] sm:$0xf]
  %v57 = vld [vmem:[%s1 + $0x5c] sm:$0xf]
  %v58 = vld [vmem:[%s1 + $0x60] sm:$0xf]
  %v59 = vld [vmem:[%s1 + $0x64] sm:$0xf]
  %v60 = vld [vmem:[%s1 + $0x68] sm:$0xf]
  %v61 = vld [vmem:[%s1 + $0x6c] sm:$0xf]
  %v62 = vld [vmem:[%s1 + $0x70] sm:$0xf]
  %v63 = vld [vmem:[%s1 + $0x74] sm:$0xf]
  %v64 = vld [vmem:[%s1 + $0x78] sm:$0xf]
  %v65 = vld [vmem:[%s1 + $0x7c] sm:$0xf]
  %v66 = vld [vmem:[%s1 + $0x80] sm:$0xf]
  %v67 = vld [vmem:[%s1 + $0x84] sm:$0xf]
  %v68 = vld [vmem:[%s1 + $0x88] sm:$0xf]
  %v69 = vld [vmem:[%s1 + $0x8c] sm:$0xf]
  %v70 = vld [vmem:[%s1 + $0x90] sm:$0xf]
  %v71 = vld [vmem:[%s1 + $0x94] sm:$0xf]
  %v72 = vld [vmem:[%s1 + $0x98] sm:$0xf]
  %v73 = vld [vmem:[%s1 + $0x9c] sm:$0xf]
  %v74 = vld [vmem:[%s1 + $0xa0] sm:$0xf]
  %v75 = vld [vmem:[%s1 + $0xa4] sm:$0xf]
  %v76 = vld [vmem:[%s1 + $0xa8] sm:$0xf]
  %v77 = vld [vmem:[%s1 + $0xac] sm:$0xf]
  %v78 = vld [vmem:[%s1 + $0xb0] sm:$0xf]
  %v79 = vld [vmem:[%s1 + $0xb4] sm:$0xf]
  %v80 = vld [vmem:[%s1 + $0xb8] sm:$0xf]
  %v81 = vld [vmem:[%s1 + $0xbc] sm:$0xf]
  %v82 = vld [vmem:[%s1 + $0xc0] sm:$0xf]
  %v83 = vld [vmem:[%s1 + $0xc4] sm:$0xf]
  %v84 = vld [vmem:[%s1 + $0xc8] sm:$0xf]
  %v85 = vld [vmem:[%s1 + $0xcc] sm:$0xf]
  %v86 = vld [vmem:[%s1 + $0xd0] sm:$0xf]
  %v87 = vld [vmem:[%s1 + $0xd4] sm:$0xf]
  %v88 = vld [vmem:[%s1 + $0xd8] sm:$0xf]
  %v89 = vld [vmem:[%s1 + $0xdc] sm:$0xf]
  %v90 = vld [vmem:[%s1 + $0xe0] sm:$0xf]
  %v91 = vld [vmem:[%s1 + $0xe4] sm:$0xf]
  %v92 = vld [vmem:[%s1 + $0xe8] sm:$0xf]
  %v93 = vld [vmem:[%s1 + $0xec] sm:$0xf]
  %v94 = vld [vmem:[%s1 + $0xf0] sm:$0xf]
  %v95 = vld [vmem:[%s1 + $0xf4] sm:$0xf]
  %v96 = vld [vmem:[%s1 + $0xf8] sm:$0xf]
  %v97 = vld [vmem:[%s1 + $0xfc] sm:$0xf]
  %v98 = vld [vmem:[%s1 + $0x100] sm:$0xf]
  %v99 = vld [vmem:[%s1 + $0x104] sm:$0xf]
  %v100 = vld [vmem:[%s1 + $0x108] sm:$0xf]
  %v101 = vld [vmem:[%s1 + $0x10c] sm:$0xf]
  %v102 = vld [vmem:[%s1 + $0x110] sm:$0xf]
  %v103 = vld [vmem:[%s1 + $0x114] sm:$0xf]
  %v104 = vld [vmem:[%s1 + $0x118] sm:$0xf]
  %v105 = vld [vmem:[%s1 + $0x11c] sm:$0xf]
  %v106 = vld [vmem:[%s1 + $0x120] sm:$0xf]
  %v107 = vld [vmem:[%s1 + $0x124] sm:$0xf]
  %v108 = vld [vmem:[%s1 + $0x128] sm:$0xf]
  %v109 = vld [vmem:[%s1 + $0x12c] sm:$0xf]
  %v110 = vld [vmem:[%s1 + $0x130] sm:$0xf]
  %v111 = vld [vmem:[%s1 + $0x134] sm:$0xf]
  %v112 = vld [vmem:[%s1 + $0x138] sm:$0xf]
  %v113 = vld [vmem:[%s1 + $0x13c] sm:$0xf]
  %v114 = vld [vmem:[%s1 + $0x140] sm:$0xf]
  %v115 = vld [vmem:[%s1 + $0x144] sm:$0xf]
  %v116 = vld [vmem:[%s1 + $0x148] sm:$0xf]
  %v117 = vld [vmem:[%s1 + $0x14c] sm:$0xf]
  %v118 = vld [vmem:[%s1 + $0x150] sm:$0xf]
  %v119 = vld [vmem:[%s1 + $0x154] sm:$0xf]
  %v120 = vld [vmem:[%s1 + $0x158] sm:$0xf]
  %v121 = vld [vmem:[%s1 + $0x15c] sm:$0xf]
  %v122 = vld [vmem:[%s1 + $0x160] sm:$0xf]
  %v123 = vld [vmem:[%s1 + $0x164] sm:$0xf]
  %v124 = vld [vmem:[%s1 + $0x168] sm:$0xf]
  %v125 = vld [vmem:[%s1 + $0x16c] sm:$0xf]
  %v126 = vld [vmem:[%s1 + $0x170] sm:$0xf]
  %v127 = vld [vmem:[%s1 + $0x174] sm:$0xf]
  %v128 = vld [vmem:[%s1 + $0x178] sm:$0xf]
  %v129 = vld [vmem:[%s1 + $0x17c] sm:$0xf]
  %v130 = vld [vmem:[%s1 + $0x180] sm:$0xf]
  %v131 = vld [vmem:[%s1 + $0x184] sm:$0xf]
  %v132 = vld [vmem:[%s1 + $0x188] sm:$0xf]
  %v133 = vld [vmem:[%s1 + $0x18c] sm:$0xf]
  %v134 = vld [vmem:[%s1 + $0x190] sm:$0xf]
  %v135 = vld [vmem:[%s1 + $0x194] sm:$0xf]
  %v136 = vld [vmem:[%s1 + $0x198] sm:$0xf]
  %v137 = vld [vmem:[%s1 + $0x19c] sm:$0xf]
  %v138 = vld [vmem:[%s1 + $0x1a0] sm:$0xf]
  %v139 = vld [vmem:[%s1 + $0x1a4] sm:$0xf]
  %v140 = vld [vmem:[%s1 + $0x1a8] sm:$0xf]
  %v141 = vld [vmem:[%s1 + $0x1ac] sm:$0xf]
  %v142 = vld [vmem:[%s1 + $0x1b0] sm:$0xf]
  %v143 = vld [vmem:[%s1 + $0x1b4] sm:$0xf]
  %v144 = vld [vmem:[%s1 + $0x1b8] sm:$0xf]
  %v145 = vld [vmem:[%s1 + $0x1bc] sm:$0xf]
  %v146 = vld [vmem:[%s1 + $0x1c0] sm:$0xf]
  %v147 = vld [vmem:[%s1 + $0x1c4] sm:$0xf]
  %v148 = vld [vmem:[%s1 + $0x1c8] sm:$0xf]
  %v149 = vld [vmem:[%s1 + $0x1cc] sm:$0xf]
  %v150 = vld [vmem:[%s1 + $0x1d0] sm:$0xf]
  %v151 = vld [vmem:[%s1 + $0x1d4] sm:$0xf]
  %v152 = vld [vmem:[%s1 + $0x1d8] sm:$0xf]
  %v153 = vld [vmem:[%s1 + $0x1dc] sm:$0xf]
  %v154 = vld [vmem:[%s1 + $0x1e0] sm:$0xf]
  %v155 = vld [vmem:[%s1 + $0x1e4] sm:$0xf]
  %v156 = vld [vmem:[%s1 + $0x1e8] sm:$0xf]
  %v157 = vld [vmem:[%s1 + $0x1ec] sm:$0xf]
  %v158 = vld [vmem:[%s1 + $0x1f0] sm:$0xf]
  %v159 = vld [vmem:[%s1 + $0x1f4] sm:$0xf]
  %v160 = vld [vmem:[%s1 + $0x1f8] sm:$0xf]
  %v161 = vld [vmem:[%s1 + $0x1fc] sm:$0xf]
  %v166 = vunpack.c.l.b16 %v18
  %v167 = vunpack.c.h.b16 %v18
  %v168 = vunpack.c.l.b16 %v19
  %v169 = vunpack.c.h.b16 %v19
  %v170 = vunpack.c.l.b16 %v20
  %v171 = vunpack.c.h.b16 %v20
  %v172 = vunpack.c.l.b16 %v21
  %v173 = vunpack.c.h.b16 %v21
  %v174 = vpack.c.b16 %v168, %v166
  %v175 = vpack.c.b16 %v169, %v167
  %v176 = vpack.c.b16 %v172, %v170
  %v177 = vpack.c.b16 %v173, %v171
  %v214 = vunpack.c.l.b16 %v34
  %v215 = vunpack.c.l.b16 %v35
  %v216 = vunpack.c.l.b16 %v36
  %v217 = vunpack.c.l.b16 %v37
  %v218 = vunpack.c.l.b16 %v38
  %v219 = vunpack.c.l.b16 %v39
  %v220 = vunpack.c.l.b16 %v40
  %v221 = vunpack.c.l.b16 %v41
  %v222 = vunpack.c.l.b16 %v42
  %v223 = vunpack.c.l.b16 %v43
  %v224 = vunpack.c.l.b16 %v44
  %v225 = vunpack.c.l.b16 %v45
  %v226 = vunpack.c.l.b16 %v46
  %v227 = vunpack.c.l.b16 %v47
  %v228 = vunpack.c.l.b16 %v48
  %v229 = vunpack.c.l.b16 %v49
  %v230 = vunpack.c.l.b16 %v50
  %v231 = vunpack.c.l.b16 %v51
  %v232 = vunpack.c.l.b16 %v52
  %v233 = vunpack.c.l.b16 %v53
  %v234 = vunpack.c.l.b16 %v54
  %v235 = vunpack.c.l.b16 %v55
  %v236 = vunpack.c.l.b16 %v56
  %v237 = vunpack.c.l.b16 %v57
  %v238 = vunpack.c.l.b16 %v58
  %v239 = vunpack.c.l.b16 %v59
  %v240 = vunpack.c.l.b16 %v60
  %v241 = vunpack.c.l.b16 %v61
  %v242 = vunpack.c.l.b16 %v62
  %v243 = vunpack.c.l.b16 %v63
  %v244 = vunpack.c.l.b16 %v64
  %v245 = vunpack.c.l.b16 %v65
  %v246 = vpack.c.b16 %v215, %v214
  %v247 = vpack.c.b16 %v217, %v216
  %v248 = vpack.c.b16 %v219, %v218
  %v249 = vpack.c.b16 %v221, %v220
  %v250 = vpack.c.b16 %v223, %v222
  %v251 = vpack.c.b16 %v225, %v224
  %v252 = vpack.c.b16 %v227, %v226
  %v253 = vpack.c.b16 %v229, %v228
  %v254 = vpack.c.b16 %v231, %v230
  %v255 = vpack.c.b16 %v233, %v232
  %v256 = vpack.c.b16 %v235, %v234
  %v257 = vpack.c.b16 %v237, %v236
  %v258 = vpack.c.b16 %v239, %v238
  %v259 = vpack.c.b16 %v241, %v240
  %v260 = vpack.c.b16 %v243, %v242
  %v261 = vpack.c.b16 %v245, %v244
  %278 = vmatprep.subr.bf16.mxu0 0
  %279 = vmatpush1.bf16.msra.mxu0 %v246
  %280 = vmatprep.subr.bf16.mxu0 0
  %281 = vmatpush1.bf16.msra.mxu0 %v247
  %282 = vmatprep.subr.bf16.mxu0 0
  %283 = vmatpush1.bf16.msra.mxu0 %v248
  %284 = vmatprep.subr.bf16.mxu0 0
  %285 = vmatpush1.bf16.msra.mxu0 %v249
  %286 = vmatprep.subr.bf16.mxu0 0
  %287 = vmatpush1.bf16.msra.mxu0 %v250
  %288 = vmatprep.subr.bf16.mxu0 0
  %289 = vmatpush1.bf16.msra.mxu0 %v251
  %290 = vmatprep.subr.bf16.mxu0 0
  %291 = vmatpush1.bf16.msra.mxu0 %v252
  %292 = vmatprep.subr.bf16.mxu0 0
  %293 = vmatpush1.bf16.msra.mxu0 %v253
  %294 = vmatprep.subr.bf16.mxu0 0
  %295 = vmatpush1.bf16.msra.mxu0 %v254
  %296 = vmatprep.subr.bf16.mxu0 0
  %297 = vmatpush1.bf16.msra.mxu0 %v255
  %298 = vmatprep.subr.bf16.mxu0 0
  %299 = vmatpush1.bf16.msra.mxu0 %v256
  %300 = vmatprep.subr.bf16.mxu0 0
  %301 = vmatpush1.bf16.msra.mxu0 %v257
  %302 = vmatprep.subr.bf16.mxu0 0
  %303 = vmatpush1.bf16.msra.mxu0 %v258
  %304 = vmatprep.subr.bf16.mxu0 0
  %305 = vmatpush1.bf16.msra.mxu0 %v259
  %306 = vmatprep.subr.bf16.mxu0 0
  %307 = vmatpush1.bf16.msra.mxu0 %v260
  %308 = vmatprep.subr.bf16.mxu0 0
  %309 = vmatpush1.bf16.msra.mxu0 %v261
  %310 = vmatprep.mubr.bf16.mxu0 %v175
  %311 = vmatmul.mubr.bf16.gmra.mrb[0].mxu0 %v174
  %v312 = vpop.f32.mrb[0].mxu0
  %v313 = vadd.f32 0.0, %v312
  %v314 = vpop.f32.mrb[0].mxu0
  %v315 = vpop.f32.mrb[0].mxu0
  %v316 = vadd.f32 0.0, %v315
  %v317 = vpop.f32.mrb[0].mxu0
  %318 = vmatprep.mubr.bf16.mxu0 %v177
  %319 = vmatmul.mubr.bf16.gmra.mrb[0].mxu0 %v176
  %v320 = vpop.f32.mrb[0].mxu0
  %v321 = vadd.f32 0.0, %v320
  %v322 = vpop.f32.mrb[0].mxu0
  %v323 = vpop.f32.mrb[0].mxu0
  %v324 = vadd.f32 0.0, %v323
  %v325 = vpop.f32.mrb[0].mxu0
  %326 = vdwg.mxu0
  %v331 = vunpack.c.l.b16 %v22
  %v332 = vunpack.c.h.b16 %v22
  %v333 = vunpack.c.l.b16 %v23
  %v334 = vunpack.c.h.b16 %v23
  %v335 = vunpack.c.l.b16 %v24
  %v336 = vunpack.c.h.b16 %v24
  %v337 = vunpack.c.l.b16 %v25
  %v338 = vunpack.c.h.b16 %v25
  %v339 = vpack.c.b16 %v333, %v331
  %v340 = vpack.c.b16 %v334, %v332
  %v341 = vpack.c.b16 %v337, %v335
  %v342 = vpack.c.b16 %v338, %v336
  %v379 = vunpack.c.l.b16 %v66
  %v380 = vunpack.c.l.b16 %v67
  %v381 = vunpack.c.l.b16 %v68
  %v382 = vunpack.c.l.b16 %v69
  %v383 = vunpack.c.l.b16 %v70
  %v384 = vunpack.c.l.b16 %v71
  %v385 = vunpack.c.l.b16 %v72
  %v386 = vunpack.c.l.b16 %v73
  %v387 = vunpack.c.l.b16 %v74
  %v388 = vunpack.c.l.b16 %v75
  %v389 = vunpack.c.l.b16 %v76
  %v390 = vunpack.c.l.b16 %v77
  %v391 = vunpack.c.l.b16 %v78
  %v392 = vunpack.c.l.b16 %v79
  %v393 = vunpack.c.l.b16 %v80
  %v394 = vunpack.c.l.b16 %v81
  %v395 = vunpack.c.l.b16 %v82
  %v396 = vunpack.c.l.b16 %v83
  %v397 = vunpack.c.l.b16 %v84
  %v398 = vunpack.c.l.b16 %v85
  %v399 = vunpack.c.l.b16 %v86
  %v400 = vunpack.c.l.b16 %v87
  %v401 = vunpack.c.l.b16 %v88
  %v402 = vunpack.c.l.b16 %v89
  %v403 = vunpack.c.l.b16 %v90
  %v404 = vunpack.c.l.b16 %v91
  %v405 = vunpack.c.l.b16 %v92
  %v406 = vunpack.c.l.b16 %v93
  %v407 = vunpack.c.l.b16 %v94
  %v408 = vunpack.c.l.b16 %v95
  %v409 = vunpack.c.l.b16 %v96
  %v410 = vunpack.c.l.b16 %v97
  %v411 = vpack.c.b16 %v380, %v379
  %v412 = vpack.c.b16 %v382, %v381
  %v413 = vpack.c.b16 %v384, %v383
  %v414 = vpack.c.b16 %v386, %v385
  %v415 = vpack.c.b16 %v388, %v387
  %v416 = vpack.c.b16 %v390, %v389
  %v417 = vpack.c.b16 %v392, %v391
  %v418 = vpack.c.b16 %v394, %v393
  %v419 = vpack.c.b16 %v396, %v395
  %v420 = vpack.c.b16 %v398, %v397
  %v421 = vpack.c.b16 %v400, %v399
  %v422 = vpack.c.b16 %v402, %v401
  %v423 = vpack.c.b16 %v404, %v403
  %v424 = vpack.c.b16 %v406, %v405
  %v425 = vpack.c.b16 %v408, %v407
  %v426 = vpack.c.b16 %v410, %v409
  %443 = vmatprep.subr.bf16.mxu0 0
  %444 = vmatpush1.bf16.msra.mxu0 %v411
  %445 = vmatprep.subr.bf16.mxu0 0
  %446 = vmatpush1.bf16.msra.mxu0 %v412
  %447 = vmatprep.subr.bf16.mxu0 0
  %448 = vmatpush1.bf16.msra.mxu0 %v413
  %449 = vmatprep.subr.bf16.mxu0 0
  %450 = vmatpush1.bf16.msra.mxu0 %v414
  %451 = vmatprep.subr.bf16.mxu0 0
  %452 = vmatpush1.bf16.msra.mxu0 %v415
  %453 = vmatprep.subr.bf16.mxu0 0
  %454 = vmatpush1.bf16.msra.mxu0 %v416
  %455 = vmatprep.subr.bf16.mxu0 0
  %456 = vmatpush1.bf16.msra.mxu0 %v417
  %457 = vmatprep.subr.bf16.mxu0 0
  %458 = vmatpush1.bf16.msra.mxu0 %v418
  %459 = vmatprep.subr.bf16.mxu0 0
  %460 = vmatpush1.bf16.msra.mxu0 %v419
  %461 = vmatprep.subr.bf16.mxu0 0
  %462 = vmatpush1.bf16.msra.mxu0 %v420
  %463 = vmatprep.subr.bf16.mxu0 0
  %464 = vmatpush1.bf16.msra.mxu0 %v421
  %465 = vmatprep.subr.bf16.mxu0 0
  %466 = vmatpush1.bf16.msra.mxu0 %v422
  %467 = vmatprep.subr.bf16.mxu0 0
  %468 = vmatpush1.bf16.msra.mxu0 %v423
  %469 = vmatprep.subr.bf16.mxu0 0
  %470 = vmatpush1.bf16.msra.mxu0 %v424
  %471 = vmatprep.subr.bf16.mxu0 0
  %472 = vmatpush1.bf16.msra.mxu0 %v425
  %473 = vmatprep.subr.bf16.mxu0 0
  %474 = vmatpush1.bf16.msra.mxu0 %v426
  %475 = vmatprep.mubr.bf16.mxu0 %v340
  %476 = vmatmul.mubr.bf16.gmra.mrb[0].mxu0 %v339
  %v477 = vpop.f32.mrb[0].mxu0
  %v478 = vadd.f32 0.0, %v477
  %v479 = vpop.f32.mrb[0].mxu0
  %v480 = vpop.f32.mrb[0].mxu0
  %v481 = vadd.f32 0.0, %v480
  %v482 = vpop.f32.mrb[0].mxu0
  %483 = vmatprep.mubr.bf16.mxu0 %v342
  %484 = vmatmul.mubr.bf16.gmra.mrb[0].mxu0 %v341
  %v485 = vpop.f32.mrb[0].mxu0
  %v486 = vadd.f32 0.0, %v485
  %v487 = vpop.f32.mrb[0].mxu0
  %v488 = vpop.f32.mrb[0].mxu0
  %v489 = vadd.f32 0.0, %v488
  %v490 = vpop.f32.mrb[0].mxu0
  %491 = vdwg.mxu0
  %v496 = vunpack.c.l.b16 %v26
  %v497 = vunpack.c.h.b16 %v26
  %v498 = vunpack.c.l.b16 %v27
  %v499 = vunpack.c.h.b16 %v27
  %v500 = vunpack.c.l.b16 %v28
  %v501 = vunpack.c.h.b16 %v28
  %v502 = vunpack.c.l.b16 %v29
  %v503 = vunpack.c.h.b16 %v29
  %v504 = vpack.c.b16 %v498, %v496
  %v505 = vpack.c.b16 %v499, %v497
  %v506 = vpack.c.b16 %v502, %v500
  %v507 = vpack.c.b16 %v503, %v501
  %v544 = vunpack.c.l.b16 %v98
  %v545 = vunpack.c.l.b16 %v99
  %v546 = vunpack.c.l.b16 %v100
  %v547 = vunpack.c.l.b16 %v101
  %v548 = vunpack.c.l.b16 %v102
  %v549 = vunpack.c.l.b16 %v103
  %v550 = vunpack.c.l.b16 %v104
  %v551 = vunpack.c.l.b16 %v105
  %v552 = vunpack.c.l.b16 %v106
  %v553 = vunpack.c.l.b16 %v107
  %v554 = vunpack.c.l.b16 %v108
  %v555 = vunpack.c.l.b16 %v109
  %v556 = vunpack.c.l.b16 %v110
  %v557 = vunpack.c.l.b16 %v111
  %v558 = vunpack.c.l.b16 %v112
  %v559 = vunpack.c.l.b16 %v113
  %v560 = vunpack.c.l.b16 %v114
  %v561 = vunpack.c.l.b16 %v115
  %v562 = vunpack.c.l.b16 %v116
  %v563 = vunpack.c.l.b16 %v117
  %v564 = vunpack.c.l.b16 %v118
  %v565 = vunpack.c.l.b16 %v119
  %v566 = vunpack.c.l.b16 %v120
  %v567 = vunpack.c.l.b16 %v121
  %v568 = vunpack.c.l.b16 %v122
  %v569 = vunpack.c.l.b16 %v123
  %v570 = vunpack.c.l.b16 %v124
  %v571 = vunpack.c.l.b16 %v125
  %v572 = vunpack.c.l.b16 %v126
  %v573 = vunpack.c.l.b16 %v127
  %v574 = vunpack.c.l.b16 %v128
  %v575 = vunpack.c.l.b16 %v129
  %v576 = vpack.c.b16 %v545, %v544
  %v577 = vpack.c.b16 %v547, %v546
  %v578 = vpack.c.b16 %v549, %v548
  %v579 = vpack.c.b16 %v551, %v550
  %v580 = vpack.c.b16 %v553, %v552
  %v581 = vpack.c.b16 %v555, %v554
  %v582 = vpack.c.b16 %v557, %v556
  %v583 = vpack.c.b16 %v559, %v558
  %v584 = vpack.c.b16 %v561, %v560
  %v585 = vpack.c.b16 %v563, %v562
  %v586 = vpack.c.b16 %v565, %v564
  %v587 = vpack.c.b16 %v567, %v566
  %v588 = vpack.c.b16 %v569, %v568
  %v589 = vpack.c.b16 %v571, %v570
  %v590 = vpack.c.b16 %v573, %v572
  %v591 = vpack.c.b16 %v575, %v574
  %608 = vmatprep.subr.bf16.mxu0 0
  %609 = vmatpush1.bf16.msra.mxu0 %v576
  %610 = vmatprep.subr.bf16.mxu0 0
  %611 = vmatpush1.bf16.msra.mxu0 %v577
  %612 = vmatprep.subr.bf16.mxu0 0
  %613 = vmatpush1.bf16.msra.mxu0 %v578
  %614 = vmatprep.subr.bf16.mxu0 0
  %615 = vmatpush1.bf16.msra.mxu0 %v579
  %616 = vmatprep.subr.bf16.mxu0 0
  %617 = vmatpush1.bf16.msra.mxu0 %v580
  %618 = vmatprep.subr.bf16.mxu0 0
  %619 = vmatpush1.bf16.msra.mxu0 %v581
  %620 = vmatprep.subr.bf16.mxu0 0
  %621 = vmatpush1.bf16.msra.mxu0 %v582
  %622 = vmatprep.subr.bf16.mxu0 0
  %623 = vmatpush1.bf16.msra.mxu0 %v583
  %624 = vmatprep.subr.bf16.mxu0 0
  %625 = vmatpush1.bf16.msra.mxu0 %v584
  %626 = vmatprep.subr.bf16.mxu0 0
  %627 = vmatpush1.bf16.msra.mxu0 %v585
  %628 = vmatprep.subr.bf16.mxu0 0
  %629 = vmatpush1.bf16.msra.mxu0 %v586
  %630 = vmatprep.subr.bf16.mxu0 0
  %631 = vmatpush1.bf16.msra.mxu0 %v587
  %632 = vmatprep.subr.bf16.mxu0 0
  %633 = vmatpush1.bf16.msra.mxu0 %v588
  %634 = vmatprep.subr.bf16.mxu0 0
  %635 = vmatpush1.bf16.msra.mxu0 %v589
  %636 = vmatprep.subr.bf16.mxu0 0
  %637 = vmatpush1.bf16.msra.mxu0 %v590
  %638 = vmatprep.subr.bf16.mxu0 0
  %639 = vmatpush1.bf16.msra.mxu0 %v591
  %640 = vmatprep.mubr.bf16.mxu0 %v505
  %641 = vmatmul.mubr.bf16.gmra.mrb[0].mxu0 %v504
  %v642 = vpop.f32.mrb[0].mxu0
  %v643 = vadd.f32 0.0, %v642
  %v644 = vpop.f32.mrb[0].mxu0
  %v645 = vpop.f32.mrb[0].mxu0
  %v646 = vadd.f32 0.0, %v645
  %v647 = vpop.f32.mrb[0].mxu0
  %648 = vmatprep.mubr.bf16.mxu0 %v507
  %649 = vmatmul.mubr.bf16.gmra.mrb[0].mxu0 %v506
  %v650 = vpop.f32.mrb[0].mxu0
  %v651 = vadd.f32 0.0, %v650
  %v652 = vpop.f32.mrb[0].mxu0
  %v653 = vpop.f32.mrb[0].mxu0
  %v654 = vadd.f32 0.0, %v653
  %v655 = vpop.f32.mrb[0].mxu0
  %656 = vdwg.mxu0
  %v661 = vunpack.c.l.b16 %v30
  %v662 = vunpack.c.h.b16 %v30
  %v663 = vunpack.c.l.b16 %v31
  %v664 = vunpack.c.h.b16 %v31
  %v665 = vunpack.c.l.b16 %v32
  %v666 = vunpack.c.h.b16 %v32
  %v667 = vunpack.c.l.b16 %v33
  %v668 = vunpack.c.h.b16 %v33
  %v669 = vpack.c.b16 %v663, %v661
  %v670 = vpack.c.b16 %v664, %v662
  %v671 = vpack.c.b16 %v667, %v665
  %v672 = vpack.c.b16 %v668, %v666
  %v709 = vunpack.c.l.b16 %v130
  %v710 = vunpack.c.l.b16 %v131
  %v711 = vunpack.c.l.b16 %v132
  %v712 = vunpack.c.l.b16 %v133
  %v713 = vunpack.c.l.b16 %v134
  %v714 = vunpack.c.l.b16 %v135
  %v715 = vunpack.c.l.b16 %v136
  %v716 = vunpack.c.l.b16 %v137
  %v717 = vunpack.c.l.b16 %v138
  %v718 = vunpack.c.l.b16 %v139
  %v719 = vunpack.c.l.b16 %v140
  %v720 = vunpack.c.l.b16 %v141
  %v721 = vunpack.c.l.b16 %v142
  %v722 = vunpack.c.l.b16 %v143
  %v723 = vunpack.c.l.b16 %v144
  %v724 = vunpack.c.l.b16 %v145
  %v725 = vunpack.c.l.b16 %v146
  %v726 = vunpack.c.l.b16 %v147
  %v727 = vunpack.c.l.b16 %v148
  %v728 = vunpack.c.l.b16 %v149
  %v729 = vunpack.c.l.b16 %v150
  %v730 = vunpack.c.l.b16 %v151
  %v731 = vunpack.c.l.b16 %v152
  %v732 = vunpack.c.l.b16 %v153
  %v733 = vunpack.c.l.b16 %v154
  %v734 = vunpack.c.l.b16 %v155
  %v735 = vunpack.c.l.b16 %v156
  %v736 = vunpack.c.l.b16 %v157
  %v737 = vunpack.c.l.b16 %v158
  %v738 = vunpack.c.l.b16 %v159
  %v739 = vunpack.c.l.b16 %v160
  %v740 = vunpack.c.l.b16 %v161
  %v741 = vpack.c.b16 %v710, %v709
  %v742 = vpack.c.b16 %v712, %v711
  %v743 = vpack.c.b16 %v714, %v713
  %v744 = vpack.c.b16 %v716, %v715
  %v745 = vpack.c.b16 %v718, %v717
  %v746 = vpack.c.b16 %v720, %v719
  %v747 = vpack.c.b16 %v722, %v721
  %v748 = vpack.c.b16 %v724, %v723
  %v749 = vpack.c.b16 %v726, %v725
  %v750 = vpack.c.b16 %v728, %v727
  %v751 = vpack.c.b16 %v730, %v729
  %v752 = vpack.c.b16 %v732, %v731
  %v753 = vpack.c.b16 %v734, %v733
  %v754 = vpack.c.b16 %v736, %v735
  %v755 = vpack.c.b16 %v738, %v737
  %v756 = vpack.c.b16 %v740, %v739
  %773 = vmatprep.subr.bf16.mxu0 0
  %774 = vmatpush1.bf16.msra.mxu0 %v741
  %775 = vmatprep.subr.bf16.mxu0 0
  %776 = vmatpush1.bf16.msra.mxu0 %v742
  %777 = vmatprep.subr.bf16.mxu0 0
  %778 = vmatpush1.bf16.msra.mxu0 %v743
  %779 = vmatprep.subr.bf16.mxu0 0
  %780 = vmatpush1.bf16.msra.mxu0 %v744
  %781 = vmatprep.subr.bf16.mxu0 0
  %782 = vmatpush1.bf16.msra.mxu0 %v745
  %783 = vmatprep.subr.bf16.mxu0 0
  %784 = vmatpush1.bf16.msra.mxu0 %v746
  %785 = vmatprep.subr.bf16.mxu0 0
  %786 = vmatpush1.bf16.msra.mxu0 %v747
  %787 = vmatprep.subr.bf16.mxu0 0
  %788 = vmatpush1.bf16.msra.mxu0 %v748
  %789 = vmatprep.subr.bf16.mxu0 0
  %790 = vmatpush1.bf16.msra.mxu0 %v749
  %791 = vmatprep.subr.bf16.mxu0 0
  %792 = vmatpush1.bf16.msra.mxu0 %v750
  %793 = vmatprep.subr.bf16.mxu0 0
  %794 = vmatpush1.bf16.msra.mxu0 %v751
  %795 = vmatprep.subr.bf16.mxu0 0
  %796 = vmatpush1.bf16.msra.mxu0 %v752
  %797 = vmatprep.subr.bf16.mxu0 0
  %798 = vmatpush1.bf16.msra.mxu0 %v753
  %799 = vmatprep.subr.bf16.mxu0 0
  %800 = vmatpush1.bf16.msra.mxu0 %v754
  %801 = vmatprep.subr.bf16.mxu0 0
  %802 = vmatpush1.bf16.msra.mxu0 %v755
  %803 = vmatprep.subr.bf16.mxu0 0
  %804 = vmatpush1.bf16.msra.mxu0 %v756
  %805 = vmatprep.mubr.bf16.mxu0 %v670
  %806 = vmatmul.mubr.bf16.gmra.mrb[0].mxu0 %v669
  %v807 = vpop.f32.mrb[0].mxu0
  %v808 = vadd.f32 0.0, %v807
  %v809 = vpop.f32.mrb[0].mxu0
  %v810 = vpop.f32.mrb[0].mxu0
  %v811 = vadd.f32 0.0, %v810
  %v812 = vpop.f32.mrb[0].mxu0
  %813 = vmatprep.mubr.bf16.mxu0 %v672
  %814 = vmatmul.mubr.bf16.gmra.mrb[0].mxu0 %v671
  %v815 = vpop.f32.mrb[0].mxu0
  %v816 = vadd.f32 0.0, %v815
  %v817 = vpop.f32.mrb[0].mxu0
  %v818 = vpop.f32.mrb[0].mxu0
  %v819 = vadd.f32 0.0, %v818
  %v820 = vpop.f32.mrb[0].mxu0
  %821 = vdwg.mxu0
  %vm822 = vcmask 261120
  %v823 = vsel %vm822, %v313, 0.0
  %824 = vadd.xlane.f32.xlu0 %v823
  %v825 = vpop.xlane.xlu0 %824
  %v826 = vsel %vm822, %v316, 0.0
  %827 = vadd.xlane.f32.xlu0 %v826
  %v828 = vpop.xlane.xlu0 %827
  %v829 = vsel %vm822, %v321, 0.0
  %830 = vadd.xlane.f32.xlu0 %v829
  %v831 = vpop.xlane.xlu0 %830
  %v832 = vsel %vm822, %v324, 0.0
  %833 = vadd.xlane.f32.xlu0 %v832
  %v834 = vpop.xlane.xlu0 %833
  %v835 = vsel %vm822, %v478, 0.0
  %836 = vadd.xlane.f32.xlu0 %v835
  %v837 = vpop.xlane.xlu0 %836
  %v838 = vsel %vm822, %v481, 0.0
  %839 = vadd.xlane.f32.xlu0 %v838
  %v840 = vpop.xlane.xlu0 %839
  %v841 = vsel %vm822, %v486, 0.0
  %842 = vadd.xlane.f32.xlu0 %v841
  %v843 = vpop.xlane.xlu0 %842
  %v844 = vsel %vm822, %v489, 0.0
  %845 = vadd.xlane.f32.xlu0 %v844
  %v846 = vpop.xlane.xlu0 %845
  %v847 = vsel %vm822, %v643, 0.0
  %848 = vadd.xlane.f32.xlu0 %v847
  %v849 = vpop.xlane.xlu0 %848
  %v850 = vsel %vm822, %v646, 0.0
  %851 = vadd.xlane.f32.xlu0 %v850
  %v852 = vpop.xlane.xlu0 %851
  %v853 = vsel %vm822, %v651, 0.0
  %854 = vadd.xlane.f32.xlu0 %v853
  %v855 = vpop.xlane.xlu0 %854
  %v856 = vsel %vm822, %v654, 0.0
  %857 = vadd.xlane.f32.xlu0 %v856
  %v858 = vpop.xlane.xlu0 %857
  %v859 = vsel %vm822, %v808, 0.0
  %860 = vadd.xlane.f32.xlu0 %v859
  %v861 = vpop.xlane.xlu0 %860
  %v862 = vsel %vm822, %v811, 0.0
  %863 = vadd.xlane.f32.xlu0 %v862
  %v864 = vpop.xlane.xlu0 %863
  %v865 = vsel %vm822, %v816, 0.0
  %866 = vadd.xlane.f32.xlu0 %v865
  %v867 = vpop.xlane.xlu0 %866
  %v868 = vsel %vm822, %v819, 0.0
  %869 = vadd.xlane.f32.xlu0 %v868
  %v870 = vpop.xlane.xlu0 %869
  %v871 = vadd.f32 %v825, %v837
  %v872 = vadd.f32 %v871, %v849
  %v873 = vadd.f32 %v872, %v861
  %v874 = vadd.f32 %v828, %v840
  %v875 = vadd.f32 %v874, %v852
  %v876 = vadd.f32 %v875, %v864
  %v877 = vadd.f32 %v831, %v843
  %v878 = vadd.f32 %v877, %v855
  %v879 = vadd.f32 %v878, %v867
  %v880 = vadd.f32 %v834, %v846
  %v881 = vadd.f32 %v880, %v858
  %v882 = vadd.f32 %v881, %v870
  %v883 = vrcp.pop 128.0
  %v884 = vmul.f32 %v873, %v883
  %v885 = vmul.f32 %v876, %v883
  %v886 = vmul.f32 %v879, %v883
  %v887 = vmul.f32 %v882, %v883
  %v888 = vsub.f32 %v313, %v884
  %v889 = vsub.f32 %v316, %v885
  %v890 = vsub.f32 %v321, %v886
  %v891 = vsub.f32 %v324, %v887
  %v892 = vsub.f32 %v478, %v884
  %v893 = vsub.f32 %v481, %v885
  %v894 = vsub.f32 %v486, %v886
  %v895 = vsub.f32 %v489, %v887
  %v896 = vsub.f32 %v643, %v884
  %v897 = vsub.f32 %v646, %v885
  %v898 = vsub.f32 %v651, %v886
  %v899 = vsub.f32 %v654, %v887
  %v900 = vsub.f32 %v808, %v884
  %v901 = vsub.f32 %v811, %v885
  %v902 = vsub.f32 %v816, %v886
  %v903 = vsub.f32 %v819, %v887
  %v904 = vmul.f32 %v888, %v888
  %v905 = vmul.f32 %v889, %v889
  %v906 = vmul.f32 %v890, %v890
  %v907 = vmul.f32 %v891, %v891
  %v908 = vmul.f32 %v892, %v892
  %v909 = vmul.f32 %v893, %v893
  %v910 = vmul.f32 %v894, %v894
  %v911 = vmul.f32 %v895, %v895
  %v912 = vmul.f32 %v896, %v896
  %v913 = vmul.f32 %v897, %v897
  %v914 = vmul.f32 %v898, %v898
  %v915 = vmul.f32 %v899, %v899
  %v916 = vmul.f32 %v900, %v900
  %v917 = vmul.f32 %v901, %v901
  %v918 = vmul.f32 %v902, %v902
  %v919 = vmul.f32 %v903, %v903
  %v920 = vsel %vm822, %v904, 0.0
  %921 = vadd.xlane.f32.xlu0 %v920
  %v922 = vpop.xlane.xlu0 %921
  %v923 = vsel %vm822, %v905, 0.0
  %924 = vadd.xlane.f32.xlu0 %v923
  %v925 = vpop.xlane.xlu0 %924
  %v926 = vsel %vm822, %v906, 0.0
  %927 = vadd.xlane.f32.xlu0 %v926
  %v928 = vpop.xlane.xlu0 %927
  %v929 = vsel %vm822, %v907, 0.0
  %930 = vadd.xlane.f32.xlu0 %v929
  %v931 = vpop.xlane.xlu0 %930
  %v932 = vsel %vm822, %v908, 0.0
  %933 = vadd.xlane.f32.xlu0 %v932
  %v934 = vpop.xlane.xlu0 %933
  %v935 = vsel %vm822, %v909, 0.0
  %936 = vadd.xlane.f32.xlu0 %v935
  %v937 = vpop.xlane.xlu0 %936
  %v938 = vsel %vm822, %v910, 0.0
  %939 = vadd.xlane.f32.xlu0 %v938
  %v940 = vpop.xlane.xlu0 %939
  %v941 = vsel %vm822, %v911, 0.0
  %942 = vadd.xlane.f32.xlu0 %v941
  %v943 = vpop.xlane.xlu0 %942
  %v944 = vsel %vm822, %v912, 0.0
  %945 = vadd.xlane.f32.xlu0 %v944
  %v946 = vpop.xlane.xlu0 %945
  %v947 = vsel %vm822, %v913, 0.0
  %948 = vadd.xlane.f32.xlu0 %v947
  %v949 = vpop.xlane.xlu0 %948
  %v950 = vsel %vm822, %v914, 0.0
  %951 = vadd.xlane.f32.xlu0 %v950
  %v952 = vpop.xlane.xlu0 %951
  %v953 = vsel %vm822, %v915, 0.0
  %954 = vadd.xlane.f32.xlu0 %v953
  %v955 = vpop.xlane.xlu0 %954
  %v956 = vsel %vm822, %v916, 0.0
  %957 = vadd.xlane.f32.xlu0 %v956
  %v958 = vpop.xlane.xlu0 %957
  %v959 = vsel %vm822, %v917, 0.0
  %960 = vadd.xlane.f32.xlu0 %v959
  %v961 = vpop.xlane.xlu0 %960
  %v962 = vsel %vm822, %v918, 0.0
  %963 = vadd.xlane.f32.xlu0 %v962
  %v964 = vpop.xlane.xlu0 %963
  %v965 = vsel %vm822, %v919, 0.0
  %966 = vadd.xlane.f32.xlu0 %v965
  %v967 = vpop.xlane.xlu0 %966
  %v968 = vadd.f32 %v922, %v934
  %v969 = vadd.f32 %v968, %v946
  %v970 = vadd.f32 %v969, %v958
  %v971 = vadd.f32 %v925, %v937
  %v972 = vadd.f32 %v971, %v949
  %v973 = vadd.f32 %v972, %v961
  %v974 = vadd.f32 %v928, %v940
  %v975 = vadd.f32 %v974, %v952
  %v976 = vadd.f32 %v975, %v964
  %v977 = vadd.f32 %v931, %v943
  %v978 = vadd.f32 %v977, %v955
  %v979 = vadd.f32 %v978, %v967
  %v980 = vmul.f32 %v970, %v883
  %v981 = vmul.f32 %v973, %v883
  %v982 = vmul.f32 %v976, %v883
  %v983 = vmul.f32 %v979, %v883
  %v984 = vld [vmem:[%s2] sm:$0xff]
  %v985 = vld [vmem:[%s2 + $0x8] sm:$0xff]
  %v986 = vld [vmem:[%s2 + $0x10] sm:$0xff]
  %v987 = vld [vmem:[%s2 + $0x18] sm:$0xff]
  %v988 = vld [vmem:[%s3] sm:$0xff]
  %v989 = vld [vmem:[%s3 + $0x8] sm:$0xff]
  %v990 = vld [vmem:[%s3 + $0x10] sm:$0xff]
  %v991 = vld [vmem:[%s3 + $0x18] sm:$0xff]
  %v992 = vadd.f32 %v980, 1e-05
  %v993 = vadd.f32 %v981, 1e-05
  %v994 = vadd.f32 %v982, 1e-05
  %v995 = vadd.f32 %v983, 1e-05
  %v996 = vrsqrt.pop %v992
  %v997 = vrsqrt.pop %v993
  %v998 = vrsqrt.pop %v994
  %v999 = vrsqrt.pop %v995
  %v1000 = vmul.f32 %v888, %v996
  %v1001 = vmul.f32 %v889, %v997
  %v1002 = vmul.f32 %v890, %v998
  %v1003 = vmul.f32 %v891, %v999
  %v1004 = vmul.f32 %v892, %v996
  %v1005 = vmul.f32 %v893, %v997
  %v1006 = vmul.f32 %v894, %v998
  %v1007 = vmul.f32 %v895, %v999
  %v1008 = vmul.f32 %v896, %v996
  %v1009 = vmul.f32 %v897, %v997
  %v1010 = vmul.f32 %v898, %v998
  %v1011 = vmul.f32 %v899, %v999
  %v1012 = vmul.f32 %v900, %v996
  %v1013 = vmul.f32 %v901, %v997
  %v1014 = vmul.f32 %v902, %v998
  %v1015 = vmul.f32 %v903, %v999
  %1017 = vset.pattern.permute.xlu0 0
  %1018 = vperm.xlu0 %1017, %v984
  %v1019 = vpop.permute.xlu0 %1018
  %1022 = vset.pattern.permute.xlu0 0
  %1023 = vperm.xlu0 %1022, %v985
  %v1024 = vpop.permute.xlu0 %1023
  %1027 = vset.pattern.permute.xlu0 0
  %1028 = vperm.xlu0 %1027, %v986
  %v1029 = vpop.permute.xlu0 %1028
  %1032 = vset.pattern.permute.xlu0 0
  %1033 = vperm.xlu0 %1032, %v987
  %v1034 = vpop.permute.xlu0 %1033
  %v1036 = vmul.f32 %v1000, %v1019
  %v1037 = vmul.f32 %v1001, %v1024
  %v1038 = vmul.f32 %v1002, %v1029
  %v1039 = vmul.f32 %v1003, %v1034
  %v1040 = vmul.f32 %v1004, %v1019
  %v1041 = vmul.f32 %v1005, %v1024
  %v1042 = vmul.f32 %v1006, %v1029
  %v1043 = vmul.f32 %v1007, %v1034
  %v1044 = vmul.f32 %v1008, %v1019
  %v1045 = vmul.f32 %v1009, %v1024
  %v1046 = vmul.f32 %v1010, %v1029
  %v1047 = vmul.f32 %v1011, %v1034
  %v1048 = vmul.f32 %v1012, %v1019
  %v1049 = vmul.f32 %v1013, %v1024
  %v1050 = vmul.f32 %v1014, %v1029
  %v1051 = vmul.f32 %v1015, %v1034
  %1053 = vset.pattern.permute.xlu0 0
  %1054 = vperm.xlu0 %1053, %v988
  %v1055 = vpop.permute.xlu0 %1054
  %1058 = vset.pattern.permute.xlu0 0
  %1059 = vperm.xlu0 %1058, %v989
  %v1060 = vpop.permute.xlu0 %1059
  %1063 = vset.pattern.permute.xlu0 0
  %1064 = vperm.xlu0 %1063, %v990
  %v1065 = vpop.permute.xlu0 %1064
  %1068 = vset.pattern.permute.xlu0 0
  %1069 = vperm.xlu0 %1068, %v991
  %v1070 = vpop.permute.xlu0 %1069
  %v1072 = vadd.f32 %v1036, %v1055
  %v1073 = vadd.f32 %v1037, %v1060
  %v1074 = vadd.f32 %v1038, %v1065
  %v1075 = vadd.f32 %v1039, %v1070
  %v1076 = vadd.f32 %v1040, %v1055
  %v1077 = vadd.f32 %v1041, %v1060
  %v1078 = vadd.f32 %v1042, %v1065
  %v1079 = vadd.f32 %v1043, %v1070
  %v1080 = vadd.f32 %v1044, %v1055
  %v1081 = vadd.f32 %v1045, %v1060
  %v1082 = vadd.f32 %v1046, %v1065
  %v1083 = vadd.f32 %v1047, %v1070
  %v1084 = vadd.f32 %v1048, %v1055
  %v1085 = vadd.f32 %v1049, %v1060
  %v1086 = vadd.f32 %v1050, %v1065
  %v1087 = vadd.f32 %v1051, %v1070
  %v1088 = vmin.f32 %v1072, 0.0
  %v1089 = vmin.f32 %v1073, 0.0
  %v1090 = vmin.f32 %v1074, 0.0
  %v1091 = vmin.f32 %v1075, 0.0
  %v1092 = vmin.f32 %v1076, 0.0
  %v1093 = vmin.f32 %v1077, 0.0
  %v1094 = vmin.f32 %v1078, 0.0
  %v1095 = vmin.f32 %v1079, 0.0
  %v1096 = vmin.f32 %v1080, 0.0
  %v1097 = vmin.f32 %v1081, 0.0
  %v1098 = vmin.f32 %v1082, 0.0
  %v1099 = vmin.f32 %v1083, 0.0
  %v1100 = vmin.f32 %v1084, 0.0
  %v1101 = vmin.f32 %v1085, 0.0
  %v1102 = vmin.f32 %v1086, 0.0
  %v1103 = vmin.f32 %v1087, 0.0
  %v1104 = vmul.f32 %v1088, 1.442695
  %v1105 = vpow.pop %v1104
  %v1106 = vmul.f32 %v1089, 1.442695
  %v1107 = vpow.pop %v1106
  %v1108 = vmul.f32 %v1090, 1.442695
  %v1109 = vpow.pop %v1108
  %v1110 = vmul.f32 %v1091, 1.442695
  %v1111 = vpow.pop %v1110
  %v1112 = vmul.f32 %v1092, 1.442695
  %v1113 = vpow.pop %v1112
  %v1114 = vmul.f32 %v1093, 1.442695
  %v1115 = vpow.pop %v1114
  %v1116 = vmul.f32 %v1094, 1.442695
  %v1117 = vpow.pop %v1116
  %v1118 = vmul.f32 %v1095, 1.442695
  %v1119 = vpow.pop %v1118
  %v1120 = vmul.f32 %v1096, 1.442695
  %v1121 = vpow.pop %v1120
  %v1122 = vmul.f32 %v1097, 1.442695
  %v1123 = vpow.pop %v1122
  %v1124 = vmul.f32 %v1098, 1.442695
  %v1125 = vpow.pop %v1124
  %v1126 = vmul.f32 %v1099, 1.442695
  %v1127 = vpow.pop %v1126
  %v1128 = vmul.f32 %v1100, 1.442695
  %v1129 = vpow.pop %v1128
  %v1130 = vmul.f32 %v1101, 1.442695
  %v1131 = vpow.pop %v1130
  %v1132 = vmul.f32 %v1102, 1.442695
  %v1133 = vpow.pop %v1132
  %v1134 = vmul.f32 %v1103, 1.442695
  %v1135 = vpow.pop %v1134
  %v1136 = vsub.f32 %v1105, 1.0
  %v1137 = vsub.f32 %v1107, 1.0
  %v1138 = vsub.f32 %v1109, 1.0
  %v1139 = vsub.f32 %v1111, 1.0
  %v1140 = vsub.f32 %v1113, 1.0
  %v1141 = vsub.f32 %v1115, 1.0
  %v1142 = vsub.f32 %v1117, 1.0
  %v1143 = vsub.f32 %v1119, 1.0
  %v1144 = vsub.f32 %v1121, 1.0
  %v1145 = vsub.f32 %v1123, 1.0
  %v1146 = vsub.f32 %v1125, 1.0
  %v1147 = vsub.f32 %v1127, 1.0
  %v1148 = vsub.f32 %v1129, 1.0
  %v1149 = vsub.f32 %v1131, 1.0
  %v1150 = vsub.f32 %v1133, 1.0
  %v1151 = vsub.f32 %v1135, 1.0
  %v1152 = vmul.f32 %v1136, 1.6732632
  %v1153 = vmul.f32 %v1137, 1.6732632
  %v1154 = vmul.f32 %v1138, 1.6732632
  %v1155 = vmul.f32 %v1139, 1.6732632
  %v1156 = vmul.f32 %v1140, 1.6732632
  %v1157 = vmul.f32 %v1141, 1.6732632
  %v1158 = vmul.f32 %v1142, 1.6732632
  %v1159 = vmul.f32 %v1143, 1.6732632
  %v1160 = vmul.f32 %v1144, 1.6732632
  %v1161 = vmul.f32 %v1145, 1.6732632
  %v1162 = vmul.f32 %v1146, 1.6732632
  %v1163 = vmul.f32 %v1147, 1.6732632
  %v1164 = vmul.f32 %v1148, 1.6732632
  %v1165 = vmul.f32 %v1149, 1.6732632
  %v1166 = vmul.f32 %v1150, 1.6732632
  %v1167 = vmul.f32 %v1151, 1.6732632
  %vm1168 = vcmp.gt.f32.partialorder %v1072, 0.0
  %vm1169 = vcmp.gt.f32.partialorder %v1073, 0.0
  %vm1170 = vcmp.gt.f32.partialorder %v1074, 0.0
  %vm1171 = vcmp.gt.f32.partialorder %v1075, 0.0
  %vm1172 = vcmp.gt.f32.partialorder %v1076, 0.0
  %vm1173 = vcmp.gt.f32.partialorder %v1077, 0.0
  %vm1174 = vcmp.gt.f32.partialorder %v1078, 0.0
  %vm1175 = vcmp.gt.f32.partialorder %v1079, 0.0
  %vm1176 = vcmp.gt.f32.partialorder %v1080, 0.0
  %vm1177 = vcmp.gt.f32.partialorder %v1081, 0.0
  %vm1178 = vcmp.gt.f32.partialorder %v1082, 0.0
  %vm1179 = vcmp.gt.f32.partialorder %v1083, 0.0
  %vm1180 = vcmp.gt.f32.partialorder %v1084, 0.0
  %vm1181 = vcmp.gt.f32.partialorder %v1085, 0.0
  %vm1182 = vcmp.gt.f32.partialorder %v1086, 0.0
  %vm1183 = vcmp.gt.f32.partialorder %v1087, 0.0
  %v1184 = vsel %vm1168, %v1072, %v1152
  %v1185 = vsel %vm1169, %v1073, %v1153
  %v1186 = vsel %vm1170, %v1074, %v1154
  %v1187 = vsel %vm1171, %v1075, %v1155
  %v1188 = vsel %vm1172, %v1076, %v1156
  %v1189 = vsel %vm1173, %v1077, %v1157
  %v1190 = vsel %vm1174, %v1078, %v1158
  %v1191 = vsel %vm1175, %v1079, %v1159
  %v1192 = vsel %vm1176, %v1080, %v1160
  %v1193 = vsel %vm1177, %v1081, %v1161
  %v1194 = vsel %vm1178, %v1082, %v1162
  %v1195 = vsel %vm1179, %v1083, %v1163
  %v1196 = vsel %vm1180, %v1084, %v1164
  %v1197 = vsel %vm1181, %v1085, %v1165
  %v1198 = vsel %vm1182, %v1086, %v1166
  %v1199 = vsel %vm1183, %v1087, %v1167
  %v1200 = vmul.f32 %v1184, 1.050701
  %v1201 = vmul.f32 %v1185, 1.050701
  %v1202 = vmul.f32 %v1186, 1.050701
  %v1203 = vmul.f32 %v1187, 1.050701
  %v1204 = vmul.f32 %v1188, 1.050701
  %v1205 = vmul.f32 %v1189, 1.050701
  %v1206 = vmul.f32 %v1190, 1.050701
  %v1207 = vmul.f32 %v1191, 1.050701
  %v1208 = vmul.f32 %v1192, 1.050701
  %v1209 = vmul.f32 %v1193, 1.050701
  %v1210 = vmul.f32 %v1194, 1.050701
  %v1211 = vmul.f32 %v1195, 1.050701
  %v1212 = vmul.f32 %v1196, 1.050701
  %v1213 = vmul.f32 %v1197, 1.050701
  %v1214 = vmul.f32 %v1198, 1.050701
  %v1215 = vmul.f32 %v1199, 1.050701
  %v1216 = vpack.c.bf16 %v1201, %v1200
  %v1217 = vpack.c.bf16 %v1203, %v1202
  %v1218 = vpack.c.bf16 %v1205, %v1204
  %v1219 = vpack.c.bf16 %v1207, %v1206
  %v1220 = vpack.c.bf16 %v1209, %v1208
  %v1221 = vpack.c.bf16 %v1211, %v1210
  %v1222 = vpack.c.bf16 %v1213, %v1212
  %v1223 = vpack.c.bf16 %v1215, %v1214
  %v1232 = vunpack.c.l.b16 %v1216
  %v1233 = vunpack.c.h.b16 %v1216
  %v1234 = vunpack.c.l.b16 %v1217
  %v1235 = vunpack.c.h.b16 %v1217
  %v1236 = vunpack.c.l.b16 %v1218
  %v1237 = vunpack.c.h.b16 %v1218
  %v1238 = vunpack.c.l.b16 %v1219
  %v1239 = vunpack.c.h.b16 %v1219
  %v1240 = vunpack.c.l.b16 %v1220
  %v1241 = vunpack.c.h.b16 %v1220
  %v1242 = vunpack.c.l.b16 %v1221
  %v1243 = vunpack.c.h.b16 %v1221
  %v1244 = vunpack.c.l.b16 %v1222
  %v1245 = vunpack.c.h.b16 %v1222
  %v1246 = vunpack.c.l.b16 %v1223
  %v1247 = vunpack.c.h.b16 %v1223
  %v1248 = vpack.c.b16 %v1232, %v1232
  %v1249 = vpack.c.b16 %v1233, %v1233
  %v1250 = vpack.c.b16 %v1234, %v1234
  %v1251 = vpack.c.b16 %v1235, %v1235
  %v1252 = vpack.c.b16 %v1236, %v1236
  %v1253 = vpack.c.b16 %v1237, %v1237
  %v1254 = vpack.c.b16 %v1238, %v1238
  %v1255 = vpack.c.b16 %v1239, %v1239
  %v1256 = vpack.c.b16 %v1240, %v1240
  %v1257 = vpack.c.b16 %v1241, %v1241
  %v1258 = vpack.c.b16 %v1242, %v1242
  %v1259 = vpack.c.b16 %v1243, %v1243
  %v1260 = vpack.c.b16 %v1244, %v1244
  %v1261 = vpack.c.b16 %v1245, %v1245
  %v1262 = vpack.c.b16 %v1246, %v1246
  %v1263 = vpack.c.b16 %v1247, %v1247
  %vm1280 = vcmask 257024
  %1281 = vst.msk [vmem:[%s4] sm:$0xf] %vm1280, %v1248
  %1282 = vst.msk [vmem:[%s4 + $0x4] sm:$0xf] %vm1280, %v1249
  %1283 = vst.msk [vmem:[%s4 + $0x8] sm:$0xf] %vm1280, %v1250
  %1284 = vst.msk [vmem:[%s4 + $0xc] sm:$0xf] %vm1280, %v1251
  %1285 = vst.msk [vmem:[%s4 + $0x10] sm:$0xf] %vm1280, %v1252
  %1286 = vst.msk [vmem:[%s4 + $0x14] sm:$0xf] %vm1280, %v1253
  %1287 = vst.msk [vmem:[%s4 + $0x18] sm:$0xf] %vm1280, %v1254
  %1288 = vst.msk [vmem:[%s4 + $0x1c] sm:$0xf] %vm1280, %v1255
  %1289 = vst.msk [vmem:[%s4 + $0x20] sm:$0xf] %vm1280, %v1256
  %1290 = vst.msk [vmem:[%s4 + $0x24] sm:$0xf] %vm1280, %v1257
  %1291 = vst.msk [vmem:[%s4 + $0x28] sm:$0xf] %vm1280, %v1258
  %1292 = vst.msk [vmem:[%s4 + $0x2c] sm:$0xf] %vm1280, %v1259
  %1293 = vst.msk [vmem:[%s4 + $0x30] sm:$0xf] %vm1280, %v1260
  %1294 = vst.msk [vmem:[%s4 + $0x34] sm:$0xf] %vm1280, %v1261
  %1295 = vst.msk [vmem:[%s4 + $0x38] sm:$0xf] %vm1280, %v1262
  %1296 = vst.msk [vmem:[%s4 + $0x3c] sm:$0xf] %vm1280, %v1263
  // Predicated region
  $region18: #{dcgan_generator_forward.5} parent=0 // pred_check
    _
  $region19: #{dcgan_generator_forward.5} parent=0 // pred_check_branch
    %1298 = sbr.rel (0) target = $region21
  $region20: #{dcgan_generator_forward.5} parent=0 // pred_region
    _
  $region21: #{dcgan_generator_forward.5} parent=0 // pred_fallthru
    _
  // Predicated region
  $region22: #{dcgan_generator_forward.5} parent=0 // pred_check
    _
  $region23: #{dcgan_generator_forward.5} parent=0 // pred_check_branch
    %1300 = sbr.rel (0) target = $region25
  $region24: #{dcgan_generator_forward.5} parent=0 // pred_region
    _
  $region25: #{dcgan_generator_forward.5} parent=0 // pred_fallthru
    _

// kernel: dcgan_generator_forward.4
$region0: #{dcgan_generator_forward.4}
  #allocation0 [shape = 'u32[]', space=smem, size = 0x4, offset = 0x4, fixed_abs, tag = 'smem constant byte address 0x4 - core index']
  #allocation1 [shape = 'u32[144,128]{1,0:T(1,128)}', space=vmem, size = 0x12000, scoped, tag = 'internal scratch']
  %s0 = inlined_call_operand.vmem [shape: bf16[16,64,16], index: 0, kind: input, shape index: {}]
  %s1 = inlined_call_operand.vmem [shape: bf16[16,16,2], index: 1, kind: input, shape index: {}]
  %s2 = inlined_call_operand.vmem [shape: f32[64,1], index: 2, kind: input, shape index: {}]
  %s3 = inlined_call_operand.vmem [shape: f32[64,1], index: 3, kind: input, shape index: {}]
  %s4 = inlined_call_operand.vmem [shape: bf16[16,64,2], index: 4, kind: output, shape index: {}]
  %s5 = sld [smem:[#allocation0]]
  $region26: #{dcgan_generator_forward.4} parent=0
    _
  %s7 = ssub.s32 1, %s5
  %s8 = scalar_select 0, %s7, %s5
  // Predicated region
  $region2: #{dcgan_generator_forward.4} parent=0 // pred_check
    _
  $region3: #{dcgan_generator_forward.4} parent=0 // pred_check_branch
    %10 = sbr.rel (0) target = $region5
  $region4: #{dcgan_generator_forward.4} parent=0 // pred_region
    _
  $region5: #{dcgan_generator_forward.4} parent=0 // pred_fallthru
    _
  // Predicated region
  $region6: #{dcgan_generator_forward.4} parent=0 // pred_check
    _
  $region7: #{dcgan_generator_forward.4} parent=0 // pred_check_branch
    %12 = sbr.rel (0) target = $region9
  $region8: #{dcgan_generator_forward.4} parent=0 // pred_region
    _
  $region9: #{dcgan_generator_forward.4} parent=0 // pred_fallthru
    _
  // Predicated region
  $region10: #{dcgan_generator_forward.4} parent=0 // pred_check
    _
  $region11: #{dcgan_generator_forward.4} parent=0 // pred_check_branch
    %14 = sbr.rel (0) target = $region13
  $region12: #{dcgan_generator_forward.4} parent=0 // pred_region
    _
  $region13: #{dcgan_generator_forward.4} parent=0 // pred_fallthru
    _
  // Predicated region
  $region14: #{dcgan_generator_forward.4} parent=0 // pred_check
    _
  $region15: #{dcgan_generator_forward.4} parent=0 // pred_check_branch
    %16 = sbr.rel (0) target = $region17
  $region16: #{dcgan_generator_forward.4} parent=0 // pred_region
    _
  $region17: #{dcgan_generator_forward.4} parent=0 // pred_fallthru
    _
  %v18 = vld [vmem:[%s0] sm:$0xf]
  %v19 = vld [vmem:[%s0 + $0x4] sm:$0xf]
  %v20 = vld [vmem:[%s0 + $0x8] sm:$0xf]
  %v21 = vld [vmem:[%s0 + $0xc] sm:$0xf]
  %v22 = vld [vmem:[%s0 + $0x10] sm:$0xf]
  %v23 = vld [vmem:[%s0 + $0x14] sm:$0xf]
  %v24 = vld [vmem:[%s0 + $0x18] sm:$0xf]
  %v25 = vld [vmem:[%s0 + $0x1c] sm:$0xf]
  %v26 = vld [vmem:[%s0 + $0x20] sm:$0xf]
  %v27 = vld [vmem:[%s0 + $0x24] sm:$0xf]
  %v28 = vld [vmem:[%s0 + $0x28] sm:$0xf]
  %v29 = vld [vmem:[%s0 + $0x2c] sm:$0xf]
  %v30 = vld [vmem:[%s0 + $0x30] sm:$0xf]
  %v31 = vld [vmem:[%s0 + $0x34] sm:$0xf]
  %v32 = vld [vmem:[%s0 + $0x38] sm:$0xf]
  %v33 = vld [vmem:[%s0 + $0x3c] sm:$0xf]
  %v34 = vld [vmem:[%s0 + $0x40] sm:$0xf]
  %v35 = vld [vmem:[%s0 + $0x44] sm:$0xf]
  %v36 = vld [vmem:[%s0 + $0x48] sm:$0xf]
  %v37 = vld [vmem:[%s0 + $0x4c] sm:$0xf]
  %v38 = vld [vmem:[%s0 + $0x50] sm:$0xf]
  %v39 = vld [vmem:[%s0 + $0x54] sm:$0xf]
  %v40 = vld [vmem:[%s0 + $0x58] sm:$0xf]
  %v41 = vld [vmem:[%s0 + $0x5c] sm:$0xf]
  %v42 = vld [vmem:[%s0 + $0x60] sm:$0xf]
  %v43 = vld [vmem:[%s0 + $0x64] sm:$0xf]
  %v44 = vld [vmem:[%s0 + $0x68] sm:$0xf]
  %v45 = vld [vmem:[%s0 + $0x6c] sm:$0xf]
  %v46 = vld [vmem:[%s0 + $0x70] sm:$0xf]
  %v47 = vld [vmem:[%s0 + $0x74] sm:$0xf]
  %v48 = vld [vmem:[%s0 + $0x78] sm:$0xf]
  %v49 = vld [vmem:[%s0 + $0x7c] sm:$0xf]
  %v50 = vld [vmem:[%s0 + $0x80] sm:$0xf]
  %v51 = vld [vmem:[%s0 + $0x84] sm:$0xf]
  %v52 = vld [vmem:[%s0 + $0x88] sm:$0xf]
  %v53 = vld [vmem:[%s0 + $0x8c] sm:$0xf]
  %v54 = vld [vmem:[%s0 + $0x90] sm:$0xf]
  %v55 = vld [vmem:[%s0 + $0x94] sm:$0xf]
  %v56 = vld [vmem:[%s0 + $0x98] sm:$0xf]
  %v57 = vld [vmem:[%s0 + $0x9c] sm:$0xf]
  %v58 = vld [vmem:[%s0 + $0xa0] sm:$0xf]
  %v59 = vld [vmem:[%s0 + $0xa4] sm:$0xf]
  %v60 = vld [vmem:[%s0 + $0xa8] sm:$0xf]
  %v61 = vld [vmem:[%s0 + $0xac] sm:$0xf]
  %v62 = vld [vmem:[%s0 + $0xb0] sm:$0xf]
  %v63 = vld [vmem:[%s0 + $0xb4] sm:$0xf]
  %v64 = vld [vmem:[%s0 + $0xb8] sm:$0xf]
  %v65 = vld [vmem:[%s0 + $0xbc] sm:$0xf]
  %v66 = vld [vmem:[%s0 + $0xc0] sm:$0xf]
  %v67 = vld [vmem:[%s0 + $0xc4] sm:$0xf]
  %v68 = vld [vmem:[%s0 + $0xc8] sm:$0xf]
  %v69 = vld [vmem:[%s0 + $0xcc] sm:$0xf]
  %v70 = vld [vmem:[%s0 + $0xd0] sm:$0xf]
  %v71 = vld [vmem:[%s0 + $0xd4] sm:$0xf]
  %v72 = vld [vmem:[%s0 + $0xd8] sm:$0xf]
  %v73 = vld [vmem:[%s0 + $0xdc] sm:$0xf]
  %v74 = vld [vmem:[%s0 + $0xe0] sm:$0xf]
  %v75 = vld [vmem:[%s0 + $0xe4] sm:$0xf]
  %v76 = vld [vmem:[%s0 + $0xe8] sm:$0xf]
  %v77 = vld [vmem:[%s0 + $0xec] sm:$0xf]
  %v78 = vld [vmem:[%s0 + $0xf0] sm:$0xf]
  %v79 = vld [vmem:[%s0 + $0xf4] sm:$0xf]
  %v80 = vld [vmem:[%s0 + $0xf8] sm:$0xf]
  %v81 = vld [vmem:[%s0 + $0xfc] sm:$0xf]
  %v82 = vld [vmem:[%s0 + $0x100] sm:$0xf]
  %v83 = vld [vmem:[%s0 + $0x104] sm:$0xf]
  %v84 = vld [vmem:[%s0 + $0x108] sm:$0xf]
  %v85 = vld [vmem:[%s0 + $0x10c] sm:$0xf]
  %v86 = vld [vmem:[%s0 + $0x110] sm:$0xf]
  %v87 = vld [vmem:[%s0 + $0x114] sm:$0xf]
  %v88 = vld [vmem:[%s0 + $0x118] sm:$0xf]
  %v89 = vld [vmem:[%s0 + $0x11c] sm:$0xf]
  %v90 = vld [vmem:[%s0 + $0x120] sm:$0xf]
  %v91 = vld [vmem:[%s0 + $0x124] sm:$0xf]
  %v92 = vld [vmem:[%s0 + $0x128] sm:$0xf]
  %v93 = vld [vmem:[%s0 + $0x12c] sm:$0xf]
  %v94 = vld [vmem:[%s0 + $0x130] sm:$0xf]
  %v95 = vld [vmem:[%s0 + $0x134] sm:$0xf]
  %v96 = vld [vmem:[%s0 + $0x138] sm:$0xf]
  %v97 = vld [vmem:[%s0 + $0x13c] sm:$0xf]
  %v98 = vld [vmem:[%s0 + $0x140] sm:$0xf]
  %v99 = vld [vmem:[%s0 + $0x144] sm:$0xf]
  %v100 = vld [vmem:[%s0 + $0x148] sm:$0xf]
  %v101 = vld [vmem:[%s0 + $0x14c] sm:$0xf]
  %v102 = vld [vmem:[%s0 + $0x150] sm:$0xf]
  %v103 = vld [vmem:[%s0 + $0x154] sm:$0xf]
  %v104 = vld [vmem:[%s0 + $0x158] sm:$0xf]
  %v105 = vld [vmem:[%s0 + $0x15c] sm:$0xf]
  %v106 = vld [vmem:[%s0 + $0x160] sm:$0xf]
  %v107 = vld [vmem:[%s0 + $0x164] sm:$0xf]
  %v108 = vld [vmem:[%s0 + $0x168] sm:$0xf]
  %v109 = vld [vmem:[%s0 + $0x16c] sm:$0xf]
  %v110 = vld [vmem:[%s0 + $0x170] sm:$0xf]
  %v111 = vld [vmem:[%s0 + $0x174] sm:$0xf]
  %v112 = vld [vmem:[%s0 + $0x178] sm:$0xf]
  %v113 = vld [vmem:[%s0 + $0x17c] sm:$0xf]
  %v114 = vld [vmem:[%s0 + $0x180] sm:$0xf]
  %v115 = vld [vmem:[%s0 + $0x184] sm:$0xf]
  %v116 = vld [vmem:[%s0 + $0x188] sm:$0xf]
  %v117 = vld [vmem:[%s0 + $0x18c] sm:$0xf]
  %v118 = vld [vmem:[%s0 + $0x190] sm:$0xf]
  %v119 = vld [vmem:[%s0 + $0x194] sm:$0xf]
  %v120 = vld [vmem:[%s0 + $0x198] sm:$0xf]
  %v121 = vld [vmem:[%s0 + $0x19c] sm:$0xf]
  %v122 = vld [vmem:[%s0 + $0x1a0] sm:$0xf]
  %v123 = vld [vmem:[%s0 + $0x1a4] sm:$0xf]
  %v124 = vld [vmem:[%s0 + $0x1a8] sm:$0xf]
  %v125 = vld [vmem:[%s0 + $0x1ac] sm:$0xf]
  %v126 = vld [vmem:[%s0 + $0x1b0] sm:$0xf]
  %v127 = vld [vmem:[%s0 + $0x1b4] sm:$0xf]
  %v128 = vld [vmem:[%s0 + $0x1b8] sm:$0xf]
  %v129 = vld [vmem:[%s0 + $0x1bc] sm:$0xf]
  %v130 = vld [vmem:[%s0 + $0x1c0] sm:$0xf]
  %v131 = vld [vmem:[%s0 + $0x1c4] sm:$0xf]
  %v132 = vld [vmem:[%s0 + $0x1c8] sm:$0xf]
  %v133 = vld [vmem:[%s0 + $0x1cc] sm:$0xf]
  %v134 = vld [vmem:[%s0 + $0x1d0] sm:$0xf]
  %v135 = vld [vmem:[%s0 + $0x1d4] sm:$0xf]
  %v136 = vld [vmem:[%s0 + $0x1d8] sm:$0xf]
  %v137 = vld [vmem:[%s0 + $0x1dc] sm:$0xf]
  %v138 = vld [vmem:[%s0 + $0x1e0] sm:$0xf]
  %v139 = vld [vmem:[%s0 + $0x1e4] sm:$0xf]
  %v140 = vld [vmem:[%s0 + $0x1e8] sm:$0xf]
  %v141 = vld [vmem:[%s0 + $0x1ec] sm:$0xf]
  %v142 = vld [vmem:[%s0 + $0x1f0] sm:$0xf]
  %v143 = vld [vmem:[%s0 + $0x1f4] sm:$0xf]
  %v144 = vld [vmem:[%s0 + $0x1f8] sm:$0xf]
  %v145 = vld [vmem:[%s0 + $0x1fc] sm:$0xf]
  %v146 = vld [vmem:[%s1] sm:$0xf]
  %v147 = vld [vmem:[%s1 + $0x4] sm:$0xf]
  %v148 = vld [vmem:[%s1 + $0x8] sm:$0xf]
  %v149 = vld [vmem:[%s1 + $0xc] sm:$0xf]
  %v150 = vld [vmem:[%s1 + $0x10] sm:$0xf]
  %v151 = vld [vmem:[%s1 + $0x14] sm:$0xf]
  %v152 = vld [vmem:[%s1 + $0x18] sm:$0xf]
  %v153 = vld [vmem:[%s1 + $0x1c] sm:$0xf]
  %v154 = vld [vmem:[%s1 + $0x20] sm:$0xf]
  %v155 = vld [vmem:[%s1 + $0x24] sm:$0xf]
  %v156 = vld [vmem:[%s1 + $0x28] sm:$0xf]
  %v157 = vld [vmem:[%s1 + $0x2c] sm:$0xf]
  %v158 = vld [vmem:[%s1 + $0x30] sm:$0xf]
  %v159 = vld [vmem:[%s1 + $0x34] sm:$0xf]
  %v160 = vld [vmem:[%s1 + $0x38] sm:$0xf]
  %v161 = vld [vmem:[%s1 + $0x3c] sm:$0xf]
  %v162 = vld [vmem:[%s1 + $0x40] sm:$0xf]
  %v163 = vld [vmem:[%s1 + $0x44] sm:$0xf]
  %v164 = vld [vmem:[%s1 + $0x48] sm:$0xf]
  %v165 = vld [vmem:[%s1 + $0x4c] sm:$0xf]
  %v166 = vld [vmem:[%s1 + $0x50] sm:$0xf]
  %v167 = vld [vmem:[%s1 + $0x54] sm:$0xf]
  %v168 = vld [vmem:[%s1 + $0x58] sm:$0xf]
  %v169 = vld [vmem:[%s1 + $0x5c] sm:$0xf]
  %v170 = vld [vmem:[%s1 + $0x60] sm:$0xf]
  %v171 = vld [vmem:[%s1 + $0x64] sm:$0xf]
  %v172 = vld [vmem:[%s1 + $0x68] sm:$0xf]
  %v173 = vld [vmem:[%s1 + $0x6c] sm:$0xf]
  %v174 = vld [vmem:[%s1 + $0x70] sm:$0xf]
  %v175 = vld [vmem:[%s1 + $0x74] sm:$0xf]
  %v176 = vld [vmem:[%s1 + $0x78] sm:$0xf]
  %v177 = vld [vmem:[%s1 + $0x7c] sm:$0xf]
  %v186 = vunpack.c.l.b16 %v18
  %v187 = vunpack.c.l.b16 %v19
  %v188 = vunpack.c.l.b16 %v20
  %v189 = vunpack.c.l.b16 %v21
  %v190 = vunpack.c.l.b16 %v22
  %v191 = vunpack.c.l.b16 %v23
  %v192 = vunpack.c.l.b16 %v24
  %v193 = vunpack.c.l.b16 %v25
  %v194 = vpack.c.b16 %v187, %v186
  %v195 = vpack.c.b16 %v189, %v188
  %v196 = vpack.c.b16 %v191, %v190
  %v197 = vpack.c.b16 %v193, %v192
  %v200 = vunpack.c.l.b16 %v146
  %v201 = vunpack.c.l.b16 %v147
  %v202 = vpack.c.b16 %v201, %v200
  %vm204 = vcmask 130048
  %v206 = vsel %vm204, %v194, 0
  %v209 = vsel %vm204, %v195, 0
  %v212 = vsel %vm204, %v196, 0
  %v215 = vsel %vm204, %v197, 0
  %217 = vmatprep.subr.bf16.mxu0 0
  %218 = vmatpush1.bf16.msra.mxu0 %v202
  %219 = vmatprep.subr.bf16.mxu0 0
  %220 = vmatpush1.bf16.msra.mxu0 0
  %221 = vmatprep.subr.bf16.mxu0 0
  %222 = vmatpush1.bf16.msra.mxu0 0
  %223 = vmatprep.subr.bf16.mxu0 0
  %224 = vmatpush1.bf16.msra.mxu0 0
  %225 = vmatprep.subr.bf16.mxu0 0
  %226 = vmatpush1.bf16.msra.mxu0 0
  %227 = vmatprep.subr.bf16.mxu0 0
  %228 = vmatpush1.bf16.msra.mxu0 0
  %229 = vmatprep.subr.bf16.mxu0 0
  %230 = vmatpush1.bf16.msra.mxu0 0
  %231 = vmatprep.subr.bf16.mxu0 0
  %232 = vmatpush1.bf16.msra.mxu0 0
  %233 = vmatprep.subr.bf16.mxu0 0
  %234 = vmatpush1.bf16.msra.mxu0 0
  %235 = vmatprep.subr.bf16.mxu0 0
  %236 = vmatpush1.bf16.msra.mxu0 0
  %237 = vmatprep.subr.bf16.mxu0 0
  %238 = vmatpush1.bf16.msra.mxu0 0
  %239 = vmatprep.subr.bf16.mxu0 0
  %240 = vmatpush1.bf16.msra.mxu0 0
  %241 = vmatprep.subr.bf16.mxu0 0
  %242 = vmatpush1.bf16.msra.mxu0 0
  %243 = vmatprep.subr.bf16.mxu0 0
  %244 = vmatpush1.bf16.msra.mxu0 0
  %245 = vmatprep.subr.bf16.mxu0 0
  %246 = vmatpush1.bf16.msra.mxu0 0
  %247 = vmatprep.subr.bf16.mxu0 0
  %248 = vmatpush1.bf16.msra.mxu0 0
  %249 = vmatprep.mubr.bf16.mxu0 0
  %250 = vmatmul.mubr.bf16.gmra.mrb[0].mxu0 %v206
  %v251 = vpop.f32.mrb[0].mxu0
  %v252 = vadd.f32 0.0, %v251
  %v253 = vpop.f32.mrb[0].mxu0
  %v254 = vpop.f32.mrb[0].mxu0
  %v255 = vadd.f32 0.0, %v254
  %v256 = vpop.f32.mrb[0].mxu0
  %257 = vmatprep.mubr.bf16.mxu0 0
  %258 = vmatmul.mubr.bf16.gmra.mrb[0].mxu0 %v209
  %v259 = vpop.f32.mrb[0].mxu0
  %v260 = vadd.f32 0.0, %v259
  %v261 = vpop.f32.mrb[0].mxu0
  %v262 = vpop.f32.mrb[0].mxu0
  %v263 = vadd.f32 0.0, %v262
  %v264 = vpop.f32.mrb[0].mxu0
  %265 = vmatprep.mubr.bf16.mxu0 0
  %266 = vmatmul.mubr.bf16.gmra.mrb[0].mxu0 %v212
  %v267 = vpop.f32.mrb[0].mxu0
  %v268 = vadd.f32 0.0, %v267
  %v269 = vpop.f32.mrb[0].mxu0
  %v270 = vpop.f32.mrb[0].mxu0
  %v271 = vadd.f32 0.0, %v270
  %v272 = vpop.f32.mrb[0].mxu0
  %273 = vmatprep.mubr.bf16.mxu0 0
  %274 = vmatmul.mubr.bf16.gmra.mrb[0].mxu0 %v215
  %v275 = vpop.f32.mrb[0].mxu0
  %v276 = vadd.f32 0.0, %v275
  %v277 = vpop.f32.mrb[0].mxu0
  %v278 = vpop.f32.mrb[0].mxu0
  %v279 = vadd.f32 0.0, %v278
  %v280 = vpop.f32.mrb[0].mxu0
  %281 = vdwg.mxu0
  %v290 = vunpack.c.l.b16 %v26
  %v291 = vunpack.c.l.b16 %v27
  %v292 = vunpack.c.l.b16 %v28
  %v293 = vunpack.c.l.b16 %v29
  %v294 = vunpack.c.l.b16 %v30
  %v295 = vunpack.c.l.b16 %v31
  %v296 = vunpack.c.l.b16 %v32
  %v297 = vunpack.c.l.b16 %v33
  %v298 = vpack.c.b16 %v291, %v290
  %v299 = vpack.c.b16 %v293, %v292
  %v300 = vpack.c.b16 %v295, %v294
  %v301 = vpack.c.b16 %v297, %v296
  %v304 = vunpack.c.l.b16 %v148
  %v305 = vunpack.c.l.b16 %v149
  %v306 = vpack.c.b16 %v305, %v304
  %v309 = vsel %vm204, %v298, 0
  %v312 = vsel %vm204, %v299, 0
  %v315 = vsel %vm204, %v300, 0
  %v318 = vsel %vm204, %v301, 0
  %320 = vmatprep.subr.bf16.mxu0 0
  %321 = vmatpush1.bf16.msra.mxu0 %v306
  %322 = vmatprep.subr.bf16.mxu0 0
  %323 = vmatpush1.bf16.msra.mxu0 0
  %324 = vmatprep.subr.bf16.mxu0 0
  %325 = vmatpush1.bf16.msra.mxu0 0
  %326 = vmatprep.subr.bf16.mxu0 0
  %327 = vmatpush1.bf16.msra.mxu0 0
  %328 = vmatprep.subr.bf16.mxu0 0
  %329 = vmatpush1.bf16.msra.mxu0 0
  %330 = vmatprep.subr.bf16.mxu0 0
  %331 = vmatpush1.bf16.msra.mxu0 0
  %332 = vmatprep.subr.bf16.mxu0 0
  %333 = vmatpush1.bf16.msra.mxu0 0
  %334 = vmatprep.subr.bf16.mxu0 0
  %335 = vmatpush1.bf16.msra.mxu0 0
  %336 = vmatprep.subr.bf16.mxu0 0
  %337 = vmatpush1.bf16.msra.mxu0 0
  %338 = vmatprep.subr.bf16.mxu0 0
  %339 = vmatpush1.bf16.msra.mxu0 0
  %340 = vmatprep.subr.bf16.mxu0 0
  %341 = vmatpush1.bf16.msra.mxu0 0
  %342 = vmatprep.subr.bf16.mxu0 0
  %343 = vmatpush1.bf16.msra.mxu0 0
  %344 = vmatprep.subr.bf16.mxu0 0
  %345 = vmatpush1.bf16.msra.mxu0 0
  %346 = vmatprep.subr.bf16.mxu0 0
  %347 = vmatpush1.bf16.msra.mxu0 0
  %348 = vmatprep.subr.bf16.mxu0 0
  %349 = vmatpush1.bf16.msra.mxu0 0
  %350 = vmatprep.subr.bf16.mxu0 0
  %351 = vmatpush1.bf16.msra.mxu0 0
  %352 = vmatprep.mubr.bf16.mxu0 0
  %353 = vmatmul.mubr.bf16.gmra.mrb[0].mxu0 %v309
  %v354 = vpop.f32.mrb[0].mxu0
  %v355 = vadd.f32 0.0, %v354
  %v356 = vpop.f32.mrb[0].mxu0
  %v357 = vpop.f32.mrb[0].mxu0
  %v358 = vadd.f32 0.0, %v357
  %v359 = vpop.f32.mrb[0].mxu0
  %360 = vmatprep.mubr.bf16.mxu0 0
  %361 = vmatmul.mubr.bf16.gmra.mrb[0].mxu0 %v312
  %v362 = vpop.f32.mrb[0].mxu0
  %v363 = vadd.f32 0.0, %v362
  %v364 = vpop.f32.mrb[0].mxu0
  %v365 = vpop.f32.mrb[0].mxu0
  %v366 = vadd.f32 0.0, %v365
  %v367 = vpop.f32.mrb[0].mxu0
  %368 = vmatprep.mubr.bf16.mxu0 0
  %369 = vmatmul.mubr.bf16.gmra.mrb[0].mxu0 %v315
  %v370 = vpop.f32.mrb[0].mxu0
  %v371 = vadd.f32 0.0, %v370
  %v372 = vpop.f32.mrb[0].mxu0
  %v373 = vpop.f32.mrb[0].mxu0
  %v374 = vadd.f32 0.0, %v373
  %v375 = vpop.f32.mrb[0].mxu0
  %376 = vmatprep.mubr.bf16.mxu0 0
  %377 = vmatmul.mubr.bf16.gmra.mrb[0].mxu0 %v318
  %v378 = vpop.f32.mrb[0].mxu0
  %v379 = vadd.f32 0.0, %v378
  %v380 = vpop.f32.mrb[0].mxu0
  %v381 = vpop.f32.mrb[0].mxu0
  %v382 = vadd.f32 0.0, %v381
  %v383 = vpop.f32.mrb[0].mxu0
  %384 = vdwg.mxu0
  %v393 = vunpack.c.l.b16 %v34
  %v394 = vunpack.c.l.b16 %v35
  %v395 = vunpack.c.l.b16 %v36
  %v396 = vunpack.c.l.b16 %v37
  %v397 = vunpack.c.l.b16 %v38
  %v398 = vunpack.c.l.b16 %v39
  %v399 = vunpack.c.l.b16 %v40
  %v400 = vunpack.c.l.b16 %v41
  %v401 = vpack.c.b16 %v394, %v393
  %v402 = vpack.c.b16 %v396, %v395
  %v403 = vpack.c.b16 %v398, %v397
  %v404 = vpack.c.b16 %v400, %v399
  %v407 = vunpack.c.l.b16 %v150
  %v408 = vunpack.c.l.b16 %v151
  %v409 = vpack.c.b16 %v408, %v407
  %v412 = vsel %vm204, %v401, 0
  %v415 = vsel %vm204, %v402, 0
  %v418 = vsel %vm204, %v403, 0
  %v421 = vsel %vm204, %v404, 0
  %423 = vmatprep.subr.bf16.mxu0 0
  %424 = vmatpush1.bf16.msra.mxu0 %v409
  %425 = vmatprep.subr.bf16.mxu0 0
  %426 = vmatpush1.bf16.msra.mxu0 0
  %427 = vmatprep.subr.bf16.mxu0 0
  %428 = vmatpush1.bf16.msra.mxu0 0
  %429 = vmatprep.subr.bf16.mxu0 0
  %430 = vmatpush1.bf16.msra.mxu0 0
  %431 = vmatprep.subr.bf16.mxu0 0
  %432 = vmatpush1.bf16.msra.mxu0 0
  %433 = vmatprep.subr.bf16.mxu0 0
  %434 = vmatpush1.bf16.msra.mxu0 0
  %435 = vmatprep.subr.bf16.mxu0 0
  %436 = vmatpush1.bf16.msra.mxu0 0
  %437 = vmatprep.subr.bf16.mxu0 0
  %438 = vmatpush1.bf16.msra.mxu0 0
  %439 = vmatprep.subr.bf16.mxu0 0
  %440 = vmatpush1.bf16.msra.mxu0 0
  %441 = vmatprep.subr.bf16.mxu0 0
  %442 = vmatpush1.bf16.msra.mxu0 0
  %443 = vmatprep.subr.bf16.mxu0 0
  %444 = vmatpush1.bf16.msra.mxu0 0
  %445 = vmatprep.subr.bf16.mxu0 0
  %446 = vmatpush1.bf16.msra.mxu0 0
  %447 = vmatprep.subr.bf16.mxu0 0
  %448 = vmatpush1.bf16.msra.mxu0 0
  %449 = vmatprep.subr.bf16.mxu0 0
  %450 = vmatpush1.bf16.msra.mxu0 0
  %451 = vmatprep.subr.bf16.mxu0 0
  %452 = vmatpush1.bf16.msra.mxu0 0
  %453 = vmatprep.subr.bf16.mxu0 0
  %454 = vmatpush1.bf16.msra.mxu0 0
  %455 = vmatprep.mubr.bf16.mxu0 0
  %456 = vmatmul.mubr.bf16.gmra.mrb[0].mxu0 %v412
  %v457 = vpop.f32.mrb[0].mxu0
  %v458 = vadd.f32 0.0, %v457
  %v459 = vpop.f32.mrb[0].mxu0
  %v460 = vpop.f32.mrb[0].mxu0
  %v461 = vadd.f32 0.0, %v460
  %v462 = vpop.f32.mrb[0].mxu0
  %463 = vmatprep.mubr.bf16.mxu0 0
  %464 = vmatmul.mubr.bf16.gmra.mrb[0].mxu0 %v415
  %v465 = vpop.f32.mrb[0].mxu0
  %v466 = vadd.f32 0.0, %v465
  %v467 = vpop.f32.mrb[0].mxu0
  %v468 = vpop.f32.mrb[0].mxu0
  %v469 = vadd.f32 0.0, %v468
  %v470 = vpop.f32.mrb[0].mxu0
  %471 = vmatprep.mubr.bf16.mxu0 0
  %472 = vmatmul.mubr.bf16.gmra.mrb[0].mxu0 %v418
  %v473 = vpop.f32.mrb[0].mxu0
  %v474 = vadd.f32 0.0, %v473
  %v475 = vpop.f32.mrb[0].mxu0
  %v476 = vpop.f32.mrb[0].mxu0
  %v477 = vadd.f32 0.0, %v476
  %v478 = vpop.f32.mrb[0].mxu0
  %479 = vmatprep.mubr.bf16.mxu0 0
  %480 = vmatmul.mubr.bf16.gmra.mrb[0].mxu0 %v421
  %v481 = vpop.f32.mrb[0].mxu0
  %v482 = vadd.f32 0.0, %v481
  %v483 = vpop.f32.mrb[0].mxu0
  %v484 = vpop.f32.mrb[0].mxu0
  %v485 = vadd.f32 0.0, %v484
  %v486 = vpop.f32.mrb[0].mxu0
  %487 = vdwg.mxu0
  %v496 = vunpack.c.l.b16 %v42
  %v497 = vunpack.c.l.b16 %v43
  %v498 = vunpack.c.l.b16 %v44
  %v499 = vunpack.c.l.b16 %v45
  %v500 = vunpack.c.l.b16 %v46
  %v501 = vunpack.c.l.b16 %v47
  %v502 = vunpack.c.l.b16 %v48
  %v503 = vunpack.c.l.b16 %v49
  %v504 = vpack.c.b16 %v497, %v496
  %v505 = vpack.c.b16 %v499, %v498
  %v506 = vpack.c.b16 %v501, %v500
  %v507 = vpack.c.b16 %v503, %v502
  %v510 = vunpack.c.l.b16 %v152
  %v511 = vunpack.c.l.b16 %v153
  %v512 = vpack.c.b16 %v511, %v510
  %v515 = vsel %vm204, %v504, 0
  %v518 = vsel %vm204, %v505, 0
  %v521 = vsel %vm204, %v506, 0
  %v524 = vsel %vm204, %v507, 0
  %526 = vmatprep.subr.bf16.mxu0 0
  %527 = vmatpush1.bf16.msra.mxu0 %v512
  %528 = vmatprep.subr.bf16.mxu0 0
  %529 = vmatpush1.bf16.msra.mxu0 0
  %530 = vmatprep.subr.bf16.mxu0 0
  %531 = vmatpush1.bf16.msra.mxu0 0
  %532 = vmatprep.subr.bf16.mxu0 0
  %533 = vmatpush1.bf16.msra.mxu0 0
  %534 = vmatprep.subr.bf16.mxu0 0
  %535 = vmatpush1.bf16.msra.mxu0 0
  %536 = vmatprep.subr.bf16.mxu0 0
  %537 = vmatpush1.bf16.msra.mxu0 0
  %538 = vmatprep.subr.bf16.mxu0 0
  %539 = vmatpush1.bf16.msra.mxu0 0
  %540 = vmatprep.subr.bf16.mxu0 0
  %541 = vmatpush1.bf16.msra.mxu0 0
  %542 = vmatprep.subr.bf16.mxu0 0
  %543 = vmatpush1.bf16.msra.mxu0 0
  %544 = vmatprep.subr.bf16.mxu0 0
  %545 = vmatpush1.bf16.msra.mxu0 0
  %546 = vmatprep.subr.bf16.mxu0 0
  %547 = vmatpush1.bf16.msra.mxu0 0
  %548 = vmatprep.subr.bf16.mxu0 0
  %549 = vmatpush1.bf16.msra.mxu0 0
  %550 = vmatprep.subr.bf16.mxu0 0
  %551 = vmatpush1.bf16.msra.mxu0 0
  %552 = vmatprep.subr.bf16.mxu0 0
  %553 = vmatpush1.bf16.msra.mxu0 0
  %554 = vmatprep.subr.bf16.mxu0 0
  %555 = vmatpush1.bf16.msra.mxu0 0
  %556 = vmatprep.subr.bf16.mxu0 0
  %557 = vmatpush1.bf16.msra.mxu0 0
  %558 = vmatprep.mubr.bf16.mxu0 0
  %559 = vmatmul.mubr.bf16.gmra.mrb[0].mxu0 %v515
  %v560 = vpop.f32.mrb[0].mxu0
  %v561 = vadd.f32 0.0, %v560
  %v562 = vpop.f32.mrb[0].mxu0
  %v563 = vpop.f32.mrb[0].mxu0
  %v564 = vadd.f32 0.0, %v563
  %v565 = vpop.f32.mrb[0].mxu0
  %566 = vmatprep.mubr.bf16.mxu0 0
  %567 = vmatmul.mubr.bf16.gmra.mrb[0].mxu0 %v518
  %v568 = vpop.f32.mrb[0].mxu0
  %v569 = vadd.f32 0.0, %v568
  %v570 = vpop.f32.mrb[0].mxu0
  %v571 = vpop.f32.mrb[0].mxu0
  %v572 = vadd.f32 0.0, %v571
  %v573 = vpop.f32.mrb[0].mxu0
  %574 = vmatprep.mubr.bf16.mxu0 0
  %575 = vmatmul.mubr.bf16.gmra.mrb[0].mxu0 %v521
  %v576 = vpop.f32.mrb[0].mxu0
  %v577 = vadd.f32 0.0, %v576
  %v578 = vpop.f32.mrb[0].mxu0
  %v579 = vpop.f32.mrb[0].mxu0
  %v580 = vadd.f32 0.0, %v579
  %v581 = vpop.f32.mrb[0].mxu0
  %582 = vmatprep.mubr.bf16.mxu0 0
  %583 = vmatmul.mubr.bf16.gmra.mrb[0].mxu0 %v524
  %v584 = vpop.f32.mrb[0].mxu0
  %v585 = vadd.f32 0.0, %v584
  %v586 = vpop.f32.mrb[0].mxu0
  %v587 = vpop.f32.mrb[0].mxu0
  %v588 = vadd.f32 0.0, %v587
  %v589 = vpop.f32.mrb[0].mxu0
  %590 = vdwg.mxu0
  %v599 = vunpack.c.l.b16 %v50
  %v600 = vunpack.c.l.b16 %v51
  %v601 = vunpack.c.l.b16 %v52
  %v602 = vunpack.c.l.b16 %v53
  %v603 = vunpack.c.l.b16 %v54
  %v604 = vunpack.c.l.b16 %v55
  %v605 = vunpack.c.l.b16 %v56
  %v606 = vunpack.c.l.b16 %v57
  %v607 = vpack.c.b16 %v600, %v599
  %v608 = vpack.c.b16 %v602, %v601
  %v609 = vpack.c.b16 %v604, %v603
  %v610 = vpack.c.b16 %v606, %v605
  %v613 = vunpack.c.l.b16 %v154
  %v614 = vunpack.c.l.b16 %v155
  %v615 = vpack.c.b16 %v614, %v613
  %v618 = vsel %vm204, %v607, 0
  %v621 = vsel %vm204, %v608, 0
  %v624 = vsel %vm204, %v609, 0
  %v627 = vsel %vm204, %v610, 0
  %629 = vmatprep.subr.bf16.mxu0 0
  %630 = vmatpush1.bf16.msra.mxu0 %v615
  %631 = vmatprep.subr.bf16.mxu0 0
  %632 = vmatpush1.bf16.msra.mxu0 0
  %633 = vmatprep.subr.bf16.mxu0 0
  %634 = vmatpush1.bf16.msra.mxu0 0
  %635 = vmatprep.subr.bf16.mxu0 0
  %636 = vmatpush1.bf16.msra.mxu0 0
  %637 = vmatprep.subr.bf16.mxu0 0
  %638 = vmatpush1.bf16.msra.mxu0 0
  %639 = vmatprep.subr.bf16.mxu0 0
  %640 = vmatpush1.bf16.msra.mxu0 0
  %641 = vmatprep.subr.bf16.mxu0 0
  %642 = vmatpush1.bf16.msra.mxu0 0
  %643 = vmatprep.subr.bf16.mxu0 0
  %644 = vmatpush1.bf16.msra.mxu0 0
  %645 = vmatprep.subr.bf16.mxu0 0
  %646 = vmatpush1.bf16.msra.mxu0 0
  %647 = vmatprep.subr.bf16.mxu0 0
  %648 = vmatpush1.bf16.msra.mxu0 0
  %649 = vmatprep.subr.bf16.mxu0 0
  %650 = vmatpush1.bf16.msra.mxu0 0
  %651 = vmatprep.subr.bf16.mxu0 0
  %652 = vmatpush1.bf16.msra.mxu0 0
  %653 = vmatprep.subr.bf16.mxu0 0
  %654 = vmatpush1.bf16.msra.mxu0 0
  %655 = vmatprep.subr.bf16.mxu0 0
  %656 = vmatpush1.bf16.msra.mxu0 0
  %657 = vmatprep.subr.bf16.mxu0 0
  %658 = vmatpush1.bf16.msra.mxu0 0
  %659 = vmatprep.subr.bf16.mxu0 0
  %660 = vmatpush1.bf16.msra.mxu0 0
  %661 = vmatprep.mubr.bf16.mxu0 0
  %662 = vmatmul.mubr.bf16.gmra.mrb[0].mxu0 %v618
  %v663 = vpop.f32.mrb[0].mxu0
  %v664 = vadd.f32 0.0, %v663
  %v665 = vpop.f32.mrb[0].mxu0
  %v666 = vpop.f32.mrb[0].mxu0
  %v667 = vadd.f32 0.0, %v666
  %v668 = vpop.f32.mrb[0].mxu0
  %669 = vmatprep.mubr.bf16.mxu0 0
  %670 = vmatmul.mubr.bf16.gmra.mrb[0].mxu0 %v621
  %v671 = vpop.f32.mrb[0].mxu0
  %v672 = vadd.f32 0.0, %v671
  %v673 = vpop.f32.mrb[0].mxu0
  %v674 = vpop.f32.mrb[0].mxu0
  %v675 = vadd.f32 0.0, %v674
  %v676 = vpop.f32.mrb[0].mxu0
  %677 = vmatprep.mubr.bf16.mxu0 0
  %678 = vmatmul.mubr.bf16.gmra.mrb[0].mxu0 %v624
  %v679 = vpop.f32.mrb[0].mxu0
  %v680 = vadd.f32 0.0, %v679
  %v681 = vpop.f32.mrb[0].mxu0
  %v682 = vpop.f32.mrb[0].mxu0
  %v683 = vadd.f32 0.0, %v682
  %v684 = vpop.f32.mrb[0].mxu0
  %685 = vmatprep.mubr.bf16.mxu0 0
  %686 = vmatmul.mubr.bf16.gmra.mrb[0].mxu0 %v627
  %v687 = vpop.f32.mrb[0].mxu0
  %v688 = vadd.f32 0.0, %v687
  %v689 = vpop.f32.mrb[0].mxu0
  %v690 = vpop.f32.mrb[0].mxu0
  %v691 = vadd.f32 0.0, %v690
  %v692 = vpop.f32.mrb[0].mxu0
  %693 = vdwg.mxu0
  %v702 = vunpack.c.l.b16 %v58
  %v703 = vunpack.c.l.b16 %v59
  %v704 = vunpack.c.l.b16 %v60
  %v705 = vunpack.c.l.b16 %v61
  %v706 = vunpack.c.l.b16 %v62
  %v707 = vunpack.c.l.b16 %v63
  %v708 = vunpack.c.l.b16 %v64
  %v709 = vunpack.c.l.b16 %v65
  %v710 = vpack.c.b16 %v703, %v702
  %v711 = vpack.c.b16 %v705, %v704
  %v712 = vpack.c.b16 %v707, %v706
  %v713 = vpack.c.b16 %v709, %v708
  %v716 = vunpack.c.l.b16 %v156
  %v717 = vunpack.c.l.b16 %v157
  %v718 = vpack.c.b16 %v717, %v716
  %v721 = vsel %vm204, %v710, 0
  %v724 = vsel %vm204, %v711, 0
  %v727 = vsel %vm204, %v712, 0
  %v730 = vsel %vm204, %v713, 0
  %732 = vmatprep.subr.bf16.mxu0 0
  %733 = vmatpush1.bf16.msra.mxu0 %v718
  %734 = vmatprep.subr.bf16.mxu0 0
  %735 = vmatpush1.bf16.msra.mxu0 0
  %736 = vmatprep.subr.bf16.mxu0 0
  %737 = vmatpush1.bf16.msra.mxu0 0
  %738 = vmatprep.subr.bf16.mxu0 0
  %739 = vmatpush1.bf16.msra.mxu0 0
  %740 = vmatprep.subr.bf16.mxu0 0
  %741 = vmatpush1.bf16.msra.mxu0 0
  %742 = vmatprep.subr.bf16.mxu0 0
  %743 = vmatpush1.bf16.msra.mxu0 0
  %744 = vmatprep.subr.bf16.mxu0 0
  %745 = vmatpush1.bf16.msra.mxu0 0
  %746 = vmatprep.subr.bf16.mxu0 0
  %747 = vmatpush1.bf16.msra.mxu0 0
  %748 = vmatprep.subr.bf16.mxu0 0
  %749 = vmatpush1.bf16.msra.mxu0 0
  %750 = vmatprep.subr.bf16.mxu0 0
  %751 = vmatpush1.bf16.msra.mxu0 0
  %752 = vmatprep.subr.bf16.mxu0 0
  %753 = vmatpush1.bf16.msra.mxu0 0
  %754 = vmatprep.subr.bf16.mxu0 0
  %755 = vmatpush1.bf16.msra.mxu0 0
  %756 = vmatprep.subr.bf16.mxu0 0
  %757 = vmatpush1.bf16.msra.mxu0 0
  %758 = vmatprep.subr.bf16.mxu0 0
  %759 = vmatpush1.bf16.msra.mxu0 0
  %760 = vmatprep.subr.bf16.mxu0 0
  %761 = vmatpush1.bf16.msra.mxu0 0
  %762 = vmatprep.subr.bf16.mxu0 0
  %763 = vmatpush1.bf16.msra.mxu0 0
  %764 = vmatprep.mubr.bf16.mxu0 0
  %765 = vmatmul.mubr.bf16.gmra.mrb[0].mxu0 %v721
  %v766 = vpop.f32.mrb[0].mxu0
  %v767 = vadd.f32 0.0, %v766
  %v768 = vpop.f32.mrb[0].mxu0
  %v769 = vpop.f32.mrb[0].mxu0
  %v770 = vadd.f32 0.0, %v769
  %v771 = vpop.f32.mrb[0].mxu0
  %772 = vmatprep.mubr.bf16.mxu0 0
  %773 = vmatmul.mubr.bf16.gmra.mrb[0].mxu0 %v724
  %v774 = vpop.f32.mrb[0].mxu0
  %v775 = vadd.f32 0.0, %v774
  %v776 = vpop.f32.mrb[0].mxu0
  %v777 = vpop.f32.mrb[0].mxu0
  %v778 = vadd.f32 0.0, %v777
  %v779 = vpop.f32.mrb[0].mxu0
  %780 = vmatprep.mubr.bf16.mxu0 0
  %781 = vmatmul.mubr.bf16.gmra.mrb[0].mxu0 %v727
  %v782 = vpop.f32.mrb[0].mxu0
  %v783 = vadd.f32 0.0, %v782
  %v784 = vpop.f32.mrb[0].mxu0
  %v785 = vpop.f32.mrb[0].mxu0
  %v786 = vadd.f32 0.0, %v785
  %v787 = vpop.f32.mrb[0].mxu0
  %788 = vmatprep.mubr.bf16.mxu0 0
  %789 = vmatmul.mubr.bf16.gmra.mrb[0].mxu0 %v730
  %v790 = vpop.f32.mrb[0].mxu0
  %v791 = vadd.f32 0.0, %v790
  %v792 = vpop.f32.mrb[0].mxu0
  %v793 = vpop.f32.mrb[0].mxu0
  %v794 = vadd.f32 0.0, %v793
  %v795 = vpop.f32.mrb[0].mxu0
  %796 = vdwg.mxu0
  %v805 = vunpack.c.l.b16 %v66
  %v806 = vunpack.c.l.b16 %v67
  %v807 = vunpack.c.l.b16 %v68
  %v808 = vunpack.c.l.b16 %v69
  %v809 = vunpack.c.l.b16 %v70
  %v810 = vunpack.c.l.b16 %v71
  %v811 = vunpack.c.l.b16 %v72
  %v812 = vunpack.c.l.b16 %v73
  %v813 = vpack.c.b16 %v806, %v805
  %v814 = vpack.c.b16 %v808, %v807
  %v815 = vpack.c.b16 %v810, %v809
  %v816 = vpack.c.b16 %v812, %v811
  %v819 = vunpack.c.l.b16 %v158
  %v820 = vunpack.c.l.b16 %v159
  %v821 = vpack.c.b16 %v820, %v819
  %v824 = vsel %vm204, %v813, 0
  %v827 = vsel %vm204, %v814, 0
  %v830 = vsel %vm204, %v815, 0
  %v833 = vsel %vm204, %v816, 0
  %835 = vmatprep.subr.bf16.mxu0 0
  %836 = vmatpush1.bf16.msra.mxu0 %v821
  %837 = vmatprep.subr.bf16.mxu0 0
  %838 = vmatpush1.bf16.msra.mxu0 0
  %839 = vmatprep.subr.bf16.mxu0 0
  %840 = vmatpush1.bf16.msra.mxu0 0
  %841 = vmatprep.subr.bf16.mxu0 0
  %842 = vmatpush1.bf16.msra.mxu0 0
  %843 = vmatprep.subr.bf16.mxu0 0
  %844 = vmatpush1.bf16.msra.mxu0 0
  %845 = vmatprep.subr.bf16.mxu0 0
  %846 = vmatpush1.bf16.msra.mxu0 0
  %847 = vmatprep.subr.bf16.mxu0 0
  %848 = vmatpush1.bf16.msra.mxu0 0
  %849 = vmatprep.subr.bf16.mxu0 0
  %850 = vmatpush1.bf16.msra.mxu0 0
  %851 = vmatprep.subr.bf16.mxu0 0
  %852 = vmatpush1.bf16.msra.mxu0 0
  %853 = vmatprep.subr.bf16.mxu0 0
  %854 = vmatpush1.bf16.msra.mxu0 0
  %855 = vmatprep.subr.bf16.mxu0 0
  %856 = vmatpush1.bf16.msra.mxu0 0
  %857 = vmatprep.subr.bf16.mxu0 0
  %858 = vmatpush1.bf16.msra.mxu0 0
  %859 = vmatprep.subr.bf16.mxu0 0
  %860 = vmatpush1.bf16.msra.mxu0 0
  %861 = vmatprep.subr.bf16.mxu0 0
  %862 = vmatpush1.bf16.msra.mxu0 0
  %863 = vmatprep.subr.bf16.mxu0 0
  %864 = vmatpush1.bf16.msra.mxu0 0
  %865 = vmatprep.subr.bf16.mxu0 0
  %866 = vmatpush1.bf16.msra.mxu0 0
  %867 = vmatprep.mubr.bf16.mxu0 0
  %868 = vmatmul.mubr.bf16.gmra.mrb[0].mxu0 %v824
  %v869 = vpop.f32.mrb[0].mxu0
  %v870 = vadd.f32 0.0, %v869
  %v871 = vpop.f32.mrb[0].mxu0
  %v872 = vpop.f32.mrb[0].mxu0
  %v873 = vadd.f32 0.0, %v872
  %v874 = vpop.f32.mrb[0].mxu0
  %875 = vmatprep.mubr.bf16.mxu0 0
  %876 = vmatmul.mubr.bf16.gmra.mrb[0].mxu0 %v827
  %v877 = vpop.f32.mrb[0].mxu0
  %v878 = vadd.f32 0.0, %v877
  %v879 = vpop.f32.mrb[0].mxu0
  %v880 = vpop.f32.mrb[0].mxu0
  %v881 = vadd.f32 0.0, %v880
  %v882 = vpop.f32.mrb[0].mxu0
  %883 = vmatprep.mubr.bf16.mxu0 0
  %884 = vmatmul.mubr.bf16.gmra.mrb[0].mxu0 %v830
  %v885 = vpop.f32.mrb[0].mxu0
  %v886 = vadd.f32 0.0, %v885
  %v887 = vpop.f32.mrb[0].mxu0
  %v888 = vpop.f32.mrb[0].mxu0
  %v889 = vadd.f32 0.0, %v888
  %v890 = vpop.f32.mrb[0].mxu0
  %891 = vmatprep.mubr.bf16.mxu0 0
  %892 = vmatmul.mubr.bf16.gmra.mrb[0].mxu0 %v833
  %v893 = vpop.f32.mrb[0].mxu0
  %v894 = vadd.f32 0.0, %v893
  %v895 = vpop.f32.mrb[0].mxu0
  %v896 = vpop.f32.mrb[0].mxu0
  %v897 = vadd.f32 0.0, %v896
  %v898 = vpop.f32.mrb[0].mxu0
  %899 = vdwg.mxu0
  %v908 = vunpack.c.l.b16 %v74
  %v909 = vunpack.c.l.b16 %v75
  %v910 = vunpack.c.l.b16 %v76
  %v911 = vunpack.c.l.b16 %v77
  %v912 = vunpack.c.l.b16 %v78
  %v913 = vunpack.c.l.b16 %v79
  %v914 = vunpack.c.l.b16 %v80
  %v915 = vunpack.c.l.b16 %v81
  %v916 = vpack.c.b16 %v909, %v908
  %v917 = vpack.c.b16 %v911, %v910
  %v918 = vpack.c.b16 %v913, %v912
  %v919 = vpack.c.b16 %v915, %v914
  %v922 = vunpack.c.l.b16 %v160
  %v923 = vunpack.c.l.b16 %v161
  %v924 = vpack.c.b16 %v923, %v922
  %v927 = vsel %vm204, %v916, 0
  %v930 = vsel %vm204, %v917, 0
  %v933 = vsel %vm204, %v918, 0
  %v936 = vsel %vm204, %v919, 0
  %938 = vmatprep.subr.bf16.mxu0 0
  %939 = vmatpush1.bf16.msra.mxu0 %v924
  %940 = vmatprep.subr.bf16.mxu0 0
  %941 = vmatpush1.bf16.msra.mxu0 0
  %942 = vmatprep.subr.bf16.mxu0 0
  %943 = vmatpush1.bf16.msra.mxu0 0
  %944 = vmatprep.subr.bf16.mxu0 0
  %945 = vmatpush1.bf16.msra.mxu0 0
  %946 = vmatprep.subr.bf16.mxu0 0
  %947 = vmatpush1.bf16.msra.mxu0 0
  %948 = vmatprep.subr.bf16.mxu0 0
  %949 = vmatpush1.bf16.msra.mxu0 0
  %950 = vmatprep.subr.bf16.mxu0 0
  %951 = vmatpush1.bf16.msra.mxu0 0
  %952 = vmatprep.subr.bf16.mxu0 0
  %953 = vmatpush1.bf16.msra.mxu0 0
  %954 = vmatprep.subr.bf16.mxu0 0
  %955 = vmatpush1.bf16.msra.mxu0 0
  %956 = vmatprep.subr.bf16.mxu0 0
  %957 = vmatpush1.bf16.msra.mxu0 0
  %958 = vmatprep.subr.bf16.mxu0 0
  %959 = vmatpush1.bf16.msra.mxu0 0
  %960 = vmatprep.subr.bf16.mxu0 0
  %961 = vmatpush1.bf16.msra.mxu0 0
  %962 = vmatprep.subr.bf16.mxu0 0
  %963 = vmatpush1.bf16.msra.mxu0 0
  %964 = vmatprep.subr.bf16.mxu0 0
  %965 = vmatpush1.bf16.msra.mxu0 0
  %966 = vmatprep.subr.bf16.mxu0 0
  %967 = vmatpush1.bf16.msra.mxu0 0
  %968 = vmatprep.subr.bf16.mxu0 0
  %969 = vmatpush1.bf16.msra.mxu0 0
  %970 = vmatprep.mubr.bf16.mxu0 0
  %971 = vmatmul.mubr.bf16.gmra.mrb[0].mxu0 %v927
  %v972 = vpop.f32.mrb[0].mxu0
  %v973 = vadd.f32 0.0, %v972
  %v974 = vpop.f32.mrb[0].mxu0
  %v975 = vpop.f32.mrb[0].mxu0
  %v976 = vadd.f32 0.0, %v975
  %v977 = vpop.f32.mrb[0].mxu0
  %978 = vmatprep.mubr.bf16.mxu0 0
  %979 = vmatmul.mubr.bf16.gmra.mrb[0].mxu0 %v930
  %v980 = vpop.f32.mrb[0].mxu0
  %v981 = vadd.f32 0.0, %v980
  %v982 = vpop.f32.mrb[0].mxu0
  %v983 = vpop.f32.mrb[0].mxu0
  %v984 = vadd.f32 0.0, %v983
  %v985 = vpop.f32.mrb[0].mxu0
  %986 = vmatprep.mubr.bf16.mxu0 0
  %987 = vmatmul.mubr.bf16.gmra.mrb[0].mxu0 %v933
  %v988 = vpop.f32.mrb[0].mxu0
  %v989 = vadd.f32 0.0, %v988
  %v990 = vpop.f32.mrb[0].mxu0
  %v991 = vpop.f32.mrb[0].mxu0
  %v992 = vadd.f32 0.0, %v991
  %v993 = vpop.f32.mrb[0].mxu0
  %994 = vmatprep.mubr.bf16.mxu0 0
  %995 = vmatmul.mubr.bf16.gmra.mrb[0].mxu0 %v936
  %v996 = vpop.f32.mrb[0].mxu0
  %v997 = vadd.f32 0.0, %v996
  %v998 = vpop.f32.mrb[0].mxu0
  %v999 = vpop.f32.mrb[0].mxu0
  %v1000 = vadd.f32 0.0, %v999
  %v1001 = vpop.f32.mrb[0].mxu0
  %1002 = vdwg.mxu0
  %v1011 = vunpack.c.l.b16 %v82
  %v1012 = vunpack.c.l.b16 %v83
  %v1013 = vunpack.c.l.b16 %v84
  %v1014 = vunpack.c.l.b16 %v85
  %v1015 = vunpack.c.l.b16 %v86
  %v1016 = vunpack.c.l.b16 %v87
  %v1017 = vunpack.c.l.b16 %v88
  %v1018 = vunpack.c.l.b16 %v89
  %v1019 = vpack.c.b16 %v1012, %v1011
  %v1020 = vpack.c.b16 %v1014, %v1013
  %v1021 = vpack.c.b16 %v1016, %v1015
  %v1022 = vpack.c.b16 %v1018, %v1017
  %v1025 = vunpack.c.l.b16 %v162
  %v1026 = vunpack.c.l.b16 %v163
  %v1027 = vpack.c.b16 %v1026, %v1025
  %v1030 = vsel %vm204, %v1019, 0
  %v1033 = vsel %vm204, %v1020, 0
  %v1036 = vsel %vm204, %v1021, 0
  %v1039 = vsel %vm204, %v1022, 0
  %1041 = vmatprep.subr.bf16.mxu0 0
  %1042 = vmatpush1.bf16.msra.mxu0 %v1027
  %1043 = vmatprep.subr.bf16.mxu0 0
  %1044 = vmatpush1.bf16.msra.mxu0 0
  %1045 = vmatprep.subr.bf16.mxu0 0
  %1046 = vmatpush1.bf16.msra.mxu0 0
  %1047 = vmatprep.subr.bf16.mxu0 0
  %1048 = vmatpush1.bf16.msra.mxu0 0
  %1049 = vmatprep.subr.bf16.mxu0 0
  %1050 = vmatpush1.bf16.msra.mxu0 0
  %1051 = vmatprep.subr.bf16.mxu0 0
  %1052 = vmatpush1.bf16.msra.mxu0 0
  %1053 = vmatprep.subr.bf16.mxu0 0
  %1054 = vmatpush1.bf16.msra.mxu0 0
  %1055 = vmatprep.subr.bf16.mxu0 0
  %1056 = vmatpush1.bf16.msra.mxu0 0
  %1057 = vmatprep.subr.bf16.mxu0 0
  %1058 = vmatpush1.bf16.msra.mxu0 0
  %1059 = vmatprep.subr.bf16.mxu0 0
  %1060 = vmatpush1.bf16.msra.mxu0 0
  %1061 = vmatprep.subr.bf16.mxu0 0
  %1062 = vmatpush1.bf16.msra.mxu0 0
  %1063 = vmatprep.subr.bf16.mxu0 0
  %1064 = vmatpush1.bf16.msra.mxu0 0
  %1065 = vmatprep.subr.bf16.mxu0 0
  %1066 = vmatpush1.bf16.msra.mxu0 0
  %1067 = vmatprep.subr.bf16.mxu0 0
  %1068 = vmatpush1.bf16.msra.mxu0 0
  %1069 = vmatprep.subr.bf16.mxu0 0
  %1070 = vmatpush1.bf16.msra.mxu0 0
  %1071 = vmatprep.subr.bf16.mxu0 0
  %1072 = vmatpush1.bf16.msra.mxu0 0
  %1073 = vmatprep.mubr.bf16.mxu0 0
  %1074 = vmatmul.mubr.bf16.gmra.mrb[0].mxu0 %v1030
  %v1075 = vpop.f32.mrb[0].mxu0
  %v1076 = vadd.f32 0.0, %v1075
  %v1077 = vpop.f32.mrb[0].mxu0
  %v1078 = vpop.f32.mrb[0].mxu0
  %v1079 = vadd.f32 0.0, %v1078
  %v1080 = vpop.f32.mrb[0].mxu0
  %1081 = vmatprep.mubr.bf16.mxu0 0
  %1082 = vmatmul.mubr.bf16.gmra.mrb[0].mxu0 %v1033
  %v1083 = vpop.f32.mrb[0].mxu0
  %v1084 = vadd.f32 0.0, %v1083
  %v1085 = vpop.f32.mrb[0].mxu0
  %v1086 = vpop.f32.mrb[0].mxu0
  %v1087 = vadd.f32 0.0, %v1086
  %v1088 = vpop.f32.mrb[0].mxu0
  %1089 = vmatprep.mubr.bf16.mxu0 0
  %1090 = vmatmul.mubr.bf16.gmra.mrb[0].mxu0 %v1036
  %v1091 = vpop.f32.mrb[0].mxu0
  %v1092 = vadd.f32 0.0, %v1091
  %v1093 = vpop.f32.mrb[0].mxu0
  %v1094 = vpop.f32.mrb[0].mxu0
  %v1095 = vadd.f32 0.0, %v1094
  %v1096 = vpop.f32.mrb[0].mxu0
  %1097 = vmatprep.mubr.bf16.mxu0 0
  %1098 = vmatmul.mubr.bf16.gmra.mrb[0].mxu0 %v1039
  %v1099 = vpop.f32.mrb[0].mxu0
  %v1100 = vadd.f32 0.0, %v1099
  %v1101 = vpop.f32.mrb[0].mxu0
  %v1102 = vpop.f32.mrb[0].mxu0
  %v1103 = vadd.f32 0.0, %v1102
  %v1104 = vpop.f32.mrb[0].mxu0
  %1105 = vdwg.mxu0
  %v1114 = vunpack.c.l.b16 %v90
  %v1115 = vunpack.c.l.b16 %v91
  %v1116 = vunpack.c.l.b16 %v92
  %v1117 = vunpack.c.l.b16 %v93
  %v1118 = vunpack.c.l.b16 %v94
  %v1119 = vunpack.c.l.b16 %v95
  %v1120 = vunpack.c.l.b16 %v96
  %v1121 = vunpack.c.l.b16 %v97
  %v1122 = vpack.c.b16 %v1115, %v1114
  %v1123 = vpack.c.b16 %v1117, %v1116
  %v1124 = vpack.c.b16 %v1119, %v1118
  %v1125 = vpack.c.b16 %v1121, %v1120
  %v1128 = vunpack.c.l.b16 %v164
  %v1129 = vunpack.c.l.b16 %v165
  %v1130 = vpack.c.b16 %v1129, %v1128
  %v1133 = vsel %vm204, %v1122, 0
  %v1136 = vsel %vm204, %v1123, 0
  %v1139 = vsel %vm204, %v1124, 0
  %v1142 = vsel %vm204, %v1125, 0
  %1144 = vmatprep.subr.bf16.mxu0 0
  %1145 = vmatpush1.bf16.msra.mxu0 %v1130
  %1146 = vmatprep.subr.bf16.mxu0 0
  %1147 = vmatpush1.bf16.msra.mxu0 0
  %1148 = vmatprep.subr.bf16.mxu0 0
  %1149 = vmatpush1.bf16.msra.mxu0 0
  %1150 = vmatprep.subr.bf16.mxu0 0
  %1151 = vmatpush1.bf16.msra.mxu0 0
  %1152 = vmatprep.subr.bf16.mxu0 0
  %1153 = vmatpush1.bf16.msra.mxu0 0
  %1154 = vmatprep.subr.bf16.mxu0 0
  %1155 = vmatpush1.bf16.msra.mxu0 0
  %1156 = vmatprep.subr.bf16.mxu0 0
  %1157 = vmatpush1.bf16.msra.mxu0 0
  %1158 = vmatprep.subr.bf16.mxu0 0
  %1159 = vmatpush1.bf16.msra.mxu0 0
  %1160 = vmatprep.subr.bf16.mxu0 0
  %1161 = vmatpush1.bf16.msra.mxu0 0
  %1162 = vmatprep.subr.bf16.mxu0 0
  %1163 = vmatpush1.bf16.msra.mxu0 0
  %1164 = vmatprep.subr.bf16.mxu0 0
  %1165 = vmatpush1.bf16.msra.mxu0 0
  %1166 = vmatprep.subr.bf16.mxu0 0
  %1167 = vmatpush1.bf16.msra.mxu0 0
  %1168 = vmatprep.subr.bf16.mxu0 0
  %1169 = vmatpush1.bf16.msra.mxu0 0
  %1170 = vmatprep.subr.bf16.mxu0 0
  %1171 = vmatpush1.bf16.msra.mxu0 0
  %1172 = vmatprep.subr.bf16.mxu0 0
  %1173 = vmatpush1.bf16.msra.mxu0 0
  %1174 = vmatprep.subr.bf16.mxu0 0
  %1175 = vmatpush1.bf16.msra.mxu0 0
  %1176 = vmatprep.mubr.bf16.mxu0 0
  %1177 = vmatmul.mubr.bf16.gmra.mrb[0].mxu0 %v1133
  %v1178 = vpop.f32.mrb[0].mxu0
  %v1179 = vadd.f32 0.0, %v1178
  %v1180 = vpop.f32.mrb[0].mxu0
  %v1181 = vpop.f32.mrb[0].mxu0
  %v1182 = vadd.f32 0.0, %v1181
  %v1183 = vpop.f32.mrb[0].mxu0
  %1184 = vmatprep.mubr.bf16.mxu0 0
  %1185 = vmatmul.mubr.bf16.gmra.mrb[0].mxu0 %v1136
  %v1186 = vpop.f32.mrb[0].mxu0
  %v1187 = vadd.f32 0.0, %v1186
  %v1188 = vpop.f32.mrb[0].mxu0
  %v1189 = vpop.f32.mrb[0].mxu0
  %v1190 = vadd.f32 0.0, %v1189
  %v1191 = vpop.f32.mrb[0].mxu0
  %1192 = vmatprep.mubr.bf16.mxu0 0
  %1193 = vmatmul.mubr.bf16.gmra.mrb[0].mxu0 %v1139
  %v1194 = vpop.f32.mrb[0].mxu0
  %v1195 = vadd.f32 0.0, %v1194
  %v1196 = vpop.f32.mrb[0].mxu0
  %v1197 = vpop.f32.mrb[0].mxu0
  %v1198 = vadd.f32 0.0, %v1197
  %v1199 = vpop.f32.mrb[0].mxu0
  %1200 = vmatprep.mubr.bf16.mxu0 0
  %1201 = vmatmul.mubr.bf16.gmra.mrb[0].mxu0 %v1142
  %v1202 = vpop.f32.mrb[0].mxu0
  %v1203 = vadd.f32 0.0, %v1202
  %v1204 = vpop.f32.mrb[0].mxu0
  %v1205 = vpop.f32.mrb[0].mxu0
  %v1206 = vadd.f32 0.0, %v1205
  %v1207 = vpop.f32.mrb[0].mxu0
  %1208 = vdwg.mxu0
  %v1217 = vunpack.c.l.b16 %v98
  %v1218 = vunpack.c.l.b16 %v99
  %v1219 = vunpack.c.l.b16 %v100
  %v1220 = vunpack.c.l.b16 %v101
  %v1221 = vunpack.c.l.b16 %v102
  %v1222 = vunpack.c.l.b16 %v103
  %v1223 = vunpack.c.l.b16 %v104
  %v1224 = vunpack.c.l.b16 %v105
  %v1225 = vpack.c.b16 %v1218, %v1217
  %v1226 = vpack.c.b16 %v1220, %v1219
  %v1227 = vpack.c.b16 %v1222, %v1221
  %v1228 = vpack.c.b16 %v1224, %v1223
  %v1231 = vunpack.c.l.b16 %v166
  %v1232 = vunpack.c.l.b16 %v167
  %v1233 = vpack.c.b16 %v1232, %v1231
  %v1236 = vsel %vm204, %v1225, 0
  %v1239 = vsel %vm204, %v1226, 0
  %v1242 = vsel %vm204, %v1227, 0
  %v1245 = vsel %vm204, %v1228, 0
  %1247 = vmatprep.subr.bf16.mxu0 0
  %1248 = vmatpush1.bf16.msra.mxu0 %v1233
  %1249 = vmatprep.subr.bf16.mxu0 0
  %1250 = vmatpush1.bf16.msra.mxu0 0
  %1251 = vmatprep.subr.bf16.mxu0 0
  %1252 = vmatpush1.bf16.msra.mxu0 0
  %1253 = vmatprep.subr.bf16.mxu0 0
  %1254 = vmatpush1.bf16.msra.mxu0 0
  %1255 = vmatprep.subr.bf16.mxu0 0
  %1256 = vmatpush1.bf16.msra.mxu0 0
  %1257 = vmatprep.subr.bf16.mxu0 0
  %1258 = vmatpush1.bf16.msra.mxu0 0
  %1259 = vmatprep.subr.bf16.mxu0 0
  %1260 = vmatpush1.bf16.msra.mxu0 0
  %1261 = vmatprep.subr.bf16.mxu0 0
  %1262 = vmatpush1.bf16.msra.mxu0 0
  %1263 = vmatprep.subr.bf16.mxu0 0
  %1264 = vmatpush1.bf16.msra.mxu0 0
  %1265 = vmatprep.subr.bf16.mxu0 0
  %1266 = vmatpush1.bf16.msra.mxu0 0
  %1267 = vmatprep.subr.bf16.mxu0 0
  %1268 = vmatpush1.bf16.msra.mxu0 0
  %1269 = vmatprep.subr.bf16.mxu0 0
  %1270 = vmatpush1.bf16.msra.mxu0 0
  %1271 = vmatprep.subr.bf16.mxu0 0
  %1272 = vmatpush1.bf16.msra.mxu0 0
  %1273 = vmatprep.subr.bf16.mxu0 0
  %1274 = vmatpush1.bf16.msra.mxu0 0
  %1275 = vmatprep.subr.bf16.mxu0 0
  %1276 = vmatpush1.bf16.msra.mxu0 0
  %1277 = vmatprep.subr.bf16.mxu0 0
  %1278 = vmatpush1.bf16.msra.mxu0 0
  %1279 = vmatprep.mubr.bf16.mxu0 0
  %1280 = vmatmul.mubr.bf16.gmra.mrb[0].mxu0 %v1236
  %v1281 = vpop.f32.mrb[0].mxu0
  %v1282 = vadd.f32 0.0, %v1281
  %v1283 = vpop.f32.mrb[0].mxu0
  %v1284 = vpop.f32.mrb[0].mxu0
  %v1285 = vadd.f32 0.0, %v1284
  %v1286 = vpop.f32.mrb[0].mxu0
  %1287 = vmatprep.mubr.bf16.mxu0 0
  %1288 = vmatmul.mubr.bf16.gmra.mrb[0].mxu0 %v1239
  %v1289 = vpop.f32.mrb[0].mxu0
  %v1290 = vadd.f32 0.0, %v1289
  %v1291 = vpop.f32.mrb[0].mxu0
  %v1292 = vpop.f32.mrb[0].mxu0
  %v1293 = vadd.f32 0.0, %v1292
  %v1294 = vpop.f32.mrb[0].mxu0
  %1295 = vmatprep.mubr.bf16.mxu0 0
  %1296 = vmatmul.mubr.bf16.gmra.mrb[0].mxu0 %v1242
  %v1297 = vpop.f32.mrb[0].mxu0
  %v1298 = vadd.f32 0.0, %v1297
  %v1299 = vpop.f32.mrb[0].mxu0
  %v1300 = vpop.f32.mrb[0].mxu0
  %v1301 = vadd.f32 0.0, %v1300
  %v1302 = vpop.f32.mrb[0].mxu0
  %1303 = vmatprep.mubr.bf16.mxu0 0
  %1304 = vmatmul.mubr.bf16.gmra.mrb[0].mxu0 %v1245
  %v1305 = vpop.f32.mrb[0].mxu0
  %v1306 = vadd.f32 0.0, %v1305
  %v1307 = vpop.f32.mrb[0].mxu0
  %v1308 = vpop.f32.mrb[0].mxu0
  %v1309 = vadd.f32 0.0, %v1308
  %v1310 = vpop.f32.mrb[0].mxu0
  %1311 = vdwg.mxu0
  %v1320 = vunpack.c.l.b16 %v106
  %v1321 = vunpack.c.l.b16 %v107
  %v1322 = vunpack.c.l.b16 %v108
  %v1323 = vunpack.c.l.b16 %v109
  %v1324 = vunpack.c.l.b16 %v110
  %v1325 = vunpack.c.l.b16 %v111
  %v1326 = vunpack.c.l.b16 %v112
  %v1327 = vunpack.c.l.b16 %v113
  %v1328 = vpack.c.b16 %v1321, %v1320
  %v1329 = vpack.c.b16 %v1323, %v1322
  %v1330 = vpack.c.b16 %v1325, %v1324
  %v1331 = vpack.c.b16 %v1327, %v1326
  %v1334 = vunpack.c.l.b16 %v168
  %v1335 = vunpack.c.l.b16 %v169
  %v1336 = vpack.c.b16 %v1335, %v1334
  %v1339 = vsel %vm204, %v1328, 0
  %v1342 = vsel %vm204, %v1329, 0
  %v1345 = vsel %vm204, %v1330, 0
  %v1348 = vsel %vm204, %v1331, 0
  %1350 = vmatprep.subr.bf16.mxu0 0
  %1351 = vmatpush1.bf16.msra.mxu0 %v1336
  %1352 = vmatprep.subr.bf16.mxu0 0
  %1353 = vmatpush1.bf16.msra.mxu0 0
  %1354 = vmatprep.subr.bf16.mxu0 0
  %1355 = vmatpush1.bf16.msra.mxu0 0
  %1356 = vmatprep.subr.bf16.mxu0 0
  %1357 = vmatpush1.bf16.msra.mxu0 0
  %1358 = vmatprep.subr.bf16.mxu0 0
  %1359 = vmatpush1.bf16.msra.mxu0 0
  %1360 = vmatprep.subr.bf16.mxu0 0
  %1361 = vmatpush1.bf16.msra.mxu0 0
  %1362 = vmatprep.subr.bf16.mxu0 0
  %1363 = vmatpush1.bf16.msra.mxu0 0
  %1364 = vmatprep.subr.bf16.mxu0 0
  %1365 = vmatpush1.bf16.msra.mxu0 0
  %1366 = vmatprep.subr.bf16.mxu0 0
  %1367 = vmatpush1.bf16.msra.mxu0 0
  %1368 = vmatprep.subr.bf16.mxu0 0
  %1369 = vmatpush1.bf16.msra.mxu0 0
  %1370 = vmatprep.subr.bf16.mxu0 0
  %1371 = vmatpush1.bf16.msra.mxu0 0
  %1372 = vmatprep.subr.bf16.mxu0 0
  %1373 = vmatpush1.bf16.msra.mxu0 0
  %1374 = vmatprep.subr.bf16.mxu0 0
  %1375 = vmatpush1.bf16.msra.mxu0 0
  %1376 = vmatprep.subr.bf16.mxu0 0
  %1377 = vmatpush1.bf16.msra.mxu0 0
  %1378 = vmatprep.subr.bf16.mxu0 0
  %1379 = vmatpush1.bf16.msra.mxu0 0
  %1380 = vmatprep.subr.bf16.mxu0 0
  %1381 = vmatpush1.bf16.msra.mxu0 0
  %1382 = vmatprep.mubr.bf16.mxu0 0
  %1383 = vmatmul.mubr.bf16.gmra.mrb[0].mxu0 %v1339
  %v1384 = vpop.f32.mrb[0].mxu0
  %v1385 = vadd.f32 0.0, %v1384
  %v1386 = vpop.f32.mrb[0].mxu0
  %v1387 = vpop.f32.mrb[0].mxu0
  %v1388 = vadd.f32 0.0, %v1387
  %v1389 = vpop.f32.mrb[0].mxu0
  %1390 = vmatprep.mubr.bf16.mxu0 0
  %1391 = vmatmul.mubr.bf16.gmra.mrb[0].mxu0 %v1342
  %v1392 = vpop.f32.mrb[0].mxu0
  %v1393 = vadd.f32 0.0, %v1392
  %v1394 = vpop.f32.mrb[0].mxu0
  %v1395 = vpop.f32.mrb[0].mxu0
  %v1396 = vadd.f32 0.0, %v1395
  %v1397 = vpop.f32.mrb[0].mxu0
  %1398 = vmatprep.mubr.bf16.mxu0 0
  %1399 = vmatmul.mubr.bf16.gmra.mrb[0].mxu0 %v1345
  %v1400 = vpop.f32.mrb[0].mxu0
  %v1401 = vadd.f32 0.0, %v1400
  %v1402 = vpop.f32.mrb[0].mxu0
  %v1403 = vpop.f32.mrb[0].mxu0
  %v1404 = vadd.f32 0.0, %v1403
  %v1405 = vpop.f32.mrb[0].mxu0
  %1406 = vmatprep.mubr.bf16.mxu0 0
  %1407 = vmatmul.mubr.bf16.gmra.mrb[0].mxu0 %v1348
  %v1408 = vpop.f32.mrb[0].mxu0
  %v1409 = vadd.f32 0.0, %v1408
  %v1410 = vpop.f32.mrb[0].mxu0
  %v1411 = vpop.f32.mrb[0].mxu0
  %v1412 = vadd.f32 0.0, %v1411
  %v1413 = vpop.f32.mrb[0].mxu0
  %1414 = vdwg.mxu0
  %v1423 = vunpack.c.l.b16 %v114
  %v1424 = vunpack.c.l.b16 %v115
  %v1425 = vunpack.c.l.b16 %v116
  %v1426 = vunpack.c.l.b16 %v117
  %v1427 = vunpack.c.l.b16 %v118
  %v1428 = vunpack.c.l.b16 %v119
  %v1429 = vunpack.c.l.b16 %v120
  %v1430 = vunpack.c.l.b16 %v121
  %v1431 = vpack.c.b16 %v1424, %v1423
  %v1432 = vpack.c.b16 %v1426, %v1425
  %v1433 = vpack.c.b16 %v1428, %v1427
  %v1434 = vpack.c.b16 %v1430, %v1429
  %v1437 = vunpack.c.l.b16 %v170
  %v1438 = vunpack.c.l.b16 %v171
  %v1439 = vpack.c.b16 %v1438, %v1437
  %v1442 = vsel %vm204, %v1431, 0
  %v1445 = vsel %vm204, %v1432, 0
  %v1448 = vsel %vm204, %v1433, 0
  %v1451 = vsel %vm204, %v1434, 0
  %1453 = vmatprep.subr.bf16.mxu0 0
  %1454 = vmatpush1.bf16.msra.mxu0 %v1439
  %1455 = vmatprep.subr.bf16.mxu0 0
  %1456 = vmatpush1.bf16.msra.mxu0 0
  %1457 = vmatprep.subr.bf16.mxu0 0
  %1458 = vmatpush1.bf16.msra.mxu0 0
  %1459 = vmatprep.subr.bf16.mxu0 0
  %1460 = vmatpush1.bf16.msra.mxu0 0
  %1461 = vmatprep.subr.bf16.mxu0 0
  %1462 = vmatpush1.bf16.msra.mxu0 0
  %1463 = vmatprep.subr.bf16.mxu0 0
  %1464 = vmatpush1.bf16.msra.mxu0 0
  %1465 = vmatprep.subr.bf16.mxu0 0
  %1466 = vmatpush1.bf16.msra.mxu0 0
  %1467 = vmatprep.subr.bf16.mxu0 0
  %1468 = vmatpush1.bf16.msra.mxu0 0
  %1469 = vmatprep.subr.bf16.mxu0 0
  %1470 = vmatpush1.bf16.msra.mxu0 0
  %1471 = vmatprep.subr.bf16.mxu0 0
  %1472 = vmatpush1.bf16.msra.mxu0 0
  %1473 = vmatprep.subr.bf16.mxu0 0
  %1474 = vmatpush1.bf16.msra.mxu0 0
  %1475 = vmatprep.subr.bf16.mxu0 0
  %1476 = vmatpush1.bf16.msra.mxu0 0
  %1477 = vmatprep.subr.bf16.mxu0 0
  %1478 = vmatpush1.bf16.msra.mxu0 0
  %1479 = vmatprep.subr.bf16.mxu0 0
  %1480 = vmatpush1.bf16.msra.mxu0 0
  %1481 = vmatprep.subr.bf16.mxu0 0
  %1482 = vmatpush1.bf16.msra.mxu0 0
  %1483 = vmatprep.subr.bf16.mxu0 0
  %1484 = vmatpush1.bf16.msra.mxu0 0
  %1485 = vmatprep.mubr.bf16.mxu0 0
  %1486 = vmatmul.mubr.bf16.gmra.mrb[0].mxu0 %v1442
  %v1487 = vpop.f32.mrb[0].mxu0
  %v1488 = vadd.f32 0.0, %v1487
  %v1489 = vpop.f32.mrb[0].mxu0
  %v1490 = vpop.f32.mrb[0].mxu0
  %v1491 = vadd.f32 0.0, %v1490
  %v1492 = vpop.f32.mrb[0].mxu0
  %1493 = vmatprep.mubr.bf16.mxu0 0
  %1494 = vmatmul.mubr.bf16.gmra.mrb[0].mxu0 %v1445
  %v1495 = vpop.f32.mrb[0].mxu0
  %v1496 = vadd.f32 0.0, %v1495
  %v1497 = vpop.f32.mrb[0].mxu0
  %v1498 = vpop.f32.mrb[0].mxu0
  %v1499 = vadd.f32 0.0, %v1498
  %v1500 = vpop.f32.mrb[0].mxu0
  %1501 = vmatprep.mubr.bf16.mxu0 0
  %1502 = vmatmul.mubr.bf16.gmra.mrb[0].mxu0 %v1448
  %v1503 = vpop.f32.mrb[0].mxu0
  %v1504 = vadd.f32 0.0, %v1503
  %v1505 = vpop.f32.mrb[0].mxu0
  %v1506 = vpop.f32.mrb[0].mxu0
  %v1507 = vadd.f32 0.0, %v1506
  %v1508 = vpop.f32.mrb[0].mxu0
  %1509 = vmatprep.mubr.bf16.mxu0 0
  %1510 = vmatmul.mubr.bf16.gmra.mrb[0].mxu0 %v1451
  %v1511 = vpop.f32.mrb[0].mxu0
  %v1512 = vadd.f32 0.0, %v1511
  %v1513 = vpop.f32.mrb[0].mxu0
  %v1514 = vpop.f32.mrb[0].mxu0
  %v1515 = vadd.f32 0.0, %v1514
  %v1516 = vpop.f32.mrb[0].mxu0
  %1517 = vdwg.mxu0
  %v1526 = vunpack.c.l.b16 %v122
  %v1527 = vunpack.c.l.b16 %v123
  %v1528 = vunpack.c.l.b16 %v124
  %v1529 = vunpack.c.l.b16 %v125
  %v1530 = vunpack.c.l.b16 %v126
  %v1531 = vunpack.c.l.b16 %v127
  %v1532 = vunpack.c.l.b16 %v128
  %v1533 = vunpack.c.l.b16 %v129
  %v1534 = vpack.c.b16 %v1527, %v1526
  %v1535 = vpack.c.b16 %v1529, %v1528
  %v1536 = vpack.c.b16 %v1531, %v1530
  %v1537 = vpack.c.b16 %v1533, %v1532
  %v1540 = vunpack.c.l.b16 %v172
  %v1541 = vunpack.c.l.b16 %v173
  %v1542 = vpack.c.b16 %v1541, %v1540
  %v1545 = vsel %vm204, %v1534, 0
  %v1548 = vsel %vm204, %v1535, 0
  %v1551 = vsel %vm204, %v1536, 0
  %v1554 = vsel %vm204, %v1537, 0
  %1556 = vmatprep.subr.bf16.mxu0 0
  %1557 = vmatpush1.bf16.msra.mxu0 %v1542
  %1558 = vmatprep.subr.bf16.mxu0 0
  %1559 = vmatpush1.bf16.msra.mxu0 0
  %1560 = vmatprep.subr.bf16.mxu0 0
  %1561 = vmatpush1.bf16.msra.mxu0 0
  %1562 = vmatprep.subr.bf16.mxu0 0
  %1563 = vmatpush1.bf16.msra.mxu0 0
  %1564 = vmatprep.subr.bf16.mxu0 0
  %1565 = vmatpush1.bf16.msra.mxu0 0
  %1566 = vmatprep.subr.bf16.mxu0 0
  %1567 = vmatpush1.bf16.msra.mxu0 0
  %1568 = vmatprep.subr.bf16.mxu0 0
  %1569 = vmatpush1.bf16.msra.mxu0 0
  %1570 = vmatprep.subr.bf16.mxu0 0
  %1571 = vmatpush1.bf16.msra.mxu0 0
  %1572 = vmatprep.subr.bf16.mxu0 0
  %1573 = vmatpush1.bf16.msra.mxu0 0
  %1574 = vmatprep.subr.bf16.mxu0 0
  %1575 = vmatpush1.bf16.msra.mxu0 0
  %1576 = vmatprep.subr.bf16.mxu0 0
  %1577 = vmatpush1.bf16.msra.mxu0 0
  %1578 = vmatprep.subr.bf16.mxu0 0
  %1579 = vmatpush1.bf16.msra.mxu0 0
  %1580 = vmatprep.subr.bf16.mxu0 0
  %1581 = vmatpush1.bf16.msra.mxu0 0
  %1582 = vmatprep.subr.bf16.mxu0 0
  %1583 = vmatpush1.bf16.msra.mxu0 0
  %1584 = vmatprep.subr.bf16.mxu0 0
  %1585 = vmatpush1.bf16.msra.mxu0 0
  %1586 = vmatprep.subr.bf16.mxu0 0
  %1587 = vmatpush1.bf16.msra.mxu0 0
  %1588 = vmatprep.mubr.bf16.mxu0 0
  %1589 = vmatmul.mubr.bf16.gmra.mrb[0].mxu0 %v1545
  %v1590 = vpop.f32.mrb[0].mxu0
  %v1591 = vadd.f32 0.0, %v1590
  %v1592 = vpop.f32.mrb[0].mxu0
  %v1593 = vpop.f32.mrb[0].mxu0
  %v1594 = vadd.f32 0.0, %v1593
  %v1595 = vpop.f32.mrb[0].mxu0
  %1596 = vmatprep.mubr.bf16.mxu0 0
  %1597 = vmatmul.mubr.bf16.gmra.mrb[0].mxu0 %v1548
  %v1598 = vpop.f32.mrb[0].mxu0
  %v1599 = vadd.f32 0.0, %v1598
  %v1600 = vpop.f32.mrb[0].mxu0
  %v1601 = vpop.f32.mrb[0].mxu0
  %v1602 = vadd.f32 0.0, %v1601
  %v1603 = vpop.f32.mrb[0].mxu0
  %1604 = vmatprep.mubr.bf16.mxu0 0
  %1605 = vmatmul.mubr.bf16.gmra.mrb[0].mxu0 %v1551
  %v1606 = vpop.f32.mrb[0].mxu0
  %v1607 = vadd.f32 0.0, %v1606
  %v1608 = vpop.f32.mrb[0].mxu0
  %v1609 = vpop.f32.mrb[0].mxu0
  %v1610 = vadd.f32 0.0, %v1609
  %v1611 = vpop.f32.mrb[0].mxu0
  %1612 = vmatprep.mubr.bf16.mxu0 0
  %1613 = vmatmul.mubr.bf16.gmra.mrb[0].mxu0 %v1554
  %v1614 = vpop.f32.mrb[0].mxu0
  %v1615 = vadd.f32 0.0, %v1614
  %v1616 = vpop.f32.mrb[0].mxu0
  %v1617 = vpop.f32.mrb[0].mxu0
  %v1618 = vadd.f32 0.0, %v1617
  %v1619 = vpop.f32.mrb[0].mxu0
  %1620 = vdwg.mxu0
  %v1629 = vunpack.c.l.b16 %v130
  %v1630 = vunpack.c.l.b16 %v131
  %v1631 = vunpack.c.l.b16 %v132
  %v1632 = vunpack.c.l.b16 %v133
  %v1633 = vunpack.c.l.b16 %v134
  %v1634 = vunpack.c.l.b16 %v135
  %v1635 = vunpack.c.l.b16 %v136
  %v1636 = vunpack.c.l.b16 %v137
  %v1637 = vpack.c.b16 %v1630, %v1629
  %v1638 = vpack.c.b16 %v1632, %v1631
  %v1639 = vpack.c.b16 %v1634, %v1633
  %v1640 = vpack.c.b16 %v1636, %v1635
  %v1643 = vunpack.c.l.b16 %v174
  %v1644 = vunpack.c.l.b16 %v175
  %v1645 = vpack.c.b16 %v1644, %v1643
  %v1648 = vsel %vm204, %v1637, 0
  %v1651 = vsel %vm204, %v1638, 0
  %v1654 = vsel %vm204, %v1639, 0
  %v1657 = vsel %vm204, %v1640, 0
  %1659 = vmatprep.subr.bf16.mxu0 0
  %1660 = vmatpush1.bf16.msra.mxu0 %v1645
  %1661 = vmatprep.subr.bf16.mxu0 0
  %1662 = vmatpush1.bf16.msra.mxu0 0
  %1663 = vmatprep.subr.bf16.mxu0 0
  %1664 = vmatpush1.bf16.msra.mxu0 0
  %1665 = vmatprep.subr.bf16.mxu0 0
  %1666 = vmatpush1.bf16.msra.mxu0 0
  %1667 = vmatprep.subr.bf16.mxu0 0
  %1668 = vmatpush1.bf16.msra.mxu0 0
  %1669 = vmatprep.subr.bf16.mxu0 0
  %1670 = vmatpush1.bf16.msra.mxu0 0
  %1671 = vmatprep.subr.bf16.mxu0 0
  %1672 = vmatpush1.bf16.msra.mxu0 0
  %1673 = vmatprep.subr.bf16.mxu0 0
  %1674 = vmatpush1.bf16.msra.mxu0 0
  %1675 = vmatprep.subr.bf16.mxu0 0
  %1676 = vmatpush1.bf16.msra.mxu0 0
  %1677 = vmatprep.subr.bf16.mxu0 0
  %1678 = vmatpush1.bf16.msra.mxu0 0
  %1679 = vmatprep.subr.bf16.mxu0 0
  %1680 = vmatpush1.bf16.msra.mxu0 0
  %1681 = vmatprep.subr.bf16.mxu0 0
  %1682 = vmatpush1.bf16.msra.mxu0 0
  %1683 = vmatprep.subr.bf16.mxu0 0
  %1684 = vmatpush1.bf16.msra.mxu0 0
  %1685 = vmatprep.subr.bf16.mxu0 0
  %1686 = vmatpush1.bf16.msra.mxu0 0
  %1687 = vmatprep.subr.bf16.mxu0 0
  %1688 = vmatpush1.bf16.msra.mxu0 0
  %1689 = vmatprep.subr.bf16.mxu0 0
  %1690 = vmatpush1.bf16.msra.mxu0 0
  %1691 = vmatprep.mubr.bf16.mxu0 0
  %1692 = vmatmul.mubr.bf16.gmra.mrb[0].mxu0 %v1648
  %v1693 = vpop.f32.mrb[0].mxu0
  %v1694 = vadd.f32 0.0, %v1693
  %v1695 = vpop.f32.mrb[0].mxu0
  %v1696 = vpop.f32.mrb[0].mxu0
  %v1697 = vadd.f32 0.0, %v1696
  %v1698 = vpop.f32.mrb[0].mxu0
  %1699 = vmatprep.mubr.bf16.mxu0 0
  %1700 = vmatmul.mubr.bf16.gmra.mrb[0].mxu0 %v1651
  %v1701 = vpop.f32.mrb[0].mxu0
  %v1702 = vadd.f32 0.0, %v1701
  %v1703 = vpop.f32.mrb[0].mxu0
  %v1704 = vpop.f32.mrb[0].mxu0
  %v1705 = vadd.f32 0.0, %v1704
  %v1706 = vpop.f32.mrb[0].mxu0
  %1707 = vmatprep.mubr.bf16.mxu0 0
  %1708 = vmatmul.mubr.bf16.gmra.mrb[0].mxu0 %v1654
  %v1709 = vpop.f32.mrb[0].mxu0
  %v1710 = vadd.f32 0.0, %v1709
  %v1711 = vpop.f32.mrb[0].mxu0
  %v1712 = vpop.f32.mrb[0].mxu0
  %v1713 = vadd.f32 0.0, %v1712
  %v1714 = vpop.f32.mrb[0].mxu0
  %1715 = vmatprep.mubr.bf16.mxu0 0
  %1716 = vmatmul.mubr.bf16.gmra.mrb[0].mxu0 %v1657
  %v1717 = vpop.f32.mrb[0].mxu0
  %v1718 = vadd.f32 0.0, %v1717
  %v1719 = vpop.f32.mrb[0].mxu0
  %v1720 = vpop.f32.mrb[0].mxu0
  %v1721 = vadd.f32 0.0, %v1720
  %v1722 = vpop.f32.mrb[0].mxu0
  %1723 = vdwg.mxu0
  %v1732 = vunpack.c.l.b16 %v138
  %v1733 = vunpack.c.l.b16 %v139
  %v1734 = vunpack.c.l.b16 %v140
  %v1735 = vunpack.c.l.b16 %v141
  %v1736 = vunpack.c.l.b16 %v142
  %v1737 = vunpack.c.l.b16 %v143
  %v1738 = vunpack.c.l.b16 %v144
  %v1739 = vunpack.c.l.b16 %v145
  %v1740 = vpack.c.b16 %v1733, %v1732
  %v1741 = vpack.c.b16 %v1735, %v1734
  %v1742 = vpack.c.b16 %v1737, %v1736
  %v1743 = vpack.c.b16 %v1739, %v1738
  %v1746 = vunpack.c.l.b16 %v176
  %v1747 = vunpack.c.l.b16 %v177
  %v1748 = vpack.c.b16 %v1747, %v1746
  %v1751 = vsel %vm204, %v1740, 0
  %v1754 = vsel %vm204, %v1741, 0
  %v1757 = vsel %vm204, %v1742, 0
  %v1760 = vsel %vm204, %v1743, 0
  %1762 = vmatprep.subr.bf16.mxu0 0
  %1763 = vmatpush1.bf16.msra.mxu0 %v1748
  %1764 = vmatprep.subr.bf16.mxu0 0
  %1765 = vmatpush1.bf16.msra.mxu0 0
  %1766 = vmatprep.subr.bf16.mxu0 0
  %1767 = vmatpush1.bf16.msra.mxu0 0
  %1768 = vmatprep.subr.bf16.mxu0 0
  %1769 = vmatpush1.bf16.msra.mxu0 0
  %1770 = vmatprep.subr.bf16.mxu0 0
  %1771 = vmatpush1.bf16.msra.mxu0 0
  %1772 = vmatprep.subr.bf16.mxu0 0
  %1773 = vmatpush1.bf16.msra.mxu0 0
  %1774 = vmatprep.subr.bf16.mxu0 0
  %1775 = vmatpush1.bf16.msra.mxu0 0
  %1776 = vmatprep.subr.bf16.mxu0 0
  %1777 = vmatpush1.bf16.msra.mxu0 0
  %1778 = vmatprep.subr.bf16.mxu0 0
  %1779 = vmatpush1.bf16.msra.mxu0 0
  %1780 = vmatprep.subr.bf16.mxu0 0
  %1781 = vmatpush1.bf16.msra.mxu0 0
  %1782 = vmatprep.subr.bf16.mxu0 0
  %1783 = vmatpush1.bf16.msra.mxu0 0
  %1784 = vmatprep.subr.bf16.mxu0 0
  %1785 = vmatpush1.bf16.msra.mxu0 0
  %1786 = vmatprep.subr.bf16.mxu0 0
  %1787 = vmatpush1.bf16.msra.mxu0 0
  %1788 = vmatprep.subr.bf16.mxu0 0
  %1789 = vmatpush1.bf16.msra.mxu0 0
  %1790 = vmatprep.subr.bf16.mxu0 0
  %1791 = vmatpush1.bf16.msra.mxu0 0
  %1792 = vmatprep.subr.bf16.mxu0 0
  %1793 = vmatpush1.bf16.msra.mxu0 0
  %1794 = vmatprep.mubr.bf16.mxu0 0
  %1795 = vmatmul.mubr.bf16.gmra.mrb[0].mxu0 %v1751
  %v1796 = vpop.f32.mrb[0].mxu0
  %v1797 = vadd.f32 0.0, %v1796
  %v1798 = vpop.f32.mrb[0].mxu0
  %v1799 = vpop.f32.mrb[0].mxu0
  %v1800 = vadd.f32 0.0, %v1799
  %v1801 = vpop.f32.mrb[0].mxu0
  %1802 = vmatprep.mubr.bf16.mxu0 0
  %1803 = vmatmul.mubr.bf16.gmra.mrb[0].mxu0 %v1754
  %v1804 = vpop.f32.mrb[0].mxu0
  %v1805 = vadd.f32 0.0, %v1804
  %v1806 = vpop.f32.mrb[0].mxu0
  %v1807 = vpop.f32.mrb[0].mxu0
  %v1808 = vadd.f32 0.0, %v1807
  %v1809 = vpop.f32.mrb[0].mxu0
  %1810 = vmatprep.mubr.bf16.mxu0 0
  %1811 = vmatmul.mubr.bf16.gmra.mrb[0].mxu0 %v1757
  %v1812 = vpop.f32.mrb[0].mxu0
  %v1813 = vadd.f32 0.0, %v1812
  %v1814 = vpop.f32.mrb[0].mxu0
  %v1815 = vpop.f32.mrb[0].mxu0
  %v1816 = vadd.f32 0.0, %v1815
  %v1817 = vpop.f32.mrb[0].mxu0
  %1818 = vmatprep.mubr.bf16.mxu0 0
  %1819 = vmatmul.mubr.bf16.gmra.mrb[0].mxu0 %v1760
  %v1820 = vpop.f32.mrb[0].mxu0
  %v1821 = vadd.f32 0.0, %v1820
  %v1822 = vpop.f32.mrb[0].mxu0
  %v1823 = vpop.f32.mrb[0].mxu0
  %v1824 = vadd.f32 0.0, %v1823
  %v1825 = vpop.f32.mrb[0].mxu0
  %1826 = vdwg.mxu0
  %vm1827 = vcmask 15360
  %v1828 = vsel %vm1827, %v252, 0.0
  %1829 = vadd.xlane.f32.xlu0 %v1828
  %v1830 = vpop.xlane.xlu0 %1829
  %v1831 = vsel %vm1827, %v255, 0.0
  %1832 = vadd.xlane.f32.xlu0 %v1831
  %v1833 = vpop.xlane.xlu0 %1832
  %v1834 = vsel %vm1827, %v260, 0.0
  %1835 = vadd.xlane.f32.xlu0 %v1834
  %v1836 = vpop.xlane.xlu0 %1835
  %v1837 = vsel %vm1827, %v263, 0.0
  %1838 = vadd.xlane.f32.xlu0 %v1837
  %v1839 = vpop.xlane.xlu0 %1838
  %v1840 = vsel %vm1827, %v268, 0.0
  %1841 = vadd.xlane.f32.xlu0 %v1840
  %v1842 = vpop.xlane.xlu0 %1841
  %v1843 = vsel %vm1827, %v271, 0.0
  %1844 = vadd.xlane.f32.xlu0 %v1843
  %v1845 = vpop.xlane.xlu0 %1844
  %v1846 = vsel %vm1827, %v276, 0.0
  %1847 = vadd.xlane.f32.xlu0 %v1846
  %v1848 = vpop.xlane.xlu0 %1847
  %v1849 = vsel %vm1827, %v279, 0.0
  %1850 = vadd.xlane.f32.xlu0 %v1849
  %v1851 = vpop.xlane.xlu0 %1850
  %v1852 = vsel %vm1827, %v355, 0.0
  %1853 = vadd.xlane.f32.xlu0 %v1852
  %v1854 = vpop.xlane.xlu0 %1853
  %v1855 = vsel %vm1827, %v358, 0.0
  %1856 = vadd.xlane.f32.xlu0 %v1855
  %v1857 = vpop.xlane.xlu0 %1856
  %v1858 = vsel %vm1827, %v363, 0.0
  %1859 = vadd.xlane.f32.xlu0 %v1858
  %v1860 = vpop.xlane.xlu0 %1859
  %v1861 = vsel %vm1827, %v366, 0.0
  %1862 = vadd.xlane.f32.xlu0 %v1861
  %v1863 = vpop.xlane.xlu0 %1862
  %v1864 = vsel %vm1827, %v371, 0.0
  %1865 = vadd.xlane.f32.xlu0 %v1864
  %v1866 = vpop.xlane.xlu0 %1865
  %v1867 = vsel %vm1827, %v374, 0.0
  %1868 = vadd.xlane.f32.xlu0 %v1867
  %v1869 = vpop.xlane.xlu0 %1868
  %v1870 = vsel %vm1827, %v379, 0.0
  %1871 = vadd.xlane.f32.xlu0 %v1870
  %v1872 = vpop.xlane.xlu0 %1871
  %v1873 = vsel %vm1827, %v382, 0.0
  %1874 = vadd.xlane.f32.xlu0 %v1873
  %v1875 = vpop.xlane.xlu0 %1874
  %v1876 = vsel %vm1827, %v458, 0.0
  %1877 = vadd.xlane.f32.xlu0 %v1876
  %v1878 = vpop.xlane.xlu0 %1877
  %v1879 = vsel %vm1827, %v461, 0.0
  %1880 = vadd.xlane.f32.xlu0 %v1879
  %v1881 = vpop.xlane.xlu0 %1880
  %v1882 = vsel %vm1827, %v466, 0.0
  %1883 = vadd.xlane.f32.xlu0 %v1882
  %v1884 = vpop.xlane.xlu0 %1883
  %v1885 = vsel %vm1827, %v469, 0.0
  %1886 = vadd.xlane.f32.xlu0 %v1885
  %v1887 = vpop.xlane.xlu0 %1886
  %v1888 = vsel %vm1827, %v474, 0.0
  %1889 = vadd.xlane.f32.xlu0 %v1888
  %v1890 = vpop.xlane.xlu0 %1889
  %v1891 = vsel %vm1827, %v477, 0.0
  %1892 = vadd.xlane.f32.xlu0 %v1891
  %v1893 = vpop.xlane.xlu0 %1892
  %v1894 = vsel %vm1827, %v482, 0.0
  %1895 = vadd.xlane.f32.xlu0 %v1894
  %v1896 = vpop.xlane.xlu0 %1895
  %v1897 = vsel %vm1827, %v485, 0.0
  %1898 = vadd.xlane.f32.xlu0 %v1897
  %v1899 = vpop.xlane.xlu0 %1898
  %v1900 = vsel %vm1827, %v561, 0.0
  %1901 = vadd.xlane.f32.xlu0 %v1900
  %v1902 = vpop.xlane.xlu0 %1901
  %v1903 = vsel %vm1827, %v564, 0.0
  %1904 = vadd.xlane.f32.xlu0 %v1903
  %v1905 = vpop.xlane.xlu0 %1904
  %v1906 = vsel %vm1827, %v569, 0.0
  %1907 = vadd.xlane.f32.xlu0 %v1906
  %v1908 = vpop.xlane.xlu0 %1907
  %v1909 = vsel %vm1827, %v572, 0.0
  %1910 = vadd.xlane.f32.xlu0 %v1909
  %v1911 = vpop.xlane.xlu0 %1910
  %v1912 = vsel %vm1827, %v577, 0.0
  %1913 = vadd.xlane.f32.xlu0 %v1912
  %v1914 = vpop.xlane.xlu0 %1913
  %v1915 = vsel %vm1827, %v580, 0.0
  %1916 = vadd.xlane.f32.xlu0 %v1915
  %v1917 = vpop.xlane.xlu0 %1916
  %v1918 = vsel %vm1827, %v585, 0.0
  %1919 = vadd.xlane.f32.xlu0 %v1918
  %v1920 = vpop.xlane.xlu0 %1919
  %v1921 = vsel %vm1827, %v588, 0.0
  %1922 = vadd.xlane.f32.xlu0 %v1921
  %v1923 = vpop.xlane.xlu0 %1922
  %v1924 = vsel %vm1827, %v664, 0.0
  %1925 = vadd.xlane.f32.xlu0 %v1924
  %v1926 = vpop.xlane.xlu0 %1925
  %v1927 = vsel %vm1827, %v667, 0.0
  %1928 = vadd.xlane.f32.xlu0 %v1927
  %v1929 = vpop.xlane.xlu0 %1928
  %v1930 = vsel %vm1827, %v672, 0.0
  %1931 = vadd.xlane.f32.xlu0 %v1930
  %v1932 = vpop.xlane.xlu0 %1931
  %v1933 = vsel %vm1827, %v675, 0.0
  %1934 = vadd.xlane.f32.xlu0 %v1933
  %v1935 = vpop.xlane.xlu0 %1934
  %v1936 = vsel %vm1827, %v680, 0.0
  %1937 = vadd.xlane.f32.xlu0 %v1936
  %v1938 = vpop.xlane.xlu0 %1937
  %v1939 = vsel %vm1827, %v683, 0.0
  %1940 = vadd.xlane.f32.xlu0 %v1939
  %v1941 = vpop.xlane.xlu0 %1940
  %v1942 = vsel %vm1827, %v688, 0.0
  %1943 = vadd.xlane.f32.xlu0 %v1942
  %v1944 = vpop.xlane.xlu0 %1943
  %v1945 = vsel %vm1827, %v691, 0.0
  %1946 = vadd.xlane.f32.xlu0 %v1945
  %v1947 = vpop.xlane.xlu0 %1946
  %v1948 = vsel %vm1827, %v767, 0.0
  %1949 = vadd.xlane.f32.xlu0 %v1948
  %v1950 = vpop.xlane.xlu0 %1949
  %v1951 = vsel %vm1827, %v770, 0.0
  %1952 = vadd.xlane.f32.xlu0 %v1951
  %v1953 = vpop.xlane.xlu0 %1952
  %v1954 = vsel %vm1827, %v775, 0.0
  %1955 = vadd.xlane.f32.xlu0 %v1954
  %v1956 = vpop.xlane.xlu0 %1955
  %v1957 = vsel %vm1827, %v778, 0.0
  %1958 = vadd.xlane.f32.xlu0 %v1957
  %v1959 = vpop.xlane.xlu0 %1958
  %v1960 = vsel %vm1827, %v783, 0.0
  %1961 = vadd.xlane.f32.xlu0 %v1960
  %v1962 = vpop.xlane.xlu0 %1961
  %v1963 = vsel %vm1827, %v786, 0.0
  %1964 = vadd.xlane.f32.xlu0 %v1963
  %v1965 = vpop.xlane.xlu0 %1964
  %v1966 = vsel %vm1827, %v791, 0.0
  %1967 = vadd.xlane.f32.xlu0 %v1966
  %v1968 = vpop.xlane.xlu0 %1967
  %v1969 = vsel %vm1827, %v794, 0.0
  %1970 = vadd.xlane.f32.xlu0 %v1969
  %v1971 = vpop.xlane.xlu0 %1970
  %v1972 = vsel %vm1827, %v870, 0.0
  %1973 = vadd.xlane.f32.xlu0 %v1972
  %v1974 = vpop.xlane.xlu0 %1973
  %v1975 = vsel %vm1827, %v873, 0.0
  %1976 = vadd.xlane.f32.xlu0 %v1975
  %v1977 = vpop.xlane.xlu0 %1976
  %v1978 = vsel %vm1827, %v878, 0.0
  %1979 = vadd.xlane.f32.xlu0 %v1978
  %v1980 = vpop.xlane.xlu0 %1979
  %v1981 = vsel %vm1827, %v881, 0.0
  %1982 = vadd.xlane.f32.xlu0 %v1981
  %v1983 = vpop.xlane.xlu0 %1982
  %v1984 = vsel %vm1827, %v886, 0.0
  %1985 = vadd.xlane.f32.xlu0 %v1984
  %v1986 = vpop.xlane.xlu0 %1985
  %v1987 = vsel %vm1827, %v889, 0.0
  %1988 = vadd.xlane.f32.xlu0 %v1987
  %v1989 = vpop.xlane.xlu0 %1988
  %v1990 = vsel %vm1827, %v894, 0.0
  %1991 = vadd.xlane.f32.xlu0 %v1990
  %v1992 = vpop.xlane.xlu0 %1991
  %v1993 = vsel %vm1827, %v897, 0.0
  %1994 = vadd.xlane.f32.xlu0 %v1993
  %v1995 = vpop.xlane.xlu0 %1994
  %v1996 = vsel %vm1827, %v973, 0.0
  %1997 = vadd.xlane.f32.xlu0 %v1996
  %v1998 = vpop.xlane.xlu0 %1997
  %v1999 = vsel %vm1827, %v976, 0.0
  %2000 = vadd.xlane.f32.xlu0 %v1999
  %v2001 = vpop.xlane.xlu0 %2000
  %v2002 = vsel %vm1827, %v981, 0.0
  %2003 = vadd.xlane.f32.xlu0 %v2002
  %v2004 = vpop.xlane.xlu0 %2003
  %v2005 = vsel %vm1827, %v984, 0.0
  %2006 = vadd.xlane.f32.xlu0 %v2005
  %v2007 = vpop.xlane.xlu0 %2006
  %v2008 = vsel %vm1827, %v989, 0.0
  %2009 = vadd.xlane.f32.xlu0 %v2008
  %v2010 = vpop.xlane.xlu0 %2009
  %v2011 = vsel %vm1827, %v992, 0.0
  %2012 = vadd.xlane.f32.xlu0 %v2011
  %v2013 = vpop.xlane.xlu0 %2012
  %v2014 = vsel %vm1827, %v997, 0.0
  %2015 = vadd.xlane.f32.xlu0 %v2014
  %v2016 = vpop.xlane.xlu0 %2015
  %v2017 = vsel %vm1827, %v1000, 0.0
  %2018 = vadd.xlane.f32.xlu0 %v2017
  %v2019 = vpop.xlane.xlu0 %2018
  %v2020 = vsel %vm1827, %v1076, 0.0
  %2021 = vadd.xlane.f32.xlu0 %v2020
  %v2022 = vpop.xlane.xlu0 %2021
  %v2023 = vsel %vm1827, %v1079, 0.0
  %2024 = vadd.xlane.f32.xlu0 %v2023
  %v2025 = vpop.xlane.xlu0 %2024
  %v2026 = vsel %vm1827, %v1084, 0.0
  %2027 = vadd.xlane.f32.xlu0 %v2026
  %v2028 = vpop.xlane.xlu0 %2027
  %v2029 = vsel %vm1827, %v1087, 0.0
  %2030 = vadd.xlane.f32.xlu0 %v2029
  %v2031 = vpop.xlane.xlu0 %2030
  %v2032 = vsel %vm1827, %v1092, 0.0
  %2033 = vadd.xlane.f32.xlu0 %v2032
  %v2034 = vpop.xlane.xlu0 %2033
  %v2035 = vsel %vm1827, %v1095, 0.0
  %2036 = vadd.xlane.f32.xlu0 %v2035
  %v2037 = vpop.xlane.xlu0 %2036
  %v2038 = vsel %vm1827, %v1100, 0.0
  %2039 = vadd.xlane.f32.xlu0 %v2038
  %v2040 = vpop.xlane.xlu0 %2039
  %v2041 = vsel %vm1827, %v1103, 0.0
  %2042 = vadd.xlane.f32.xlu0 %v2041
  %v2043 = vpop.xlane.xlu0 %2042
  %v2044 = vsel %vm1827, %v1179, 0.0
  %2045 = vadd.xlane.f32.xlu0 %v2044
  %v2046 = vpop.xlane.xlu0 %2045
  %v2047 = vsel %vm1827, %v1182, 0.0
  %2048 = vadd.xlane.f32.xlu0 %v2047
  %v2049 = vpop.xlane.xlu0 %2048
  %v2050 = vsel %vm1827, %v1187, 0.0
  %2051 = vadd.xlane.f32.xlu0 %v2050
  %v2052 = vpop.xlane.xlu0 %2051
  %v2053 = vsel %vm1827, %v1190, 0.0
  %2054 = vadd.xlane.f32.xlu0 %v2053
  %v2055 = vpop.xlane.xlu0 %2054
  %v2056 = vsel %vm1827, %v1195, 0.0
  %2057 = vadd.xlane.f32.xlu0 %v2056
  %v2058 = vpop.xlane.xlu0 %2057
  %v2059 = vsel %vm1827, %v1198, 0.0
  %2060 = vadd.xlane.f32.xlu0 %v2059
  %v2061 = vpop.xlane.xlu0 %2060
  %v2062 = vsel %vm1827, %v1203, 0.0
  %2063 = vadd.xlane.f32.xlu0 %v2062
  %v2064 = vpop.xlane.xlu0 %2063
  %v2065 = vsel %vm1827, %v1206, 0.0
  %2066 = vadd.xlane.f32.xlu0 %v2065
  %v2067 = vpop.xlane.xlu0 %2066
  %v2068 = vsel %vm1827, %v1282, 0.0
  %2069 = vadd.xlane.f32.xlu0 %v2068
  %v2070 = vpop.xlane.xlu0 %2069
  %v2071 = vsel %vm1827, %v1285, 0.0
  %2072 = vadd.xlane.f32.xlu0 %v2071
  %v2073 = vpop.xlane.xlu0 %2072
  %v2074 = vsel %vm1827, %v1290, 0.0
  %2075 = vadd.xlane.f32.xlu0 %v2074
  %v2076 = vpop.xlane.xlu0 %2075
  %v2077 = vsel %vm1827, %v1293, 0.0
  %2078 = vadd.xlane.f32.xlu0 %v2077
  %v2079 = vpop.xlane.xlu0 %2078
  %v2080 = vsel %vm1827, %v1298, 0.0
  %2081 = vadd.xlane.f32.xlu0 %v2080
  %v2082 = vpop.xlane.xlu0 %2081
  %v2083 = vsel %vm1827, %v1301, 0.0
  %2084 = vadd.xlane.f32.xlu0 %v2083
  %v2085 = vpop.xlane.xlu0 %2084
  %v2086 = vsel %vm1827, %v1306, 0.0
  %2087 = vadd.xlane.f32.xlu0 %v2086
  %v2088 = vpop.xlane.xlu0 %2087
  %v2089 = vsel %vm1827, %v1309, 0.0
  %2090 = vadd.xlane.f32.xlu0 %v2089
  %v2091 = vpop.xlane.xlu0 %2090
  %v2092 = vsel %vm1827, %v1385, 0.0
  %2093 = vadd.xlane.f32.xlu0 %v2092
  %v2094 = vpop.xlane.xlu0 %2093
  %v2095 = vsel %vm1827, %v1388, 0.0
  %2096 = vadd.xlane.f32.xlu0 %v2095
  %v2097 = vpop.xlane.xlu0 %2096
  %v2098 = vsel %vm1827, %v1393, 0.0
  %2099 = vadd.xlane.f32.xlu0 %v2098
  %v2100 = vpop.xlane.xlu0 %2099
  %v2101 = vsel %vm1827, %v1396, 0.0
  %2102 = vadd.xlane.f32.xlu0 %v2101
  %v2103 = vpop.xlane.xlu0 %2102
  %v2104 = vsel %vm1827, %v1401, 0.0
  %2105 = vadd.xlane.f32.xlu0 %v2104
  %v2106 = vpop.xlane.xlu0 %2105
  %v2107 = vsel %vm1827, %v1404, 0.0
  %2108 = vadd.xlane.f32.xlu0 %v2107
  %v2109 = vpop.xlane.xlu0 %2108
  %v2110 = vsel %vm1827, %v1409, 0.0
  %2111 = vadd.xlane.f32.xlu0 %v2110
  %v2112 = vpop.xlane.xlu0 %2111
  %v2113 = vsel %vm1827, %v1412, 0.0
  %2114 = vadd.xlane.f32.xlu0 %v2113
  %v2115 = vpop.xlane.xlu0 %2114
  %v2116 = vsel %vm1827, %v1488, 0.0
  %2117 = vadd.xlane.f32.xlu0 %v2116
  %v2118 = vpop.xlane.xlu0 %2117
  %v2119 = vsel %vm1827, %v1491, 0.0
  %2120 = vadd.xlane.f32.xlu0 %v2119
  %v2121 = vpop.xlane.xlu0 %2120
  %v2122 = vsel %vm1827, %v1496, 0.0
  %2123 = vadd.xlane.f32.xlu0 %v2122
  %v2124 = vpop.xlane.xlu0 %2123
  %v2125 = vsel %vm1827, %v1499, 0.0
  %2126 = vadd.xlane.f32.xlu0 %v2125
  %v2127 = vpop.xlane.xlu0 %2126
  %v2128 = vsel %vm1827, %v1504, 0.0
  %2129 = vadd.xlane.f32.xlu0 %v2128
  %v2130 = vpop.xlane.xlu0 %2129
  %v2131 = vsel %vm1827, %v1507, 0.0
  %2132 = vadd.xlane.f32.xlu0 %v2131
  %v2133 = vpop.xlane.xlu0 %2132
  %v2134 = vsel %vm1827, %v1512, 0.0
  %2135 = vadd.xlane.f32.xlu0 %v2134
  %v2136 = vpop.xlane.xlu0 %2135
  %v2137 = vsel %vm1827, %v1515, 0.0
  %2138 = vadd.xlane.f32.xlu0 %v2137
  %v2139 = vpop.xlane.xlu0 %2138
  %v2140 = vsel %vm1827, %v1591, 0.0
  %2141 = vadd.xlane.f32.xlu0 %v2140
  %v2142 = vpop.xlane.xlu0 %2141
  %v2143 = vsel %vm1827, %v1594, 0.0
  %2144 = vadd.xlane.f32.xlu0 %v2143
  %v2145 = vpop.xlane.xlu0 %2144
  %v2146 = vsel %vm1827, %v1599, 0.0
  %2147 = vadd.xlane.f32.xlu0 %v2146
  %v2148 = vpop.xlane.xlu0 %2147
  %v2149 = vsel %vm1827, %v1602, 0.0
  %2150 = vadd.xlane.f32.xlu0 %v2149
  %v2151 = vpop.xlane.xlu0 %2150
  %v2152 = vsel %vm1827, %v1607, 0.0
  %2153 = vadd.xlane.f32.xlu0 %v2152
  %v2154 = vpop.xlane.xlu0 %2153
  %v2155 = vsel %vm1827, %v1610, 0.0
  %2156 = vadd.xlane.f32.xlu0 %v2155
  %v2157 = vpop.xlane.xlu0 %2156
  %v2158 = vsel %vm1827, %v1615, 0.0
  %2159 = vadd.xlane.f32.xlu0 %v2158
  %v2160 = vpop.xlane.xlu0 %2159
  %v2161 = vsel %vm1827, %v1618, 0.0
  %2162 = vadd.xlane.f32.xlu0 %v2161
  %v2163 = vpop.xlane.xlu0 %2162
  %v2164 = vsel %vm1827, %v1694, 0.0
  %2165 = vadd.xlane.f32.xlu0 %v2164
  %v2166 = vpop.xlane.xlu0 %2165
  %v2167 = vsel %vm1827, %v1697, 0.0
  %2168 = vadd.xlane.f32.xlu0 %v2167
  %v2169 = vpop.xlane.xlu0 %2168
  %v2170 = vsel %vm1827, %v1702, 0.0
  %2171 = vadd.xlane.f32.xlu0 %v2170
  %v2172 = vpop.xlane.xlu0 %2171
  %v2173 = vsel %vm1827, %v1705, 0.0
  %2174 = vadd.xlane.f32.xlu0 %v2173
  %v2175 = vpop.xlane.xlu0 %2174
  %v2176 = vsel %vm1827, %v1710, 0.0
  %2177 = vadd.xlane.f32.xlu0 %v2176
  %v2178 = vpop.xlane.xlu0 %2177
  %v2179 = vsel %vm1827, %v1713, 0.0
  %2180 = vadd.xlane.f32.xlu0 %v2179
  %v2181 = vpop.xlane.xlu0 %2180
  %v2182 = vsel %vm1827, %v1718, 0.0
  %2183 = vadd.xlane.f32.xlu0 %v2182
  %v2184 = vpop.xlane.xlu0 %2183
  %v2185 = vsel %vm1827, %v1721, 0.0
  %2186 = vadd.xlane.f32.xlu0 %v2185
  %v2187 = vpop.xlane.xlu0 %2186
  %v2188 = vsel %vm1827, %v1797, 0.0
  %2189 = vadd.xlane.f32.xlu0 %v2188
  %v2190 = vpop.xlane.xlu0 %2189
  %v2191 = vsel %vm1827, %v1800, 0.0
  %2192 = vadd.xlane.f32.xlu0 %v2191
  %v2193 = vpop.xlane.xlu0 %2192
  %v2194 = vsel %vm1827, %v1805, 0.0
  %2195 = vadd.xlane.f32.xlu0 %v2194
  %v2196 = vpop.xlane.xlu0 %2195
  %v2197 = vsel %vm1827, %v1808, 0.0
  %2198 = vadd.xlane.f32.xlu0 %v2197
  %v2199 = vpop.xlane.xlu0 %2198
  %v2200 = vsel %vm1827, %v1813, 0.0
  %2201 = vadd.xlane.f32.xlu0 %v2200
  %v2202 = vpop.xlane.xlu0 %2201
  %v2203 = vsel %vm1827, %v1816, 0.0
  %2204 = vadd.xlane.f32.xlu0 %v2203
  %v2205 = vpop.xlane.xlu0 %2204
  %v2206 = vsel %vm1827, %v1821, 0.0
  %2207 = vadd.xlane.f32.xlu0 %v2206
  %v2208 = vpop.xlane.xlu0 %2207
  %v2209 = vsel %vm1827, %v1824, 0.0
  %2210 = vadd.xlane.f32.xlu0 %v2209
  %v2211 = vpop.xlane.xlu0 %2210
  %v2212 = vadd.f32 %v1830, %v1854
  %v2213 = vadd.f32 %v2212, %v1878
  %v2214 = vadd.f32 %v2213, %v1902
  %v2215 = vadd.f32 %v2214, %v1926
  %v2216 = vadd.f32 %v2215, %v1950
  %v2217 = vadd.f32 %v2216, %v1974
  %v2218 = vadd.f32 %v2217, %v1998
  %v2219 = vadd.f32 %v2218, %v2022
  %v2220 = vadd.f32 %v2219, %v2046
  %v2221 = vadd.f32 %v2220, %v2070
  %v2222 = vadd.f32 %v2221, %v2094
  %v2223 = vadd.f32 %v2222, %v2118
  %v2224 = vadd.f32 %v2223, %v2142
  %v2225 = vadd.f32 %v2224, %v2166
  %v2226 = vadd.f32 %v2225, %v2190
  %v2227 = vadd.f32 %v1833, %v1857
  %v2228 = vadd.f32 %v2227, %v1881
  %v2229 = vadd.f32 %v2228, %v1905
  %v2230 = vadd.f32 %v2229, %v1929
  %v2231 = vadd.f32 %v2230, %v1953
  %v2232 = vadd.f32 %v2231, %v1977
  %v2233 = vadd.f32 %v2232, %v2001
  %v2234 = vadd.f32 %v2233, %v2025
  %v2235 = vadd.f32 %v2234, %v2049
  %v2236 = vadd.f32 %v2235, %v2073
  %v2237 = vadd.f32 %v2236, %v2097
  %v2238 = vadd.f32 %v2237, %v2121
  %v2239 = vadd.f32 %v2238, %v2145
  %v2240 = vadd.f32 %v2239, %v2169
  %v2241 = vadd.f32 %v2240, %v2193
  %v2242 = vadd.f32 %v1836, %v1860
  %v2243 = vadd.f32 %v2242, %v1884
  %v2244 = vadd.f32 %v2243, %v1908
  %v2245 = vadd.f32 %v2244, %v1932
  %v2246 = vadd.f32 %v2245, %v1956
  %v2247 = vadd.f32 %v2246, %v1980
  %v2248 = vadd.f32 %v2247, %v2004
  %v2249 = vadd.f32 %v2248, %v2028
  %v2250 = vadd.f32 %v2249, %v2052
  %v2251 = vadd.f32 %v2250, %v2076
  %v2252 = vadd.f32 %v2251, %v2100
  %v2253 = vadd.f32 %v2252, %v2124
  %v2254 = vadd.f32 %v2253, %v2148
  %v2255 = vadd.f32 %v2254, %v2172
  %v2256 = vadd.f32 %v2255, %v2196
  %v2257 = vadd.f32 %v1839, %v1863
  %v2258 = vadd.f32 %v2257, %v1887
  %v2259 = vadd.f32 %v2258, %v1911
  %v2260 = vadd.f32 %v2259, %v1935
  %v2261 = vadd.f32 %v2260, %v1959
  %v2262 = vadd.f32 %v2261, %v1983
  %v2263 = vadd.f32 %v2262, %v2007
  %v2264 = vadd.f32 %v2263, %v2031
  %v2265 = vadd.f32 %v2264, %v2055
  %v2266 = vadd.f32 %v2265, %v2079
  %v2267 = vadd.f32 %v2266, %v2103
  %v2268 = vadd.f32 %v2267, %v2127
  %v2269 = vadd.f32 %v2268, %v2151
  %v2270 = vadd.f32 %v2269, %v2175
  %v2271 = vadd.f32 %v2270, %v2199
  %v2272 = vadd.f32 %v1842, %v1866
  %v2273 = vadd.f32 %v2272, %v1890
  %v2274 = vadd.f32 %v2273, %v1914
  %v2275 = vadd.f32 %v2274, %v1938
  %v2276 = vadd.f32 %v2275, %v1962
  %v2277 = vadd.f32 %v2276, %v1986
  %v2278 = vadd.f32 %v2277, %v2010
  %v2279 = vadd.f32 %v2278, %v2034
  %v2280 = vadd.f32 %v2279, %v2058
  %v2281 = vadd.f32 %v2280, %v2082
  %v2282 = vadd.f32 %v2281, %v2106
  %v2283 = vadd.f32 %v2282, %v2130
  %v2284 = vadd.f32 %v2283, %v2154
  %v2285 = vadd.f32 %v2284, %v2178
  %v2286 = vadd.f32 %v2285, %v2202
  %v2287 = vadd.f32 %v1845, %v1869
  %v2288 = vadd.f32 %v2287, %v1893
  %v2289 = vadd.f32 %v2288, %v1917
  %v2290 = vadd.f32 %v2289, %v1941
  %v2291 = vadd.f32 %v2290, %v1965
  %v2292 = vadd.f32 %v2291, %v1989
  %v2293 = vadd.f32 %v2292, %v2013
  %v2294 = vadd.f32 %v2293, %v2037
  %v2295 = vadd.f32 %v2294, %v2061
  %v2296 = vadd.f32 %v2295, %v2085
  %v2297 = vadd.f32 %v2296, %v2109
  %v2298 = vadd.f32 %v2297, %v2133
  %v2299 = vadd.f32 %v2298, %v2157
  %v2300 = vadd.f32 %v2299, %v2181
  %v2301 = vadd.f32 %v2300, %v2205
  %v2302 = vadd.f32 %v1848, %v1872
  %v2303 = vadd.f32 %v2302, %v1896
  %v2304 = vadd.f32 %v2303, %v1920
  %v2305 = vadd.f32 %v2304, %v1944
  %v2306 = vadd.f32 %v2305, %v1968
  %v2307 = vadd.f32 %v2306, %v1992
  %v2308 = vadd.f32 %v2307, %v2016
  %v2309 = vadd.f32 %v2308, %v2040
  %v2310 = vadd.f32 %v2309, %v2064
  %v2311 = vadd.f32 %v2310, %v2088
  %v2312 = vadd.f32 %v2311, %v2112
  %v2313 = vadd.f32 %v2312, %v2136
  %v2314 = vadd.f32 %v2313, %v2160
  %v2315 = vadd.f32 %v2314, %v2184
  %v2316 = vadd.f32 %v2315, %v2208
  %v2317 = vadd.f32 %v1851, %v1875
  %v2318 = vadd.f32 %v2317, %v1899
  %v2319 = vadd.f32 %v2318, %v1923
  %v2320 = vadd.f32 %v2319, %v1947
  %v2321 = vadd.f32 %v2320, %v1971
  %v2322 = vadd.f32 %v2321, %v1995
  %v2323 = vadd.f32 %v2322, %v2019
  %v2324 = vadd.f32 %v2323, %v2043
  %v2325 = vadd.f32 %v2324, %v2067
  %v2326 = vadd.f32 %v2325, %v2091
  %v2327 = vadd.f32 %v2326, %v2115
  %v2328 = vadd.f32 %v2327, %v2139
  %v2329 = vadd.f32 %v2328, %v2163
  %v2330 = vadd.f32 %v2329, %v2187
  %v2331 = vadd.f32 %v2330, %v2211
  %v2332 = vrcp.pop 32.0
  %v2333 = vmul.f32 %v2226, %v2332
  %v2334 = vmul.f32 %v2241, %v2332
  %v2335 = vmul.f32 %v2256, %v2332
  %v2336 = vmul.f32 %v2271, %v2332
  %v2337 = vmul.f32 %v2286, %v2332
  %v2338 = vmul.f32 %v2301, %v2332
  %v2339 = vmul.f32 %v2316, %v2332
  %v2340 = vmul.f32 %v2331, %v2332
  %v2341 = vsub.f32 %v252, %v2333
  %v2342 = vsub.f32 %v255, %v2334
  %v2343 = vsub.f32 %v260, %v2335
  %v2344 = vsub.f32 %v263, %v2336
  %v2345 = vsub.f32 %v268, %v2337
  %v2346 = vsub.f32 %v271, %v2338
  %v2347 = vsub.f32 %v276, %v2339
  %v2348 = vsub.f32 %v279, %v2340
  %v2349 = vsub.f32 %v355, %v2333
  %v2350 = vsub.f32 %v358, %v2334
  %v2351 = vsub.f32 %v363, %v2335
  %v2352 = vsub.f32 %v366, %v2336
  %v2353 = vsub.f32 %v371, %v2337
  %v2354 = vsub.f32 %v374, %v2338
  %v2355 = vsub.f32 %v379, %v2339
  %v2356 = vsub.f32 %v382, %v2340
  %v2357 = vsub.f32 %v458, %v2333
  %v2358 = vsub.f32 %v461, %v2334
  %v2359 = vsub.f32 %v466, %v2335
  %v2360 = vsub.f32 %v469, %v2336
  %v2361 = vsub.f32 %v474, %v2337
  %v2362 = vsub.f32 %v477, %v2338
  %v2363 = vsub.f32 %v482, %v2339
  %v2364 = vsub.f32 %v485, %v2340
  %v2365 = vsub.f32 %v561, %v2333
  %v2366 = vsub.f32 %v564, %v2334
  %v2367 = vsub.f32 %v569, %v2335
  %v2368 = vsub.f32 %v572, %v2336
  %v2369 = vsub.f32 %v577, %v2337
  %v2370 = vsub.f32 %v580, %v2338
  %v2371 = vsub.f32 %v585, %v2339
  %v2372 = vsub.f32 %v588, %v2340
  %v2373 = vsub.f32 %v664, %v2333
  %v2374 = vsub.f32 %v667, %v2334
  %v2375 = vsub.f32 %v672, %v2335
  %v2376 = vsub.f32 %v675, %v2336
  %v2377 = vsub.f32 %v680, %v2337
  %v2378 = vsub.f32 %v683, %v2338
  %v2379 = vsub.f32 %v688, %v2339
  %v2380 = vsub.f32 %v691, %v2340
  %v2381 = vsub.f32 %v767, %v2333
  %v2382 = vsub.f32 %v770, %v2334
  %v2383 = vsub.f32 %v775, %v2335
  %v2384 = vsub.f32 %v778, %v2336
  %v2385 = vsub.f32 %v783, %v2337
  %v2386 = vsub.f32 %v786, %v2338
  %v2387 = vsub.f32 %v791, %v2339
  %v2388 = vsub.f32 %v794, %v2340
  %v2389 = vsub.f32 %v870, %v2333
  %v2390 = vsub.f32 %v873, %v2334
  %v2391 = vsub.f32 %v878, %v2335
  %v2392 = vsub.f32 %v881, %v2336
  %v2393 = vsub.f32 %v886, %v2337
  %v2394 = vsub.f32 %v889, %v2338
  %v2395 = vsub.f32 %v894, %v2339
  %v2396 = vsub.f32 %v897, %v2340
  %v2397 = vsub.f32 %v973, %v2333
  %v2398 = vsub.f32 %v976, %v2334
  %v2399 = vsub.f32 %v981, %v2335
  %v2400 = vsub.f32 %v984, %v2336
  %v2401 = vsub.f32 %v989, %v2337
  %v2402 = vsub.f32 %v992, %v2338
  %v2403 = vsub.f32 %v997, %v2339
  %v2404 = vsub.f32 %v1000, %v2340
  %v2405 = vsub.f32 %v1076, %v2333
  %v2406 = vsub.f32 %v1079, %v2334
  %v2407 = vsub.f32 %v1084, %v2335
  %v2408 = vsub.f32 %v1087, %v2336
  %v2409 = vsub.f32 %v1092, %v2337
  %v2410 = vsub.f32 %v1095, %v2338
  %v2411 = vsub.f32 %v1100, %v2339
  %v2412 = vsub.f32 %v1103, %v2340
  %v2413 = vsub.f32 %v1179, %v2333
  %v2414 = vsub.f32 %v1182, %v2334
  %v2415 = vsub.f32 %v1187, %v2335
  %v2416 = vsub.f32 %v1190, %v2336
  %v2417 = vsub.f32 %v1195, %v2337
  %v2418 = vsub.f32 %v1198, %v2338
  %v2419 = vsub.f32 %v1203, %v2339
  %v2420 = vsub.f32 %v1206, %v2340
  %v2421 = vsub.f32 %v1282, %v2333
  %v2422 = vsub.f32 %v1285, %v2334
  %v2423 = vsub.f32 %v1290, %v2335
  %v2424 = vsub.f32 %v1293, %v2336
  %v2425 = vsub.f32 %v1298, %v2337
  %v2426 = vsub.f32 %v1301, %v2338
  %v2427 = vsub.f32 %v1306, %v2339
  %v2428 = vsub.f32 %v1309, %v2340
  %v2429 = vsub.f32 %v1385, %v2333
  %v2430 = vsub.f32 %v1388, %v2334
  %v2431 = vsub.f32 %v1393, %v2335
  %v2432 = vsub.f32 %v1396, %v2336
  %v2433 = vsub.f32 %v1401, %v2337
  %v2434 = vsub.f32 %v1404, %v2338
  %v2435 = vsub.f32 %v1409, %v2339
  %v2436 = vsub.f32 %v1412, %v2340
  %v2437 = vsub.f32 %v1488, %v2333
  %v2438 = vsub.f32 %v1491, %v2334
  %v2439 = vsub.f32 %v1496, %v2335
  %v2440 = vsub.f32 %v1499, %v2336
  %v2441 = vsub.f32 %v1504, %v2337
  %v2442 = vsub.f32 %v1507, %v2338
  %v2443 = vsub.f32 %v1512, %v2339
  %v2444 = vsub.f32 %v1515, %v2340
  %v2445 = vsub.f32 %v1591, %v2333
  %v2446 = vsub.f32 %v1594, %v2334
  %v2447 = vsub.f32 %v1599, %v2335
  %v2448 = vsub.f32 %v1602, %v2336
  %v2449 = vsub.f32 %v1607, %v2337
  %v2450 = vsub.f32 %v1610, %v2338
  %v2451 = vsub.f32 %v1615, %v2339
  %v2452 = vsub.f32 %v1618, %v2340
  %v2453 = vsub.f32 %v1694, %v2333
  %v2454 = vsub.f32 %v1697, %v2334
  %v2455 = vsub.f32 %v1702, %v2335
  %v2456 = vsub.f32 %v1705, %v2336
  %v2457 = vsub.f32 %v1710, %v2337
  %v2458 = vsub.f32 %v1713, %v2338
  %v2459 = vsub.f32 %v1718, %v2339
  %v2460 = vsub.f32 %v1721, %v2340
  %v2461 = vsub.f32 %v1797, %v2333
  %v2462 = vsub.f32 %v1800, %v2334
  %v2463 = vsub.f32 %v1805, %v2335
  %v2464 = vsub.f32 %v1808, %v2336
  %v2465 = vsub.f32 %v1813, %v2337
  %v2466 = vsub.f32 %v1816, %v2338
  %v2467 = vsub.f32 %v1821, %v2339
  %v2468 = vsub.f32 %v1824, %v2340
  %v2469 = vmul.f32 %v2341, %v2341
  %v2470 = vmul.f32 %v2342, %v2342
  %v2471 = vmul.f32 %v2343, %v2343
  %v2472 = vmul.f32 %v2344, %v2344
  %v2473 = vmul.f32 %v2345, %v2345
  %v2474 = vmul.f32 %v2346, %v2346
  %v2475 = vmul.f32 %v2347, %v2347
  %v2476 = vmul.f32 %v2348, %v2348
  %v2477 = vmul.f32 %v2349, %v2349
  %v2478 = vmul.f32 %v2350, %v2350
  %v2479 = vmul.f32 %v2351, %v2351
  %v2480 = vmul.f32 %v2352, %v2352
  %v2481 = vmul.f32 %v2353, %v2353
  %v2482 = vmul.f32 %v2354, %v2354
  %v2483 = vmul.f32 %v2355, %v2355
  %v2484 = vmul.f32 %v2356, %v2356
  %v2485 = vmul.f32 %v2357, %v2357
  %v2486 = vmul.f32 %v2358, %v2358
  %v2487 = vmul.f32 %v2359, %v2359
  %v2488 = vmul.f32 %v2360, %v2360
  %v2489 = vmul.f32 %v2361, %v2361
  %v2490 = vmul.f32 %v2362, %v2362
  %v2491 = vmul.f32 %v2363, %v2363
  %v2492 = vmul.f32 %v2364, %v2364
  %v2493 = vmul.f32 %v2365, %v2365
  %v2494 = vmul.f32 %v2366, %v2366
  %v2495 = vmul.f32 %v2367, %v2367
  %v2496 = vmul.f32 %v2368, %v2368
  %v2497 = vmul.f32 %v2369, %v2369
  %v2498 = vmul.f32 %v2370, %v2370
  %v2499 = vmul.f32 %v2371, %v2371
  %v2500 = vmul.f32 %v2372, %v2372
  %v2501 = vmul.f32 %v2373, %v2373
  %v2502 = vmul.f32 %v2374, %v2374
  %v2503 = vmul.f32 %v2375, %v2375
  %v2504 = vmul.f32 %v2376, %v2376
  %v2505 = vmul.f32 %v2377, %v2377
  %v2506 = vmul.f32 %v2378, %v2378
  %v2507 = vmul.f32 %v2379, %v2379
  %v2508 = vmul.f32 %v2380, %v2380
  %v2509 = vmul.f32 %v2381, %v2381
  %v2510 = vmul.f32 %v2382, %v2382
  %v2511 = vmul.f32 %v2383, %v2383
  %v2512 = vmul.f32 %v2384, %v2384
  %v2513 = vmul.f32 %v2385, %v2385
  %v2514 = vmul.f32 %v2386, %v2386
  %v2515 = vmul.f32 %v2387, %v2387
  %v2516 = vmul.f32 %v2388, %v2388
  %v2517 = vmul.f32 %v2389, %v2389
  %v2518 = vmul.f32 %v2390, %v2390
  %v2519 = vmul.f32 %v2391, %v2391
  %v2520 = vmul.f32 %v2392, %v2392
  %v2521 = vmul.f32 %v2393, %v2393
  %v2522 = vmul.f32 %v2394, %v2394
  %v2523 = vmul.f32 %v2395, %v2395
  %v2524 = vmul.f32 %v2396, %v2396
  %v2525 = vmul.f32 %v2397, %v2397
  %v2526 = vmul.f32 %v2398, %v2398
  %v2527 = vmul.f32 %v2399, %v2399
  %v2528 = vmul.f32 %v2400, %v2400
  %v2529 = vmul.f32 %v2401, %v2401
  %v2530 = vmul.f32 %v2402, %v2402
  %v2531 = vmul.f32 %v2403, %v2403
  %v2532 = vmul.f32 %v2404, %v2404
  %v2533 = vmul.f32 %v2405, %v2405
  %v2534 = vmul.f32 %v2406, %v2406
  %v2535 = vmul.f32 %v2407, %v2407
  %v2536 = vmul.f32 %v2408, %v2408
  %v2537 = vmul.f32 %v2409, %v2409
  %v2538 = vmul.f32 %v2410, %v2410
  %v2539 = vmul.f32 %v2411, %v2411
  %v2540 = vmul.f32 %v2412, %v2412
  %v2541 = vmul.f32 %v2413, %v2413
  %v2542 = vmul.f32 %v2414, %v2414
  %v2543 = vmul.f32 %v2415, %v2415
  %v2544 = vmul.f32 %v2416, %v2416
  %v2545 = vmul.f32 %v2417, %v2417
  %v2546 = vmul.f32 %v2418, %v2418
  %v2547 = vmul.f32 %v2419, %v2419
  %v2548 = vmul.f32 %v2420, %v2420
  %v2549 = vmul.f32 %v2421, %v2421
  %v2550 = vmul.f32 %v2422, %v2422
  %v2551 = vmul.f32 %v2423, %v2423
  %v2552 = vmul.f32 %v2424, %v2424
  %v2553 = vmul.f32 %v2425, %v2425
  %v2554 = vmul.f32 %v2426, %v2426
  %v2555 = vmul.f32 %v2427, %v2427
  %v2556 = vmul.f32 %v2428, %v2428
  %v2557 = vmul.f32 %v2429, %v2429
  %v2558 = vmul.f32 %v2430, %v2430
  %v2559 = vmul.f32 %v2431, %v2431
  %v2560 = vmul.f32 %v2432, %v2432
  %v2561 = vmul.f32 %v2433, %v2433
  %v2562 = vmul.f32 %v2434, %v2434
  %v2563 = vmul.f32 %v2435, %v2435
  %v2564 = vmul.f32 %v2436, %v2436
  %v2565 = vmul.f32 %v2437, %v2437
  %v2566 = vmul.f32 %v2438, %v2438
  %v2567 = vmul.f32 %v2439, %v2439
  %v2568 = vmul.f32 %v2440, %v2440
  %v2569 = vmul.f32 %v2441, %v2441
  %v2570 = vmul.f32 %v2442, %v2442
  %v2571 = vmul.f32 %v2443, %v2443
  %v2572 = vmul.f32 %v2444, %v2444
  %v2573 = vmul.f32 %v2445, %v2445
  %v2574 = vmul.f32 %v2446, %v2446
  %v2575 = vmul.f32 %v2447, %v2447
  %v2576 = vmul.f32 %v2448, %v2448
  %v2577 = vmul.f32 %v2449, %v2449
  %v2578 = vmul.f32 %v2450, %v2450
  %v2579 = vmul.f32 %v2451, %v2451
  %v2580 = vmul.f32 %v2452, %v2452
  %v2581 = vmul.f32 %v2453, %v2453
  %v2582 = vmul.f32 %v2454, %v2454
  %v2583 = vmul.f32 %v2455, %v2455
  %v2584 = vmul.f32 %v2456, %v2456
  %v2585 = vmul.f32 %v2457, %v2457
  %v2586 = vmul.f32 %v2458, %v2458
  %v2587 = vmul.f32 %v2459, %v2459
  %v2588 = vmul.f32 %v2460, %v2460
  %v2589 = vmul.f32 %v2461, %v2461
  %v2590 = vmul.f32 %v2462, %v2462
  %v2591 = vmul.f32 %v2463, %v2463
  %v2592 = vmul.f32 %v2464, %v2464
  %v2593 = vmul.f32 %v2465, %v2465
  %v2594 = vmul.f32 %v2466, %v2466
  %v2595 = vmul.f32 %v2467, %v2467
  %v2596 = vmul.f32 %v2468, %v2468
  %v2597 = vsel %vm1827, %v2469, 0.0
  %2598 = vadd.xlane.f32.xlu0 %v2597
  %v2599 = vpop.xlane.xlu0 %2598
  %v2600 = vsel %vm1827, %v2470, 0.0
  %2601 = vadd.xlane.f32.xlu0 %v2600
  %v2602 = vpop.xlane.xlu0 %2601
  %v2603 = vsel %vm1827, %v2471, 0.0
  %2604 = vadd.xlane.f32.xlu0 %v2603
  %v2605 = vpop.xlane.xlu0 %2604
  %v2606 = vsel %vm1827, %v2472, 0.0
  %2607 = vadd.xlane.f32.xlu0 %v2606
  %v2608 = vpop.xlane.xlu0 %2607
  %v2609 = vsel %vm1827, %v2473, 0.0
  %2610 = vadd.xlane.f32.xlu0 %v2609
  %v2611 = vpop.xlane.xlu0 %2610
  %v2612 = vsel %vm1827, %v2474, 0.0
  %2613 = vadd.xlane.f32.xlu0 %v2612
  %v2614 = vpop.xlane.xlu0 %2613
  %v2615 = vsel %vm1827, %v2475, 0.0
  %2616 = vadd.xlane.f32.xlu0 %v2615
  %v2617 = vpop.xlane.xlu0 %2616
  %v2618 = vsel %vm1827, %v2476, 0.0
  %2619 = vadd.xlane.f32.xlu0 %v2618
  %v2620 = vpop.xlane.xlu0 %2619
  %v2621 = vsel %vm1827, %v2477, 0.0
  %2622 = vadd.xlane.f32.xlu0 %v2621
  %v2623 = vpop.xlane.xlu0 %2622
  %v2624 = vsel %vm1827, %v2478, 0.0
  %2625 = vadd.xlane.f32.xlu0 %v2624
  %v2626 = vpop.xlane.xlu0 %2625
  %v2627 = vsel %vm1827, %v2479, 0.0
  %2628 = vadd.xlane.f32.xlu0 %v2627
  %v2629 = vpop.xlane.xlu0 %2628
  %v2630 = vsel %vm1827, %v2480, 0.0
  %2631 = vadd.xlane.f32.xlu0 %v2630
  %v2632 = vpop.xlane.xlu0 %2631
  %v2633 = vsel %vm1827, %v2481, 0.0
  %2634 = vadd.xlane.f32.xlu0 %v2633
  %v2635 = vpop.xlane.xlu0 %2634
  %v2636 = vsel %vm1827, %v2482, 0.0
  %2637 = vadd.xlane.f32.xlu0 %v2636
  %v2638 = vpop.xlane.xlu0 %2637
  %v2639 = vsel %vm1827, %v2483, 0.0
  %2640 = vadd.xlane.f32.xlu0 %v2639
  %v2641 = vpop.xlane.xlu0 %2640
  %v2642 = vsel %vm1827, %v2484, 0.0
  %2643 = vadd.xlane.f32.xlu0 %v2642
  %v2644 = vpop.xlane.xlu0 %2643
  %v2645 = vsel %vm1827, %v2485, 0.0
  %2646 = vadd.xlane.f32.xlu0 %v2645
  %v2647 = vpop.xlane.xlu0 %2646
  %v2648 = vsel %vm1827, %v2486, 0.0
  %2649 = vadd.xlane.f32.xlu0 %v2648
  %v2650 = vpop.xlane.xlu0 %2649
  %v2651 = vsel %vm1827, %v2487, 0.0
  %2652 = vadd.xlane.f32.xlu0 %v2651
  %v2653 = vpop.xlane.xlu0 %2652
  %v2654 = vsel %vm1827, %v2488, 0.0
  %2655 = vadd.xlane.f32.xlu0 %v2654
  %v2656 = vpop.xlane.xlu0 %2655
  %v2657 = vsel %vm1827, %v2489, 0.0
  %2658 = vadd.xlane.f32.xlu0 %v2657
  %v2659 = vpop.xlane.xlu0 %2658
  %v2660 = vsel %vm1827, %v2490, 0.0
  %2661 = vadd.xlane.f32.xlu0 %v2660
  %v2662 = vpop.xlane.xlu0 %2661
  %v2663 = vsel %vm1827, %v2491, 0.0
  %2664 = vadd.xlane.f32.xlu0 %v2663
  %v2665 = vpop.xlane.xlu0 %2664
  %v2666 = vsel %vm1827, %v2492, 0.0
  %2667 = vadd.xlane.f32.xlu0 %v2666
  %v2668 = vpop.xlane.xlu0 %2667
  %v2669 = vsel %vm1827, %v2493, 0.0
  %2670 = vadd.xlane.f32.xlu0 %v2669
  %v2671 = vpop.xlane.xlu0 %2670
  %v2672 = vsel %vm1827, %v2494, 0.0
  %2673 = vadd.xlane.f32.xlu0 %v2672
  %v2674 = vpop.xlane.xlu0 %2673
  %v2675 = vsel %vm1827, %v2495, 0.0
  %2676 = vadd.xlane.f32.xlu0 %v2675
  %v2677 = vpop.xlane.xlu0 %2676
  %v2678 = vsel %vm1827, %v2496, 0.0
  %2679 = vadd.xlane.f32.xlu0 %v2678
  %v2680 = vpop.xlane.xlu0 %2679
  %v2681 = vsel %vm1827, %v2497, 0.0
  %2682 = vadd.xlane.f32.xlu0 %v2681
  %v2683 = vpop.xlane.xlu0 %2682
  %v2684 = vsel %vm1827, %v2498, 0.0
  %2685 = vadd.xlane.f32.xlu0 %v2684
  %v2686 = vpop.xlane.xlu0 %2685
  %v2687 = vsel %vm1827, %v2499, 0.0
  %2688 = vadd.xlane.f32.xlu0 %v2687
  %v2689 = vpop.xlane.xlu0 %2688
  %v2690 = vsel %vm1827, %v2500, 0.0
  %2691 = vadd.xlane.f32.xlu0 %v2690
  %v2692 = vpop.xlane.xlu0 %2691
  %v2693 = vsel %vm1827, %v2501, 0.0
  %2694 = vadd.xlane.f32.xlu0 %v2693
  %v2695 = vpop.xlane.xlu0 %2694
  %v2696 = vsel %vm1827, %v2502, 0.0
  %2697 = vadd.xlane.f32.xlu0 %v2696
  %v2698 = vpop.xlane.xlu0 %2697
  %v2699 = vsel %vm1827, %v2503, 0.0
  %2700 = vadd.xlane.f32.xlu0 %v2699
  %v2701 = vpop.xlane.xlu0 %2700
  %v2702 = vsel %vm1827, %v2504, 0.0
  %2703 = vadd.xlane.f32.xlu0 %v2702
  %v2704 = vpop.xlane.xlu0 %2703
  %v2705 = vsel %vm1827, %v2505, 0.0
  %2706 = vadd.xlane.f32.xlu0 %v2705
  %v2707 = vpop.xlane.xlu0 %2706
  %v2708 = vsel %vm1827, %v2506, 0.0
  %2709 = vadd.xlane.f32.xlu0 %v2708
  %v2710 = vpop.xlane.xlu0 %2709
  %v2711 = vsel %vm1827, %v2507, 0.0
  %2712 = vadd.xlane.f32.xlu0 %v2711
  %v2713 = vpop.xlane.xlu0 %2712
  %v2714 = vsel %vm1827, %v2508, 0.0
  %2715 = vadd.xlane.f32.xlu0 %v2714
  %v2716 = vpop.xlane.xlu0 %2715
  %v2717 = vsel %vm1827, %v2509, 0.0
  %2718 = vadd.xlane.f32.xlu0 %v2717
  %v2719 = vpop.xlane.xlu0 %2718
  %v2720 = vsel %vm1827, %v2510, 0.0
  %2721 = vadd.xlane.f32.xlu0 %v2720
  %v2722 = vpop.xlane.xlu0 %2721
  %v2723 = vsel %vm1827, %v2511, 0.0
  %2724 = vadd.xlane.f32.xlu0 %v2723
  %v2725 = vpop.xlane.xlu0 %2724
  %v2726 = vsel %vm1827, %v2512, 0.0
  %2727 = vadd.xlane.f32.xlu0 %v2726
  %v2728 = vpop.xlane.xlu0 %2727
  %v2729 = vsel %vm1827, %v2513, 0.0
  %2730 = vadd.xlane.f32.xlu0 %v2729
  %v2731 = vpop.xlane.xlu0 %2730
  %v2732 = vsel %vm1827, %v2514, 0.0
  %2733 = vadd.xlane.f32.xlu0 %v2732
  %v2734 = vpop.xlane.xlu0 %2733
  %v2735 = vsel %vm1827, %v2515, 0.0
  %2736 = vadd.xlane.f32.xlu0 %v2735
  %v2737 = vpop.xlane.xlu0 %2736
  %v2738 = vsel %vm1827, %v2516, 0.0
  %2739 = vadd.xlane.f32.xlu0 %v2738
  %v2740 = vpop.xlane.xlu0 %2739
  %v2741 = vsel %vm1827, %v2517, 0.0
  %2742 = vadd.xlane.f32.xlu0 %v2741
  %v2743 = vpop.xlane.xlu0 %2742
  %v2744 = vsel %vm1827, %v2518, 0.0
  %2745 = vadd.xlane.f32.xlu0 %v2744
  %v2746 = vpop.xlane.xlu0 %2745
  %v2747 = vsel %vm1827, %v2519, 0.0
  %2748 = vadd.xlane.f32.xlu0 %v2747
  %v2749 = vpop.xlane.xlu0 %2748
  %v2750 = vsel %vm1827, %v2520, 0.0
  %2751 = vadd.xlane.f32.xlu0 %v2750
  %v2752 = vpop.xlane.xlu0 %2751
  %v2753 = vsel %vm1827, %v2521, 0.0
  %2754 = vadd.xlane.f32.xlu0 %v2753
  %v2755 = vpop.xlane.xlu0 %2754
  %v2756 = vsel %vm1827, %v2522, 0.0
  %2757 = vadd.xlane.f32.xlu0 %v2756
  %v2758 = vpop.xlane.xlu0 %2757
  %v2759 = vsel %vm1827, %v2523, 0.0
  %2760 = vadd.xlane.f32.xlu0 %v2759
  %v2761 = vpop.xlane.xlu0 %2760
  %v2762 = vsel %vm1827, %v2524, 0.0
  %2763 = vadd.xlane.f32.xlu0 %v2762
  %v2764 = vpop.xlane.xlu0 %2763
  %v2765 = vsel %vm1827, %v2525, 0.0
  %2766 = vadd.xlane.f32.xlu0 %v2765
  %v2767 = vpop.xlane.xlu0 %2766
  %v2768 = vsel %vm1827, %v2526, 0.0
  %2769 = vadd.xlane.f32.xlu0 %v2768
  %v2770 = vpop.xlane.xlu0 %2769
  %v2771 = vsel %vm1827, %v2527, 0.0
  %2772 = vadd.xlane.f32.xlu0 %v2771
  %v2773 = vpop.xlane.xlu0 %2772
  %v2774 = vsel %vm1827, %v2528, 0.0
  %2775 = vadd.xlane.f32.xlu0 %v2774
  %v2776 = vpop.xlane.xlu0 %2775
  %v2777 = vsel %vm1827, %v2529, 0.0
  %2778 = vadd.xlane.f32.xlu0 %v2777
  %v2779 = vpop.xlane.xlu0 %2778
  %v2780 = vsel %vm1827, %v2530, 0.0
  %2781 = vadd.xlane.f32.xlu0 %v2780
  %v2782 = vpop.xlane.xlu0 %2781
  %v2783 = vsel %vm1827, %v2531, 0.0
  %2784 = vadd.xlane.f32.xlu0 %v2783
  %v2785 = vpop.xlane.xlu0 %2784
  %v2786 = vsel %vm1827, %v2532, 0.0
  %2787 = vadd.xlane.f32.xlu0 %v2786
  %v2788 = vpop.xlane.xlu0 %2787
  %v2789 = vsel %vm1827, %v2533, 0.0
  %2790 = vadd.xlane.f32.xlu0 %v2789
  %v2791 = vpop.xlane.xlu0 %2790
  %v2792 = vsel %vm1827, %v2534, 0.0
  %2793 = vadd.xlane.f32.xlu0 %v2792
  %v2794 = vpop.xlane.xlu0 %2793
  %v2795 = vsel %vm1827, %v2535, 0.0
  %2796 = vadd.xlane.f32.xlu0 %v2795
  %v2797 = vpop.xlane.xlu0 %2796
  %v2798 = vsel %vm1827, %v2536, 0.0
  %2799 = vadd.xlane.f32.xlu0 %v2798
  %v2800 = vpop.xlane.xlu0 %2799
  %v2801 = vsel %vm1827, %v2537, 0.0
  %2802 = vadd.xlane.f32.xlu0 %v2801
  %v2803 = vpop.xlane.xlu0 %2802
  %v2804 = vsel %vm1827, %v2538, 0.0
  %2805 = vadd.xlane.f32.xlu0 %v2804
  %v2806 = vpop.xlane.xlu0 %2805
  %v2807 = vsel %vm1827, %v2539, 0.0
  %2808 = vadd.xlane.f32.xlu0 %v2807
  %v2809 = vpop.xlane.xlu0 %2808
  %v2810 = vsel %vm1827, %v2540, 0.0
  %2811 = vadd.xlane.f32.xlu0 %v2810
  %v2812 = vpop.xlane.xlu0 %2811
  %v2813 = vsel %vm1827, %v2541, 0.0
  %2814 = vadd.xlane.f32.xlu0 %v2813
  %v2815 = vpop.xlane.xlu0 %2814
  %v2816 = vsel %vm1827, %v2542, 0.0
  %2817 = vadd.xlane.f32.xlu0 %v2816
  %v2818 = vpop.xlane.xlu0 %2817
  %v2819 = vsel %vm1827, %v2543, 0.0
  %2820 = vadd.xlane.f32.xlu0 %v2819
  %v2821 = vpop.xlane.xlu0 %2820
  %v2822 = vsel %vm1827, %v2544, 0.0
  %2823 = vadd.xlane.f32.xlu0 %v2822
  %v2824 = vpop.xlane.xlu0 %2823
  %v2825 = vsel %vm1827, %v2545, 0.0
  %2826 = vadd.xlane.f32.xlu0 %v2825
  %v2827 = vpop.xlane.xlu0 %2826
  %v2828 = vsel %vm1827, %v2546, 0.0
  %2829 = vadd.xlane.f32.xlu0 %v2828
  %v2830 = vpop.xlane.xlu0 %2829
  %v2831 = vsel %vm1827, %v2547, 0.0
  %2832 = vadd.xlane.f32.xlu0 %v2831
  %v2833 = vpop.xlane.xlu0 %2832
  %v2834 = vsel %vm1827, %v2548, 0.0
  %2835 = vadd.xlane.f32.xlu0 %v2834
  %v2836 = vpop.xlane.xlu0 %2835
  %v2837 = vsel %vm1827, %v2549, 0.0
  %2838 = vadd.xlane.f32.xlu0 %v2837
  %v2839 = vpop.xlane.xlu0 %2838
  %v2840 = vsel %vm1827, %v2550, 0.0
  %2841 = vadd.xlane.f32.xlu0 %v2840
  %v2842 = vpop.xlane.xlu0 %2841
  %v2843 = vsel %vm1827, %v2551, 0.0
  %2844 = vadd.xlane.f32.xlu0 %v2843
  %v2845 = vpop.xlane.xlu0 %2844
  %v2846 = vsel %vm1827, %v2552, 0.0
  %2847 = vadd.xlane.f32.xlu0 %v2846
  %v2848 = vpop.xlane.xlu0 %2847
  %v2849 = vsel %vm1827, %v2553, 0.0
  %2850 = vadd.xlane.f32.xlu0 %v2849
  %v2851 = vpop.xlane.xlu0 %2850
  %v2852 = vsel %vm1827, %v2554, 0.0
  %2853 = vadd.xlane.f32.xlu0 %v2852
  %v2854 = vpop.xlane.xlu0 %2853
  %v2855 = vsel %vm1827, %v2555, 0.0
  %2856 = vadd.xlane.f32.xlu0 %v2855
  %v2857 = vpop.xlane.xlu0 %2856
  %v2858 = vsel %vm1827, %v2556, 0.0
  %2859 = vadd.xlane.f32.xlu0 %v2858
  %v2860 = vpop.xlane.xlu0 %2859
  %v2861 = vsel %vm1827, %v2557, 0.0
  %2862 = vadd.xlane.f32.xlu0 %v2861
  %v2863 = vpop.xlane.xlu0 %2862
  %v2864 = vsel %vm1827, %v2558, 0.0
  %2865 = vadd.xlane.f32.xlu0 %v2864
  %v2866 = vpop.xlane.xlu0 %2865
  %v2867 = vsel %vm1827, %v2559, 0.0
  %2868 = vadd.xlane.f32.xlu0 %v2867
  %v2869 = vpop.xlane.xlu0 %2868
  %v2870 = vsel %vm1827, %v2560, 0.0
  %2871 = vadd.xlane.f32.xlu0 %v2870
  %v2872 = vpop.xlane.xlu0 %2871
  %v2873 = vsel %vm1827, %v2561, 0.0
  %2874 = vadd.xlane.f32.xlu0 %v2873
  %v2875 = vpop.xlane.xlu0 %2874
  %v2876 = vsel %vm1827, %v2562, 0.0
  %2877 = vadd.xlane.f32.xlu0 %v2876
  %v2878 = vpop.xlane.xlu0 %2877
  %v2879 = vsel %vm1827, %v2563, 0.0
  %2880 = vadd.xlane.f32.xlu0 %v2879
  %v2881 = vpop.xlane.xlu0 %2880
  %v2882 = vsel %vm1827, %v2564, 0.0
  %2883 = vadd.xlane.f32.xlu0 %v2882
  %v2884 = vpop.xlane.xlu0 %2883
  %v2885 = vsel %vm1827, %v2565, 0.0
  %2886 = vadd.xlane.f32.xlu0 %v2885
  %v2887 = vpop.xlane.xlu0 %2886
  %v2888 = vsel %vm1827, %v2566, 0.0
  %2889 = vadd.xlane.f32.xlu0 %v2888
  %v2890 = vpop.xlane.xlu0 %2889
  %v2891 = vsel %vm1827, %v2567, 0.0
  %2892 = vadd.xlane.f32.xlu0 %v2891
  %v2893 = vpop.xlane.xlu0 %2892
  %v2894 = vsel %vm1827, %v2568, 0.0
  %2895 = vadd.xlane.f32.xlu0 %v2894
  %v2896 = vpop.xlane.xlu0 %2895
  %v2897 = vsel %vm1827, %v2569, 0.0
  %2898 = vadd.xlane.f32.xlu0 %v2897
  %v2899 = vpop.xlane.xlu0 %2898
  %v2900 = vsel %vm1827, %v2570, 0.0
  %2901 = vadd.xlane.f32.xlu0 %v2900
  %v2902 = vpop.xlane.xlu0 %2901
  %v2903 = vsel %vm1827, %v2571, 0.0
  %2904 = vadd.xlane.f32.xlu0 %v2903
  %v2905 = vpop.xlane.xlu0 %2904
  %v2906 = vsel %vm1827, %v2572, 0.0
  %2907 = vadd.xlane.f32.xlu0 %v2906
  %v2908 = vpop.xlane.xlu0 %2907
  %v2909 = vsel %vm1827, %v2573, 0.0
  %2910 = vadd.xlane.f32.xlu0 %v2909
  %v2911 = vpop.xlane.xlu0 %2910
  %v2912 = vsel %vm1827, %v2574, 0.0
  %2913 = vadd.xlane.f32.xlu0 %v2912
  %v2914 = vpop.xlane.xlu0 %2913
  %v2915 = vsel %vm1827, %v2575, 0.0
  %2916 = vadd.xlane.f32.xlu0 %v2915
  %v2917 = vpop.xlane.xlu0 %2916
  %v2918 = vsel %vm1827, %v2576, 0.0
  %2919 = vadd.xlane.f32.xlu0 %v2918
  %v2920 = vpop.xlane.xlu0 %2919
  %v2921 = vsel %vm1827, %v2577, 0.0
  %2922 = vadd.xlane.f32.xlu0 %v2921
  %v2923 = vpop.xlane.xlu0 %2922
  %v2924 = vsel %vm1827, %v2578, 0.0
  %2925 = vadd.xlane.f32.xlu0 %v2924
  %v2926 = vpop.xlane.xlu0 %2925
  %v2927 = vsel %vm1827, %v2579, 0.0
  %2928 = vadd.xlane.f32.xlu0 %v2927
  %v2929 = vpop.xlane.xlu0 %2928
  %v2930 = vsel %vm1827, %v2580, 0.0
  %2931 = vadd.xlane.f32.xlu0 %v2930
  %v2932 = vpop.xlane.xlu0 %2931
  %v2933 = vsel %vm1827, %v2581, 0.0
  %2934 = vadd.xlane.f32.xlu0 %v2933
  %v2935 = vpop.xlane.xlu0 %2934
  %v2936 = vsel %vm1827, %v2582, 0.0
  %2937 = vadd.xlane.f32.xlu0 %v2936
  %v2938 = vpop.xlane.xlu0 %2937
  %v2939 = vsel %vm1827, %v2583, 0.0
  %2940 = vadd.xlane.f32.xlu0 %v2939
  %v2941 = vpop.xlane.xlu0 %2940
  %v2942 = vsel %vm1827, %v2584, 0.0
  %2943 = vadd.xlane.f32.xlu0 %v2942
  %v2944 = vpop.xlane.xlu0 %2943
  %v2945 = vsel %vm1827, %v2585, 0.0
  %2946 = vadd.xlane.f32.xlu0 %v2945
  %v2947 = vpop.xlane.xlu0 %2946
  %v2948 = vsel %vm1827, %v2586, 0.0
  %2949 = vadd.xlane.f32.xlu0 %v2948
  %v2950 = vpop.xlane.xlu0 %2949
  %v2951 = vsel %vm1827, %v2587, 0.0
  %2952 = vadd.xlane.f32.xlu0 %v2951
  %v2953 = vpop.xlane.xlu0 %2952
  %v2954 = vsel %vm1827, %v2588, 0.0
  %2955 = vadd.xlane.f32.xlu0 %v2954
  %v2956 = vpop.xlane.xlu0 %2955
  %v2957 = vsel %vm1827, %v2589, 0.0
  %2958 = vadd.xlane.f32.xlu0 %v2957
  %v2959 = vpop.xlane.xlu0 %2958
  %v2960 = vsel %vm1827, %v2590, 0.0
  %2961 = vadd.xlane.f32.xlu0 %v2960
  %v2962 = vpop.xlane.xlu0 %2961
  %v2963 = vsel %vm1827, %v2591, 0.0
  %2964 = vadd.xlane.f32.xlu0 %v2963
  %v2965 = vpop.xlane.xlu0 %2964
  %v2966 = vsel %vm1827, %v2592, 0.0
  %2967 = vadd.xlane.f32.xlu0 %v2966
  %v2968 = vpop.xlane.xlu0 %2967
  %v2969 = vsel %vm1827, %v2593, 0.0
  %2970 = vadd.xlane.f32.xlu0 %v2969
  %v2971 = vpop.xlane.xlu0 %2970
  %v2972 = vsel %vm1827, %v2594, 0.0
  %2973 = vadd.xlane.f32.xlu0 %v2972
  %v2974 = vpop.xlane.xlu0 %2973
  %v2975 = vsel %vm1827, %v2595, 0.0
  %2976 = vadd.xlane.f32.xlu0 %v2975
  %v2977 = vpop.xlane.xlu0 %2976
  %v2978 = vsel %vm1827, %v2596, 0.0
  %2979 = vadd.xlane.f32.xlu0 %v2978
  %v2980 = vpop.xlane.xlu0 %2979
  %v2981 = vadd.f32 %v2599, %v2623
  %v2982 = vadd.f32 %v2981, %v2647
  %v2983 = vadd.f32 %v2982, %v2671
  %v2984 = vadd.f32 %v2983, %v2695
  %v2985 = vadd.f32 %v2984, %v2719
  %v2986 = vadd.f32 %v2985, %v2743
  %v2987 = vadd.f32 %v2986, %v2767
  %v2988 = vadd.f32 %v2987, %v2791
  %v2989 = vadd.f32 %v2988, %v2815
  %v2990 = vadd.f32 %v2989, %v2839
  %v2991 = vadd.f32 %v2990, %v2863
  %v2992 = vadd.f32 %v2991, %v2887
  %v2993 = vadd.f32 %v2992, %v2911
  %v2994 = vadd.f32 %v2993, %v2935
  %v2995 = vadd.f32 %v2994, %v2959
  %v2996 = vadd.f32 %v2602, %v2626
  %v2997 = vadd.f32 %v2996, %v2650
  %v2998 = vadd.f32 %v2997, %v2674
  %v2999 = vadd.f32 %v2998, %v2698
  %v3000 = vadd.f32 %v2999, %v2722
  %v3001 = vadd.f32 %v3000, %v2746
  %v3002 = vadd.f32 %v3001, %v2770
  %v3003 = vadd.f32 %v3002, %v2794
  %v3004 = vadd.f32 %v3003, %v2818
  %v3005 = vadd.f32 %v3004, %v2842
  %v3006 = vadd.f32 %v3005, %v2866
  %v3007 = vadd.f32 %v3006, %v2890
  %v3008 = vadd.f32 %v3007, %v2914
  %v3009 = vadd.f32 %v3008, %v2938
  %v3010 = vadd.f32 %v3009, %v2962
  %v3011 = vadd.f32 %v2605, %v2629
  %v3012 = vadd.f32 %v3011, %v2653
  %v3013 = vadd.f32 %v3012, %v2677
  %v3014 = vadd.f32 %v3013, %v2701
  %v3015 = vadd.f32 %v3014, %v2725
  %v3016 = vadd.f32 %v3015, %v2749
  %v3017 = vadd.f32 %v3016, %v2773
  %v3018 = vadd.f32 %v3017, %v2797
  %v3019 = vadd.f32 %v3018, %v2821
  %v3020 = vadd.f32 %v3019, %v2845
  %v3021 = vadd.f32 %v3020, %v2869
  %v3022 = vadd.f32 %v3021, %v2893
  %v3023 = vadd.f32 %v3022, %v2917
  %v3024 = vadd.f32 %v3023, %v2941
  %v3025 = vadd.f32 %v3024, %v2965
  %v3026 = vadd.f32 %v2608, %v2632
  %v3027 = vadd.f32 %v3026, %v2656
  %v3028 = vadd.f32 %v3027, %v2680
  %v3029 = vadd.f32 %v3028, %v2704
  %v3030 = vadd.f32 %v3029, %v2728
  %v3031 = vadd.f32 %v3030, %v2752
  %v3032 = vadd.f32 %v3031, %v2776
  %v3033 = vadd.f32 %v3032, %v2800
  %v3034 = vadd.f32 %v3033, %v2824
  %v3035 = vadd.f32 %v3034, %v2848
  %v3036 = vadd.f32 %v3035, %v2872
  %v3037 = vadd.f32 %v3036, %v2896
  %v3038 = vadd.f32 %v3037, %v2920
  %v3039 = vadd.f32 %v3038, %v2944
  %v3040 = vadd.f32 %v3039, %v2968
  %v3041 = vadd.f32 %v2611, %v2635
  %v3042 = vadd.f32 %v3041, %v2659
  %v3043 = vadd.f32 %v3042, %v2683
  %v3044 = vadd.f32 %v3043, %v2707
  %v3045 = vadd.f32 %v3044, %v2731
  %v3046 = vadd.f32 %v3045, %v2755
  %v3047 = vadd.f32 %v3046, %v2779
  %v3048 = vadd.f32 %v3047, %v2803
  %v3049 = vadd.f32 %v3048, %v2827
  %v3050 = vadd.f32 %v3049, %v2851
  %v3051 = vadd.f32 %v3050, %v2875
  %v3052 = vadd.f32 %v3051, %v2899
  %v3053 = vadd.f32 %v3052, %v2923
  %v3054 = vadd.f32 %v3053, %v2947
  %v3055 = vadd.f32 %v3054, %v2971
  %v3056 = vadd.f32 %v2614, %v2638
  %v3057 = vadd.f32 %v3056, %v2662
  %v3058 = vadd.f32 %v3057, %v2686
  %v3059 = vadd.f32 %v3058, %v2710
  %v3060 = vadd.f32 %v3059, %v2734
  %v3061 = vadd.f32 %v3060, %v2758
  %v3062 = vadd.f32 %v3061, %v2782
  %v3063 = vadd.f32 %v3062, %v2806
  %v3064 = vadd.f32 %v3063, %v2830
  %v3065 = vadd.f32 %v3064, %v2854
  %v3066 = vadd.f32 %v3065, %v2878
  %v3067 = vadd.f32 %v3066, %v2902
  %v3068 = vadd.f32 %v3067, %v2926
  %v3069 = vadd.f32 %v3068, %v2950
  %v3070 = vadd.f32 %v3069, %v2974
  %v3071 = vadd.f32 %v2617, %v2641
  %v3072 = vadd.f32 %v3071, %v2665
  %v3073 = vadd.f32 %v3072, %v2689
  %v3074 = vadd.f32 %v3073, %v2713
  %v3075 = vadd.f32 %v3074, %v2737
  %v3076 = vadd.f32 %v3075, %v2761
  %v3077 = vadd.f32 %v3076, %v2785
  %v3078 = vadd.f32 %v3077, %v2809
  %v3079 = vadd.f32 %v3078, %v2833
  %v3080 = vadd.f32 %v3079, %v2857
  %v3081 = vadd.f32 %v3080, %v2881
  %v3082 = vadd.f32 %v3081, %v2905
  %v3083 = vadd.f32 %v3082, %v2929
  %v3084 = vadd.f32 %v3083, %v2953
  %v3085 = vadd.f32 %v3084, %v2977
  %v3086 = vadd.f32 %v2620, %v2644
  %v3087 = vadd.f32 %v3086, %v2668
  %v3088 = vadd.f32 %v3087, %v2692
  %v3089 = vadd.f32 %v3088, %v2716
  %v3090 = vadd.f32 %v3089, %v2740
  %v3091 = vadd.f32 %v3090, %v2764
  %v3092 = vadd.f32 %v3091, %v2788
  %v3093 = vadd.f32 %v3092, %v2812
  %v3094 = vadd.f32 %v3093, %v2836
  %v3095 = vadd.f32 %v3094, %v2860
  %v3096 = vadd.f32 %v3095, %v2884
  %v3097 = vadd.f32 %v3096, %v2908
  %v3098 = vadd.f32 %v3097, %v2932
  %v3099 = vadd.f32 %v3098, %v2956
  %v3100 = vadd.f32 %v3099, %v2980
  %v3101 = vmul.f32 %v2995, %v2332
  %v3102 = vmul.f32 %v3010, %v2332
  %v3103 = vmul.f32 %v3025, %v2332
  %v3104 = vmul.f32 %v3040, %v2332
  %v3105 = vmul.f32 %v3055, %v2332
  %v3106 = vmul.f32 %v3070, %v2332
  %v3107 = vmul.f32 %v3085, %v2332
  %v3108 = vmul.f32 %v3100, %v2332
  %v3109 = vld [vmem:[%s2] sm:$0xff]
  %v3110 = vld [vmem:[%s2 + $0x8] sm:$0xff]
  %v3111 = vld [vmem:[%s2 + $0x10] sm:$0xff]
  %v3112 = vld [vmem:[%s2 + $0x18] sm:$0xff]
  %v3113 = vld [vmem:[%s2 + $0x20] sm:$0xff]
  %v3114 = vld [vmem:[%s2 + $0x28] sm:$0xff]
  %v3115 = vld [vmem:[%s2 + $0x30] sm:$0xff]
  %v3116 = vld [vmem:[%s2 + $0x38] sm:$0xff]
  %v3117 = vld [vmem:[%s3] sm:$0xff]
  %v3118 = vld [vmem:[%s3 + $0x8] sm:$0xff]
  %v3119 = vld [vmem:[%s3 + $0x10] sm:$0xff]
  %v3120 = vld [vmem:[%s3 + $0x18] sm:$0xff]
  %v3121 = vld [vmem:[%s3 + $0x20] sm:$0xff]
  %v3122 = vld [vmem:[%s3 + $0x28] sm:$0xff]
  %v3123 = vld [vmem:[%s3 + $0x30] sm:$0xff]
  %v3124 = vld [vmem:[%s3 + $0x38] sm:$0xff]
  %v3125 = vadd.f32 %v3101, 1e-05
  %v3126 = vadd.f32 %v3102, 1e-05
  %v3127 = vadd.f32 %v3103, 1e-05
  %v3128 = vadd.f32 %v3104, 1e-05
  %v3129 = vadd.f32 %v3105, 1e-05
  %v3130 = vadd.f32 %v3106, 1e-05
  %v3131 = vadd.f32 %v3107, 1e-05
  %v3132 = vadd.f32 %v3108, 1e-05
  %v3133 = vrsqrt.pop %v3125
  %v3134 = vrsqrt.pop %v3126
  %v3135 = vrsqrt.pop %v3127
  %v3136 = vrsqrt.pop %v3128
  %v3137 = vrsqrt.pop %v3129
  %v3138 = vrsqrt.pop %v3130
  %v3139 = vrsqrt.pop %v3131
  %v3140 = vrsqrt.pop %v3132
  %v3141 = vmul.f32 %v2341, %v3133
  %v3142 = vmul.f32 %v2342, %v3134
  %v3143 = vmul.f32 %v2343, %v3135
  %v3144 = vmul.f32 %v2344, %v3136
  %v3145 = vmul.f32 %v2345, %v3137
  %v3146 = vmul.f32 %v2346, %v3138
  %v3147 = vmul.f32 %v2347, %v3139
  %v3148 = vmul.f32 %v2348, %v3140
  %v3149 = vmul.f32 %v2349, %v3133
  %v3150 = vmul.f32 %v2350, %v3134
  %v3151 = vmul.f32 %v2351, %v3135
  %v3152 = vmul.f32 %v2352, %v3136
  %v3153 = vmul.f32 %v2353, %v3137
  %v3154 = vmul.f32 %v2354, %v3138
  %v3155 = vmul.f32 %v2355, %v3139
  %v3156 = vmul.f32 %v2356, %v3140
  %v3157 = vmul.f32 %v2357, %v3133
  %v3158 = vmul.f32 %v2358, %v3134
  %v3159 = vmul.f32 %v2359, %v3135
  %v3160 = vmul.f32 %v2360, %v3136
  %v3161 = vmul.f32 %v2361, %v3137
  %v3162 = vmul.f32 %v2362, %v3138
  %v3163 = vmul.f32 %v2363, %v3139
  %v3164 = vmul.f32 %v2364, %v3140
  %v3165 = vmul.f32 %v2365, %v3133
  %v3166 = vmul.f32 %v2366, %v3134
  %v3167 = vmul.f32 %v2367, %v3135
  %v3168 = vmul.f32 %v2368, %v3136
  %v3169 = vmul.f32 %v2369, %v3137
  %v3170 = vmul.f32 %v2370, %v3138
  %v3171 = vmul.f32 %v2371, %v3139
  %v3172 = vmul.f32 %v2372, %v3140
  %v3173 = vmul.f32 %v2373, %v3133
  %v3174 = vmul.f32 %v2374, %v3134
  %v3175 = vmul.f32 %v2375, %v3135
  %v3176 = vmul.f32 %v2376, %v3136
  %v3177 = vmul.f32 %v2377, %v3137
  %v3178 = vmul.f32 %v2378, %v3138
  %v3179 = vmul.f32 %v2379, %v3139
  %v3180 = vmul.f32 %v2380, %v3140
  %v3181 = vmul.f32 %v2381, %v3133
  %v3182 = vmul.f32 %v2382, %v3134
  %v3183 = vmul.f32 %v2383, %v3135
  %v3184 = vmul.f32 %v2384, %v3136
  %v3185 = vmul.f32 %v2385, %v3137
  %v3186 = vmul.f32 %v2386, %v3138
  %v3187 = vmul.f32 %v2387, %v3139
  %v3188 = vmul.f32 %v2388, %v3140
  %v3189 = vmul.f32 %v2389, %v3133
  %v3190 = vmul.f32 %v2390, %v3134
  %v3191 = vmul.f32 %v2391, %v3135
  %v3192 = vmul.f32 %v2392, %v3136
  %v3193 = vmul.f32 %v2393, %v3137
  %v3194 = vmul.f32 %v2394, %v3138
  %v3195 = vmul.f32 %v2395, %v3139
  %v3196 = vmul.f32 %v2396, %v3140
  %v3197 = vmul.f32 %v2397, %v3133
  %v3198 = vmul.f32 %v2398, %v3134
  %v3199 = vmul.f32 %v2399, %v3135
  %v3200 = vmul.f32 %v2400, %v3136
  %v3201 = vmul.f32 %v2401, %v3137
  %v3202 = vmul.f32 %v2402, %v3138
  %v3203 = vmul.f32 %v2403, %v3139
  %v3204 = vmul.f32 %v2404, %v3140
  %v3205 = vmul.f32 %v2405, %v3133
  %v3206 = vmul.f32 %v2406, %v3134
  %v3207 = vmul.f32 %v2407, %v3135
  %v3208 = vmul.f32 %v2408, %v3136
  %v3209 = vmul.f32 %v2409, %v3137
  %v3210 = vmul.f32 %v2410, %v3138
  %v3211 = vmul.f32 %v2411, %v3139
  %v3212 = vmul.f32 %v2412, %v3140
  %v3213 = vmul.f32 %v2413, %v3133
  %v3214 = vmul.f32 %v2414, %v3134
  %v3215 = vmul.f32 %v2415, %v3135
  %v3216 = vmul.f32 %v2416, %v3136
  %v3217 = vmul.f32 %v2417, %v3137
  %v3218 = vmul.f32 %v2418, %v3138
  %v3219 = vmul.f32 %v2419, %v3139
  %v3220 = vmul.f32 %v2420, %v3140
  %v3221 = vmul.f32 %v2421, %v3133
  %v3222 = vmul.f32 %v2422, %v3134
  %v3223 = vmul.f32 %v2423, %v3135
  %v3224 = vmul.f32 %v2424, %v3136
  %v3225 = vmul.f32 %v2425, %v3137
  %v3226 = vmul.f32 %v2426, %v3138
  %v3227 = vmul.f32 %v2427, %v3139
  %v3228 = vmul.f32 %v2428, %v3140
  %v3229 = vmul.f32 %v2429, %v3133
  %v3230 = vmul.f32 %v2430, %v3134
  %v3231 = vmul.f32 %v2431, %v3135
  %v3232 = vmul.f32 %v2432, %v3136
  %v3233 = vmul.f32 %v2433, %v3137
  %v3234 = vmul.f32 %v2434, %v3138
  %v3235 = vmul.f32 %v2435, %v3139
  %v3236 = vmul.f32 %v2436, %v3140
  %v3237 = vmul.f32 %v2437, %v3133
  %v3238 = vmul.f32 %v2438, %v3134
  %v3239 = vmul.f32 %v2439, %v3135
  %v3240 = vmul.f32 %v2440, %v3136
  %v3241 = vmul.f32 %v2441, %v3137
  %v3242 = vmul.f32 %v2442, %v3138
  %v3243 = vmul.f32 %v2443, %v3139
  %v3244 = vmul.f32 %v2444, %v3140
  %v3245 = vmul.f32 %v2445, %v3133
  %v3246 = vmul.f32 %v2446, %v3134
  %v3247 = vmul.f32 %v2447, %v3135
  %v3248 = vmul.f32 %v2448, %v3136
  %v3249 = vmul.f32 %v2449, %v3137
  %v3250 = vmul.f32 %v2450, %v3138
  %v3251 = vmul.f32 %v2451, %v3139
  %v3252 = vmul.f32 %v2452, %v3140
  %v3253 = vmul.f32 %v2453, %v3133
  %v3254 = vmul.f32 %v2454, %v3134
  %v3255 = vmul.f32 %v2455, %v3135
  %v3256 = vmul.f32 %v2456, %v3136
  %v3257 = vmul.f32 %v2457, %v3137
  %v3258 = vmul.f32 %v2458, %v3138
  %v3259 = vmul.f32 %v2459, %v3139
  %v3260 = vmul.f32 %v2460, %v3140
  %v3261 = vmul.f32 %v2461, %v3133
  %v3262 = vmul.f32 %v2462, %v3134
  %v3263 = vmul.f32 %v2463, %v3135
  %v3264 = vmul.f32 %v2464, %v3136
  %v3265 = vmul.f32 %v2465, %v3137
  %v3266 = vmul.f32 %v2466, %v3138
  %v3267 = vmul.f32 %v2467, %v3139
  %v3268 = vmul.f32 %v2468, %v3140
  %3270 = vset.pattern.permute.xlu0 0
  %3271 = vperm.xlu0 %3270, %v3109
  %v3272 = vpop.permute.xlu0 %3271
  %3275 = vset.pattern.permute.xlu0 0
  %3276 = vperm.xlu0 %3275, %v3110
  %v3277 = vpop.permute.xlu0 %3276
  %3280 = vset.pattern.permute.xlu0 0
  %3281 = vperm.xlu0 %3280, %v3111
  %v3282 = vpop.permute.xlu0 %3281
  %3285 = vset.pattern.permute.xlu0 0
  %3286 = vperm.xlu0 %3285, %v3112
  %v3287 = vpop.permute.xlu0 %3286
  %3290 = vset.pattern.permute.xlu0 0
  %3291 = vperm.xlu0 %3290, %v3113
  %v3292 = vpop.permute.xlu0 %3291
  %3295 = vset.pattern.permute.xlu0 0
  %3296 = vperm.xlu0 %3295, %v3114
  %v3297 = vpop.permute.xlu0 %3296
  %3300 = vset.pattern.permute.xlu0 0
  %3301 = vperm.xlu0 %3300, %v3115
  %v3302 = vpop.permute.xlu0 %3301
  %3305 = vset.pattern.permute.xlu0 0
  %3306 = vperm.xlu0 %3305, %v3116
  %v3307 = vpop.permute.xlu0 %3306
  %v3309 = vmul.f32 %v3141, %v3272
  %v3310 = vmul.f32 %v3142, %v3277
  %v3311 = vmul.f32 %v3143, %v3282
  %v3312 = vmul.f32 %v3144, %v3287
  %v3313 = vmul.f32 %v3145, %v3292
  %v3314 = vmul.f32 %v3146, %v3297
  %v3315 = vmul.f32 %v3147, %v3302
  %v3316 = vmul.f32 %v3148, %v3307
  %v3317 = vmul.f32 %v3149, %v3272
  %v3318 = vmul.f32 %v3150, %v3277
  %v3319 = vmul.f32 %v3151, %v3282
  %v3320 = vmul.f32 %v3152, %v3287
  %v3321 = vmul.f32 %v3153, %v3292
  %v3322 = vmul.f32 %v3154, %v3297
  %v3323 = vmul.f32 %v3155, %v3302
  %v3324 = vmul.f32 %v3156, %v3307
  %v3325 = vmul.f32 %v3157, %v3272
  %v3326 = vmul.f32 %v3158, %v3277
  %v3327 = vmul.f32 %v3159, %v3282
  %v3328 = vmul.f32 %v3160, %v3287
  %v3329 = vmul.f32 %v3161, %v3292
  %v3330 = vmul.f32 %v3162, %v3297
  %v3331 = vmul.f32 %v3163, %v3302
  %v3332 = vmul.f32 %v3164, %v3307
  %v3333 = vmul.f32 %v3165, %v3272
  %v3334 = vmul.f32 %v3166, %v3277
  %v3335 = vmul.f32 %v3167, %v3282
  %v3336 = vmul.f32 %v3168, %v3287
  %v3337 = vmul.f32 %v3169, %v3292
  %v3338 = vmul.f32 %v3170, %v3297
  %v3339 = vmul.f32 %v3171, %v3302
  %v3340 = vmul.f32 %v3172, %v3307
  %v3341 = vmul.f32 %v3173, %v3272
  %v3342 = vmul.f32 %v3174, %v3277
  %v3343 = vmul.f32 %v3175, %v3282
  %v3344 = vmul.f32 %v3176, %v3287
  %v3345 = vmul.f32 %v3177, %v3292
  %v3346 = vmul.f32 %v3178, %v3297
  %v3347 = vmul.f32 %v3179, %v3302
  %v3348 = vmul.f32 %v3180, %v3307
  %v3349 = vmul.f32 %v3181, %v3272
  %v3350 = vmul.f32 %v3182, %v3277
  %v3351 = vmul.f32 %v3183, %v3282
  %v3352 = vmul.f32 %v3184, %v3287
  %v3353 = vmul.f32 %v3185, %v3292
  %v3354 = vmul.f32 %v3186, %v3297
  %v3355 = vmul.f32 %v3187, %v3302
  %v3356 = vmul.f32 %v3188, %v3307
  %v3357 = vmul.f32 %v3189, %v3272
  %v3358 = vmul.f32 %v3190, %v3277
  %v3359 = vmul.f32 %v3191, %v3282
  %v3360 = vmul.f32 %v3192, %v3287
  %v3361 = vmul.f32 %v3193, %v3292
  %v3362 = vmul.f32 %v3194, %v3297
  %v3363 = vmul.f32 %v3195, %v3302
  %v3364 = vmul.f32 %v3196, %v3307
  %v3365 = vmul.f32 %v3197, %v3272
  %v3366 = vmul.f32 %v3198, %v3277
  %v3367 = vmul.f32 %v3199, %v3282
  %v3368 = vmul.f32 %v3200, %v3287
  %v3369 = vmul.f32 %v3201, %v3292
  %v3370 = vmul.f32 %v3202, %v3297
  %v3371 = vmul.f32 %v3203, %v3302
  %v3372 = vmul.f32 %v3204, %v3307
  %v3373 = vmul.f32 %v3205, %v3272
  %v3374 = vmul.f32 %v3206, %v3277
  %v3375 = vmul.f32 %v3207, %v3282
  %v3376 = vmul.f32 %v3208, %v3287
  %v3377 = vmul.f32 %v3209, %v3292
  %v3378 = vmul.f32 %v3210, %v3297
  %v3379 = vmul.f32 %v3211, %v3302
  %v3380 = vmul.f32 %v3212, %v3307
  %v3381 = vmul.f32 %v3213, %v3272
  %v3382 = vmul.f32 %v3214, %v3277
  %v3383 = vmul.f32 %v3215, %v3282
  %v3384 = vmul.f32 %v3216, %v3287
  %v3385 = vmul.f32 %v3217, %v3292
  %v3386 = vmul.f32 %v3218, %v3297
  %v3387 = vmul.f32 %v3219, %v3302
  %v3388 = vmul.f32 %v3220, %v3307
  %v3389 = vmul.f32 %v3221, %v3272
  %v3390 = vmul.f32 %v3222, %v3277
  %v3391 = vmul.f32 %v3223, %v3282
  %v3392 = vmul.f32 %v3224, %v3287
  %v3393 = vmul.f32 %v3225, %v3292
  %v3394 = vmul.f32 %v3226, %v3297
  %v3395 = vmul.f32 %v3227, %v3302
  %v3396 = vmul.f32 %v3228, %v3307
  %v3397 = vmul.f32 %v3229, %v3272
  %v3398 = vmul.f32 %v3230, %v3277
  %v3399 = vmul.f32 %v3231, %v3282
  %v3400 = vmul.f32 %v3232, %v3287
  %v3401 = vmul.f32 %v3233, %v3292
  %v3402 = vmul.f32 %v3234, %v3297
  %v3403 = vmul.f32 %v3235, %v3302
  %v3404 = vmul.f32 %v3236, %v3307
  %v3405 = vmul.f32 %v3237, %v3272
  %v3406 = vmul.f32 %v3238, %v3277
  %v3407 = vmul.f32 %v3239, %v3282
  %v3408 = vmul.f32 %v3240, %v3287
  %v3409 = vmul.f32 %v3241, %v3292
  %v3410 = vmul.f32 %v3242, %v3297
  %v3411 = vmul.f32 %v3243, %v3302
  %v3412 = vmul.f32 %v3244, %v3307
  %v3413 = vmul.f32 %v3245, %v3272
  %v3414 = vmul.f32 %v3246, %v3277
  %v3415 = vmul.f32 %v3247, %v3282
  %v3416 = vmul.f32 %v3248, %v3287
  %v3417 = vmul.f32 %v3249, %v3292
  %v3418 = vmul.f32 %v3250, %v3297
  %v3419 = vmul.f32 %v3251, %v3302
  %v3420 = vmul.f32 %v3252, %v3307
  %v3421 = vmul.f32 %v3253, %v3272
  %v3422 = vmul.f32 %v3254, %v3277
  %v3423 = vmul.f32 %v3255, %v3282
  %v3424 = vmul.f32 %v3256, %v3287
  %v3425 = vmul.f32 %v3257, %v3292
  %v3426 = vmul.f32 %v3258, %v3297
  %v3427 = vmul.f32 %v3259, %v3302
  %v3428 = vmul.f32 %v3260, %v3307
  %v3429 = vmul.f32 %v3261, %v3272
  %v3430 = vmul.f32 %v3262, %v3277
  %v3431 = vmul.f32 %v3263, %v3282
  %v3432 = vmul.f32 %v3264, %v3287
  %v3433 = vmul.f32 %v3265, %v3292
  %v3434 = vmul.f32 %v3266, %v3297
  %v3435 = vmul.f32 %v3267, %v3302
  %v3436 = vmul.f32 %v3268, %v3307
  %3438 = vset.pattern.permute.xlu0 0
  %3439 = vperm.xlu0 %3438, %v3117
  %v3440 = vpop.permute.xlu0 %3439
  %3443 = vset.pattern.permute.xlu0 0
  %3444 = vperm.xlu0 %3443, %v3118
  %v3445 = vpop.permute.xlu0 %3444
  %3448 = vset.pattern.permute.xlu0 0
  %3449 = vperm.xlu0 %3448, %v3119
  %v3450 = vpop.permute.xlu0 %3449
  %3453 = vset.pattern.permute.xlu0 0
  %3454 = vperm.xlu0 %3453, %v3120
  %v3455 = vpop.permute.xlu0 %3454
  %3458 = vset.pattern.permute.xlu0 0
  %3459 = vperm.xlu0 %3458, %v3121
  %v3460 = vpop.permute.xlu0 %3459
  %3463 = vset.pattern.permute.xlu0 0
  %3464 = vperm.xlu0 %3463, %v3122
  %v3465 = vpop.permute.xlu0 %3464
  %3468 = vset.pattern.permute.xlu0 0
  %3469 = vperm.xlu0 %3468, %v3123
  %v3470 = vpop.permute.xlu0 %3469
  %3473 = vset.pattern.permute.xlu0 0
  %3474 = vperm.xlu0 %3473, %v3124
  %v3475 = vpop.permute.xlu0 %3474
  %v3477 = vadd.f32 %v3309, %v3440
  %v3478 = vadd.f32 %v3310, %v3445
  %v3479 = vadd.f32 %v3311, %v3450
  %v3480 = vadd.f32 %v3312, %v3455
  %v3481 = vadd.f32 %v3313, %v3460
  %v3482 = vadd.f32 %v3314, %v3465
  %v3483 = vadd.f32 %v3315, %v3470
  %v3484 = vadd.f32 %v3316, %v3475
  %v3485 = vadd.f32 %v3317, %v3440
  %v3486 = vadd.f32 %v3318, %v3445
  %v3487 = vadd.f32 %v3319, %v3450
  %v3488 = vadd.f32 %v3320, %v3455
  %v3489 = vadd.f32 %v3321, %v3460
  %v3490 = vadd.f32 %v3322, %v3465
  %v3491 = vadd.f32 %v3323, %v3470
  %v3492 = vadd.f32 %v3324, %v3475
  %v3493 = vadd.f32 %v3325, %v3440
  %v3494 = vadd.f32 %v3326, %v3445
  %v3495 = vadd.f32 %v3327, %v3450
  %v3496 = vadd.f32 %v3328, %v3455
  %v3497 = vadd.f32 %v3329, %v3460
  %v3498 = vadd.f32 %v3330, %v3465
  %v3499 = vadd.f32 %v3331, %v3470
  %v3500 = vadd.f32 %v3332, %v3475
  %v3501 = vadd.f32 %v3333, %v3440
  %v3502 = vadd.f32 %v3334, %v3445
  %v3503 = vadd.f32 %v3335, %v3450
  %v3504 = vadd.f32 %v3336, %v3455
  %v3505 = vadd.f32 %v3337, %v3460
  %v3506 = vadd.f32 %v3338, %v3465
  %v3507 = vadd.f32 %v3339, %v3470
  %v3508 = vadd.f32 %v3340, %v3475
  %v3509 = vadd.f32 %v3341, %v3440
  %v3510 = vadd.f32 %v3342, %v3445
  %v3511 = vadd.f32 %v3343, %v3450
  %v3512 = vadd.f32 %v3344, %v3455
  %v3513 = vadd.f32 %v3345, %v3460
  %v3514 = vadd.f32 %v3346, %v3465
  %v3515 = vadd.f32 %v3347, %v3470
  %v3516 = vadd.f32 %v3348, %v3475
  %v3517 = vadd.f32 %v3349, %v3440
  %v3518 = vadd.f32 %v3350, %v3445
  %v3519 = vadd.f32 %v3351, %v3450
  %v3520 = vadd.f32 %v3352, %v3455
  %v3521 = vadd.f32 %v3353, %v3460
  %v3522 = vadd.f32 %v3354, %v3465
  %v3523 = vadd.f32 %v3355, %v3470
  %v3524 = vadd.f32 %v3356, %v3475
  %v3525 = vadd.f32 %v3357, %v3440
  %v3526 = vadd.f32 %v3358, %v3445
  %v3527 = vadd.f32 %v3359, %v3450
  %v3528 = vadd.f32 %v3360, %v3455
  %v3529 = vadd.f32 %v3361, %v3460
  %v3530 = vadd.f32 %v3362, %v3465
  %v3531 = vadd.f32 %v3363, %v3470
  %v3532 = vadd.f32 %v3364, %v3475
  %v3533 = vadd.f32 %v3365, %v3440
  %v3534 = vadd.f32 %v3366, %v3445
  %v3535 = vadd.f32 %v3367, %v3450
  %v3536 = vadd.f32 %v3368, %v3455
  %v3537 = vadd.f32 %v3369, %v3460
  %v3538 = vadd.f32 %v3370, %v3465
  %v3539 = vadd.f32 %v3371, %v3470
  %v3540 = vadd.f32 %v3372, %v3475
  %v3541 = vadd.f32 %v3373, %v3440
  %v3542 = vadd.f32 %v3374, %v3445
  %v3543 = vadd.f32 %v3375, %v3450
  %v3544 = vadd.f32 %v3376, %v3455
  %v3545 = vadd.f32 %v3377, %v3460
  %v3546 = vadd.f32 %v3378, %v3465
  %v3547 = vadd.f32 %v3379, %v3470
  %v3548 = vadd.f32 %v3380, %v3475
  %v3549 = vadd.f32 %v3381, %v3440
  %v3550 = vadd.f32 %v3382, %v3445
  %v3551 = vadd.f32 %v3383, %v3450
  %v3552 = vadd.f32 %v3384, %v3455
  %v3553 = vadd.f32 %v3385, %v3460
  %v3554 = vadd.f32 %v3386, %v3465
  %v3555 = vadd.f32 %v3387, %v3470
  %v3556 = vadd.f32 %v3388, %v3475
  %v3557 = vadd.f32 %v3389, %v3440
  %v3558 = vadd.f32 %v3390, %v3445
  %v3559 = vadd.f32 %v3391, %v3450
  %v3560 = vadd.f32 %v3392, %v3455
  %v3561 = vadd.f32 %v3393, %v3460
  %v3562 = vadd.f32 %v3394, %v3465
  %v3563 = vadd.f32 %v3395, %v3470
  %v3564 = vadd.f32 %v3396, %v3475
  %v3565 = vadd.f32 %v3397, %v3440
  %v3566 = vadd.f32 %v3398, %v3445
  %v3567 = vadd.f32 %v3399, %v3450
  %v3568 = vadd.f32 %v3400, %v3455
  %v3569 = vadd.f32 %v3401, %v3460
  %v3570 = vadd.f32 %v3402, %v3465
  %v3571 = vadd.f32 %v3403, %v3470
  %v3572 = vadd.f32 %v3404, %v3475
  %v3573 = vadd.f32 %v3405, %v3440
  %v3574 = vadd.f32 %v3406, %v3445
  %v3575 = vadd.f32 %v3407, %v3450
  %v3576 = vadd.f32 %v3408, %v3455
  %v3577 = vadd.f32 %v3409, %v3460
  %v3578 = vadd.f32 %v3410, %v3465
  %v3579 = vadd.f32 %v3411, %v3470
  %v3580 = vadd.f32 %v3412, %v3475
  %v3581 = vadd.f32 %v3413, %v3440
  %v3582 = vadd.f32 %v3414, %v3445
  %v3583 = vadd.f32 %v3415, %v3450
  %v3584 = vadd.f32 %v3416, %v3455
  %v3585 = vadd.f32 %v3417, %v3460
  %v3586 = vadd.f32 %v3418, %v3465
  %v3587 = vadd.f32 %v3419, %v3470
  %v3588 = vadd.f32 %v3420, %v3475
  %v3589 = vadd.f32 %v3421, %v3440
  %v3590 = vadd.f32 %v3422, %v3445
  %v3591 = vadd.f32 %v3423, %v3450
  %v3592 = vadd.f32 %v3424, %v3455
  %v3593 = vadd.f32 %v3425, %v3460
  %v3594 = vadd.f32 %v3426, %v3465
  %v3595 = vadd.f32 %v3427, %v3470
  %v3596 = vadd.f32 %v3428, %v3475
  %v3597 = vadd.f32 %v3429, %v3440
  %v3598 = vadd.f32 %v3430, %v3445
  %v3599 = vadd.f32 %v3431, %v3450
  %v3600 = vadd.f32 %v3432, %v3455
  %v3601 = vadd.f32 %v3433, %v3460
  %v3602 = vadd.f32 %v3434, %v3465
  %v3603 = vadd.f32 %v3435, %v3470
  %v3604 = vadd.f32 %v3436, %v3475
  %v3605 = vmin.f32 %v3477, 0.0
  %v3606 = vmin.f32 %v3478, 0.0
  %v3607 = vmin.f32 %v3479, 0.0
  %v3608 = vmin.f32 %v3480, 0.0
  %v3609 = vmin.f32 %v3481, 0.0
  %v3610 = vmin.f32 %v3482, 0.0
  %v3611 = vmin.f32 %v3483, 0.0
  %v3612 = vmin.f32 %v3484, 0.0
  %v3613 = vmin.f32 %v3485, 0.0
  %v3614 = vmin.f32 %v3486, 0.0
  %v3615 = vmin.f32 %v3487, 0.0
  %v3616 = vmin.f32 %v3488, 0.0
  %v3617 = vmin.f32 %v3489, 0.0
  %v3618 = vmin.f32 %v3490, 0.0
  %v3619 = vmin.f32 %v3491, 0.0
  %v3620 = vmin.f32 %v3492, 0.0
  %v3621 = vmin.f32 %v3493, 0.0
  %v3622 = vmin.f32 %v3494, 0.0
  %v3623 = vmin.f32 %v3495, 0.0
  %v3624 = vmin.f32 %v3496, 0.0
  %v3625 = vmin.f32 %v3497, 0.0
  %v3626 = vmin.f32 %v3498, 0.0
  %v3627 = vmin.f32 %v3499, 0.0
  %v3628 = vmin.f32 %v3500, 0.0
  %v3629 = vmin.f32 %v3501, 0.0
  %v3630 = vmin.f32 %v3502, 0.0
  %v3631 = vmin.f32 %v3503, 0.0
  %v3632 = vmin.f32 %v3504, 0.0
  %v3633 = vmin.f32 %v3505, 0.0
  %v3634 = vmin.f32 %v3506, 0.0
  %v3635 = vmin.f32 %v3507, 0.0
  %v3636 = vmin.f32 %v3508, 0.0
  %v3637 = vmin.f32 %v3509, 0.0
  %v3638 = vmin.f32 %v3510, 0.0
  %v3639 = vmin.f32 %v3511, 0.0
  %v3640 = vmin.f32 %v3512, 0.0
  %v3641 = vmin.f32 %v3513, 0.0
  %v3642 = vmin.f32 %v3514, 0.0
  %v3643 = vmin.f32 %v3515, 0.0
  %v3644 = vmin.f32 %v3516, 0.0
  %v3645 = vmin.f32 %v3517, 0.0
  %v3646 = vmin.f32 %v3518, 0.0
  %v3647 = vmin.f32 %v3519, 0.0
  %v3648 = vmin.f32 %v3520, 0.0
  %v3649 = vmin.f32 %v3521, 0.0
  %v3650 = vmin.f32 %v3522, 0.0
  %v3651 = vmin.f32 %v3523, 0.0
  %v3652 = vmin.f32 %v3524, 0.0
  %v3653 = vmin.f32 %v3525, 0.0
  %v3654 = vmin.f32 %v3526, 0.0
  %v3655 = vmin.f32 %v3527, 0.0
  %v3656 = vmin.f32 %v3528, 0.0
  %v3657 = vmin.f32 %v3529, 0.0
  %v3658 = vmin.f32 %v3530, 0.0
  %v3659 = vmin.f32 %v3531, 0.0
  %v3660 = vmin.f32 %v3532, 0.0
  %v3661 = vmin.f32 %v3533, 0.0
  %v3662 = vmin.f32 %v3534, 0.0
  %v3663 = vmin.f32 %v3535, 0.0
  %v3664 = vmin.f32 %v3536, 0.0
  %v3665 = vmin.f32 %v3537, 0.0
  %v3666 = vmin.f32 %v3538, 0.0
  %v3667 = vmin.f32 %v3539, 0.0
  %v3668 = vmin.f32 %v3540, 0.0
  %v3669 = vmin.f32 %v3541, 0.0
  %v3670 = vmin.f32 %v3542, 0.0
  %v3671 = vmin.f32 %v3543, 0.0
  %v3672 = vmin.f32 %v3544, 0.0
  %v3673 = vmin.f32 %v3545, 0.0
  %v3674 = vmin.f32 %v3546, 0.0
  %v3675 = vmin.f32 %v3547, 0.0
  %v3676 = vmin.f32 %v3548, 0.0
  %v3677 = vmin.f32 %v3549, 0.0
  %v3678 = vmin.f32 %v3550, 0.0
  %v3679 = vmin.f32 %v3551, 0.0
  %v3680 = vmin.f32 %v3552, 0.0
  %v3681 = vmin.f32 %v3553, 0.0
  %v3682 = vmin.f32 %v3554, 0.0
  %v3683 = vmin.f32 %v3555, 0.0
  %v3684 = vmin.f32 %v3556, 0.0
  %v3685 = vmin.f32 %v3557, 0.0
  %v3686 = vmin.f32 %v3558, 0.0
  %v3687 = vmin.f32 %v3559, 0.0
  %v3688 = vmin.f32 %v3560, 0.0
  %v3689 = vmin.f32 %v3561, 0.0
  %v3690 = vmin.f32 %v3562, 0.0
  %v3691 = vmin.f32 %v3563, 0.0
  %v3692 = vmin.f32 %v3564, 0.0
  %v3693 = vmin.f32 %v3565, 0.0
  %v3694 = vmin.f32 %v3566, 0.0
  %v3695 = vmin.f32 %v3567, 0.0
  %v3696 = vmin.f32 %v3568, 0.0
  %v3697 = vmin.f32 %v3569, 0.0
  %v3698 = vmin.f32 %v3570, 0.0
  %v3699 = vmin.f32 %v3571, 0.0
  %v3700 = vmin.f32 %v3572, 0.0
  %v3701 = vmin.f32 %v3573, 0.0
  %v3702 = vmin.f32 %v3574, 0.0
  %v3703 = vmin.f32 %v3575, 0.0
  %v3704 = vmin.f32 %v3576, 0.0
  %v3705 = vmin.f32 %v3577, 0.0
  %v3706 = vmin.f32 %v3578, 0.0
  %v3707 = vmin.f32 %v3579, 0.0
  %v3708 = vmin.f32 %v3580, 0.0
  %v3709 = vmin.f32 %v3581, 0.0
  %v3710 = vmin.f32 %v3582, 0.0
  %v3711 = vmin.f32 %v3583, 0.0
  %v3712 = vmin.f32 %v3584, 0.0
  %v3713 = vmin.f32 %v3585, 0.0
  %v3714 = vmin.f32 %v3586, 0.0
  %v3715 = vmin.f32 %v3587, 0.0
  %v3716 = vmin.f32 %v3588, 0.0
  %v3717 = vmin.f32 %v3589, 0.0
  %v3718 = vmin.f32 %v3590, 0.0
  %v3719 = vmin.f32 %v3591, 0.0
  %v3720 = vmin.f32 %v3592, 0.0
  %v3721 = vmin.f32 %v3593, 0.0
  %v3722 = vmin.f32 %v3594, 0.0
  %v3723 = vmin.f32 %v3595, 0.0
  %v3724 = vmin.f32 %v3596, 0.0
  %v3725 = vmin.f32 %v3597, 0.0
  %v3726 = vmin.f32 %v3598, 0.0
  %v3727 = vmin.f32 %v3599, 0.0
  %v3728 = vmin.f32 %v3600, 0.0
  %v3729 = vmin.f32 %v3601, 0.0
  %v3730 = vmin.f32 %v3602, 0.0
  %v3731 = vmin.f32 %v3603, 0.0
  %v3732 = vmin.f32 %v3604, 0.0
  %v3733 = vmul.f32 %v3605, 1.442695
  %v3734 = vpow.pop %v3733
  %v3735 = vmul.f32 %v3606, 1.442695
  %v3736 = vpow.pop %v3735
  %v3737 = vmul.f32 %v3607, 1.442695
  %v3738 = vpow.pop %v3737
  %v3739 = vmul.f32 %v3608, 1.442695
  %v3740 = vpow.pop %v3739
  %v3741 = vmul.f32 %v3609, 1.442695
  %v3742 = vpow.pop %v3741
  %v3743 = vmul.f32 %v3610, 1.442695
  %v3744 = vpow.pop %v3743
  %v3745 = vmul.f32 %v3611, 1.442695
  %v3746 = vpow.pop %v3745
  %v3747 = vmul.f32 %v3612, 1.442695
  %v3748 = vpow.pop %v3747
  %v3749 = vmul.f32 %v3613, 1.442695
  %v3750 = vpow.pop %v3749
  %v3751 = vmul.f32 %v3614, 1.442695
  %v3752 = vpow.pop %v3751
  %v3753 = vmul.f32 %v3615, 1.442695
  %v3754 = vpow.pop %v3753
  %v3755 = vmul.f32 %v3616, 1.442695
  %v3756 = vpow.pop %v3755
  %v3757 = vmul.f32 %v3617, 1.442695
  %v3758 = vpow.pop %v3757
  %v3759 = vmul.f32 %v3618, 1.442695
  %v3760 = vpow.pop %v3759
  %v3761 = vmul.f32 %v3619, 1.442695
  %v3762 = vpow.pop %v3761
  %v3763 = vmul.f32 %v3620, 1.442695
  %v3764 = vpow.pop %v3763
  %v3765 = vmul.f32 %v3621, 1.442695
  %v3766 = vpow.pop %v3765
  %v3767 = vmul.f32 %v3622, 1.442695
  %v3768 = vpow.pop %v3767
  %v3769 = vmul.f32 %v3623, 1.442695
  %v3770 = vpow.pop %v3769
  %v3771 = vmul.f32 %v3624, 1.442695
  %v3772 = vpow.pop %v3771
  %v3773 = vmul.f32 %v3625, 1.442695
  %v3774 = vpow.pop %v3773
  %v3775 = vmul.f32 %v3626, 1.442695
  %v3776 = vpow.pop %v3775
  %v3777 = vmul.f32 %v3627, 1.442695
  %v3778 = vpow.pop %v3777
  %v3779 = vmul.f32 %v3628, 1.442695
  %v3780 = vpow.pop %v3779
  %v3781 = vmul.f32 %v3629, 1.442695
  %v3782 = vpow.pop %v3781
  %v3783 = vmul.f32 %v3630, 1.442695
  %v3784 = vpow.pop %v3783
  %v3785 = vmul.f32 %v3631, 1.442695
  %v3786 = vpow.pop %v3785
  %v3787 = vmul.f32 %v3632, 1.442695
  %v3788 = vpow.pop %v3787
  %v3789 = vmul.f32 %v3633, 1.442695
  %v3790 = vpow.pop %v3789
  %v3791 = vmul.f32 %v3634, 1.442695
  %v3792 = vpow.pop %v3791
  %v3793 = vmul.f32 %v3635, 1.442695
  %v3794 = vpow.pop %v3793
  %v3795 = vmul.f32 %v3636, 1.442695
  %v3796 = vpow.pop %v3795
  %v3797 = vmul.f32 %v3637, 1.442695
  %v3798 = vpow.pop %v3797
  %v3799 = vmul.f32 %v3638, 1.442695
  %v3800 = vpow.pop %v3799
  %v3801 = vmul.f32 %v3639, 1.442695
  %v3802 = vpow.pop %v3801
  %v3803 = vmul.f32 %v3640, 1.442695
  %v3804 = vpow.pop %v3803
  %v3805 = vmul.f32 %v3641, 1.442695
  %v3806 = vpow.pop %v3805
  %v3807 = vmul.f32 %v3642, 1.442695
  %v3808 = vpow.pop %v3807
  %v3809 = vmul.f32 %v3643, 1.442695
  %v3810 = vpow.pop %v3809
  %v3811 = vmul.f32 %v3644, 1.442695
  %v3812 = vpow.pop %v3811
  %v3813 = vmul.f32 %v3645, 1.442695
  %v3814 = vpow.pop %v3813
  %v3815 = vmul.f32 %v3646, 1.442695
  %v3816 = vpow.pop %v3815
  %v3817 = vmul.f32 %v3647, 1.442695
  %v3818 = vpow.pop %v3817
  %v3819 = vmul.f32 %v3648, 1.442695
  %v3820 = vpow.pop %v3819
  %v3821 = vmul.f32 %v3649, 1.442695
  %v3822 = vpow.pop %v3821
  %v3823 = vmul.f32 %v3650, 1.442695
  %v3824 = vpow.pop %v3823
  %v3825 = vmul.f32 %v3651, 1.442695
  %v3826 = vpow.pop %v3825
  %v3827 = vmul.f32 %v3652, 1.442695
  %v3828 = vpow.pop %v3827
  %v3829 = vmul.f32 %v3653, 1.442695
  %v3830 = vpow.pop %v3829
  %v3831 = vmul.f32 %v3654, 1.442695
  %v3832 = vpow.pop %v3831
  %v3833 = vmul.f32 %v3655, 1.442695
  %v3834 = vpow.pop %v3833
  %v3835 = vmul.f32 %v3656, 1.442695
  %v3836 = vpow.pop %v3835
  %v3837 = vmul.f32 %v3657, 1.442695
  %v3838 = vpow.pop %v3837
  %v3839 = vmul.f32 %v3658, 1.442695
  %v3840 = vpow.pop %v3839
  %v3841 = vmul.f32 %v3659, 1.442695
  %v3842 = vpow.pop %v3841
  %v3843 = vmul.f32 %v3660, 1.442695
  %v3844 = vpow.pop %v3843
  %v3845 = vmul.f32 %v3661, 1.442695
  %v3846 = vpow.pop %v3845
  %v3847 = vmul.f32 %v3662, 1.442695
  %v3848 = vpow.pop %v3847
  %v3849 = vmul.f32 %v3663, 1.442695
  %v3850 = vpow.pop %v3849
  %v3851 = vmul.f32 %v3664, 1.442695
  %v3852 = vpow.pop %v3851
  %v3853 = vmul.f32 %v3665, 1.442695
  %v3854 = vpow.pop %v3853
  %v3855 = vmul.f32 %v3666, 1.442695
  %v3856 = vpow.pop %v3855
  %v3857 = vmul.f32 %v3667, 1.442695
  %v3858 = vpow.pop %v3857
  %v3859 = vmul.f32 %v3668, 1.442695
  %v3860 = vpow.pop %v3859
  %v3861 = vmul.f32 %v3669, 1.442695
  %v3862 = vpow.pop %v3861
  %v3863 = vmul.f32 %v3670, 1.442695
  %v3864 = vpow.pop %v3863
  %v3865 = vmul.f32 %v3671, 1.442695
  %v3866 = vpow.pop %v3865
  %v3867 = vmul.f32 %v3672, 1.442695
  %v3868 = vpow.pop %v3867
  %v3869 = vmul.f32 %v3673, 1.442695
  %v3870 = vpow.pop %v3869
  %v3871 = vmul.f32 %v3674, 1.442695
  %v3872 = vpow.pop %v3871
  %v3873 = vmul.f32 %v3675, 1.442695
  %v3874 = vpow.pop %v3873
  %v3875 = vmul.f32 %v3676, 1.442695
  %v3876 = vpow.pop %v3875
  %v3877 = vmul.f32 %v3677, 1.442695
  %v3878 = vpow.pop %v3877
  %v3879 = vmul.f32 %v3678, 1.442695
  %v3880 = vpow.pop %v3879
  %v3881 = vmul.f32 %v3679, 1.442695
  %v3882 = vpow.pop %v3881
  %v3883 = vmul.f32 %v3680, 1.442695
  %v3884 = vpow.pop %v3883
  %v3885 = vmul.f32 %v3681, 1.442695
  %v3886 = vpow.pop %v3885
  %v3887 = vmul.f32 %v3682, 1.442695
  %v3888 = vpow.pop %v3887
  %v3889 = vmul.f32 %v3683, 1.442695
  %v3890 = vpow.pop %v3889
  %v3891 = vmul.f32 %v3684, 1.442695
  %v3892 = vpow.pop %v3891
  %v3893 = vmul.f32 %v3685, 1.442695
  %v3894 = vpow.pop %v3893
  %v3895 = vmul.f32 %v3686, 1.442695
  %v3896 = vpow.pop %v3895
  %v3897 = vmul.f32 %v3687, 1.442695
  %v3898 = vpow.pop %v3897
  %v3899 = vmul.f32 %v3688, 1.442695
  %v3900 = vpow.pop %v3899
  %v3901 = vmul.f32 %v3689, 1.442695
  %v3902 = vpow.pop %v3901
  %v3903 = vmul.f32 %v3690, 1.442695
  %v3904 = vpow.pop %v3903
  %v3905 = vmul.f32 %v3691, 1.442695
  %v3906 = vpow.pop %v3905
  %v3907 = vmul.f32 %v3692, 1.442695
  %v3908 = vpow.pop %v3907
  %v3909 = vmul.f32 %v3693, 1.442695
  %v3910 = vpow.pop %v3909
  %v3911 = vmul.f32 %v3694, 1.442695
  %v3912 = vpow.pop %v3911
  %v3913 = vmul.f32 %v3695, 1.442695
  %v3914 = vpow.pop %v3913
  %v3915 = vmul.f32 %v3696, 1.442695
  %v3916 = vpow.pop %v3915
  %v3917 = vmul.f32 %v3697, 1.442695
  %v3918 = vpow.pop %v3917
  %v3919 = vmul.f32 %v3698, 1.442695
  %v3920 = vpow.pop %v3919
  %v3921 = vmul.f32 %v3699, 1.442695
  %v3922 = vpow.pop %v3921
  %v3923 = vmul.f32 %v3700, 1.442695
  %v3924 = vpow.pop %v3923
  %v3925 = vmul.f32 %v3701, 1.442695
  %v3926 = vpow.pop %v3925
  %v3927 = vmul.f32 %v3702, 1.442695
  %v3928 = vpow.pop %v3927
  %v3929 = vmul.f32 %v3703, 1.442695
  %v3930 = vpow.pop %v3929
  %v3931 = vmul.f32 %v3704, 1.442695
  %v3932 = vpow.pop %v3931
  %v3933 = vmul.f32 %v3705, 1.442695
  %v3934 = vpow.pop %v3933
  %v3935 = vmul.f32 %v3706, 1.442695
  %v3936 = vpow.pop %v3935
  %v3937 = vmul.f32 %v3707, 1.442695
  %v3938 = vpow.pop %v3937
  %v3939 = vmul.f32 %v3708, 1.442695
  %v3940 = vpow.pop %v3939
  %v3941 = vmul.f32 %v3709, 1.442695
  %v3942 = vpow.pop %v3941
  %v3943 = vmul.f32 %v3710, 1.442695
  %v3944 = vpow.pop %v3943
  %v3945 = vmul.f32 %v3711, 1.442695
  %v3946 = vpow.pop %v3945
  %v3947 = vmul.f32 %v3712, 1.442695
  %v3948 = vpow.pop %v3947
  %v3949 = vmul.f32 %v3713, 1.442695
  %v3950 = vpow.pop %v3949
  %v3951 = vmul.f32 %v3714, 1.442695
  %v3952 = vpow.pop %v3951
  %v3953 = vmul.f32 %v3715, 1.442695
  %v3954 = vpow.pop %v3953
  %v3955 = vmul.f32 %v3716, 1.442695
  %v3956 = vpow.pop %v3955
  %v3957 = vmul.f32 %v3717, 1.442695
  %v3958 = vpow.pop %v3957
  %v3959 = vmul.f32 %v3718, 1.442695
  %v3960 = vpow.pop %v3959
  %v3961 = vmul.f32 %v3719, 1.442695
  %v3962 = vpow.pop %v3961
  %v3963 = vmul.f32 %v3720, 1.442695
  %v3964 = vpow.pop %v3963
  %v3965 = vmul.f32 %v3721, 1.442695
  %v3966 = vpow.pop %v3965
  %v3967 = vmul.f32 %v3722, 1.442695
  %v3968 = vpow.pop %v3967
  %v3969 = vmul.f32 %v3723, 1.442695
  %v3970 = vpow.pop %v3969
  %v3971 = vmul.f32 %v3724, 1.442695
  %v3972 = vpow.pop %v3971
  %v3973 = vmul.f32 %v3725, 1.442695
  %v3974 = vpow.pop %v3973
  %v3975 = vmul.f32 %v3726, 1.442695
  %v3976 = vpow.pop %v3975
  %v3977 = vmul.f32 %v3727, 1.442695
  %v3978 = vpow.pop %v3977
  %v3979 = vmul.f32 %v3728, 1.442695
  %v3980 = vpow.pop %v3979
  %v3981 = vmul.f32 %v3729, 1.442695
  %v3982 = vpow.pop %v3981
  %v3983 = vmul.f32 %v3730, 1.442695
  %v3984 = vpow.pop %v3983
  %v3985 = vmul.f32 %v3731, 1.442695
  %v3986 = vpow.pop %v3985
  %v3987 = vmul.f32 %v3732, 1.442695
  %v3988 = vpow.pop %v3987
  %v3989 = vsub.f32 %v3734, 1.0
  %v3990 = vsub.f32 %v3736, 1.0
  %v3991 = vsub.f32 %v3738, 1.0
  %v3992 = vsub.f32 %v3740, 1.0
  %v3993 = vsub.f32 %v3742, 1.0
  %v3994 = vsub.f32 %v3744, 1.0
  %v3995 = vsub.f32 %v3746, 1.0
  %v3996 = vsub.f32 %v3748, 1.0
  %v3997 = vsub.f32 %v3750, 1.0
  %v3998 = vsub.f32 %v3752, 1.0
  %v3999 = vsub.f32 %v3754, 1.0
  %v4000 = vsub.f32 %v3756, 1.0
  %v4001 = vsub.f32 %v3758, 1.0
  %v4002 = vsub.f32 %v3760, 1.0
  %v4003 = vsub.f32 %v3762, 1.0
  %v4004 = vsub.f32 %v3764, 1.0
  %v4005 = vsub.f32 %v3766, 1.0
  %v4006 = vsub.f32 %v3768, 1.0
  %v4007 = vsub.f32 %v3770, 1.0
  %v4008 = vsub.f32 %v3772, 1.0
  %v4009 = vsub.f32 %v3774, 1.0
  %v4010 = vsub.f32 %v3776, 1.0
  %v4011 = vsub.f32 %v3778, 1.0
  %v4012 = vsub.f32 %v3780, 1.0
  %v4013 = vsub.f32 %v3782, 1.0
  %v4014 = vsub.f32 %v3784, 1.0
  %v4015 = vsub.f32 %v3786, 1.0
  %v4016 = vsub.f32 %v3788, 1.0
  %v4017 = vsub.f32 %v3790, 1.0
  %v4018 = vsub.f32 %v3792, 1.0
  %v4019 = vsub.f32 %v3794, 1.0
  %v4020 = vsub.f32 %v3796, 1.0
  %v4021 = vsub.f32 %v3798, 1.0
  %v4022 = vsub.f32 %v3800, 1.0
  %v4023 = vsub.f32 %v3802, 1.0
  %v4024 = vsub.f32 %v3804, 1.0
  %v4025 = vsub.f32 %v3806, 1.0
  %v4026 = vsub.f32 %v3808, 1.0
  %v4027 = vsub.f32 %v3810, 1.0
  %v4028 = vsub.f32 %v3812, 1.0
  %v4029 = vsub.f32 %v3814, 1.0
  %v4030 = vsub.f32 %v3816, 1.0
  %v4031 = vsub.f32 %v3818, 1.0
  %v4032 = vsub.f32 %v3820, 1.0
  %v4033 = vsub.f32 %v3822, 1.0
  %v4034 = vsub.f32 %v3824, 1.0
  %v4035 = vsub.f32 %v3826, 1.0
  %v4036 = vsub.f32 %v3828, 1.0
  %v4037 = vsub.f32 %v3830, 1.0
  %v4038 = vsub.f32 %v3832, 1.0
  %v4039 = vsub.f32 %v3834, 1.0
  %v4040 = vsub.f32 %v3836, 1.0
  %v4041 = vsub.f32 %v3838, 1.0
  %v4042 = vsub.f32 %v3840, 1.0
  %v4043 = vsub.f32 %v3842, 1.0
  %v4044 = vsub.f32 %v3844, 1.0
  %v4045 = vsub.f32 %v3846, 1.0
  %v4046 = vsub.f32 %v3848, 1.0
  %v4047 = vsub.f32 %v3850, 1.0
  %v4048 = vsub.f32 %v3852, 1.0
  %v4049 = vsub.f32 %v3854, 1.0
  %v4050 = vsub.f32 %v3856, 1.0
  %v4051 = vsub.f32 %v3858, 1.0
  %v4052 = vsub.f32 %v3860, 1.0
  %v4053 = vsub.f32 %v3862, 1.0
  %v4054 = vsub.f32 %v3864, 1.0
  %v4055 = vsub.f32 %v3866, 1.0
  %v4056 = vsub.f32 %v3868, 1.0
  %v4057 = vsub.f32 %v3870, 1.0
  %v4058 = vsub.f32 %v3872, 1.0
  %v4059 = vsub.f32 %v3874, 1.0
  %v4060 = vsub.f32 %v3876, 1.0
  %v4061 = vsub.f32 %v3878, 1.0
  %v4062 = vsub.f32 %v3880, 1.0
  %v4063 = vsub.f32 %v3882, 1.0
  %v4064 = vsub.f32 %v3884, 1.0
  %v4065 = vsub.f32 %v3886, 1.0
  %v4066 = vsub.f32 %v3888, 1.0
  %v4067 = vsub.f32 %v3890, 1.0
  %v4068 = vsub.f32 %v3892, 1.0
  %v4069 = vsub.f32 %v3894, 1.0
  %v4070 = vsub.f32 %v3896, 1.0
  %v4071 = vsub.f32 %v3898, 1.0
  %v4072 = vsub.f32 %v3900, 1.0
  %v4073 = vsub.f32 %v3902, 1.0
  %v4074 = vsub.f32 %v3904, 1.0
  %v4075 = vsub.f32 %v3906, 1.0
  %v4076 = vsub.f32 %v3908, 1.0
  %v4077 = vsub.f32 %v3910, 1.0
  %v4078 = vsub.f32 %v3912, 1.0
  %v4079 = vsub.f32 %v3914, 1.0
  %v4080 = vsub.f32 %v3916, 1.0
  %v4081 = vsub.f32 %v3918, 1.0
  %v4082 = vsub.f32 %v3920, 1.0
  %v4083 = vsub.f32 %v3922, 1.0
  %v4084 = vsub.f32 %v3924, 1.0
  %v4085 = vsub.f32 %v3926, 1.0
  %v4086 = vsub.f32 %v3928, 1.0
  %v4087 = vsub.f32 %v3930, 1.0
  %v4088 = vsub.f32 %v3932, 1.0
  %v4089 = vsub.f32 %v3934, 1.0
  %v4090 = vsub.f32 %v3936, 1.0
  %v4091 = vsub.f32 %v3938, 1.0
  %v4092 = vsub.f32 %v3940, 1.0
  %v4093 = vsub.f32 %v3942, 1.0
  %v4094 = vsub.f32 %v3944, 1.0
  %v4095 = vsub.f32 %v3946, 1.0
  %v4096 = vsub.f32 %v3948, 1.0
  %v4097 = vsub.f32 %v3950, 1.0
  %v4098 = vsub.f32 %v3952, 1.0
  %v4099 = vsub.f32 %v3954, 1.0
  %v4100 = vsub.f32 %v3956, 1.0
  %v4101 = vsub.f32 %v3958, 1.0
  %v4102 = vsub.f32 %v3960, 1.0
  %v4103 = vsub.f32 %v3962, 1.0
  %v4104 = vsub.f32 %v3964, 1.0
  %v4105 = vsub.f32 %v3966, 1.0
  %v4106 = vsub.f32 %v3968, 1.0
  %v4107 = vsub.f32 %v3970, 1.0
  %v4108 = vsub.f32 %v3972, 1.0
  %v4109 = vsub.f32 %v3974, 1.0
  %v4110 = vsub.f32 %v3976, 1.0
  %v4111 = vsub.f32 %v3978, 1.0
  %v4112 = vsub.f32 %v3980, 1.0
  %v4113 = vsub.f32 %v3982, 1.0
  %v4114 = vsub.f32 %v3984, 1.0
  %v4115 = vsub.f32 %v3986, 1.0
  %v4116 = vsub.f32 %v3988, 1.0
  %v4117 = vmul.f32 %v3989, 1.6732632
  %v4118 = vmul.f32 %v3990, 1.6732632
  %v4119 = vmul.f32 %v3991, 1.6732632
  %v4120 = vmul.f32 %v3992, 1.6732632
  %v4121 = vmul.f32 %v3993, 1.6732632
  %v4122 = vmul.f32 %v3994, 1.6732632
  %v4123 = vmul.f32 %v3995, 1.6732632
  %v4124 = vmul.f32 %v3996, 1.6732632
  %v4125 = vmul.f32 %v3997, 1.6732632
  %v4126 = vmul.f32 %v3998, 1.6732632
  %v4127 = vmul.f32 %v3999, 1.6732632
  %v4128 = vmul.f32 %v4000, 1.6732632
  %v4129 = vmul.f32 %v4001, 1.6732632
  %v4130 = vmul.f32 %v4002, 1.6732632
  %v4131 = vmul.f32 %v4003, 1.6732632
  %v4132 = vmul.f32 %v4004, 1.6732632
  %v4133 = vmul.f32 %v4005, 1.6732632
  %v4134 = vmul.f32 %v4006, 1.6732632
  %v4135 = vmul.f32 %v4007, 1.6732632
  %v4136 = vmul.f32 %v4008, 1.6732632
  %v4137 = vmul.f32 %v4009, 1.6732632
  %v4138 = vmul.f32 %v4010, 1.6732632
  %v4139 = vmul.f32 %v4011, 1.6732632
  %v4140 = vmul.f32 %v4012, 1.6732632
  %v4141 = vmul.f32 %v4013, 1.6732632
  %v4142 = vmul.f32 %v4014, 1.6732632
  %v4143 = vmul.f32 %v4015, 1.6732632
  %v4144 = vmul.f32 %v4016, 1.6732632
  %v4145 = vmul.f32 %v4017, 1.6732632
  %v4146 = vmul.f32 %v4018, 1.6732632
  %v4147 = vmul.f32 %v4019, 1.6732632
  %v4148 = vmul.f32 %v4020, 1.6732632
  %v4149 = vmul.f32 %v4021, 1.6732632
  %v4150 = vmul.f32 %v4022, 1.6732632
  %v4151 = vmul.f32 %v4023, 1.6732632
  %v4152 = vmul.f32 %v4024, 1.6732632
  %v4153 = vmul.f32 %v4025, 1.6732632
  %v4154 = vmul.f32 %v4026, 1.6732632
  %v4155 = vmul.f32 %v4027, 1.6732632
  %v4156 = vmul.f32 %v4028, 1.6732632
  %v4157 = vmul.f32 %v4029, 1.6732632
  %v4158 = vmul.f32 %v4030, 1.6732632
  %v4159 = vmul.f32 %v4031, 1.6732632
  %v4160 = vmul.f32 %v4032, 1.6732632
  %v4161 = vmul.f32 %v4033, 1.6732632
  %v4162 = vmul.f32 %v4034, 1.6732632
  %v4163 = vmul.f32 %v4035, 1.6732632
  %v4164 = vmul.f32 %v4036, 1.6732632
  %v4165 = vmul.f32 %v4037, 1.6732632
  %v4166 = vmul.f32 %v4038, 1.6732632
  %v4167 = vmul.f32 %v4039, 1.6732632
  %v4168 = vmul.f32 %v4040, 1.6732632
  %v4169 = vmul.f32 %v4041, 1.6732632
  %v4170 = vmul.f32 %v4042, 1.6732632
  %v4171 = vmul.f32 %v4043, 1.6732632
  %v4172 = vmul.f32 %v4044, 1.6732632
  %v4173 = vmul.f32 %v4045, 1.6732632
  %v4174 = vmul.f32 %v4046, 1.6732632
  %v4175 = vmul.f32 %v4047, 1.6732632
  %v4176 = vmul.f32 %v4048, 1.6732632
  %v4177 = vmul.f32 %v4049, 1.6732632
  %v4178 = vmul.f32 %v4050, 1.6732632
  %v4179 = vmul.f32 %v4051, 1.6732632
  %v4180 = vmul.f32 %v4052, 1.6732632
  %v4181 = vmul.f32 %v4053, 1.6732632
  %v4182 = vmul.f32 %v4054, 1.6732632
  %v4183 = vmul.f32 %v4055, 1.6732632
  %v4184 = vmul.f32 %v4056, 1.6732632
  %v4185 = vmul.f32 %v4057, 1.6732632
  %v4186 = vmul.f32 %v4058, 1.6732632
  %v4187 = vmul.f32 %v4059, 1.6732632
  %v4188 = vmul.f32 %v4060, 1.6732632
  %v4189 = vmul.f32 %v4061, 1.6732632
  %v4190 = vmul.f32 %v4062, 1.6732632
  %v4191 = vmul.f32 %v4063, 1.6732632
  %v4192 = vmul.f32 %v4064, 1.6732632
  %v4193 = vmul.f32 %v4065, 1.6732632
  %v4194 = vmul.f32 %v4066, 1.6732632
  %v4195 = vmul.f32 %v4067, 1.6732632
  %v4196 = vmul.f32 %v4068, 1.6732632
  %v4197 = vmul.f32 %v4069, 1.6732632
  %v4198 = vmul.f32 %v4070, 1.6732632
  %v4199 = vmul.f32 %v4071, 1.6732632
  %v4200 = vmul.f32 %v4072, 1.6732632
  %v4201 = vmul.f32 %v4073, 1.6732632
  %v4202 = vmul.f32 %v4074, 1.6732632
  %v4203 = vmul.f32 %v4075, 1.6732632
  %v4204 = vmul.f32 %v4076, 1.6732632
  %v4205 = vmul.f32 %v4077, 1.6732632
  %v4206 = vmul.f32 %v4078, 1.6732632
  %v4207 = vmul.f32 %v4079, 1.6732632
  %v4208 = vmul.f32 %v4080, 1.6732632
  %v4209 = vmul.f32 %v4081, 1.6732632
  %v4210 = vmul.f32 %v4082, 1.6732632
  %v4211 = vmul.f32 %v4083, 1.6732632
  %v4212 = vmul.f32 %v4084, 1.6732632
  %v4213 = vmul.f32 %v4085, 1.6732632
  %v4214 = vmul.f32 %v4086, 1.6732632
  %v4215 = vmul.f32 %v4087, 1.6732632
  %v4216 = vmul.f32 %v4088, 1.6732632
  %v4217 = vmul.f32 %v4089, 1.6732632
  %v4218 = vmul.f32 %v4090, 1.6732632
  %v4219 = vmul.f32 %v4091, 1.6732632
  %v4220 = vmul.f32 %v4092, 1.6732632
  %v4221 = vmul.f32 %v4093, 1.6732632
  %v4222 = vmul.f32 %v4094, 1.6732632
  %v4223 = vmul.f32 %v4095, 1.6732632
  %v4224 = vmul.f32 %v4096, 1.6732632
  %v4225 = vmul.f32 %v4097, 1.6732632
  %v4226 = vmul.f32 %v4098, 1.6732632
  %v4227 = vmul.f32 %v4099, 1.6732632
  %v4228 = vmul.f32 %v4100, 1.6732632
  %v4229 = vmul.f32 %v4101, 1.6732632
  %v4230 = vmul.f32 %v4102, 1.6732632
  %v4231 = vmul.f32 %v4103, 1.6732632
  %v4232 = vmul.f32 %v4104, 1.6732632
  %v4233 = vmul.f32 %v4105, 1.6732632
  %v4234 = vmul.f32 %v4106, 1.6732632
  %v4235 = vmul.f32 %v4107, 1.6732632
  %v4236 = vmul.f32 %v4108, 1.6732632
  %v4237 = vmul.f32 %v4109, 1.6732632
  %v4238 = vmul.f32 %v4110, 1.6732632
  %v4239 = vmul.f32 %v4111, 1.6732632
  %v4240 = vmul.f32 %v4112, 1.6732632
  %v4241 = vmul.f32 %v4113, 1.6732632
  %v4242 = vmul.f32 %v4114, 1.6732632
  %v4243 = vmul.f32 %v4115, 1.6732632
  %v4244 = vmul.f32 %v4116, 1.6732632
  %vm4245 = vcmp.gt.f32.partialorder %v3477, 0.0
  %vm4246 = vcmp.gt.f32.partialorder %v3478, 0.0
  %vm4247 = vcmp.gt.f32.partialorder %v3479, 0.0
  %vm4248 = vcmp.gt.f32.partialorder %v3480, 0.0
  %vm4249 = vcmp.gt.f32.partialorder %v3481, 0.0
  %vm4250 = vcmp.gt.f32.partialorder %v3482, 0.0
  %vm4251 = vcmp.gt.f32.partialorder %v3483, 0.0
  %vm4252 = vcmp.gt.f32.partialorder %v3484, 0.0
  %vm4253 = vcmp.gt.f32.partialorder %v3485, 0.0
  %vm4254 = vcmp.gt.f32.partialorder %v3486, 0.0
  %vm4255 = vcmp.gt.f32.partialorder %v3487, 0.0
  %vm4256 = vcmp.gt.f32.partialorder %v3488, 0.0
  %vm4257 = vcmp.gt.f32.partialorder %v3489, 0.0
  %vm4258 = vcmp.gt.f32.partialorder %v3490, 0.0
  %vm4259 = vcmp.gt.f32.partialorder %v3491, 0.0
  %vm4260 = vcmp.gt.f32.partialorder %v3492, 0.0
  %vm4261 = vcmp.gt.f32.partialorder %v3493, 0.0
  %vm4262 = vcmp.gt.f32.partialorder %v3494, 0.0
  %vm4263 = vcmp.gt.f32.partialorder %v3495, 0.0
  %vm4264 = vcmp.gt.f32.partialorder %v3496, 0.0
  %vm4265 = vcmp.gt.f32.partialorder %v3497, 0.0
  %vm4266 = vcmp.gt.f32.partialorder %v3498, 0.0
  %vm4267 = vcmp.gt.f32.partialorder %v3499, 0.0
  %vm4268 = vcmp.gt.f32.partialorder %v3500, 0.0
  %vm4269 = vcmp.gt.f32.partialorder %v3501, 0.0
  %vm4270 = vcmp.gt.f32.partialorder %v3502, 0.0
  %vm4271 = vcmp.gt.f32.partialorder %v3503, 0.0
  %vm4272 = vcmp.gt.f32.partialorder %v3504, 0.0
  %vm4273 = vcmp.gt.f32.partialorder %v3505, 0.0
  %vm4274 = vcmp.gt.f32.partialorder %v3506, 0.0
  %vm4275 = vcmp.gt.f32.partialorder %v3507, 0.0
  %vm4276 = vcmp.gt.f32.partialorder %v3508, 0.0
  %vm4277 = vcmp.gt.f32.partialorder %v3509, 0.0
  %vm4278 = vcmp.gt.f32.partialorder %v3510, 0.0
  %vm4279 = vcmp.gt.f32.partialorder %v3511, 0.0
  %vm4280 = vcmp.gt.f32.partialorder %v3512, 0.0
  %vm4281 = vcmp.gt.f32.partialorder %v3513, 0.0
  %vm4282 = vcmp.gt.f32.partialorder %v3514, 0.0
  %vm4283 = vcmp.gt.f32.partialorder %v3515, 0.0
  %vm4284 = vcmp.gt.f32.partialorder %v3516, 0.0
  %vm4285 = vcmp.gt.f32.partialorder %v3517, 0.0
  %vm4286 = vcmp.gt.f32.partialorder %v3518, 0.0
  %vm4287 = vcmp.gt.f32.partialorder %v3519, 0.0
  %vm4288 = vcmp.gt.f32.partialorder %v3520, 0.0
  %vm4289 = vcmp.gt.f32.partialorder %v3521, 0.0
  %vm4290 = vcmp.gt.f32.partialorder %v3522, 0.0
  %vm4291 = vcmp.gt.f32.partialorder %v3523, 0.0
  %vm4292 = vcmp.gt.f32.partialorder %v3524, 0.0
  %vm4293 = vcmp.gt.f32.partialorder %v3525, 0.0
  %vm4294 = vcmp.gt.f32.partialorder %v3526, 0.0
  %vm4295 = vcmp.gt.f32.partialorder %v3527, 0.0
  %vm4296 = vcmp.gt.f32.partialorder %v3528, 0.0
  %vm4297 = vcmp.gt.f32.partialorder %v3529, 0.0
  %vm4298 = vcmp.gt.f32.partialorder %v3530, 0.0
  %vm4299 = vcmp.gt.f32.partialorder %v3531, 0.0
  %vm4300 = vcmp.gt.f32.partialorder %v3532, 0.0
  %vm4301 = vcmp.gt.f32.partialorder %v3533, 0.0
  %vm4302 = vcmp.gt.f32.partialorder %v3534, 0.0
  %vm4303 = vcmp.gt.f32.partialorder %v3535, 0.0
  %vm4304 = vcmp.gt.f32.partialorder %v3536, 0.0
  %vm4305 = vcmp.gt.f32.partialorder %v3537, 0.0
  %vm4306 = vcmp.gt.f32.partialorder %v3538, 0.0
  %vm4307 = vcmp.gt.f32.partialorder %v3539, 0.0
  %vm4308 = vcmp.gt.f32.partialorder %v3540, 0.0
  %vm4309 = vcmp.gt.f32.partialorder %v3541, 0.0
  %vm4310 = vcmp.gt.f32.partialorder %v3542, 0.0
  %vm4311 = vcmp.gt.f32.partialorder %v3543, 0.0
  %vm4312 = vcmp.gt.f32.partialorder %v3544, 0.0
  %vm4313 = vcmp.gt.f32.partialorder %v3545, 0.0
  %vm4314 = vcmp.gt.f32.partialorder %v3546, 0.0
  %vm4315 = vcmp.gt.f32.partialorder %v3547, 0.0
  %vm4316 = vcmp.gt.f32.partialorder %v3548, 0.0
  %vm4317 = vcmp.gt.f32.partialorder %v3549, 0.0
  %vm4318 = vcmp.gt.f32.partialorder %v3550, 0.0
  %vm4319 = vcmp.gt.f32.partialorder %v3551, 0.0
  %vm4320 = vcmp.gt.f32.partialorder %v3552, 0.0
  %vm4321 = vcmp.gt.f32.partialorder %v3553, 0.0
  %vm4322 = vcmp.gt.f32.partialorder %v3554, 0.0
  %vm4323 = vcmp.gt.f32.partialorder %v3555, 0.0
  %vm4324 = vcmp.gt.f32.partialorder %v3556, 0.0
  %vm4325 = vcmp.gt.f32.partialorder %v3557, 0.0
  %vm4326 = vcmp.gt.f32.partialorder %v3558, 0.0
  %vm4327 = vcmp.gt.f32.partialorder %v3559, 0.0
  %vm4328 = vcmp.gt.f32.partialorder %v3560, 0.0
  %vm4329 = vcmp.gt.f32.partialorder %v3561, 0.0
  %vm4330 = vcmp.gt.f32.partialorder %v3562, 0.0
  %vm4331 = vcmp.gt.f32.partialorder %v3563, 0.0
  %vm4332 = vcmp.gt.f32.partialorder %v3564, 0.0
  %vm4333 = vcmp.gt.f32.partialorder %v3565, 0.0
  %vm4334 = vcmp.gt.f32.partialorder %v3566, 0.0
  %vm4335 = vcmp.gt.f32.partialorder %v3567, 0.0
  %vm4336 = vcmp.gt.f32.partialorder %v3568, 0.0
  %vm4337 = vcmp.gt.f32.partialorder %v3569, 0.0
  %vm4338 = vcmp.gt.f32.partialorder %v3570, 0.0
  %vm4339 = vcmp.gt.f32.partialorder %v3571, 0.0
  %vm4340 = vcmp.gt.f32.partialorder %v3572, 0.0
  %vm4341 = vcmp.gt.f32.partialorder %v3573, 0.0
  %vm4342 = vcmp.gt.f32.partialorder %v3574, 0.0
  %vm4343 = vcmp.gt.f32.partialorder %v3575, 0.0
  %vm4344 = vcmp.gt.f32.partialorder %v3576, 0.0
  %vm4345 = vcmp.gt.f32.partialorder %v3577, 0.0
  %vm4346 = vcmp.gt.f32.partialorder %v3578, 0.0
  %vm4347 = vcmp.gt.f32.partialorder %v3579, 0.0
  %vm4348 = vcmp.gt.f32.partialorder %v3580, 0.0
  %vm4349 = vcmp.gt.f32.partialorder %v3581, 0.0
  %vm4350 = vcmp.gt.f32.partialorder %v3582, 0.0
  %vm4351 = vcmp.gt.f32.partialorder %v3583, 0.0
  %vm4352 = vcmp.gt.f32.partialorder %v3584, 0.0
  %vm4353 = vcmp.gt.f32.partialorder %v3585, 0.0
  %vm4354 = vcmp.gt.f32.partialorder %v3586, 0.0
  %vm4355 = vcmp.gt.f32.partialorder %v3587, 0.0
  %vm4356 = vcmp.gt.f32.partialorder %v3588, 0.0
  %vm4357 = vcmp.gt.f32.partialorder %v3589, 0.0
  %vm4358 = vcmp.gt.f32.partialorder %v3590, 0.0
  %vm4359 = vcmp.gt.f32.partialorder %v3591, 0.0
  %vm4360 = vcmp.gt.f32.partialorder %v3592, 0.0
  %vm4361 = vcmp.gt.f32.partialorder %v3593, 0.0
  %vm4362 = vcmp.gt.f32.partialorder %v3594, 0.0
  %vm4363 = vcmp.gt.f32.partialorder %v3595, 0.0
  %vm4364 = vcmp.gt.f32.partialorder %v3596, 0.0
  %vm4365 = vcmp.gt.f32.partialorder %v3597, 0.0
  %vm4366 = vcmp.gt.f32.partialorder %v3598, 0.0
  %vm4367 = vcmp.gt.f32.partialorder %v3599, 0.0
  %vm4368 = vcmp.gt.f32.partialorder %v3600, 0.0
  %vm4369 = vcmp.gt.f32.partialorder %v3601, 0.0
  %vm4370 = vcmp.gt.f32.partialorder %v3602, 0.0
  %vm4371 = vcmp.gt.f32.partialorder %v3603, 0.0
  %vm4372 = vcmp.gt.f32.partialorder %v3604, 0.0
  %v4373 = vsel %vm4245, %v3477, %v4117
  %v4374 = vsel %vm4246, %v3478, %v4118
  %v4375 = vsel %vm4247, %v3479, %v4119
  %v4376 = vsel %vm4248, %v3480, %v4120
  %v4377 = vsel %vm4249, %v3481, %v4121
  %v4378 = vsel %vm4250, %v3482, %v4122
  %v4379 = vsel %vm4251, %v3483, %v4123
  %v4380 = vsel %vm4252, %v3484, %v4124
  %v4381 = vsel %vm4253, %v3485, %v4125
  %v4382 = vsel %vm4254, %v3486, %v4126
  %v4383 = vsel %vm4255, %v3487, %v4127
  %v4384 = vsel %vm4256, %v3488, %v4128
  %v4385 = vsel %vm4257, %v3489, %v4129
  %v4386 = vsel %vm4258, %v3490, %v4130
  %v4387 = vsel %vm4259, %v3491, %v4131
  %v4388 = vsel %vm4260, %v3492, %v4132
  %v4389 = vsel %vm4261, %v3493, %v4133
  %v4390 = vsel %vm4262, %v3494, %v4134
  %v4391 = vsel %vm4263, %v3495, %v4135
  %v4392 = vsel %vm4264, %v3496, %v4136
  %v4393 = vsel %vm4265, %v3497, %v4137
  %v4394 = vsel %vm4266, %v3498, %v4138
  %v4395 = vsel %vm4267, %v3499, %v4139
  %v4396 = vsel %vm4268, %v3500, %v4140
  %v4397 = vsel %vm4269, %v3501, %v4141
  %v4398 = vsel %vm4270, %v3502, %v4142
  %v4399 = vsel %vm4271, %v3503, %v4143
  %v4400 = vsel %vm4272, %v3504, %v4144
  %v4401 = vsel %vm4273, %v3505, %v4145
  %v4402 = vsel %vm4274, %v3506, %v4146
  %v4403 = vsel %vm4275, %v3507, %v4147
  %v4404 = vsel %vm4276, %v3508, %v4148
  %v4405 = vsel %vm4277, %v3509, %v4149
  %v4406 = vsel %vm4278, %v3510, %v4150
  %v4407 = vsel %vm4279, %v3511, %v4151
  %v4408 = vsel %vm4280, %v3512, %v4152
  %v4409 = vsel %vm4281, %v3513, %v4153
  %v4410 = vsel %vm4282, %v3514, %v4154
  %v4411 = vsel %vm4283, %v3515, %v4155
  %v4412 = vsel %vm4284, %v3516, %v4156
  %v4413 = vsel %vm4285, %v3517, %v4157
  %v4414 = vsel %vm4286, %v3518, %v4158
  %v4415 = vsel %vm4287, %v3519, %v4159
  %v4416 = vsel %vm4288, %v3520, %v4160
  %v4417 = vsel %vm4289, %v3521, %v4161
  %v4418 = vsel %vm4290, %v3522, %v4162
  %v4419 = vsel %vm4291, %v3523, %v4163
  %v4420 = vsel %vm4292, %v3524, %v4164
  %v4421 = vsel %vm4293, %v3525, %v4165
  %v4422 = vsel %vm4294, %v3526, %v4166
  %v4423 = vsel %vm4295, %v3527, %v4167
  %v4424 = vsel %vm4296, %v3528, %v4168
  %v4425 = vsel %vm4297, %v3529, %v4169
  %v4426 = vsel %vm4298, %v3530, %v4170
  %v4427 = vsel %vm4299, %v3531, %v4171
  %v4428 = vsel %vm4300, %v3532, %v4172
  %v4429 = vsel %vm4301, %v3533, %v4173
  %v4430 = vsel %vm4302, %v3534, %v4174
  %v4431 = vsel %vm4303, %v3535, %v4175
  %v4432 = vsel %vm4304, %v3536, %v4176
  %v4433 = vsel %vm4305, %v3537, %v4177
  %v4434 = vsel %vm4306, %v3538, %v4178
  %v4435 = vsel %vm4307, %v3539, %v4179
  %v4436 = vsel %vm4308, %v3540, %v4180
  %v4437 = vsel %vm4309, %v3541, %v4181
  %v4438 = vsel %vm4310, %v3542, %v4182
  %v4439 = vsel %vm4311, %v3543, %v4183
  %v4440 = vsel %vm4312, %v3544, %v4184
  %v4441 = vsel %vm4313, %v3545, %v4185
  %v4442 = vsel %vm4314, %v3546, %v4186
  %v4443 = vsel %vm4315, %v3547, %v4187
  %v4444 = vsel %vm4316, %v3548, %v4188
  %v4445 = vsel %vm4317, %v3549, %v4189
  %v4446 = vsel %vm4318, %v3550, %v4190
  %v4447 = vsel %vm4319, %v3551, %v4191
  %v4448 = vsel %vm4320, %v3552, %v4192
  %v4449 = vsel %vm4321, %v3553, %v4193
  %v4450 = vsel %vm4322, %v3554, %v4194
  %v4451 = vsel %vm4323, %v3555, %v4195
  %v4452 = vsel %vm4324, %v3556, %v4196
  %v4453 = vsel %vm4325, %v3557, %v4197
  %v4454 = vsel %vm4326, %v3558, %v4198
  %v4455 = vsel %vm4327, %v3559, %v4199
  %v4456 = vsel %vm4328, %v3560, %v4200
  %v4457 = vsel %vm4329, %v3561, %v4201
  %v4458 = vsel %vm4330, %v3562, %v4202
  %v4459 = vsel %vm4331, %v3563, %v4203
  %v4460 = vsel %vm4332, %v3564, %v4204
  %v4461 = vsel %vm4333, %v3565, %v4205
  %v4462 = vsel %vm4334, %v3566, %v4206
  %v4463 = vsel %vm4335, %v3567, %v4207
  %v4464 = vsel %vm4336, %v3568, %v4208
  %v4465 = vsel %vm4337, %v3569, %v4209
  %v4466 = vsel %vm4338, %v3570, %v4210
  %v4467 = vsel %vm4339, %v3571, %v4211
  %v4468 = vsel %vm4340, %v3572, %v4212
  %v4469 = vsel %vm4341, %v3573, %v4213
  %v4470 = vsel %vm4342, %v3574, %v4214
  %v4471 = vsel %vm4343, %v3575, %v4215
  %v4472 = vsel %vm4344, %v3576, %v4216
  %v4473 = vsel %vm4345, %v3577, %v4217
  %v4474 = vsel %vm4346, %v3578, %v4218
  %v4475 = vsel %vm4347, %v3579, %v4219
  %v4476 = vsel %vm4348, %v3580, %v4220
  %v4477 = vsel %vm4349, %v3581, %v4221
  %v4478 = vsel %vm4350, %v3582, %v4222
  %v4479 = vsel %vm4351, %v3583, %v4223
  %v4480 = vsel %vm4352, %v3584, %v4224
  %v4481 = vsel %vm4353, %v3585, %v4225
  %v4482 = vsel %vm4354, %v3586, %v4226
  %v4483 = vsel %vm4355, %v3587, %v4227
  %v4484 = vsel %vm4356, %v3588, %v4228
  %v4485 = vsel %vm4357, %v3589, %v4229
  %v4486 = vsel %vm4358, %v3590, %v4230
  %v4487 = vsel %vm4359, %v3591, %v4231
  %v4488 = vsel %vm4360, %v3592, %v4232
  %v4489 = vsel %vm4361, %v3593, %v4233
  %v4490 = vsel %vm4362, %v3594, %v4234
  %v4491 = vsel %vm4363, %v3595, %v4235
  %v4492 = vsel %vm4364, %v3596, %v4236
  %v4493 = vsel %vm4365, %v3597, %v4237
  %v4494 = vsel %vm4366, %v3598, %v4238
  %v4495 = vsel %vm4367, %v3599, %v4239
  %v4496 = vsel %vm4368, %v3600, %v4240
  %v4497 = vsel %vm4369, %v3601, %v4241
  %v4498 = vsel %vm4370, %v3602, %v4242
  %v4499 = vsel %vm4371, %v3603, %v4243
  %v4500 = vsel %vm4372, %v3604, %v4244
  %v4501 = vmul.f32 %v4373, 1.050701
  %v4502 = vmul.f32 %v4374, 1.050701
  %v4503 = vmul.f32 %v4375, 1.050701
  %v4504 = vmul.f32 %v4376, 1.050701
  %v4505 = vmul.f32 %v4377, 1.050701
  %v4506 = vmul.f32 %v4378, 1.050701
  %v4507 = vmul.f32 %v4379, 1.050701
  %v4508 = vmul.f32 %v4380, 1.050701
  %v4509 = vmul.f32 %v4381, 1.050701
  %v4510 = vmul.f32 %v4382, 1.050701
  %v4511 = vmul.f32 %v4383, 1.050701
  %v4512 = vmul.f32 %v4384, 1.050701
  %v4513 = vmul.f32 %v4385, 1.050701
  %v4514 = vmul.f32 %v4386, 1.050701
  %v4515 = vmul.f32 %v4387, 1.050701
  %v4516 = vmul.f32 %v4388, 1.050701
  %v4517 = vmul.f32 %v4389, 1.050701
  %v4518 = vmul.f32 %v4390, 1.050701
  %v4519 = vmul.f32 %v4391, 1.050701
  %v4520 = vmul.f32 %v4392, 1.050701
  %v4521 = vmul.f32 %v4393, 1.050701
  %v4522 = vmul.f32 %v4394, 1.050701
  %v4523 = vmul.f32 %v4395, 1.050701
  %v4524 = vmul.f32 %v4396, 1.050701
  %v4525 = vmul.f32 %v4397, 1.050701
  %v4526 = vmul.f32 %v4398, 1.050701
  %v4527 = vmul.f32 %v4399, 1.050701
  %v4528 = vmul.f32 %v4400, 1.050701
  %v4529 = vmul.f32 %v4401, 1.050701
  %v4530 = vmul.f32 %v4402, 1.050701
  %v4531 = vmul.f32 %v4403, 1.050701
  %v4532 = vmul.f32 %v4404, 1.050701
  %v4533 = vmul.f32 %v4405, 1.050701
  %v4534 = vmul.f32 %v4406, 1.050701
  %v4535 = vmul.f32 %v4407, 1.050701
  %v4536 = vmul.f32 %v4408, 1.050701
  %v4537 = vmul.f32 %v4409, 1.050701
  %v4538 = vmul.f32 %v4410, 1.050701
  %v4539 = vmul.f32 %v4411, 1.050701
  %v4540 = vmul.f32 %v4412, 1.050701
  %v4541 = vmul.f32 %v4413, 1.050701
  %v4542 = vmul.f32 %v4414, 1.050701
  %v4543 = vmul.f32 %v4415, 1.050701
  %v4544 = vmul.f32 %v4416, 1.050701
  %v4545 = vmul.f32 %v4417, 1.050701
  %v4546 = vmul.f32 %v4418, 1.050701
  %v4547 = vmul.f32 %v4419, 1.050701
  %v4548 = vmul.f32 %v4420, 1.050701
  %v4549 = vmul.f32 %v4421, 1.050701
  %v4550 = vmul.f32 %v4422, 1.050701
  %v4551 = vmul.f32 %v4423, 1.050701
  %v4552 = vmul.f32 %v4424, 1.050701
  %v4553 = vmul.f32 %v4425, 1.050701
  %v4554 = vmul.f32 %v4426, 1.050701
  %v4555 = vmul.f32 %v4427, 1.050701
  %v4556 = vmul.f32 %v4428, 1.050701
  %v4557 = vmul.f32 %v4429, 1.050701
  %v4558 = vmul.f32 %v4430, 1.050701
  %v4559 = vmul.f32 %v4431, 1.050701
  %v4560 = vmul.f32 %v4432, 1.050701
  %v4561 = vmul.f32 %v4433, 1.050701
  %v4562 = vmul.f32 %v4434, 1.050701
  %v4563 = vmul.f32 %v4435, 1.050701
  %v4564 = vmul.f32 %v4436, 1.050701
  %v4565 = vmul.f32 %v4437, 1.050701
  %v4566 = vmul.f32 %v4438, 1.050701
  %v4567 = vmul.f32 %v4439, 1.050701
  %v4568 = vmul.f32 %v4440, 1.050701
  %v4569 = vmul.f32 %v4441, 1.050701
  %v4570 = vmul.f32 %v4442, 1.050701
  %v4571 = vmul.f32 %v4443, 1.050701
  %v4572 = vmul.f32 %v4444, 1.050701
  %v4573 = vmul.f32 %v4445, 1.050701
  %v4574 = vmul.f32 %v4446, 1.050701
  %v4575 = vmul.f32 %v4447, 1.050701
  %v4576 = vmul.f32 %v4448, 1.050701
  %v4577 = vmul.f32 %v4449, 1.050701
  %v4578 = vmul.f32 %v4450, 1.050701
  %v4579 = vmul.f32 %v4451, 1.050701
  %v4580 = vmul.f32 %v4452, 1.050701
  %v4581 = vmul.f32 %v4453, 1.050701
  %v4582 = vmul.f32 %v4454, 1.050701
  %v4583 = vmul.f32 %v4455, 1.050701
  %v4584 = vmul.f32 %v4456, 1.050701
  %v4585 = vmul.f32 %v4457, 1.050701
  %v4586 = vmul.f32 %v4458, 1.050701
  %v4587 = vmul.f32 %v4459, 1.050701
  %v4588 = vmul.f32 %v4460, 1.050701
  %v4589 = vmul.f32 %v4461, 1.050701
  %v4590 = vmul.f32 %v4462, 1.050701
  %v4591 = vmul.f32 %v4463, 1.050701
  %v4592 = vmul.f32 %v4464, 1.050701
  %v4593 = vmul.f32 %v4465, 1.050701
  %v4594 = vmul.f32 %v4466, 1.050701
  %v4595 = vmul.f32 %v4467, 1.050701
  %v4596 = vmul.f32 %v4468, 1.050701
  %v4597 = vmul.f32 %v4469, 1.050701
  %v4598 = vmul.f32 %v4470, 1.050701
  %v4599 = vmul.f32 %v4471, 1.050701
  %v4600 = vmul.f32 %v4472, 1.050701
  %v4601 = vmul.f32 %v4473, 1.050701
  %v4602 = vmul.f32 %v4474, 1.050701
  %v4603 = vmul.f32 %v4475, 1.050701
  %v4604 = vmul.f32 %v4476, 1.050701
  %v4605 = vmul.f32 %v4477, 1.050701
  %v4606 = vmul.f32 %v4478, 1.050701
  %v4607 = vmul.f32 %v4479, 1.050701
  %v4608 = vmul.f32 %v4480, 1.050701
  %v4609 = vmul.f32 %v4481, 1.050701
  %v4610 = vmul.f32 %v4482, 1.050701
  %v4611 = vmul.f32 %v4483, 1.050701
  %v4612 = vmul.f32 %v4484, 1.050701
  %v4613 = vmul.f32 %v4485, 1.050701
  %v4614 = vmul.f32 %v4486, 1.050701
  %v4615 = vmul.f32 %v4487, 1.050701
  %v4616 = vmul.f32 %v4488, 1.050701
  %v4617 = vmul.f32 %v4489, 1.050701
  %v4618 = vmul.f32 %v4490, 1.050701
  %v4619 = vmul.f32 %v4491, 1.050701
  %v4620 = vmul.f32 %v4492, 1.050701
  %v4621 = vmul.f32 %v4493, 1.050701
  %v4622 = vmul.f32 %v4494, 1.050701
  %v4623 = vmul.f32 %v4495, 1.050701
  %v4624 = vmul.f32 %v4496, 1.050701
  %v4625 = vmul.f32 %v4497, 1.050701
  %v4626 = vmul.f32 %v4498, 1.050701
  %v4627 = vmul.f32 %v4499, 1.050701
  %v4628 = vmul.f32 %v4500, 1.050701
  %v4629 = vpack.c.bf16 %v4502, %v4501
  %v4630 = vpack.c.bf16 %v4504, %v4503
  %v4631 = vpack.c.bf16 %v4506, %v4505
  %v4632 = vpack.c.bf16 %v4508, %v4507
  %v4633 = vpack.c.bf16 %v4510, %v4509
  %v4634 = vpack.c.bf16 %v4512, %v4511
  %v4635 = vpack.c.bf16 %v4514, %v4513
  %v4636 = vpack.c.bf16 %v4516, %v4515
  %v4637 = vpack.c.bf16 %v4518, %v4517
  %v4638 = vpack.c.bf16 %v4520, %v4519
  %v4639 = vpack.c.bf16 %v4522, %v4521
  %v4640 = vpack.c.bf16 %v4524, %v4523
  %v4641 = vpack.c.bf16 %v4526, %v4525
  %v4642 = vpack.c.bf16 %v4528, %v4527
  %v4643 = vpack.c.bf16 %v4530, %v4529
  %v4644 = vpack.c.bf16 %v4532, %v4531
  %v4645 = vpack.c.bf16 %v4534, %v4533
  %v4646 = vpack.c.bf16 %v4536, %v4535
  %v4647 = vpack.c.bf16 %v4538, %v4537
  %v4648 = vpack.c.bf16 %v4540, %v4539
  %v4649 = vpack.c.bf16 %v4542, %v4541
  %v4650 = vpack.c.bf16 %v4544, %v4543
  %v4651 = vpack.c.bf16 %v4546, %v4545
  %v4652 = vpack.c.bf16 %v4548, %v4547
  %v4653 = vpack.c.bf16 %v4550, %v4549
  %v4654 = vpack.c.bf16 %v4552, %v4551
  %v4655 = vpack.c.bf16 %v4554, %v4553
  %v4656 = vpack.c.bf16 %v4556, %v4555
  %v4657 = vpack.c.bf16 %v4558, %v4557
  %v4658 = vpack.c.bf16 %v4560, %v4559
  %v4659 = vpack.c.bf16 %v4562, %v4561
  %v4660 = vpack.c.bf16 %v4564, %v4563
  %v4661 = vpack.c.bf16 %v4566, %v4565
  %v4662 = vpack.c.bf16 %v4568, %v4567
  %v4663 = vpack.c.bf16 %v4570, %v4569
  %v4664 = vpack.c.bf16 %v4572, %v4571
  %v4665 = vpack.c.bf16 %v4574, %v4573
  %v4666 = vpack.c.bf16 %v4576, %v4575
  %v4667 = vpack.c.bf16 %v4578, %v4577
  %v4668 = vpack.c.bf16 %v4580, %v4579
  %v4669 = vpack.c.bf16 %v4582, %v4581
  %v4670 = vpack.c.bf16 %v4584, %v4583
  %v4671 = vpack.c.bf16 %v4586, %v4585
  %v4672 = vpack.c.bf16 %v4588, %v4587
  %v4673 = vpack.c.bf16 %v4590, %v4589
  %v4674 = vpack.c.bf16 %v4592, %v4591
  %v4675 = vpack.c.bf16 %v4594, %v4593
  %v4676 = vpack.c.bf16 %v4596, %v4595
  %v4677 = vpack.c.bf16 %v4598, %v4597
  %v4678 = vpack.c.bf16 %v4600, %v4599
  %v4679 = vpack.c.bf16 %v4602, %v4601
  %v4680 = vpack.c.bf16 %v4604, %v4603
  %v4681 = vpack.c.bf16 %v4606, %v4605
  %v4682 = vpack.c.bf16 %v4608, %v4607
  %v4683 = vpack.c.bf16 %v4610, %v4609
  %v4684 = vpack.c.bf16 %v4612, %v4611
  %v4685 = vpack.c.bf16 %v4614, %v4613
  %v4686 = vpack.c.bf16 %v4616, %v4615
  %v4687 = vpack.c.bf16 %v4618, %v4617
  %v4688 = vpack.c.bf16 %v4620, %v4619
  %v4689 = vpack.c.bf16 %v4622, %v4621
  %v4690 = vpack.c.bf16 %v4624, %v4623
  %v4691 = vpack.c.bf16 %v4626, %v4625
  %v4692 = vpack.c.bf16 %v4628, %v4627
  %v4757 = vunpack.c.l.b16 %v4629
  %v4758 = vunpack.c.h.b16 %v4629
  %v4759 = vunpack.c.l.b16 %v4630
  %v4760 = vunpack.c.h.b16 %v4630
  %v4761 = vunpack.c.l.b16 %v4631
  %v4762 = vunpack.c.h.b16 %v4631
  %v4763 = vunpack.c.l.b16 %v4632
  %v4764 = vunpack.c.h.b16 %v4632
  %v4765 = vunpack.c.l.b16 %v4633
  %v4766 = vunpack.c.h.b16 %v4633
  %v4767 = vunpack.c.l.b16 %v4634
  %v4768 = vunpack.c.h.b16 %v4634
  %v4769 = vunpack.c.l.b16 %v4635
  %v4770 = vunpack.c.h.b16 %v4635
  %v4771 = vunpack.c.l.b16 %v4636
  %v4772 = vunpack.c.h.b16 %v4636
  %v4773 = vunpack.c.l.b16 %v4637
  %v4774 = vunpack.c.h.b16 %v4637
  %v4775 = vunpack.c.l.b16 %v4638
  %v4776 = vunpack.c.h.b16 %v4638
  %v4777 = vunpack.c.l.b16 %v4639
  %v4778 = vunpack.c.h.b16 %v4639
  %v4779 = vunpack.c.l.b16 %v4640
  %v4780 = vunpack.c.h.b16 %v4640
  %v4781 = vunpack.c.l.b16 %v4641
  %v4782 = vunpack.c.h.b16 %v4641
  %v4783 = vunpack.c.l.b16 %v4642
  %v4784 = vunpack.c.h.b16 %v4642
  %v4785 = vunpack.c.l.b16 %v4643
  %v4786 = vunpack.c.h.b16 %v4643
  %v4787 = vunpack.c.l.b16 %v4644
  %v4788 = vunpack.c.h.b16 %v4644
  %v4789 = vunpack.c.l.b16 %v4645
  %v4790 = vunpack.c.h.b16 %v4645
  %v4791 = vunpack.c.l.b16 %v4646
  %v4792 = vunpack.c.h.b16 %v4646
  %v4793 = vunpack.c.l.b16 %v4647
  %v4794 = vunpack.c.h.b16 %v4647
  %v4795 = vunpack.c.l.b16 %v4648
  %v4796 = vunpack.c.h.b16 %v4648
  %v4797 = vunpack.c.l.b16 %v4649
  %v4798 = vunpack.c.h.b16 %v4649
  %v4799 = vunpack.c.l.b16 %v4650
  %v4800 = vunpack.c.h.b16 %v4650
  %v4801 = vunpack.c.l.b16 %v4651
  %v4802 = vunpack.c.h.b16 %v4651
  %v4803 = vunpack.c.l.b16 %v4652
  %v4804 = vunpack.c.h.b16 %v4652
  %v4805 = vunpack.c.l.b16 %v4653
  %v4806 = vunpack.c.h.b16 %v4653
  %v4807 = vunpack.c.l.b16 %v4654
  %v4808 = vunpack.c.h.b16 %v4654
  %v4809 = vunpack.c.l.b16 %v4655
  %v4810 = vunpack.c.h.b16 %v4655
  %v4811 = vunpack.c.l.b16 %v4656
  %v4812 = vunpack.c.h.b16 %v4656
  %v4813 = vunpack.c.l.b16 %v4657
  %v4814 = vunpack.c.h.b16 %v4657
  %v4815 = vunpack.c.l.b16 %v4658
  %v4816 = vunpack.c.h.b16 %v4658
  %v4817 = vunpack.c.l.b16 %v4659
  %v4818 = vunpack.c.h.b16 %v4659
  %v4819 = vunpack.c.l.b16 %v4660
  %v4820 = vunpack.c.h.b16 %v4660
  %v4821 = vunpack.c.l.b16 %v4661
  %v4822 = vunpack.c.h.b16 %v4661
  %v4823 = vunpack.c.l.b16 %v4662
  %v4824 = vunpack.c.h.b16 %v4662
  %v4825 = vunpack.c.l.b16 %v4663
  %v4826 = vunpack.c.h.b16 %v4663
  %v4827 = vunpack.c.l.b16 %v4664
  %v4828 = vunpack.c.h.b16 %v4664
  %v4829 = vunpack.c.l.b16 %v4665
  %v4830 = vunpack.c.h.b16 %v4665
  %v4831 = vunpack.c.l.b16 %v4666
  %v4832 = vunpack.c.h.b16 %v4666
  %v4833 = vunpack.c.l.b16 %v4667
  %v4834 = vunpack.c.h.b16 %v4667
  %v4835 = vunpack.c.l.b16 %v4668
  %v4836 = vunpack.c.h.b16 %v4668
  %v4837 = vunpack.c.l.b16 %v4669
  %v4838 = vunpack.c.h.b16 %v4669
  %v4839 = vunpack.c.l.b16 %v4670
  %v4840 = vunpack.c.h.b16 %v4670
  %v4841 = vunpack.c.l.b16 %v4671
  %v4842 = vunpack.c.h.b16 %v4671
  %v4843 = vunpack.c.l.b16 %v4672
  %v4844 = vunpack.c.h.b16 %v4672
  %v4845 = vunpack.c.l.b16 %v4673
  %v4846 = vunpack.c.h.b16 %v4673
  %v4847 = vunpack.c.l.b16 %v4674
  %v4848 = vunpack.c.h.b16 %v4674
  %v4849 = vunpack.c.l.b16 %v4675
  %v4850 = vunpack.c.h.b16 %v4675
  %v4851 = vunpack.c.l.b16 %v4676
  %v4852 = vunpack.c.h.b16 %v4676
  %v4853 = vunpack.c.l.b16 %v4677
  %v4854 = vunpack.c.h.b16 %v4677
  %v4855 = vunpack.c.l.b16 %v4678
  %v4856 = vunpack.c.h.b16 %v4678
  %v4857 = vunpack.c.l.b16 %v4679
  %v4858 = vunpack.c.h.b16 %v4679
  %v4859 = vunpack.c.l.b16 %v4680
  %v4860 = vunpack.c.h.b16 %v4680
  %v4861 = vunpack.c.l.b16 %v4681
  %v4862 = vunpack.c.h.b16 %v4681
  %v4863 = vunpack.c.l.b16 %v4682
  %v4864 = vunpack.c.h.b16 %v4682
  %v4865 = vunpack.c.l.b16 %v4683
  %v4866 = vunpack.c.h.b16 %v4683
  %v4867 = vunpack.c.l.b16 %v4684
  %v4868 = vunpack.c.h.b16 %v4684
  %v4869 = vunpack.c.l.b16 %v4685
  %v4870 = vunpack.c.h.b16 %v4685
  %v4871 = vunpack.c.l.b16 %v4686
  %v4872 = vunpack.c.h.b16 %v4686
  %v4873 = vunpack.c.l.b16 %v4687
  %v4874 = vunpack.c.h.b16 %v4687
  %v4875 = vunpack.c.l.b16 %v4688
  %v4876 = vunpack.c.h.b16 %v4688
  %v4877 = vunpack.c.l.b16 %v4689
  %v4878 = vunpack.c.h.b16 %v4689
  %v4879 = vunpack.c.l.b16 %v4690
  %v4880 = vunpack.c.h.b16 %v4690
  %v4881 = vunpack.c.l.b16 %v4691
  %v4882 = vunpack.c.h.b16 %v4691
  %v4883 = vunpack.c.l.b16 %v4692
  %v4884 = vunpack.c.h.b16 %v4692
  %v4885 = vpack.c.b16 %v4757, %v4757
  %v4886 = vpack.c.b16 %v4758, %v4758
  %v4887 = vpack.c.b16 %v4759, %v4759
  %v4888 = vpack.c.b16 %v4760, %v4760
  %v4889 = vpack.c.b16 %v4761, %v4761
  %v4890 = vpack.c.b16 %v4762, %v4762
  %v4891 = vpack.c.b16 %v4763, %v4763
  %v4892 = vpack.c.b16 %v4764, %v4764
  %v4893 = vpack.c.b16 %v4765, %v4765
  %v4894 = vpack.c.b16 %v4766, %v4766
  %v4895 = vpack.c.b16 %v4767, %v4767
  %v4896 = vpack.c.b16 %v4768, %v4768
  %v4897 = vpack.c.b16 %v4769, %v4769
  %v4898 = vpack.c.b16 %v4770, %v4770
  %v4899 = vpack.c.b16 %v4771, %v4771
  %v4900 = vpack.c.b16 %v4772, %v4772
  %v4901 = vpack.c.b16 %v4773, %v4773
  %v4902 = vpack.c.b16 %v4774, %v4774
  %v4903 = vpack.c.b16 %v4775, %v4775
  %v4904 = vpack.c.b16 %v4776, %v4776
  %v4905 = vpack.c.b16 %v4777, %v4777
  %v4906 = vpack.c.b16 %v4778, %v4778
  %v4907 = vpack.c.b16 %v4779, %v4779
  %v4908 = vpack.c.b16 %v4780, %v4780
  %v4909 = vpack.c.b16 %v4781, %v4781
  %v4910 = vpack.c.b16 %v4782, %v4782
  %v4911 = vpack.c.b16 %v4783, %v4783
  %v4912 = vpack.c.b16 %v4784, %v4784
  %v4913 = vpack.c.b16 %v4785, %v4785
  %v4914 = vpack.c.b16 %v4786, %v4786
  %v4915 = vpack.c.b16 %v4787, %v4787
  %v4916 = vpack.c.b16 %v4788, %v4788
  %v4917 = vpack.c.b16 %v4789, %v4789
  %v4918 = vpack.c.b16 %v4790, %v4790
  %v4919 = vpack.c.b16 %v4791, %v4791
  %v4920 = vpack.c.b16 %v4792, %v4792
  %v4921 = vpack.c.b16 %v4793, %v4793
  %v4922 = vpack.c.b16 %v4794, %v4794
  %v4923 = vpack.c.b16 %v4795, %v4795
  %v4924 = vpack.c.b16 %v4796, %v4796
  %v4925 = vpack.c.b16 %v4797, %v4797
  %v4926 = vpack.c.b16 %v4798, %v4798
  %v4927 = vpack.c.b16 %v4799, %v4799
  %v4928 = vpack.c.b16 %v4800, %v4800
  %v4929 = vpack.c.b16 %v4801, %v4801
  %v4930 = vpack.c.b16 %v4802, %v4802
  %v4931 = vpack.c.b16 %v4803, %v4803
  %v4932 = vpack.c.b16 %v4804, %v4804
  %v4933 = vpack.c.b16 %v4805, %v4805
  %v4934 = vpack.c.b16 %v4806, %v4806
  %v4935 = vpack.c.b16 %v4807, %v4807
  %v4936 = vpack.c.b16 %v4808, %v4808
  %v4937 = vpack.c.b16 %v4809, %v4809
  %v4938 = vpack.c.b16 %v4810, %v4810
  %v4939 = vpack.c.b16 %v4811, %v4811
  %v4940 = vpack.c.b16 %v4812, %v4812
  %v4941 = vpack.c.b16 %v4813, %v4813
  %v4942 = vpack.c.b16 %v4814, %v4814
  %v4943 = vpack.c.b16 %v4815, %v4815
  %v4944 = vpack.c.b16 %v4816, %v4816
  %v4945 = vpack.c.b16 %v4817, %v4817
  %v4946 = vpack.c.b16 %v4818, %v4818
  %v4947 = vpack.c.b16 %v4819, %v4819
  %v4948 = vpack.c.b16 %v4820, %v4820
  %v4949 = vpack.c.b16 %v4821, %v4821
  %v4950 = vpack.c.b16 %v4822, %v4822
  %v4951 = vpack.c.b16 %v4823, %v4823
  %v4952 = vpack.c.b16 %v4824, %v4824
  %v4953 = vpack.c.b16 %v4825, %v4825
  %v4954 = vpack.c.b16 %v4826, %v4826
  %v4955 = vpack.c.b16 %v4827, %v4827
  %v4956 = vpack.c.b16 %v4828, %v4828
  %v4957 = vpack.c.b16 %v4829, %v4829
  %v4958 = vpack.c.b16 %v4830, %v4830
  %v4959 = vpack.c.b16 %v4831, %v4831
  %v4960 = vpack.c.b16 %v4832, %v4832
  %v4961 = vpack.c.b16 %v4833, %v4833
  %v4962 = vpack.c.b16 %v4834, %v4834
  %v4963 = vpack.c.b16 %v4835, %v4835
  %v4964 = vpack.c.b16 %v4836, %v4836
  %v4965 = vpack.c.b16 %v4837, %v4837
  %v4966 = vpack.c.b16 %v4838, %v4838
  %v4967 = vpack.c.b16 %v4839, %v4839
  %v4968 = vpack.c.b16 %v4840, %v4840
  %v4969 = vpack.c.b16 %v4841, %v4841
  %v4970 = vpack.c.b16 %v4842, %v4842
  %v4971 = vpack.c.b16 %v4843, %v4843
  %v4972 = vpack.c.b16 %v4844, %v4844
  %v4973 = vpack.c.b16 %v4845, %v4845
  %v4974 = vpack.c.b16 %v4846, %v4846
  %v4975 = vpack.c.b16 %v4847, %v4847
  %v4976 = vpack.c.b16 %v4848, %v4848
  %v4977 = vpack.c.b16 %v4849, %v4849
  %v4978 = vpack.c.b16 %v4850, %v4850
  %v4979 = vpack.c.b16 %v4851, %v4851
  %v4980 = vpack.c.b16 %v4852, %v4852
  %v4981 = vpack.c.b16 %v4853, %v4853
  %v4982 = vpack.c.b16 %v4854, %v4854
  %v4983 = vpack.c.b16 %v4855, %v4855
  %v4984 = vpack.c.b16 %v4856, %v4856
  %v4985 = vpack.c.b16 %v4857, %v4857
  %v4986 = vpack.c.b16 %v4858, %v4858
  %v4987 = vpack.c.b16 %v4859, %v4859
  %v4988 = vpack.c.b16 %v4860, %v4860
  %v4989 = vpack.c.b16 %v4861, %v4861
  %v4990 = vpack.c.b16 %v4862, %v4862
  %v4991 = vpack.c.b16 %v4863, %v4863
  %v4992 = vpack.c.b16 %v4864, %v4864
  %v4993 = vpack.c.b16 %v4865, %v4865
  %v4994 = vpack.c.b16 %v4866, %v4866
  %v4995 = vpack.c.b16 %v4867, %v4867
  %v4996 = vpack.c.b16 %v4868, %v4868
  %v4997 = vpack.c.b16 %v4869, %v4869
  %v4998 = vpack.c.b16 %v4870, %v4870
  %v4999 = vpack.c.b16 %v4871, %v4871
  %v5000 = vpack.c.b16 %v4872, %v4872
  %v5001 = vpack.c.b16 %v4873, %v4873
  %v5002 = vpack.c.b16 %v4874, %v4874
  %v5003 = vpack.c.b16 %v4875, %v4875
  %v5004 = vpack.c.b16 %v4876, %v4876
  %v5005 = vpack.c.b16 %v4877, %v4877
  %v5006 = vpack.c.b16 %v4878, %v4878
  %v5007 = vpack.c.b16 %v4879, %v4879
  %v5008 = vpack.c.b16 %v4880, %v4880
  %v5009 = vpack.c.b16 %v4881, %v4881
  %v5010 = vpack.c.b16 %v4882, %v4882
  %v5011 = vpack.c.b16 %v4883, %v4883
  %v5012 = vpack.c.b16 %v4884, %v4884
  %vm5141 = vcmask 11264
  %5142 = vst.msk [vmem:[%s4] sm:$0xf] %vm5141, %v4885
  %5143 = vst.msk [vmem:[%s4 + $0x4] sm:$0xf] %vm5141, %v4886
  %5144 = vst.msk [vmem:[%s4 + $0x8] sm:$0xf] %vm5141, %v4887
  %5145 = vst.msk [vmem:[%s4 + $0xc] sm:$0xf] %vm5141, %v4888
  %5146 = vst.msk [vmem:[%s4 + $0x10] sm:$0xf] %vm5141, %v4889
  %5147 = vst.msk [vmem:[%s4 + $0x14] sm:$0xf] %vm5141, %v4890
  %5148 = vst.msk [vmem:[%s4 + $0x18] sm:$0xf] %vm5141, %v4891
  %5149 = vst.msk [vmem:[%s4 + $0x1c] sm:$0xf] %vm5141, %v4892
  %5150 = vst.msk [vmem:[%s4 + $0x20] sm:$0xf] %vm5141, %v4893
  %5151 = vst.msk [vmem:[%s4 + $0x24] sm:$0xf] %vm5141, %v4894
  %5152 = vst.msk [vmem:[%s4 + $0x28] sm:$0xf] %vm5141, %v4895
  %5153 = vst.msk [vmem:[%s4 + $0x2c] sm:$0xf] %vm5141, %v4896
  %5154 = vst.msk [vmem:[%s4 + $0x30] sm:$0xf] %vm5141, %v4897
  %5155 = vst.msk [vmem:[%s4 + $0x34] sm:$0xf] %vm5141, %v4898
  %5156 = vst.msk [vmem:[%s4 + $0x38] sm:$0xf] %vm5141, %v4899
  %5157 = vst.msk [vmem:[%s4 + $0x3c] sm:$0xf] %vm5141, %v4900
  %5158 = vst.msk [vmem:[%s4 + $0x40] sm:$0xf] %vm5141, %v4901
  %5159 = vst.msk [vmem:[%s4 + $0x44] sm:$0xf] %vm5141, %v4902
  %5160 = vst.msk [vmem:[%s4 + $0x48] sm:$0xf] %vm5141, %v4903
  %5161 = vst.msk [vmem:[%s4 + $0x4c] sm:$0xf] %vm5141, %v4904
  %5162 = vst.msk [vmem:[%s4 + $0x50] sm:$0xf] %vm5141, %v4905
  %5163 = vst.msk [vmem:[%s4 + $0x54] sm:$0xf] %vm5141, %v4906
  %5164 = vst.msk [vmem:[%s4 + $0x58] sm:$0xf] %vm5141, %v4907
  %5165 = vst.msk [vmem:[%s4 + $0x5c] sm:$0xf] %vm5141, %v4908
  %5166 = vst.msk [vmem:[%s4 + $0x60] sm:$0xf] %vm5141, %v4909
  %5167 = vst.msk [vmem:[%s4 + $0x64] sm:$0xf] %vm5141, %v4910
  %5168 = vst.msk [vmem:[%s4 + $0x68] sm:$0xf] %vm5141, %v4911
  %5169 = vst.msk [vmem:[%s4 + $0x6c] sm:$0xf] %vm5141, %v4912
  %5170 = vst.msk [vmem:[%s4 + $0x70] sm:$0xf] %vm5141, %v4913
  %5171 = vst.msk [vmem:[%s4 + $0x74] sm:$0xf] %vm5141, %v4914
  %5172 = vst.msk [vmem:[%s4 + $0x78] sm:$0xf] %vm5141, %v4915
  %5173 = vst.msk [vmem:[%s4 + $0x7c] sm:$0xf] %vm5141, %v4916
  %5174 = vst.msk [vmem:[%s4 + $0x80] sm:$0xf] %vm5141, %v4917
  %5175 = vst.msk [vmem:[%s4 + $0x84] sm:$0xf] %vm5141, %v4918
  %5176 = vst.msk [vmem:[%s4 + $0x88] sm:$0xf] %vm5141, %v4919
  %5177 = vst.msk [vmem:[%s4 + $0x8c] sm:$0xf] %vm5141, %v4920
  %5178 = vst.msk [vmem:[%s4 + $0x90] sm:$0xf] %vm5141, %v4921
  %5179 = vst.msk [vmem:[%s4 + $0x94] sm:$0xf] %vm5141, %v4922
  %5180 = vst.msk [vmem:[%s4 + $0x98] sm:$0xf] %vm5141, %v4923
  %5181 = vst.msk [vmem:[%s4 + $0x9c] sm:$0xf] %vm5141, %v4924
  %5182 = vst.msk [vmem:[%s4 + $0xa0] sm:$0xf] %vm5141, %v4925
  %5183 = vst.msk [vmem:[%s4 + $0xa4] sm:$0xf] %vm5141, %v4926
  %5184 = vst.msk [vmem:[%s4 + $0xa8] sm:$0xf] %vm5141, %v4927
  %5185 = vst.msk [vmem:[%s4 + $0xac] sm:$0xf] %vm5141, %v4928
  %5186 = vst.msk [vmem:[%s4 + $0xb0] sm:$0xf] %vm5141, %v4929
  %5187 = vst.msk [vmem:[%s4 + $0xb4] sm:$0xf] %vm5141, %v4930
  %5188 = vst.msk [vmem:[%s4 + $0xb8] sm:$0xf] %vm5141, %v4931
  %5189 = vst.msk [vmem:[%s4 + $0xbc] sm:$0xf] %vm5141, %v4932
  %5190 = vst.msk [vmem:[%s4 + $0xc0] sm:$0xf] %vm5141, %v4933
  %5191 = vst.msk [vmem:[%s4 + $0xc4] sm:$0xf] %vm5141, %v4934
  %5192 = vst.msk [vmem:[%s4 + $0xc8] sm:$0xf] %vm5141, %v4935
  %5193 = vst.msk [vmem:[%s4 + $0xcc] sm:$0xf] %vm5141, %v4936
  %5194 = vst.msk [vmem:[%s4 + $0xd0] sm:$0xf] %vm5141, %v4937
  %5195 = vst.msk [vmem:[%s4 + $0xd4] sm:$0xf] %vm5141, %v4938
  %5196 = vst.msk [vmem:[%s4 + $0xd8] sm:$0xf] %vm5141, %v4939
  %5197 = vst.msk [vmem:[%s4 + $0xdc] sm:$0xf] %vm5141, %v4940
  %5198 = vst.msk [vmem:[%s4 + $0xe0] sm:$0xf] %vm5141, %v4941
  %5199 = vst.msk [vmem:[%s4 + $0xe4] sm:$0xf] %vm5141, %v4942
  %5200 = vst.msk [vmem:[%s4 + $0xe8] sm:$0xf] %vm5141, %v4943
  %5201 = vst.msk [vmem:[%s4 + $0xec] sm:$0xf] %vm5141, %v4944
  %5202 = vst.msk [vmem:[%s4 + $0xf0] sm:$0xf] %vm5141, %v4945
  %5203 = vst.msk [vmem:[%s4 + $0xf4] sm:$0xf] %vm5141, %v4946
  %5204 = vst.msk [vmem:[%s4 + $0xf8] sm:$0xf] %vm5141, %v4947
  %5205 = vst.msk [vmem:[%s4 + $0xfc] sm:$0xf] %vm5141, %v4948
  %5206 = vst.msk [vmem:[%s4 + $0x100] sm:$0xf] %vm5141, %v4949
  %5207 = vst.msk [vmem:[%s4 + $0x104] sm:$0xf] %vm5141, %v4950
  %5208 = vst.msk [vmem:[%s4 + $0x108] sm:$0xf] %vm5141, %v4951
  %5209 = vst.msk [vmem:[%s4 + $0x10c] sm:$0xf] %vm5141, %v4952
  %5210 = vst.msk [vmem:[%s4 + $0x110] sm:$0xf] %vm5141, %v4953
  %5211 = vst.msk [vmem:[%s4 + $0x114] sm:$0xf] %vm5141, %v4954
  %5212 = vst.msk [vmem:[%s4 + $0x118] sm:$0xf] %vm5141, %v4955
  %5213 = vst.msk [vmem:[%s4 + $0x11c] sm:$0xf] %vm5141, %v4956
  %5214 = vst.msk [vmem:[%s4 + $0x120] sm:$0xf] %vm5141, %v4957
  %5215 = vst.msk [vmem:[%s4 + $0x124] sm:$0xf] %vm5141, %v4958
  %5216 = vst.msk [vmem:[%s4 + $0x128] sm:$0xf] %vm5141, %v4959
  %5217 = vst.msk [vmem:[%s4 + $0x12c] sm:$0xf] %vm5141, %v4960
  %5218 = vst.msk [vmem:[%s4 + $0x130] sm:$0xf] %vm5141, %v4961
  %5219 = vst.msk [vmem:[%s4 + $0x134] sm:$0xf] %vm5141, %v4962
  %5220 = vst.msk [vmem:[%s4 + $0x138] sm:$0xf] %vm5141, %v4963
  %5221 = vst.msk [vmem:[%s4 + $0x13c] sm:$0xf] %vm5141, %v4964
  %5222 = vst.msk [vmem:[%s4 + $0x140] sm:$0xf] %vm5141, %v4965
  %5223 = vst.msk [vmem:[%s4 + $0x144] sm:$0xf] %vm5141, %v4966
  %5224 = vst.msk [vmem:[%s4 + $0x148] sm:$0xf] %vm5141, %v4967
  %5225 = vst.msk [vmem:[%s4 + $0x14c] sm:$0xf] %vm5141, %v4968
  %5226 = vst.msk [vmem:[%s4 + $0x150] sm:$0xf] %vm5141, %v4969
  %5227 = vst.msk [vmem:[%s4 + $0x154] sm:$0xf] %vm5141, %v4970
  %5228 = vst.msk [vmem:[%s4 + $0x158] sm:$0xf] %vm5141, %v4971
  %5229 = vst.msk [vmem:[%s4 + $0x15c] sm:$0xf] %vm5141, %v4972
  %5230 = vst.msk [vmem:[%s4 + $0x160] sm:$0xf] %vm5141, %v4973
  %5231 = vst.msk [vmem:[%s4 + $0x164] sm:$0xf] %vm5141, %v4974
  %5232 = vst.msk [vmem:[%s4 + $0x168] sm:$0xf] %vm5141, %v4975
  %5233 = vst.msk [vmem:[%s4 + $0x16c] sm:$0xf] %vm5141, %v4976
  %5234 = vst.msk [vmem:[%s4 + $0x170] sm:$0xf] %vm5141, %v4977
  %5235 = vst.msk [vmem:[%s4 + $0x174] sm:$0xf] %vm5141, %v4978
  %5236 = vst.msk [vmem:[%s4 + $0x178] sm:$0xf] %vm5141, %v4979
  %5237 = vst.msk [vmem:[%s4 + $0x17c] sm:$0xf] %vm5141, %v4980
  %5238 = vst.msk [vmem:[%s4 + $0x180] sm:$0xf] %vm5141, %v4981
  %5239 = vst.msk [vmem:[%s4 + $0x184] sm:$0xf] %vm5141, %v4982
  %5240 = vst.msk [vmem:[%s4 + $0x188] sm:$0xf] %vm5141, %v4983
  %5241 = vst.msk [vmem:[%s4 + $0x18c] sm:$0xf] %vm5141, %v4984
  %5242 = vst.msk [vmem:[%s4 + $0x190] sm:$0xf] %vm5141, %v4985
  %5243 = vst.msk [vmem:[%s4 + $0x194] sm:$0xf] %vm5141, %v4986
  %5244 = vst.msk [vmem:[%s4 + $0x198] sm:$0xf] %vm5141, %v4987
  %5245 = vst.msk [vmem:[%s4 + $0x19c] sm:$0xf] %vm5141, %v4988
  %5246 = vst.msk [vmem:[%s4 + $0x1a0] sm:$0xf] %vm5141, %v4989
  %5247 = vst.msk [vmem:[%s4 + $0x1a4] sm:$0xf] %vm5141, %v4990
  %5248 = vst.msk [vmem:[%s4 + $0x1a8] sm:$0xf] %vm5141, %v4991
  %5249 = vst.msk [vmem:[%s4 + $0x1ac] sm:$0xf] %vm5141, %v4992
  %5250 = vst.msk [vmem:[%s4 + $0x1b0] sm:$0xf] %vm5141, %v4993
  %5251 = vst.msk [vmem:[%s4 + $0x1b4] sm:$0xf] %vm5141, %v4994
  %5252 = vst.msk [vmem:[%s4 + $0x1b8] sm:$0xf] %vm5141, %v4995
  %5253 = vst.msk [vmem:[%s4 + $0x1bc] sm:$0xf] %vm5141, %v4996
  %5254 = vst.msk [vmem:[%s4 + $0x1c0] sm:$0xf] %vm5141, %v4997
  %5255 = vst.msk [vmem:[%s4 + $0x1c4] sm:$0xf] %vm5141, %v4998
  %5256 = vst.msk [vmem:[%s4 + $0x1c8] sm:$0xf] %vm5141, %v4999
  %5257 = vst.msk [vmem:[%s4 + $0x1cc] sm:$0xf] %vm5141, %v5000
  %5258 = vst.msk [vmem:[%s4 + $0x1d0] sm:$0xf] %vm5141, %v5001
  %5259 = vst.msk [vmem:[%s4 + $0x1d4] sm:$0xf] %vm5141, %v5002
  %5260 = vst.msk [vmem:[%s4 + $0x1d8] sm:$0xf] %vm5141, %v5003
  %5261 = vst.msk [vmem:[%s4 + $0x1dc] sm:$0xf] %vm5141, %v5004
  %5262 = vst.msk [vmem:[%s4 + $0x1e0] sm:$0xf] %vm5141, %v5005
  %5263 = vst.msk [vmem:[%s4 + $0x1e4] sm:$0xf] %vm5141, %v5006
  %5264 = vst.msk [vmem:[%s4 + $0x1e8] sm:$0xf] %vm5141, %v5007
  %5265 = vst.msk [vmem:[%s4 + $0x1ec] sm:$0xf] %vm5141, %v5008
  %5266 = vst.msk [vmem:[%s4 + $0x1f0] sm:$0xf] %vm5141, %v5009
  %5267 = vst.msk [vmem:[%s4 + $0x1f4] sm:$0xf] %vm5141, %v5010
  %5268 = vst.msk [vmem:[%s4 + $0x1f8] sm:$0xf] %vm5141, %v5011
  %5269 = vst.msk [vmem:[%s4 + $0x1fc] sm:$0xf] %vm5141, %v5012
  // Predicated region
  $region18: #{dcgan_generator_forward.4} parent=0 // pred_check
    _
  $region19: #{dcgan_generator_forward.4} parent=0 // pred_check_branch
    %5271 = sbr.rel (0) target = $region21
  $region20: #{dcgan_generator_forward.4} parent=0 // pred_region
    _
  $region21: #{dcgan_generator_forward.4} parent=0 // pred_fallthru
    _
  // Predicated region
  $region22: #{dcgan_generator_forward.4} parent=0 // pred_check
    _
  $region23: #{dcgan_generator_forward.4} parent=0 // pred_check_branch
    %5273 = sbr.rel (0) target = $region25
  $region24: #{dcgan_generator_forward.4} parent=0 // pred_region
    _
  $region25: #{dcgan_generator_forward.4} parent=0 // pred_fallthru
    _

// kernel: dcgan_generator_forward.6
$region0: #{dcgan_generator_forward.6}
  #allocation0 [shape = 'u32[]', space=smem, size = 0x4, offset = 0x4, fixed_abs, tag = 'smem constant byte address 0x4 - core index']
  #allocation1 [shape = 'u32[144,128]{1,0:T(1,128)}', space=vmem, size = 0x12000, scoped, tag = 'internal scratch']
  %s0 = inlined_call_operand.vmem [shape: bf16[4,16,128], index: 0, kind: input, shape index: {}]
  %s1 = inlined_call_operand.vmem [shape: bf16[4,128,128], index: 1, kind: input, shape index: {}]
  %s2 = inlined_call_operand.vmem [shape: f32[16,1], index: 2, kind: input, shape index: {}]
  %s3 = inlined_call_operand.vmem [shape: f32[16,1], index: 3, kind: input, shape index: {}]
  %s4 = inlined_call_operand.vmem [shape: bf16[4,16,128], index: 4, kind: output, shape index: {}]
  %s5 = sld [smem:[#allocation0]]
  $region26: #{dcgan_generator_forward.6} parent=0
    _
  %s7 = ssub.s32 1, %s5
  %s8 = scalar_select 0, %s7, %s5
  // Predicated region
  $region2: #{dcgan_generator_forward.6} parent=0 // pred_check
    _
  $region3: #{dcgan_generator_forward.6} parent=0 // pred_check_branch
    %10 = sbr.rel (0) target = $region5
  $region4: #{dcgan_generator_forward.6} parent=0 // pred_region
    _
  $region5: #{dcgan_generator_forward.6} parent=0 // pred_fallthru
    _
  // Predicated region
  $region6: #{dcgan_generator_forward.6} parent=0 // pred_check
    _
  $region7: #{dcgan_generator_forward.6} parent=0 // pred_check_branch
    %12 = sbr.rel (0) target = $region9
  $region8: #{dcgan_generator_forward.6} parent=0 // pred_region
    _
  $region9: #{dcgan_generator_forward.6} parent=0 // pred_fallthru
    _
  // Predicated region
  $region10: #{dcgan_generator_forward.6} parent=0 // pred_check
    _
  $region11: #{dcgan_generator_forward.6} parent=0 // pred_check_branch
    %14 = sbr.rel (0) target = $region13
  $region12: #{dcgan_generator_forward.6} parent=0 // pred_region
    _
  $region13: #{dcgan_generator_forward.6} parent=0 // pred_fallthru
    _
  // Predicated region
  $region14: #{dcgan_generator_forward.6} parent=0 // pred_check
    _
  $region15: #{dcgan_generator_forward.6} parent=0 // pred_check_branch
    %16 = sbr.rel (0) target = $region17
  $region16: #{dcgan_generator_forward.6} parent=0 // pred_region
    _
  $region17: #{dcgan_generator_forward.6} parent=0 // pred_fallthru
    _
  %v18 = vld [vmem:[%s0] sm:$0xf]
  %v19 = vld [vmem:[%s0 + $0x4] sm:$0xf]
  %v20 = vld [vmem:[%s0 + $0x8] sm:$0xf]
  %v21 = vld [vmem:[%s0 + $0xc] sm:$0xf]
  %v22 = vld [vmem:[%s0 + $0x10] sm:$0xf]
  %v23 = vld [vmem:[%s0 + $0x14] sm:$0xf]
  %v24 = vld [vmem:[%s0 + $0x18] sm:$0xf]
  %v25 = vld [vmem:[%s0 + $0x1c] sm:$0xf]
  %v26 = vld [vmem:[%s1] sm:$0xf]
  %v27 = vld [vmem:[%s1 + $0x4] sm:$0xf]
  %v28 = vld [vmem:[%s1 + $0x8] sm:$0xf]
  %v29 = vld [vmem:[%s1 + $0xc] sm:$0xf]
  %v30 = vld [vmem:[%s1 + $0x10] sm:$0xf]
  %v31 = vld [vmem:[%s1 + $0x14] sm:$0xf]
  %v32 = vld [vmem:[%s1 + $0x18] sm:$0xf]
  %v33 = vld [vmem:[%s1 + $0x1c] sm:$0xf]
  %v34 = vld [vmem:[%s1 + $0x20] sm:$0xf]
  %v35 = vld [vmem:[%s1 + $0x24] sm:$0xf]
  %v36 = vld [vmem:[%s1 + $0x28] sm:$0xf]
  %v37 = vld [vmem:[%s1 + $0x2c] sm:$0xf]
  %v38 = vld [vmem:[%s1 + $0x30] sm:$0xf]
  %v39 = vld [vmem:[%s1 + $0x34] sm:$0xf]
  %v40 = vld [vmem:[%s1 + $0x38] sm:$0xf]
  %v41 = vld [vmem:[%s1 + $0x3c] sm:$0xf]
  %v42 = vld [vmem:[%s1 + $0x40] sm:$0xf]
  %v43 = vld [vmem:[%s1 + $0x44] sm:$0xf]
  %v44 = vld [vmem:[%s1 + $0x48] sm:$0xf]
  %v45 = vld [vmem:[%s1 + $0x4c] sm:$0xf]
  %v46 = vld [vmem:[%s1 + $0x50] sm:$0xf]
  %v47 = vld [vmem:[%s1 + $0x54] sm:$0xf]
  %v48 = vld [vmem:[%s1 + $0x58] sm:$0xf]
  %v49 = vld [vmem:[%s1 + $0x5c] sm:$0xf]
  %v50 = vld [vmem:[%s1 + $0x60] sm:$0xf]
  %v51 = vld [vmem:[%s1 + $0x64] sm:$0xf]
  %v52 = vld [vmem:[%s1 + $0x68] sm:$0xf]
  %v53 = vld [vmem:[%s1 + $0x6c] sm:$0xf]
  %v54 = vld [vmem:[%s1 + $0x70] sm:$0xf]
  %v55 = vld [vmem:[%s1 + $0x74] sm:$0xf]
  %v56 = vld [vmem:[%s1 + $0x78] sm:$0xf]
  %v57 = vld [vmem:[%s1 + $0x7c] sm:$0xf]
  %v58 = vld [vmem:[%s1 + $0x80] sm:$0xf]
  %v59 = vld [vmem:[%s1 + $0x84] sm:$0xf]
  %v60 = vld [vmem:[%s1 + $0x88] sm:$0xf]
  %v61 = vld [vmem:[%s1 + $0x8c] sm:$0xf]
  %v62 = vld [vmem:[%s1 + $0x90] sm:$0xf]
  %v63 = vld [vmem:[%s1 + $0x94] sm:$0xf]
  %v64 = vld [vmem:[%s1 + $0x98] sm:$0xf]
  %v65 = vld [vmem:[%s1 + $0x9c] sm:$0xf]
  %v66 = vld [vmem:[%s1 + $0xa0] sm:$0xf]
  %v67 = vld [vmem:[%s1 + $0xa4] sm:$0xf]
  %v68 = vld [vmem:[%s1 + $0xa8] sm:$0xf]
  %v69 = vld [vmem:[%s1 + $0xac] sm:$0xf]
  %v70 = vld [vmem:[%s1 + $0xb0] sm:$0xf]
  %v71 = vld [vmem:[%s1 + $0xb4] sm:$0xf]
  %v72 = vld [vmem:[%s1 + $0xb8] sm:$0xf]
  %v73 = vld [vmem:[%s1 + $0xbc] sm:$0xf]
  %v74 = vld [vmem:[%s1 + $0xc0] sm:$0xf]
  %v75 = vld [vmem:[%s1 + $0xc4] sm:$0xf]
  %v76 = vld [vmem:[%s1 + $0xc8] sm:$0xf]
  %v77 = vld [vmem:[%s1 + $0xcc] sm:$0xf]
  %v78 = vld [vmem:[%s1 + $0xd0] sm:$0xf]
  %v79 = vld [vmem:[%s1 + $0xd4] sm:$0xf]
  %v80 = vld [vmem:[%s1 + $0xd8] sm:$0xf]
  %v81 = vld [vmem:[%s1 + $0xdc] sm:$0xf]
  %v82 = vld [vmem:[%s1 + $0xe0] sm:$0xf]
  %v83 = vld [vmem:[%s1 + $0xe4] sm:$0xf]
  %v84 = vld [vmem:[%s1 + $0xe8] sm:$0xf]
  %v85 = vld [vmem:[%s1 + $0xec] sm:$0xf]
  %v86 = vld [vmem:[%s1 + $0xf0] sm:$0xf]
  %v87 = vld [vmem:[%s1 + $0xf4] sm:$0xf]
  %v88 = vld [vmem:[%s1 + $0xf8] sm:$0xf]
  %v89 = vld [vmem:[%s1 + $0xfc] sm:$0xf]
  %v92 = vunpack.c.l.b16 %v18
  %v93 = vunpack.c.l.b16 %v19
  %v94 = vpack.c.b16 %v93, %v92
  %v112 = vunpack.c.l.b16 %v26
  %v113 = vunpack.c.l.b16 %v27
  %v114 = vunpack.c.l.b16 %v28
  %v115 = vunpack.c.l.b16 %v29
  %v116 = vunpack.c.l.b16 %v30
  %v117 = vunpack.c.l.b16 %v31
  %v118 = vunpack.c.l.b16 %v32
  %v119 = vunpack.c.l.b16 %v33
  %v120 = vunpack.c.l.b16 %v34
  %v121 = vunpack.c.l.b16 %v35
  %v122 = vunpack.c.l.b16 %v36
  %v123 = vunpack.c.l.b16 %v37
  %v124 = vunpack.c.l.b16 %v38
  %v125 = vunpack.c.l.b16 %v39
  %v126 = vunpack.c.l.b16 %v40
  %v127 = vunpack.c.l.b16 %v41
  %v128 = vpack.c.b16 %v113, %v112
  %v129 = vpack.c.b16 %v115, %v114
  %v130 = vpack.c.b16 %v117, %v116
  %v131 = vpack.c.b16 %v119, %v118
  %v132 = vpack.c.b16 %v121, %v120
  %v133 = vpack.c.b16 %v123, %v122
  %v134 = vpack.c.b16 %v125, %v124
  %v135 = vpack.c.b16 %v127, %v126
  %144 = vmatprep.subr.bf16.mxu0 0
  %145 = vmatpush1.bf16.msra.mxu0 %v128
  %146 = vmatprep.subr.bf16.mxu0 0
  %147 = vmatpush1.bf16.msra.mxu0 %v129
  %148 = vmatprep.subr.bf16.mxu0 0
  %149 = vmatpush1.bf16.msra.mxu0 %v130
  %150 = vmatprep.subr.bf16.mxu0 0
  %151 = vmatpush1.bf16.msra.mxu0 %v131
  %152 = vmatprep.subr.bf16.mxu0 0
  %153 = vmatpush1.bf16.msra.mxu0 %v132
  %154 = vmatprep.subr.bf16.mxu0 0
  %155 = vmatpush1.bf16.msra.mxu0 %v133
  %156 = vmatprep.subr.bf16.mxu0 0
  %157 = vmatpush1.bf16.msra.mxu0 %v134
  %158 = vmatprep.subr.bf16.mxu0 0
  %159 = vmatpush1.bf16.msra.mxu0 %v135
  %160 = vmatprep.subr.bf16.mxu0 0
  %161 = vmatpush1.bf16.msra.mxu0 0
  %162 = vmatprep.subr.bf16.mxu0 0
  %163 = vmatpush1.bf16.msra.mxu0 0
  %164 = vmatprep.subr.bf16.mxu0 0
  %165 = vmatpush1.bf16.msra.mxu0 0
  %166 = vmatprep.subr.bf16.mxu0 0
  %167 = vmatpush1.bf16.msra.mxu0 0
  %168 = vmatprep.subr.bf16.mxu0 0
  %169 = vmatpush1.bf16.msra.mxu0 0
  %170 = vmatprep.subr.bf16.mxu0 0
  %171 = vmatpush1.bf16.msra.mxu0 0
  %172 = vmatprep.subr.bf16.mxu0 0
  %173 = vmatpush1.bf16.msra.mxu0 0
  %174 = vmatprep.subr.bf16.mxu0 0
  %175 = vmatpush1.bf16.msra.mxu0 0
  %176 = vmatprep.mubr.bf16.mxu0 0
  %177 = vmatmul.mubr.bf16.gmra.mrb[0].mxu0 %v94
  %v178 = vpop.f32.mrb[0].mxu0
  %v179 = vadd.f32 0.0, %v178
  %v180 = vpop.f32.mrb[0].mxu0
  %v181 = vpop.f32.mrb[0].mxu0
  %v182 = vadd.f32 0.0, %v181
  %v183 = vpop.f32.mrb[0].mxu0
  %184 = vdwg.mxu0
  %v187 = vunpack.c.l.b16 %v20
  %v188 = vunpack.c.l.b16 %v21
  %v189 = vpack.c.b16 %v188, %v187
  %v207 = vunpack.c.l.b16 %v42
  %v208 = vunpack.c.l.b16 %v43
  %v209 = vunpack.c.l.b16 %v44
  %v210 = vunpack.c.l.b16 %v45
  %v211 = vunpack.c.l.b16 %v46
  %v212 = vunpack.c.l.b16 %v47
  %v213 = vunpack.c.l.b16 %v48
  %v214 = vunpack.c.l.b16 %v49
  %v215 = vunpack.c.l.b16 %v50
  %v216 = vunpack.c.l.b16 %v51
  %v217 = vunpack.c.l.b16 %v52
  %v218 = vunpack.c.l.b16 %v53
  %v219 = vunpack.c.l.b16 %v54
  %v220 = vunpack.c.l.b16 %v55
  %v221 = vunpack.c.l.b16 %v56
  %v222 = vunpack.c.l.b16 %v57
  %v223 = vpack.c.b16 %v208, %v207
  %v224 = vpack.c.b16 %v210, %v209
  %v225 = vpack.c.b16 %v212, %v211
  %v226 = vpack.c.b16 %v214, %v213
  %v227 = vpack.c.b16 %v216, %v215
  %v228 = vpack.c.b16 %v218, %v217
  %v229 = vpack.c.b16 %v220, %v219
  %v230 = vpack.c.b16 %v222, %v221
  %239 = vmatprep.subr.bf16.mxu0 0
  %240 = vmatpush1.bf16.msra.mxu0 %v223
  %241 = vmatprep.subr.bf16.mxu0 0
  %242 = vmatpush1.bf16.msra.mxu0 %v224
  %243 = vmatprep.subr.bf16.mxu0 0
  %244 = vmatpush1.bf16.msra.mxu0 %v225
  %245 = vmatprep.subr.bf16.mxu0 0
  %246 = vmatpush1.bf16.msra.mxu0 %v226
  %247 = vmatprep.subr.bf16.mxu0 0
  %248 = vmatpush1.bf16.msra.mxu0 %v227
  %249 = vmatprep.subr.bf16.mxu0 0
  %250 = vmatpush1.bf16.msra.mxu0 %v228
  %251 = vmatprep.subr.bf16.mxu0 0
  %252 = vmatpush1.bf16.msra.mxu0 %v229
  %253 = vmatprep.subr.bf16.mxu0 0
  %254 = vmatpush1.bf16.msra.mxu0 %v230
  %255 = vmatprep.subr.bf16.mxu0 0
  %256 = vmatpush1.bf16.msra.mxu0 0
  %257 = vmatprep.subr.bf16.mxu0 0
  %258 = vmatpush1.bf16.msra.mxu0 0
  %259 = vmatprep.subr.bf16.mxu0 0
  %260 = vmatpush1.bf16.msra.mxu0 0
  %261 = vmatprep.subr.bf16.mxu0 0
  %262 = vmatpush1.bf16.msra.mxu0 0
  %263 = vmatprep.subr.bf16.mxu0 0
  %264 = vmatpush1.bf16.msra.mxu0 0
  %265 = vmatprep.subr.bf16.mxu0 0
  %266 = vmatpush1.bf16.msra.mxu0 0
  %267 = vmatprep.subr.bf16.mxu0 0
  %268 = vmatpush1.bf16.msra.mxu0 0
  %269 = vmatprep.subr.bf16.mxu0 0
  %270 = vmatpush1.bf16.msra.mxu0 0
  %271 = vmatprep.mubr.bf16.mxu0 0
  %272 = vmatmul.mubr.bf16.gmra.mrb[0].mxu0 %v189
  %v273 = vpop.f32.mrb[0].mxu0
  %v274 = vadd.f32 0.0, %v273
  %v275 = vpop.f32.mrb[0].mxu0
  %v276 = vpop.f32.mrb[0].mxu0
  %v277 = vadd.f32 0.0, %v276
  %v278 = vpop.f32.mrb[0].mxu0
  %279 = vdwg.mxu0
  %v282 = vunpack.c.l.b16 %v22
  %v283 = vunpack.c.l.b16 %v23
  %v284 = vpack.c.b16 %v283, %v282
  %v302 = vunpack.c.l.b16 %v58
  %v303 = vunpack.c.l.b16 %v59
  %v304 = vunpack.c.l.b16 %v60
  %v305 = vunpack.c.l.b16 %v61
  %v306 = vunpack.c.l.b16 %v62
  %v307 = vunpack.c.l.b16 %v63
  %v308 = vunpack.c.l.b16 %v64
  %v309 = vunpack.c.l.b16 %v65
  %v310 = vunpack.c.l.b16 %v66
  %v311 = vunpack.c.l.b16 %v67
  %v312 = vunpack.c.l.b16 %v68
  %v313 = vunpack.c.l.b16 %v69
  %v314 = vunpack.c.l.b16 %v70
  %v315 = vunpack.c.l.b16 %v71
  %v316 = vunpack.c.l.b16 %v72
  %v317 = vunpack.c.l.b16 %v73
  %v318 = vpack.c.b16 %v303, %v302
  %v319 = vpack.c.b16 %v305, %v304
  %v320 = vpack.c.b16 %v307, %v306
  %v321 = vpack.c.b16 %v309, %v308
  %v322 = vpack.c.b16 %v311, %v310
  %v323 = vpack.c.b16 %v313, %v312
  %v324 = vpack.c.b16 %v315, %v314
  %v325 = vpack.c.b16 %v317, %v316
  %334 = vmatprep.subr.bf16.mxu0 0
  %335 = vmatpush1.bf16.msra.mxu0 %v318
  %336 = vmatprep.subr.bf16.mxu0 0
  %337 = vmatpush1.bf16.msra.mxu0 %v319
  %338 = vmatprep.subr.bf16.mxu0 0
  %339 = vmatpush1.bf16.msra.mxu0 %v320
  %340 = vmatprep.subr.bf16.mxu0 0
  %341 = vmatpush1.bf16.msra.mxu0 %v321
  %342 = vmatprep.subr.bf16.mxu0 0
  %343 = vmatpush1.bf16.msra.mxu0 %v322
  %344 = vmatprep.subr.bf16.mxu0 0
  %345 = vmatpush1.bf16.msra.mxu0 %v323
  %346 = vmatprep.subr.bf16.mxu0 0
  %347 = vmatpush1.bf16.msra.mxu0 %v324
  %348 = vmatprep.subr.bf16.mxu0 0
  %349 = vmatpush1.bf16.msra.mxu0 %v325
  %350 = vmatprep.subr.bf16.mxu0 0
  %351 = vmatpush1.bf16.msra.mxu0 0
  %352 = vmatprep.subr.bf16.mxu0 0
  %353 = vmatpush1.bf16.msra.mxu0 0
  %354 = vmatprep.subr.bf16.mxu0 0
  %355 = vmatpush1.bf16.msra.mxu0 0
  %356 = vmatprep.subr.bf16.mxu0 0
  %357 = vmatpush1.bf16.msra.mxu0 0
  %358 = vmatprep.subr.bf16.mxu0 0
  %359 = vmatpush1.bf16.msra.mxu0 0
  %360 = vmatprep.subr.bf16.mxu0 0
  %361 = vmatpush1.bf16.msra.mxu0 0
  %362 = vmatprep.subr.bf16.mxu0 0
  %363 = vmatpush1.bf16.msra.mxu0 0
  %364 = vmatprep.subr.bf16.mxu0 0
  %365 = vmatpush1.bf16.msra.mxu0 0
  %366 = vmatprep.mubr.bf16.mxu0 0
  %367 = vmatmul.mubr.bf16.gmra.mrb[0].mxu0 %v284
  %v368 = vpop.f32.mrb[0].mxu0
  %v369 = vadd.f32 0.0, %v368
  %v370 = vpop.f32.mrb[0].mxu0
  %v371 = vpop.f32.mrb[0].mxu0
  %v372 = vadd.f32 0.0, %v371
  %v373 = vpop.f32.mrb[0].mxu0
  %374 = vdwg.mxu0
  %v377 = vunpack.c.l.b16 %v24
  %v378 = vunpack.c.l.b16 %v25
  %v379 = vpack.c.b16 %v378, %v377
  %v397 = vunpack.c.l.b16 %v74
  %v398 = vunpack.c.l.b16 %v75
  %v399 = vunpack.c.l.b16 %v76
  %v400 = vunpack.c.l.b16 %v77
  %v401 = vunpack.c.l.b16 %v78
  %v402 = vunpack.c.l.b16 %v79
  %v403 = vunpack.c.l.b16 %v80
  %v404 = vunpack.c.l.b16 %v81
  %v405 = vunpack.c.l.b16 %v82
  %v406 = vunpack.c.l.b16 %v83
  %v407 = vunpack.c.l.b16 %v84
  %v408 = vunpack.c.l.b16 %v85
  %v409 = vunpack.c.l.b16 %v86
  %v410 = vunpack.c.l.b16 %v87
  %v411 = vunpack.c.l.b16 %v88
  %v412 = vunpack.c.l.b16 %v89
  %v413 = vpack.c.b16 %v398, %v397
  %v414 = vpack.c.b16 %v400, %v399
  %v415 = vpack.c.b16 %v402, %v401
  %v416 = vpack.c.b16 %v404, %v403
  %v417 = vpack.c.b16 %v406, %v405
  %v418 = vpack.c.b16 %v408, %v407
  %v419 = vpack.c.b16 %v410, %v409
  %v420 = vpack.c.b16 %v412, %v411
  %429 = vmatprep.subr.bf16.mxu0 0
  %430 = vmatpush1.bf16.msra.mxu0 %v413
  %431 = vmatprep.subr.bf16.mxu0 0
  %432 = vmatpush1.bf16.msra.mxu0 %v414
  %433 = vmatprep.subr.bf16.mxu0 0
  %434 = vmatpush1.bf16.msra.mxu0 %v415
  %435 = vmatprep.subr.bf16.mxu0 0
  %436 = vmatpush1.bf16.msra.mxu0 %v416
  %437 = vmatprep.subr.bf16.mxu0 0
  %438 = vmatpush1.bf16.msra.mxu0 %v417
  %439 = vmatprep.subr.bf16.mxu0 0
  %440 = vmatpush1.bf16.msra.mxu0 %v418
  %441 = vmatprep.subr.bf16.mxu0 0
  %442 = vmatpush1.bf16.msra.mxu0 %v419
  %443 = vmatprep.subr.bf16.mxu0 0
  %444 = vmatpush1.bf16.msra.mxu0 %v420
  %445 = vmatprep.subr.bf16.mxu0 0
  %446 = vmatpush1.bf16.msra.mxu0 0
  %447 = vmatprep.subr.bf16.mxu0 0
  %448 = vmatpush1.bf16.msra.mxu0 0
  %449 = vmatprep.subr.bf16.mxu0 0
  %450 = vmatpush1.bf16.msra.mxu0 0
  %451 = vmatprep.subr.bf16.mxu0 0
  %452 = vmatpush1.bf16.msra.mxu0 0
  %453 = vmatprep.subr.bf16.mxu0 0
  %454 = vmatpush1.bf16.msra.mxu0 0
  %455 = vmatprep.subr.bf16.mxu0 0
  %456 = vmatpush1.bf16.msra.mxu0 0
  %457 = vmatprep.subr.bf16.mxu0 0
  %458 = vmatpush1.bf16.msra.mxu0 0
  %459 = vmatprep.subr.bf16.mxu0 0
  %460 = vmatpush1.bf16.msra.mxu0 0
  %461 = vmatprep.mubr.bf16.mxu0 0
  %462 = vmatmul.mubr.bf16.gmra.mrb[0].mxu0 %v379
  %v463 = vpop.f32.mrb[0].mxu0
  %v464 = vadd.f32 0.0, %v463
  %v465 = vpop.f32.mrb[0].mxu0
  %v466 = vpop.f32.mrb[0].mxu0
  %v467 = vadd.f32 0.0, %v466
  %v468 = vpop.f32.mrb[0].mxu0
  %469 = vdwg.mxu0
  %470 = vadd.xlane.f32.xlu0 %v179
  %v471 = vpop.xlane.xlu0 %470
  %472 = vadd.xlane.f32.xlu0 %v182
  %v473 = vpop.xlane.xlu0 %472
  %474 = vadd.xlane.f32.xlu0 %v274
  %v475 = vpop.xlane.xlu0 %474
  %476 = vadd.xlane.f32.xlu0 %v277
  %v477 = vpop.xlane.xlu0 %476
  %478 = vadd.xlane.f32.xlu0 %v369
  %v479 = vpop.xlane.xlu0 %478
  %480 = vadd.xlane.f32.xlu0 %v372
  %v481 = vpop.xlane.xlu0 %480
  %482 = vadd.xlane.f32.xlu0 %v464
  %v483 = vpop.xlane.xlu0 %482
  %484 = vadd.xlane.f32.xlu0 %v467
  %v485 = vpop.xlane.xlu0 %484
  %v486 = vadd.f32 %v471, %v475
  %v487 = vadd.f32 %v486, %v479
  %v488 = vadd.f32 %v487, %v483
  %v489 = vadd.f32 %v473, %v477
  %v490 = vadd.f32 %v489, %v481
  %v491 = vadd.f32 %v490, %v485
  %v492 = vrcp.pop 512.0
  %v493 = vmul.f32 %v488, %v492
  %v494 = vmul.f32 %v491, %v492
  %v495 = vsub.f32 %v179, %v493
  %v496 = vsub.f32 %v182, %v494
  %v497 = vsub.f32 %v274, %v493
  %v498 = vsub.f32 %v277, %v494
  %v499 = vsub.f32 %v369, %v493
  %v500 = vsub.f32 %v372, %v494
  %v501 = vsub.f32 %v464, %v493
  %v502 = vsub.f32 %v467, %v494
  %v503 = vmul.f32 %v495, %v495
  %v504 = vmul.f32 %v496, %v496
  %v505 = vmul.f32 %v497, %v497
  %v506 = vmul.f32 %v498, %v498
  %v507 = vmul.f32 %v499, %v499
  %v508 = vmul.f32 %v500, %v500
  %v509 = vmul.f32 %v501, %v501
  %v510 = vmul.f32 %v502, %v502
  %511 = vadd.xlane.f32.xlu0 %v503
  %v512 = vpop.xlane.xlu0 %511
  %513 = vadd.xlane.f32.xlu0 %v504
  %v514 = vpop.xlane.xlu0 %513
  %515 = vadd.xlane.f32.xlu0 %v505
  %v516 = vpop.xlane.xlu0 %515
  %517 = vadd.xlane.f32.xlu0 %v506
  %v518 = vpop.xlane.xlu0 %517
  %519 = vadd.xlane.f32.xlu0 %v507
  %v520 = vpop.xlane.xlu0 %519
  %521 = vadd.xlane.f32.xlu0 %v508
  %v522 = vpop.xlane.xlu0 %521
  %523 = vadd.xlane.f32.xlu0 %v509
  %v524 = vpop.xlane.xlu0 %523
  %525 = vadd.xlane.f32.xlu0 %v510
  %v526 = vpop.xlane.xlu0 %525
  %v527 = vadd.f32 %v512, %v516
  %v528 = vadd.f32 %v527, %v520
  %v529 = vadd.f32 %v528, %v524
  %v530 = vadd.f32 %v514, %v518
  %v531 = vadd.f32 %v530, %v522
  %v532 = vadd.f32 %v531, %v526
  %v533 = vmul.f32 %v529, %v492
  %v534 = vmul.f32 %v532, %v492
  %v535 = vld [vmem:[%s2] sm:$0xff]
  %v536 = vld [vmem:[%s2 + $0x8] sm:$0xff]
  %v537 = vld [vmem:[%s3] sm:$0xff]
  %v538 = vld [vmem:[%s3 + $0x8] sm:$0xff]
  %v539 = vadd.f32 %v533, 1e-05
  %v540 = vadd.f32 %v534, 1e-05
  %v541 = vrsqrt.pop %v539
  %v542 = vrsqrt.pop %v540
  %v543 = vmul.f32 %v495, %v541
  %v544 = vmul.f32 %v496, %v542
  %v545 = vmul.f32 %v497, %v541
  %v546 = vmul.f32 %v498, %v542
  %v547 = vmul.f32 %v499, %v541
  %v548 = vmul.f32 %v500, %v542
  %v549 = vmul.f32 %v501, %v541
  %v550 = vmul.f32 %v502, %v542
  %552 = vset.pattern.permute.xlu0 0
  %553 = vperm.xlu0 %552, %v535
  %v554 = vpop.permute.xlu0 %553
  %557 = vset.pattern.permute.xlu0 0
  %558 = vperm.xlu0 %557, %v536
  %v559 = vpop.permute.xlu0 %558
  %v561 = vmul.f32 %v543, %v554
  %v562 = vmul.f32 %v544, %v559
  %v563 = vmul.f32 %v545, %v554
  %v564 = vmul.f32 %v546, %v559
  %v565 = vmul.f32 %v547, %v554
  %v566 = vmul.f32 %v548, %v559
  %v567 = vmul.f32 %v549, %v554
  %v568 = vmul.f32 %v550, %v559
  %570 = vset.pattern.permute.xlu0 0
  %571 = vperm.xlu0 %570, %v537
  %v572 = vpop.permute.xlu0 %571
  %575 = vset.pattern.permute.xlu0 0
  %576 = vperm.xlu0 %575, %v538
  %v577 = vpop.permute.xlu0 %576
  %v579 = vadd.f32 %v561, %v572
  %v580 = vadd.f32 %v562, %v577
  %v581 = vadd.f32 %v563, %v572
  %v582 = vadd.f32 %v564, %v577
  %v583 = vadd.f32 %v565, %v572
  %v584 = vadd.f32 %v566, %v577
  %v585 = vadd.f32 %v567, %v572
  %v586 = vadd.f32 %v568, %v577
  %v587 = vmin.f32 %v579, 0.0
  %v588 = vmin.f32 %v580, 0.0
  %v589 = vmin.f32 %v581, 0.0
  %v590 = vmin.f32 %v582, 0.0
  %v591 = vmin.f32 %v583, 0.0
  %v592 = vmin.f32 %v584, 0.0
  %v593 = vmin.f32 %v585, 0.0
  %v594 = vmin.f32 %v586, 0.0
  %v595 = vmul.f32 %v587, 1.442695
  %v596 = vpow.pop %v595
  %v597 = vmul.f32 %v588, 1.442695
  %v598 = vpow.pop %v597
  %v599 = vmul.f32 %v589, 1.442695
  %v600 = vpow.pop %v599
  %v601 = vmul.f32 %v590, 1.442695
  %v602 = vpow.pop %v601
  %v603 = vmul.f32 %v591, 1.442695
  %v604 = vpow.pop %v603
  %v605 = vmul.f32 %v592, 1.442695
  %v606 = vpow.pop %v605
  %v607 = vmul.f32 %v593, 1.442695
  %v608 = vpow.pop %v607
  %v609 = vmul.f32 %v594, 1.442695
  %v610 = vpow.pop %v609
  %v611 = vsub.f32 %v596, 1.0
  %v612 = vsub.f32 %v598, 1.0
  %v613 = vsub.f32 %v600, 1.0
  %v614 = vsub.f32 %v602, 1.0
  %v615 = vsub.f32 %v604, 1.0
  %v616 = vsub.f32 %v606, 1.0
  %v617 = vsub.f32 %v608, 1.0
  %v618 = vsub.f32 %v610, 1.0
  %v619 = vmul.f32 %v611, 1.6732632
  %v620 = vmul.f32 %v612, 1.6732632
  %v621 = vmul.f32 %v613, 1.6732632
  %v622 = vmul.f32 %v614, 1.6732632
  %v623 = vmul.f32 %v615, 1.6732632
  %v624 = vmul.f32 %v616, 1.6732632
  %v625 = vmul.f32 %v617, 1.6732632
  %v626 = vmul.f32 %v618, 1.6732632
  %vm627 = vcmp.gt.f32.partialorder %v579, 0.0
  %vm628 = vcmp.gt.f32.partialorder %v580, 0.0
  %vm629 = vcmp.gt.f32.partialorder %v581, 0.0
  %vm630 = vcmp.gt.f32.partialorder %v582, 0.0
  %vm631 = vcmp.gt.f32.partialorder %v583, 0.0
  %vm632 = vcmp.gt.f32.partialorder %v584, 0.0
  %vm633 = vcmp.gt.f32.partialorder %v585, 0.0
  %vm634 = vcmp.gt.f32.partialorder %v586, 0.0
  %v635 = vsel %vm627, %v579, %v619
  %v636 = vsel %vm628, %v580, %v620
  %v637 = vsel %vm629, %v581, %v621
  %v638 = vsel %vm630, %v582, %v622
  %v639 = vsel %vm631, %v583, %v623
  %v640 = vsel %vm632, %v584, %v624
  %v641 = vsel %vm633, %v585, %v625
  %v642 = vsel %vm634, %v586, %v626
  %v643 = vmul.f32 %v635, 1.050701
  %v644 = vmul.f32 %v636, 1.050701
  %v645 = vmul.f32 %v637, 1.050701
  %v646 = vmul.f32 %v638, 1.050701
  %v647 = vmul.f32 %v639, 1.050701
  %v648 = vmul.f32 %v640, 1.050701
  %v649 = vmul.f32 %v641, 1.050701
  %v650 = vmul.f32 %v642, 1.050701
  %v651 = vpack.c.bf16 %v644, %v643
  %v652 = vpack.c.bf16 %v646, %v645
  %v653 = vpack.c.bf16 %v648, %v647
  %v654 = vpack.c.bf16 %v650, %v649
  %v659 = vunpack.c.l.b16 %v651
  %v660 = vunpack.c.h.b16 %v651
  %v661 = vunpack.c.l.b16 %v652
  %v662 = vunpack.c.h.b16 %v652
  %v663 = vunpack.c.l.b16 %v653
  %v664 = vunpack.c.h.b16 %v653
  %v665 = vunpack.c.l.b16 %v654
  %v666 = vunpack.c.h.b16 %v654
  %v667 = vpack.c.b16 %v659, %v659
  %v668 = vpack.c.b16 %v660, %v660
  %v669 = vpack.c.b16 %v661, %v661
  %v670 = vpack.c.b16 %v662, %v662
  %v671 = vpack.c.b16 %v663, %v663
  %v672 = vpack.c.b16 %v664, %v664
  %v673 = vpack.c.b16 %v665, %v665
  %v674 = vpack.c.b16 %v666, %v666
  %683 = vst [vmem:[%s4] sm:$0xf] %v667
  %684 = vst [vmem:[%s4 + $0x4] sm:$0xf] %v668
  %685 = vst [vmem:[%s4 + $0x8] sm:$0xf] %v669
  %686 = vst [vmem:[%s4 + $0xc] sm:$0xf] %v670
  %687 = vst [vmem:[%s4 + $0x10] sm:$0xf] %v671
  %688 = vst [vmem:[%s4 + $0x14] sm:$0xf] %v672
  %689 = vst [vmem:[%s4 + $0x18] sm:$0xf] %v673
  %690 = vst [vmem:[%s4 + $0x1c] sm:$0xf] %v674
  // Predicated region
  $region18: #{dcgan_generator_forward.6} parent=0 // pred_check
    _
  $region19: #{dcgan_generator_forward.6} parent=0 // pred_check_branch
    %692 = sbr.rel (0) target = $region21
  $region20: #{dcgan_generator_forward.6} parent=0 // pred_region
    _
  $region21: #{dcgan_generator_forward.6} parent=0 // pred_fallthru
    _
  // Predicated region
  $region22: #{dcgan_generator_forward.6} parent=0 // pred_check
    _
  $region23: #{dcgan_generator_forward.6} parent=0 // pred_check_branch
    %694 = sbr.rel (0) target = $region25
  $region24: #{dcgan_generator_forward.6} parent=0 // pred_region
    _
  $region25: #{dcgan_generator_forward.6} parent=0 // pred_fallthru
    _

// kernel: dcgan_generator_forward.7
$region0: #{dcgan_generator_forward.7}
  #allocation0 [shape = 'u32[]', space=smem, size = 0x4, offset = 0x4, fixed_abs, tag = 'smem constant byte address 0x4 - core index']
  #allocation1 [shape = 'u32[144,128]{1,0:T(1,128)}', space=vmem, size = 0x12000, scoped, tag = 'internal scratch']
  %s0 = inlined_call_operand.vmem [shape: bf16[4,8,64], index: 0, kind: input, shape index: {}]
  %s1 = inlined_call_operand.vmem [shape: bf16[4,64,512], index: 1, kind: input, shape index: {}]
  %s2 = inlined_call_operand.vmem [shape: f32[8,1], index: 2, kind: input, shape index: {}]
  %s3 = inlined_call_operand.vmem [shape: f32[8,1], index: 3, kind: input, shape index: {}]
  %s4 = inlined_call_operand.vmem [shape: f32[1,8], index: 4, kind: input, shape index: {}]
  %s5 = inlined_call_operand.vmem [shape: f32[4,1,512], index: 5, kind: output, shape index: {}]
  %s6 = sld [smem:[#allocation0]]
  $region30: #{dcgan_generator_forward.7} parent=0
    _
  %s8 = ssub.s32 1, %s6
  %s9 = scalar_select 0, %s8, %s6
  // Predicated region
  $region2: #{dcgan_generator_forward.7} parent=0 // pred_check
    _
  $region3: #{dcgan_generator_forward.7} parent=0 // pred_check_branch
    %11 = sbr.rel (0) target = $region5
  $region4: #{dcgan_generator_forward.7} parent=0 // pred_region
    _
  $region5: #{dcgan_generator_forward.7} parent=0 // pred_fallthru
    _
  // Predicated region
  $region6: #{dcgan_generator_forward.7} parent=0 // pred_check
    _
  $region7: #{dcgan_generator_forward.7} parent=0 // pred_check_branch
    %13 = sbr.rel (0) target = $region9
  $region8: #{dcgan_generator_forward.7} parent=0 // pred_region
    _
  $region9: #{dcgan_generator_forward.7} parent=0 // pred_fallthru
    _
  // Predicated region
  $region10: #{dcgan_generator_forward.7} parent=0 // pred_check
    _
  $region11: #{dcgan_generator_forward.7} parent=0 // pred_check_branch
    %15 = sbr.rel (0) target = $region13
  $region12: #{dcgan_generator_forward.7} parent=0 // pred_region
    _
  $region13: #{dcgan_generator_forward.7} parent=0 // pred_fallthru
    _
  // Predicated region
  $region14: #{dcgan_generator_forward.7} parent=0 // pred_check
    _
  $region15: #{dcgan_generator_forward.7} parent=0 // pred_check_branch
    %17 = sbr.rel (0) target = $region17
  $region16: #{dcgan_generator_forward.7} parent=0 // pred_region
    _
  $region17: #{dcgan_generator_forward.7} parent=0 // pred_fallthru
    _
  // Predicated region
  $region18: #{dcgan_generator_forward.7} parent=0 // pred_check
    _
  $region19: #{dcgan_generator_forward.7} parent=0 // pred_check_branch
    %19 = sbr.rel (0) target = $region21
  $region20: #{dcgan_generator_forward.7} parent=0 // pred_region
    _
  $region21: #{dcgan_generator_forward.7} parent=0 // pred_fallthru
    _
  %v21 = vld [vmem:[%s0] sm:$0xf]
  %v22 = vld [vmem:[%s0 + $0x4] sm:$0xf]
  %v23 = vld [vmem:[%s0 + $0x8] sm:$0xf]
  %v24 = vld [vmem:[%s0 + $0xc] sm:$0xf]
  %v25 = vld [vmem:[%s1] sm:$0xff]
  %v26 = vld [vmem:[%s1 + $0x8] sm:$0xff]
  %v27 = vld [vmem:[%s1 + $0x10] sm:$0xff]
  %v28 = vld [vmem:[%s1 + $0x18] sm:$0xff]
  %v29 = vld [vmem:[%s1 + $0x20] sm:$0xff]
  %v30 = vld [vmem:[%s1 + $0x28] sm:$0xff]
  %v31 = vld [vmem:[%s1 + $0x30] sm:$0xff]
  %v32 = vld [vmem:[%s1 + $0x38] sm:$0xff]
  %v33 = vld [vmem:[%s1 + $0x40] sm:$0xff]
  %v34 = vld [vmem:[%s1 + $0x48] sm:$0xff]
  %v35 = vld [vmem:[%s1 + $0x50] sm:$0xff]
  %v36 = vld [vmem:[%s1 + $0x58] sm:$0xff]
  %v37 = vld [vmem:[%s1 + $0x60] sm:$0xff]
  %v38 = vld [vmem:[%s1 + $0x68] sm:$0xff]
  %v39 = vld [vmem:[%s1 + $0x70] sm:$0xff]
  %v40 = vld [vmem:[%s1 + $0x78] sm:$0xff]
  %v41 = vld [vmem:[%s1 + $0x80] sm:$0xff]
  %v42 = vld [vmem:[%s1 + $0x88] sm:$0xff]
  %v43 = vld [vmem:[%s1 + $0x90] sm:$0xff]
  %v44 = vld [vmem:[%s1 + $0x98] sm:$0xff]
  %v45 = vld [vmem:[%s1 + $0xa0] sm:$0xff]
  %v46 = vld [vmem:[%s1 + $0xa8] sm:$0xff]
  %v47 = vld [vmem:[%s1 + $0xb0] sm:$0xff]
  %v48 = vld [vmem:[%s1 + $0xb8] sm:$0xff]
  %v49 = vld [vmem:[%s1 + $0xc0] sm:$0xff]
  %v50 = vld [vmem:[%s1 + $0xc8] sm:$0xff]
  %v51 = vld [vmem:[%s1 + $0xd0] sm:$0xff]
  %v52 = vld [vmem:[%s1 + $0xd8] sm:$0xff]
  %v53 = vld [vmem:[%s1 + $0xe0] sm:$0xff]
  %v54 = vld [vmem:[%s1 + $0xe8] sm:$0xff]
  %v55 = vld [vmem:[%s1 + $0xf0] sm:$0xff]
  %v56 = vld [vmem:[%s1 + $0xf8] sm:$0xff]
  %v57 = vld [vmem:[%s1 + $0x100] sm:$0xff]
  %v58 = vld [vmem:[%s1 + $0x108] sm:$0xff]
  %v59 = vld [vmem:[%s1 + $0x110] sm:$0xff]
  %v60 = vld [vmem:[%s1 + $0x118] sm:$0xff]
  %v61 = vld [vmem:[%s1 + $0x120] sm:$0xff]
  %v62 = vld [vmem:[%s1 + $0x128] sm:$0xff]
  %v63 = vld [vmem:[%s1 + $0x130] sm:$0xff]
  %v64 = vld [vmem:[%s1 + $0x138] sm:$0xff]
  %v65 = vld [vmem:[%s1 + $0x140] sm:$0xff]
  %v66 = vld [vmem:[%s1 + $0x148] sm:$0xff]
  %v67 = vld [vmem:[%s1 + $0x150] sm:$0xff]
  %v68 = vld [vmem:[%s1 + $0x158] sm:$0xff]
  %v69 = vld [vmem:[%s1 + $0x160] sm:$0xff]
  %v70 = vld [vmem:[%s1 + $0x168] sm:$0xff]
  %v71 = vld [vmem:[%s1 + $0x170] sm:$0xff]
  %v72 = vld [vmem:[%s1 + $0x178] sm:$0xff]
  %v73 = vld [vmem:[%s1 + $0x180] sm:$0xff]
  %v74 = vld [vmem:[%s1 + $0x188] sm:$0xff]
  %v75 = vld [vmem:[%s1 + $0x190] sm:$0xff]
  %v76 = vld [vmem:[%s1 + $0x198] sm:$0xff]
  %v77 = vld [vmem:[%s1 + $0x1a0] sm:$0xff]
  %v78 = vld [vmem:[%s1 + $0x1a8] sm:$0xff]
  %v79 = vld [vmem:[%s1 + $0x1b0] sm:$0xff]
  %v80 = vld [vmem:[%s1 + $0x1b8] sm:$0xff]
  %v81 = vld [vmem:[%s1 + $0x1c0] sm:$0xff]
  %v82 = vld [vmem:[%s1 + $0x1c8] sm:$0xff]
  %v83 = vld [vmem:[%s1 + $0x1d0] sm:$0xff]
  %v84 = vld [vmem:[%s1 + $0x1d8] sm:$0xff]
  %v85 = vld [vmem:[%s1 + $0x1e0] sm:$0xff]
  %v86 = vld [vmem:[%s1 + $0x1e8] sm:$0xff]
  %v87 = vld [vmem:[%s1 + $0x1f0] sm:$0xff]
  %v88 = vld [vmem:[%s1 + $0x1f8] sm:$0xff]
  %v105 = vunpack.c.l.b16 %v25
  %v106 = vunpack.c.h.b16 %v25
  %v107 = vunpack.c.l.b16 %v26
  %v108 = vunpack.c.h.b16 %v26
  %v109 = vunpack.c.l.b16 %v27
  %v110 = vunpack.c.h.b16 %v27
  %v111 = vunpack.c.l.b16 %v28
  %v112 = vunpack.c.h.b16 %v28
  %v113 = vunpack.c.l.b16 %v29
  %v114 = vunpack.c.h.b16 %v29
  %v115 = vunpack.c.l.b16 %v30
  %v116 = vunpack.c.h.b16 %v30
  %v117 = vunpack.c.l.b16 %v31
  %v118 = vunpack.c.h.b16 %v31
  %v119 = vunpack.c.l.b16 %v32
  %v120 = vunpack.c.h.b16 %v32
  %v121 = vunpack.c.l.b16 %v33
  %v122 = vunpack.c.h.b16 %v33
  %v123 = vunpack.c.l.b16 %v34
  %v124 = vunpack.c.h.b16 %v34
  %v125 = vunpack.c.l.b16 %v35
  %v126 = vunpack.c.h.b16 %v35
  %v127 = vunpack.c.l.b16 %v36
  %v128 = vunpack.c.h.b16 %v36
  %v129 = vunpack.c.l.b16 %v37
  %v130 = vunpack.c.h.b16 %v37
  %v131 = vunpack.c.l.b16 %v38
  %v132 = vunpack.c.h.b16 %v38
  %v133 = vunpack.c.l.b16 %v39
  %v134 = vunpack.c.h.b16 %v39
  %v135 = vunpack.c.l.b16 %v40
  %v136 = vunpack.c.h.b16 %v40
  %v137 = vpack.c.b16 %v109, %v105
  %v138 = vpack.c.b16 %v110, %v106
  %v139 = vpack.c.b16 %v111, %v107
  %v140 = vpack.c.b16 %v112, %v108
  %v141 = vpack.c.b16 %v117, %v113
  %v142 = vpack.c.b16 %v118, %v114
  %v143 = vpack.c.b16 %v119, %v115
  %v144 = vpack.c.b16 %v120, %v116
  %v145 = vpack.c.b16 %v125, %v121
  %v146 = vpack.c.b16 %v126, %v122
  %v147 = vpack.c.b16 %v127, %v123
  %v148 = vpack.c.b16 %v128, %v124
  %v149 = vpack.c.b16 %v133, %v129
  %v150 = vpack.c.b16 %v134, %v130
  %v151 = vpack.c.b16 %v135, %v131
  %v152 = vpack.c.b16 %v136, %v132
  %vm169 = vcmask 523264
  %v171 = vsel %vm169, %v21, 0
  %173 = vmatprep.subr.bf16.mxu0 %v138
  %174 = vmatpush1.bf16.msra.mxu0 %v137
  %175 = vmatprep.subr.bf16.mxu0 %v142
  %176 = vmatpush1.bf16.msra.mxu0 %v141
  %177 = vmatprep.subr.bf16.mxu0 %v146
  %178 = vmatpush1.bf16.msra.mxu0 %v145
  %179 = vmatprep.subr.bf16.mxu0 %v150
  %180 = vmatpush1.bf16.msra.mxu0 %v149
  %181 = vmatprep.subr.bf16.mxu0 0
  %182 = vmatpush1.bf16.msra.mxu0 0
  %183 = vmatprep.subr.bf16.mxu0 0
  %184 = vmatpush1.bf16.msra.mxu0 0
  %185 = vmatprep.subr.bf16.mxu0 0
  %186 = vmatpush1.bf16.msra.mxu0 0
  %187 = vmatprep.subr.bf16.mxu0 0
  %188 = vmatpush1.bf16.msra.mxu0 0
  %189 = vmatprep.subr.bf16.mxu0 0
  %190 = vmatpush1.bf16.msra.mxu0 0
  %191 = vmatprep.subr.bf16.mxu0 0
  %192 = vmatpush1.bf16.msra.mxu0 0
  %193 = vmatprep.subr.bf16.mxu0 0
  %194 = vmatpush1.bf16.msra.mxu0 0
  %195 = vmatprep.subr.bf16.mxu0 0
  %196 = vmatpush1.bf16.msra.mxu0 0
  %197 = vmatprep.subr.bf16.mxu0 0
  %198 = vmatpush1.bf16.msra.mxu0 0
  %199 = vmatprep.subr.bf16.mxu0 0
  %200 = vmatpush1.bf16.msra.mxu0 0
  %201 = vmatprep.subr.bf16.mxu0 0
  %202 = vmatpush1.bf16.msra.mxu0 0
  %203 = vmatprep.subr.bf16.mxu0 0
  %204 = vmatpush1.bf16.msra.mxu0 0
  %205 = vmatprep.mubr.bf16.mxu0 0
  %206 = vmatmul.mubr.bf16.gmra.mrb[0].mxu0 %v171
  %v207 = vpop.f32.mrb[0].mxu0
  %v208 = vadd.f32 0.0, %v207
  %v209 = vpop.f32.mrb[0].mxu0
  %v210 = vadd.f32 0.0, %v209
  %v211 = vpop.f32.mrb[0].mxu0
  %v212 = vpop.f32.mrb[0].mxu0
  %213 = vdwg.mxu0
  %214 = vmatprep.subr.bf16.mxu0 %v140
  %215 = vmatpush1.bf16.msra.mxu0 %v139
  %216 = vmatprep.subr.bf16.mxu0 %v144
  %217 = vmatpush1.bf16.msra.mxu0 %v143
  %218 = vmatprep.subr.bf16.mxu0 %v148
  %219 = vmatpush1.bf16.msra.mxu0 %v147
  %220 = vmatprep.subr.bf16.mxu0 %v152
  %221 = vmatpush1.bf16.msra.mxu0 %v151
  %222 = vmatprep.subr.bf16.mxu0 0
  %223 = vmatpush1.bf16.msra.mxu0 0
  %224 = vmatprep.subr.bf16.mxu0 0
  %225 = vmatpush1.bf16.msra.mxu0 0
  %226 = vmatprep.subr.bf16.mxu0 0
  %227 = vmatpush1.bf16.msra.mxu0 0
  %228 = vmatprep.subr.bf16.mxu0 0
  %229 = vmatpush1.bf16.msra.mxu0 0
  %230 = vmatprep.subr.bf16.mxu0 0
  %231 = vmatpush1.bf16.msra.mxu0 0
  %232 = vmatprep.subr.bf16.mxu0 0
  %233 = vmatpush1.bf16.msra.mxu0 0
  %234 = vmatprep.subr.bf16.mxu0 0
  %235 = vmatpush1.bf16.msra.mxu0 0
  %236 = vmatprep.subr.bf16.mxu0 0
  %237 = vmatpush1.bf16.msra.mxu0 0
  %238 = vmatprep.subr.bf16.mxu0 0
  %239 = vmatpush1.bf16.msra.mxu0 0
  %240 = vmatprep.subr.bf16.mxu0 0
  %241 = vmatpush1.bf16.msra.mxu0 0
  %242 = vmatprep.subr.bf16.mxu0 0
  %243 = vmatpush1.bf16.msra.mxu0 0
  %244 = vmatprep.subr.bf16.mxu0 0
  %245 = vmatpush1.bf16.msra.mxu0 0
  %246 = vmatprep.mubr.bf16.mxu0 0
  %247 = vmatmul.mubr.bf16.gmra.mrb[0].mxu0 %v171
  %v248 = vpop.f32.mrb[0].mxu0
  %v249 = vadd.f32 0.0, %v248
  %v250 = vpop.f32.mrb[0].mxu0
  %v251 = vadd.f32 0.0, %v250
  %v252 = vpop.f32.mrb[0].mxu0
  %v253 = vpop.f32.mrb[0].mxu0
  %254 = vdwg.mxu0
  %v271 = vunpack.c.l.b16 %v41
  %v272 = vunpack.c.h.b16 %v41
  %v273 = vunpack.c.l.b16 %v42
  %v274 = vunpack.c.h.b16 %v42
  %v275 = vunpack.c.l.b16 %v43
  %v276 = vunpack.c.h.b16 %v43
  %v277 = vunpack.c.l.b16 %v44
  %v278 = vunpack.c.h.b16 %v44
  %v279 = vunpack.c.l.b16 %v45
  %v280 = vunpack.c.h.b16 %v45
  %v281 = vunpack.c.l.b16 %v46
  %v282 = vunpack.c.h.b16 %v46
  %v283 = vunpack.c.l.b16 %v47
  %v284 = vunpack.c.h.b16 %v47
  %v285 = vunpack.c.l.b16 %v48
  %v286 = vunpack.c.h.b16 %v48
  %v287 = vunpack.c.l.b16 %v49
  %v288 = vunpack.c.h.b16 %v49
  %v289 = vunpack.c.l.b16 %v50
  %v290 = vunpack.c.h.b16 %v50
  %v291 = vunpack.c.l.b16 %v51
  %v292 = vunpack.c.h.b16 %v51
  %v293 = vunpack.c.l.b16 %v52
  %v294 = vunpack.c.h.b16 %v52
  %v295 = vunpack.c.l.b16 %v53
  %v296 = vunpack.c.h.b16 %v53
  %v297 = vunpack.c.l.b16 %v54
  %v298 = vunpack.c.h.b16 %v54
  %v299 = vunpack.c.l.b16 %v55
  %v300 = vunpack.c.h.b16 %v55
  %v301 = vunpack.c.l.b16 %v56
  %v302 = vunpack.c.h.b16 %v56
  %v303 = vpack.c.b16 %v275, %v271
  %v304 = vpack.c.b16 %v276, %v272
  %v305 = vpack.c.b16 %v277, %v273
  %v306 = vpack.c.b16 %v278, %v274
  %v307 = vpack.c.b16 %v283, %v279
  %v308 = vpack.c.b16 %v284, %v280
  %v309 = vpack.c.b16 %v285, %v281
  %v310 = vpack.c.b16 %v286, %v282
  %v311 = vpack.c.b16 %v291, %v287
  %v312 = vpack.c.b16 %v292, %v288
  %v313 = vpack.c.b16 %v293, %v289
  %v314 = vpack.c.b16 %v294, %v290
  %v315 = vpack.c.b16 %v299, %v295
  %v316 = vpack.c.b16 %v300, %v296
  %v317 = vpack.c.b16 %v301, %v297
  %v318 = vpack.c.b16 %v302, %v298
  %v336 = vsel %vm169, %v22, 0
  %338 = vmatprep.subr.bf16.mxu0 %v304
  %339 = vmatpush1.bf16.msra.mxu0 %v303
  %340 = vmatprep.subr.bf16.mxu0 %v308
  %341 = vmatpush1.bf16.msra.mxu0 %v307
  %342 = vmatprep.subr.bf16.mxu0 %v312
  %343 = vmatpush1.bf16.msra.mxu0 %v311
  %344 = vmatprep.subr.bf16.mxu0 %v316
  %345 = vmatpush1.bf16.msra.mxu0 %v315
  %346 = vmatprep.subr.bf16.mxu0 0
  %347 = vmatpush1.bf16.msra.mxu0 0
  %348 = vmatprep.subr.bf16.mxu0 0
  %349 = vmatpush1.bf16.msra.mxu0 0
  %350 = vmatprep.subr.bf16.mxu0 0
  %351 = vmatpush1.bf16.msra.mxu0 0
  %352 = vmatprep.subr.bf16.mxu0 0
  %353 = vmatpush1.bf16.msra.mxu0 0
  %354 = vmatprep.subr.bf16.mxu0 0
  %355 = vmatpush1.bf16.msra.mxu0 0
  %356 = vmatprep.subr.bf16.mxu0 0
  %357 = vmatpush1.bf16.msra.mxu0 0
  %358 = vmatprep.subr.bf16.mxu0 0
  %359 = vmatpush1.bf16.msra.mxu0 0
  %360 = vmatprep.subr.bf16.mxu0 0
  %361 = vmatpush1.bf16.msra.mxu0 0
  %362 = vmatprep.subr.bf16.mxu0 0
  %363 = vmatpush1.bf16.msra.mxu0 0
  %364 = vmatprep.subr.bf16.mxu0 0
  %365 = vmatpush1.bf16.msra.mxu0 0
  %366 = vmatprep.subr.bf16.mxu0 0
  %367 = vmatpush1.bf16.msra.mxu0 0
  %368 = vmatprep.subr.bf16.mxu0 0
  %369 = vmatpush1.bf16.msra.mxu0 0
  %370 = vmatprep.mubr.bf16.mxu0 0
  %371 = vmatmul.mubr.bf16.gmra.mrb[0].mxu0 %v336
  %v372 = vpop.f32.mrb[0].mxu0
  %v373 = vadd.f32 0.0, %v372
  %v374 = vpop.f32.mrb[0].mxu0
  %v375 = vadd.f32 0.0, %v374
  %v376 = vpop.f32.mrb[0].mxu0
  %v377 = vpop.f32.mrb[0].mxu0
  %378 = vdwg.mxu0
  %379 = vmatprep.subr.bf16.mxu0 %v306
  %380 = vmatpush1.bf16.msra.mxu0 %v305
  %381 = vmatprep.subr.bf16.mxu0 %v310
  %382 = vmatpush1.bf16.msra.mxu0 %v309
  %383 = vmatprep.subr.bf16.mxu0 %v314
  %384 = vmatpush1.bf16.msra.mxu0 %v313
  %385 = vmatprep.subr.bf16.mxu0 %v318
  %386 = vmatpush1.bf16.msra.mxu0 %v317
  %387 = vmatprep.subr.bf16.mxu0 0
  %388 = vmatpush1.bf16.msra.mxu0 0
  %389 = vmatprep.subr.bf16.mxu0 0
  %390 = vmatpush1.bf16.msra.mxu0 0
  %391 = vmatprep.subr.bf16.mxu0 0
  %392 = vmatpush1.bf16.msra.mxu0 0
  %393 = vmatprep.subr.bf16.mxu0 0
  %394 = vmatpush1.bf16.msra.mxu0 0
  %395 = vmatprep.subr.bf16.mxu0 0
  %396 = vmatpush1.bf16.msra.mxu0 0
  %397 = vmatprep.subr.bf16.mxu0 0
  %398 = vmatpush1.bf16.msra.mxu0 0
  %399 = vmatprep.subr.bf16.mxu0 0
  %400 = vmatpush1.bf16.msra.mxu0 0
  %401 = vmatprep.subr.bf16.mxu0 0
  %402 = vmatpush1.bf16.msra.mxu0 0
  %403 = vmatprep.subr.bf16.mxu0 0
  %404 = vmatpush1.bf16.msra.mxu0 0
  %405 = vmatprep.subr.bf16.mxu0 0
  %406 = vmatpush1.bf16.msra.mxu0 0
  %407 = vmatprep.subr.bf16.mxu0 0
  %408 = vmatpush1.bf16.msra.mxu0 0
  %409 = vmatprep.subr.bf16.mxu0 0
  %410 = vmatpush1.bf16.msra.mxu0 0
  %411 = vmatprep.mubr.bf16.mxu0 0
  %412 = vmatmul.mubr.bf16.gmra.mrb[0].mxu0 %v336
  %v413 = vpop.f32.mrb[0].mxu0
  %v414 = vadd.f32 0.0, %v413
  %v415 = vpop.f32.mrb[0].mxu0
  %v416 = vadd.f32 0.0, %v415
  %v417 = vpop.f32.mrb[0].mxu0
  %v418 = vpop.f32.mrb[0].mxu0
  %419 = vdwg.mxu0
  %v436 = vunpack.c.l.b16 %v57
  %v437 = vunpack.c.h.b16 %v57
  %v438 = vunpack.c.l.b16 %v58
  %v439 = vunpack.c.h.b16 %v58
  %v440 = vunpack.c.l.b16 %v59
  %v441 = vunpack.c.h.b16 %v59
  %v442 = vunpack.c.l.b16 %v60
  %v443 = vunpack.c.h.b16 %v60
  %v444 = vunpack.c.l.b16 %v61
  %v445 = vunpack.c.h.b16 %v61
  %v446 = vunpack.c.l.b16 %v62
  %v447 = vunpack.c.h.b16 %v62
  %v448 = vunpack.c.l.b16 %v63
  %v449 = vunpack.c.h.b16 %v63
  %v450 = vunpack.c.l.b16 %v64
  %v451 = vunpack.c.h.b16 %v64
  %v452 = vunpack.c.l.b16 %v65
  %v453 = vunpack.c.h.b16 %v65
  %v454 = vunpack.c.l.b16 %v66
  %v455 = vunpack.c.h.b16 %v66
  %v456 = vunpack.c.l.b16 %v67
  %v457 = vunpack.c.h.b16 %v67
  %v458 = vunpack.c.l.b16 %v68
  %v459 = vunpack.c.h.b16 %v68
  %v460 = vunpack.c.l.b16 %v69
  %v461 = vunpack.c.h.b16 %v69
  %v462 = vunpack.c.l.b16 %v70
  %v463 = vunpack.c.h.b16 %v70
  %v464 = vunpack.c.l.b16 %v71
  %v465 = vunpack.c.h.b16 %v71
  %v466 = vunpack.c.l.b16 %v72
  %v467 = vunpack.c.h.b16 %v72
  %v468 = vpack.c.b16 %v440, %v436
  %v469 = vpack.c.b16 %v441, %v437
  %v470 = vpack.c.b16 %v442, %v438
  %v471 = vpack.c.b16 %v443, %v439
  %v472 = vpack.c.b16 %v448, %v444
  %v473 = vpack.c.b16 %v449, %v445
  %v474 = vpack.c.b16 %v450, %v446
  %v475 = vpack.c.b16 %v451, %v447
  %v476 = vpack.c.b16 %v456, %v452
  %v477 = vpack.c.b16 %v457, %v453
  %v478 = vpack.c.b16 %v458, %v454
  %v479 = vpack.c.b16 %v459, %v455
  %v480 = vpack.c.b16 %v464, %v460
  %v481 = vpack.c.b16 %v465, %v461
  %v482 = vpack.c.b16 %v466, %v462
  %v483 = vpack.c.b16 %v467, %v463
  %v501 = vsel %vm169, %v23, 0
  %503 = vmatprep.subr.bf16.mxu0 %v469
  %504 = vmatpush1.bf16.msra.mxu0 %v468
  %505 = vmatprep.subr.bf16.mxu0 %v473
  %506 = vmatpush1.bf16.msra.mxu0 %v472
  %507 = vmatprep.subr.bf16.mxu0 %v477
  %508 = vmatpush1.bf16.msra.mxu0 %v476
  %509 = vmatprep.subr.bf16.mxu0 %v481
  %510 = vmatpush1.bf16.msra.mxu0 %v480
  %511 = vmatprep.subr.bf16.mxu0 0
  %512 = vmatpush1.bf16.msra.mxu0 0
  %513 = vmatprep.subr.bf16.mxu0 0
  %514 = vmatpush1.bf16.msra.mxu0 0
  %515 = vmatprep.subr.bf16.mxu0 0
  %516 = vmatpush1.bf16.msra.mxu0 0
  %517 = vmatprep.subr.bf16.mxu0 0
  %518 = vmatpush1.bf16.msra.mxu0 0
  %519 = vmatprep.subr.bf16.mxu0 0
  %520 = vmatpush1.bf16.msra.mxu0 0
  %521 = vmatprep.subr.bf16.mxu0 0
  %522 = vmatpush1.bf16.msra.mxu0 0
  %523 = vmatprep.subr.bf16.mxu0 0
  %524 = vmatpush1.bf16.msra.mxu0 0
  %525 = vmatprep.subr.bf16.mxu0 0
  %526 = vmatpush1.bf16.msra.mxu0 0
  %527 = vmatprep.subr.bf16.mxu0 0
  %528 = vmatpush1.bf16.msra.mxu0 0
  %529 = vmatprep.subr.bf16.mxu0 0
  %530 = vmatpush1.bf16.msra.mxu0 0
  %531 = vmatprep.subr.bf16.mxu0 0
  %532 = vmatpush1.bf16.msra.mxu0 0
  %533 = vmatprep.subr.bf16.mxu0 0
  %534 = vmatpush1.bf16.msra.mxu0 0
  %535 = vmatprep.mubr.bf16.mxu0 0
  %536 = vmatmul.mubr.bf16.gmra.mrb[0].mxu0 %v501
  %v537 = vpop.f32.mrb[0].mxu0
  %v538 = vadd.f32 0.0, %v537
  %v539 = vpop.f32.mrb[0].mxu0
  %v540 = vadd.f32 0.0, %v539
  %v541 = vpop.f32.mrb[0].mxu0
  %v542 = vpop.f32.mrb[0].mxu0
  %543 = vdwg.mxu0
  %544 = vmatprep.subr.bf16.mxu0 %v471
  %545 = vmatpush1.bf16.msra.mxu0 %v470
  %546 = vmatprep.subr.bf16.mxu0 %v475
  %547 = vmatpush1.bf16.msra.mxu0 %v474
  %548 = vmatprep.subr.bf16.mxu0 %v479
  %549 = vmatpush1.bf16.msra.mxu0 %v478
  %550 = vmatprep.subr.bf16.mxu0 %v483
  %551 = vmatpush1.bf16.msra.mxu0 %v482
  %552 = vmatprep.subr.bf16.mxu0 0
  %553 = vmatpush1.bf16.msra.mxu0 0
  %554 = vmatprep.subr.bf16.mxu0 0
  %555 = vmatpush1.bf16.msra.mxu0 0
  %556 = vmatprep.subr.bf16.mxu0 0
  %557 = vmatpush1.bf16.msra.mxu0 0
  %558 = vmatprep.subr.bf16.mxu0 0
  %559 = vmatpush1.bf16.msra.mxu0 0
  %560 = vmatprep.subr.bf16.mxu0 0
  %561 = vmatpush1.bf16.msra.mxu0 0
  %562 = vmatprep.subr.bf16.mxu0 0
  %563 = vmatpush1.bf16.msra.mxu0 0
  %564 = vmatprep.subr.bf16.mxu0 0
  %565 = vmatpush1.bf16.msra.mxu0 0
  %566 = vmatprep.subr.bf16.mxu0 0
  %567 = vmatpush1.bf16.msra.mxu0 0
  %568 = vmatprep.subr.bf16.mxu0 0
  %569 = vmatpush1.bf16.msra.mxu0 0
  %570 = vmatprep.subr.bf16.mxu0 0
  %571 = vmatpush1.bf16.msra.mxu0 0
  %572 = vmatprep.subr.bf16.mxu0 0
  %573 = vmatpush1.bf16.msra.mxu0 0
  %574 = vmatprep.subr.bf16.mxu0 0
  %575 = vmatpush1.bf16.msra.mxu0 0
  %576 = vmatprep.mubr.bf16.mxu0 0
  %577 = vmatmul.mubr.bf16.gmra.mrb[0].mxu0 %v501
  %v578 = vpop.f32.mrb[0].mxu0
  %v579 = vadd.f32 0.0, %v578
  %v580 = vpop.f32.mrb[0].mxu0
  %v581 = vadd.f32 0.0, %v580
  %v582 = vpop.f32.mrb[0].mxu0
  %v583 = vpop.f32.mrb[0].mxu0
  %584 = vdwg.mxu0
  %v601 = vunpack.c.l.b16 %v73
  %v602 = vunpack.c.h.b16 %v73
  %v603 = vunpack.c.l.b16 %v74
  %v604 = vunpack.c.h.b16 %v74
  %v605 = vunpack.c.l.b16 %v75
  %v606 = vunpack.c.h.b16 %v75
  %v607 = vunpack.c.l.b16 %v76
  %v608 = vunpack.c.h.b16 %v76
  %v609 = vunpack.c.l.b16 %v77
  %v610 = vunpack.c.h.b16 %v77
  %v611 = vunpack.c.l.b16 %v78
  %v612 = vunpack.c.h.b16 %v78
  %v613 = vunpack.c.l.b16 %v79
  %v614 = vunpack.c.h.b16 %v79
  %v615 = vunpack.c.l.b16 %v80
  %v616 = vunpack.c.h.b16 %v80
  %v617 = vunpack.c.l.b16 %v81
  %v618 = vunpack.c.h.b16 %v81
  %v619 = vunpack.c.l.b16 %v82
  %v620 = vunpack.c.h.b16 %v82
  %v621 = vunpack.c.l.b16 %v83
  %v622 = vunpack.c.h.b16 %v83
  %v623 = vunpack.c.l.b16 %v84
  %v624 = vunpack.c.h.b16 %v84
  %v625 = vunpack.c.l.b16 %v85
  %v626 = vunpack.c.h.b16 %v85
  %v627 = vunpack.c.l.b16 %v86
  %v628 = vunpack.c.h.b16 %v86
  %v629 = vunpack.c.l.b16 %v87
  %v630 = vunpack.c.h.b16 %v87
  %v631 = vunpack.c.l.b16 %v88
  %v632 = vunpack.c.h.b16 %v88
  %v633 = vpack.c.b16 %v605, %v601
  %v634 = vpack.c.b16 %v606, %v602
  %v635 = vpack.c.b16 %v607, %v603
  %v636 = vpack.c.b16 %v608, %v604
  %v637 = vpack.c.b16 %v613, %v609
  %v638 = vpack.c.b16 %v614, %v610
  %v639 = vpack.c.b16 %v615, %v611
  %v640 = vpack.c.b16 %v616, %v612
  %v641 = vpack.c.b16 %v621, %v617
  %v642 = vpack.c.b16 %v622, %v618
  %v643 = vpack.c.b16 %v623, %v619
  %v644 = vpack.c.b16 %v624, %v620
  %v645 = vpack.c.b16 %v629, %v625
  %v646 = vpack.c.b16 %v630, %v626
  %v647 = vpack.c.b16 %v631, %v627
  %v648 = vpack.c.b16 %v632, %v628
  %v666 = vsel %vm169, %v24, 0
  %668 = vmatprep.subr.bf16.mxu0 %v634
  %669 = vmatpush1.bf16.msra.mxu0 %v633
  %670 = vmatprep.subr.bf16.mxu0 %v638
  %671 = vmatpush1.bf16.msra.mxu0 %v637
  %672 = vmatprep.subr.bf16.mxu0 %v642
  %673 = vmatpush1.bf16.msra.mxu0 %v641
  %674 = vmatprep.subr.bf16.mxu0 %v646
  %675 = vmatpush1.bf16.msra.mxu0 %v645
  %676 = vmatprep.subr.bf16.mxu0 0
  %677 = vmatpush1.bf16.msra.mxu0 0
  %678 = vmatprep.subr.bf16.mxu0 0
  %679 = vmatpush1.bf16.msra.mxu0 0
  %680 = vmatprep.subr.bf16.mxu0 0
  %681 = vmatpush1.bf16.msra.mxu0 0
  %682 = vmatprep.subr.bf16.mxu0 0
  %683 = vmatpush1.bf16.msra.mxu0 0
  %684 = vmatprep.subr.bf16.mxu0 0
  %685 = vmatpush1.bf16.msra.mxu0 0
  %686 = vmatprep.subr.bf16.mxu0 0
  %687 = vmatpush1.bf16.msra.mxu0 0
  %688 = vmatprep.subr.bf16.mxu0 0
  %689 = vmatpush1.bf16.msra.mxu0 0
  %690 = vmatprep.subr.bf16.mxu0 0
  %691 = vmatpush1.bf16.msra.mxu0 0
  %692 = vmatprep.subr.bf16.mxu0 0
  %693 = vmatpush1.bf16.msra.mxu0 0
  %694 = vmatprep.subr.bf16.mxu0 0
  %695 = vmatpush1.bf16.msra.mxu0 0
  %696 = vmatprep.subr.bf16.mxu0 0
  %697 = vmatpush1.bf16.msra.mxu0 0
  %698 = vmatprep.subr.bf16.mxu0 0
  %699 = vmatpush1.bf16.msra.mxu0 0
  %700 = vmatprep.mubr.bf16.mxu0 0
  %701 = vmatmul.mubr.bf16.gmra.mrb[0].mxu0 %v666
  %v702 = vpop.f32.mrb[0].mxu0
  %v703 = vadd.f32 0.0, %v702
  %v704 = vpop.f32.mrb[0].mxu0
  %v705 = vadd.f32 0.0, %v704
  %v706 = vpop.f32.mrb[0].mxu0
  %v707 = vpop.f32.mrb[0].mxu0
  %708 = vdwg.mxu0
  %709 = vmatprep.subr.bf16.mxu0 %v636
  %710 = vmatpush1.bf16.msra.mxu0 %v635
  %711 = vmatprep.subr.bf16.mxu0 %v640
  %712 = vmatpush1.bf16.msra.mxu0 %v639
  %713 = vmatprep.subr.bf16.mxu0 %v644
  %714 = vmatpush1.bf16.msra.mxu0 %v643
  %715 = vmatprep.subr.bf16.mxu0 %v648
  %716 = vmatpush1.bf16.msra.mxu0 %v647
  %717 = vmatprep.subr.bf16.mxu0 0
  %718 = vmatpush1.bf16.msra.mxu0 0
  %719 = vmatprep.subr.bf16.mxu0 0
  %720 = vmatpush1.bf16.msra.mxu0 0
  %721 = vmatprep.subr.bf16.mxu0 0
  %722 = vmatpush1.bf16.msra.mxu0 0
  %723 = vmatprep.subr.bf16.mxu0 0
  %724 = vmatpush1.bf16.msra.mxu0 0
  %725 = vmatprep.subr.bf16.mxu0 0
  %726 = vmatpush1.bf16.msra.mxu0 0
  %727 = vmatprep.subr.bf16.mxu0 0
  %728 = vmatpush1.bf16.msra.mxu0 0
  %729 = vmatprep.subr.bf16.mxu0 0
  %730 = vmatpush1.bf16.msra.mxu0 0
  %731 = vmatprep.subr.bf16.mxu0 0
  %732 = vmatpush1.bf16.msra.mxu0 0
  %733 = vmatprep.subr.bf16.mxu0 0
  %734 = vmatpush1.bf16.msra.mxu0 0
  %735 = vmatprep.subr.bf16.mxu0 0
  %736 = vmatpush1.bf16.msra.mxu0 0
  %737 = vmatprep.subr.bf16.mxu0 0
  %738 = vmatpush1.bf16.msra.mxu0 0
  %739 = vmatprep.subr.bf16.mxu0 0
  %740 = vmatpush1.bf16.msra.mxu0 0
  %741 = vmatprep.mubr.bf16.mxu0 0
  %742 = vmatmul.mubr.bf16.gmra.mrb[0].mxu0 %v666
  %v743 = vpop.f32.mrb[0].mxu0
  %v744 = vadd.f32 0.0, %v743
  %v745 = vpop.f32.mrb[0].mxu0
  %v746 = vadd.f32 0.0, %v745
  %v747 = vpop.f32.mrb[0].mxu0
  %v748 = vpop.f32.mrb[0].mxu0
  %749 = vdwg.mxu0
  %v750 = vadd.f32 %v208, %v210
  %v751 = vadd.f32 %v750, %v249
  %v752 = vadd.f32 %v751, %v251
  %753 = vadd.xlane.f32.xlu0 %v752
  %v754 = vpop.xlane.xlu0 %753
  %v755 = vadd.f32 %v373, %v375
  %v756 = vadd.f32 %v755, %v414
  %v757 = vadd.f32 %v756, %v416
  %758 = vadd.xlane.f32.xlu0 %v757
  %v759 = vpop.xlane.xlu0 %758
  %v760 = vadd.f32 %v538, %v540
  %v761 = vadd.f32 %v760, %v579
  %v762 = vadd.f32 %v761, %v581
  %763 = vadd.xlane.f32.xlu0 %v762
  %v764 = vpop.xlane.xlu0 %763
  %v765 = vadd.f32 %v703, %v705
  %v766 = vadd.f32 %v765, %v744
  %v767 = vadd.f32 %v766, %v746
  %768 = vadd.xlane.f32.xlu0 %v767
  %v769 = vpop.xlane.xlu0 %768
  %v770 = vadd.f32 %v754, %v759
  %v771 = vadd.f32 %v770, %v764
  %v772 = vadd.f32 %v771, %v769
  %v773 = vrcp.pop 2048.0
  %v774 = vmul.f32 %v772, %v773
  %v775 = vsub.f32 %v208, %v774
  %v776 = vsub.f32 %v210, %v774
  %v777 = vsub.f32 %v249, %v774
  %v778 = vsub.f32 %v251, %v774
  %v779 = vsub.f32 %v373, %v774
  %v780 = vsub.f32 %v375, %v774
  %v781 = vsub.f32 %v414, %v774
  %v782 = vsub.f32 %v416, %v774
  %v783 = vsub.f32 %v538, %v774
  %v784 = vsub.f32 %v540, %v774
  %v785 = vsub.f32 %v579, %v774
  %v786 = vsub.f32 %v581, %v774
  %v787 = vsub.f32 %v703, %v774
  %v788 = vsub.f32 %v705, %v774
  %v789 = vsub.f32 %v744, %v774
  %v790 = vsub.f32 %v746, %v774
  %v791 = vmul.f32 %v775, %v775
  %v792 = vmul.f32 %v776, %v776
  %v793 = vmul.f32 %v777, %v777
  %v794 = vmul.f32 %v778, %v778
  %v795 = vmul.f32 %v779, %v779
  %v796 = vmul.f32 %v780, %v780
  %v797 = vmul.f32 %v781, %v781
  %v798 = vmul.f32 %v782, %v782
  %v799 = vmul.f32 %v783, %v783
  %v800 = vmul.f32 %v784, %v784
  %v801 = vmul.f32 %v785, %v785
  %v802 = vmul.f32 %v786, %v786
  %v803 = vmul.f32 %v787, %v787
  %v804 = vmul.f32 %v788, %v788
  %v805 = vmul.f32 %v789, %v789
  %v806 = vmul.f32 %v790, %v790
  %v807 = vadd.f32 %v791, %v792
  %v808 = vadd.f32 %v807, %v793
  %v809 = vadd.f32 %v808, %v794
  %810 = vadd.xlane.f32.xlu0 %v809
  %v811 = vpop.xlane.xlu0 %810
  %v812 = vadd.f32 %v795, %v796
  %v813 = vadd.f32 %v812, %v797
  %v814 = vadd.f32 %v813, %v798
  %815 = vadd.xlane.f32.xlu0 %v814
  %v816 = vpop.xlane.xlu0 %815
  %v817 = vadd.f32 %v799, %v800
  %v818 = vadd.f32 %v817, %v801
  %v819 = vadd.f32 %v818, %v802
  %820 = vadd.xlane.f32.xlu0 %v819
  %v821 = vpop.xlane.xlu0 %820
  %v822 = vadd.f32 %v803, %v804
  %v823 = vadd.f32 %v822, %v805
  %v824 = vadd.f32 %v823, %v806
  %825 = vadd.xlane.f32.xlu0 %v824
  %v826 = vpop.xlane.xlu0 %825
  %v827 = vadd.f32 %v811, %v816
  %v828 = vadd.f32 %v827, %v821
  %v829 = vadd.f32 %v828, %v826
  %v830 = vmul.f32 %v829, %v773
  %v831 = vld [vmem:[%s2] sm:$0xff]
  %v832 = vld [vmem:[%s3] sm:$0xff]
  %v833 = vadd.f32 %v830, 1e-05
  %v834 = vrsqrt.pop %v833
  %v835 = vmul.f32 %v775, %v834
  %v836 = vmul.f32 %v776, %v834
  %v837 = vmul.f32 %v777, %v834
  %v838 = vmul.f32 %v778, %v834
  %v839 = vmul.f32 %v779, %v834
  %v840 = vmul.f32 %v780, %v834
  %v841 = vmul.f32 %v781, %v834
  %v842 = vmul.f32 %v782, %v834
  %v843 = vmul.f32 %v783, %v834
  %v844 = vmul.f32 %v784, %v834
  %v845 = vmul.f32 %v785, %v834
  %v846 = vmul.f32 %v786, %v834
  %v847 = vmul.f32 %v787, %v834
  %v848 = vmul.f32 %v788, %v834
  %v849 = vmul.f32 %v789, %v834
  %v850 = vmul.f32 %v790, %v834
  %852 = vset.pattern.permute.xlu0 0
  %853 = vperm.xlu0 %852, %v831
  %v854 = vpop.permute.xlu0 %853
  %v856 = vmul.f32 %v835, %v854
  %v857 = vmul.f32 %v836, %v854
  %v858 = vmul.f32 %v837, %v854
  %v859 = vmul.f32 %v838, %v854
  %v860 = vmul.f32 %v839, %v854
  %v861 = vmul.f32 %v840, %v854
  %v862 = vmul.f32 %v841, %v854
  %v863 = vmul.f32 %v842, %v854
  %v864 = vmul.f32 %v843, %v854
  %v865 = vmul.f32 %v844, %v854
  %v866 = vmul.f32 %v845, %v854
  %v867 = vmul.f32 %v846, %v854
  %v868 = vmul.f32 %v847, %v854
  %v869 = vmul.f32 %v848, %v854
  %v870 = vmul.f32 %v849, %v854
  %v871 = vmul.f32 %v850, %v854
  %873 = vset.pattern.permute.xlu0 0
  %874 = vperm.xlu0 %873, %v832
  %v875 = vpop.permute.xlu0 %874
  %v877 = vadd.f32 %v856, %v875
  %v878 = vadd.f32 %v857, %v875
  %v879 = vadd.f32 %v858, %v875
  %v880 = vadd.f32 %v859, %v875
  %v881 = vadd.f32 %v860, %v875
  %v882 = vadd.f32 %v861, %v875
  %v883 = vadd.f32 %v862, %v875
  %v884 = vadd.f32 %v863, %v875
  %v885 = vadd.f32 %v864, %v875
  %v886 = vadd.f32 %v865, %v875
  %v887 = vadd.f32 %v866, %v875
  %v888 = vadd.f32 %v867, %v875
  %v889 = vadd.f32 %v868, %v875
  %v890 = vadd.f32 %v869, %v875
  %v891 = vadd.f32 %v870, %v875
  %v892 = vadd.f32 %v871, %v875
  %v893 = vmin.f32 %v877, 0.0
  %v894 = vmin.f32 %v878, 0.0
  %v895 = vmin.f32 %v879, 0.0
  %v896 = vmin.f32 %v880, 0.0
  %v897 = vmin.f32 %v881, 0.0
  %v898 = vmin.f32 %v882, 0.0
  %v899 = vmin.f32 %v883, 0.0
  %v900 = vmin.f32 %v884, 0.0
  %v901 = vmin.f32 %v885, 0.0
  %v902 = vmin.f32 %v886, 0.0
  %v903 = vmin.f32 %v887, 0.0
  %v904 = vmin.f32 %v888, 0.0
  %v905 = vmin.f32 %v889, 0.0
  %v906 = vmin.f32 %v890, 0.0
  %v907 = vmin.f32 %v891, 0.0
  %v908 = vmin.f32 %v892, 0.0
  %v909 = vmul.f32 %v893, 1.442695
  %v910 = vpow.pop %v909
  %v911 = vmul.f32 %v894, 1.442695
  %v912 = vpow.pop %v911
  %v913 = vmul.f32 %v895, 1.442695
  %v914 = vpow.pop %v913
  %v915 = vmul.f32 %v896, 1.442695
  %v916 = vpow.pop %v915
  %v917 = vmul.f32 %v897, 1.442695
  %v918 = vpow.pop %v917
  %v919 = vmul.f32 %v898, 1.442695
  %v920 = vpow.pop %v919
  %v921 = vmul.f32 %v899, 1.442695
  %v922 = vpow.pop %v921
  %v923 = vmul.f32 %v900, 1.442695
  %v924 = vpow.pop %v923
  %v925 = vmul.f32 %v901, 1.442695
  %v926 = vpow.pop %v925
  %v927 = vmul.f32 %v902, 1.442695
  %v928 = vpow.pop %v927
  %v929 = vmul.f32 %v903, 1.442695
  %v930 = vpow.pop %v929
  %v931 = vmul.f32 %v904, 1.442695
  %v932 = vpow.pop %v931
  %v933 = vmul.f32 %v905, 1.442695
  %v934 = vpow.pop %v933
  %v935 = vmul.f32 %v906, 1.442695
  %v936 = vpow.pop %v935
  %v937 = vmul.f32 %v907, 1.442695
  %v938 = vpow.pop %v937
  %v939 = vmul.f32 %v908, 1.442695
  %v940 = vpow.pop %v939
  %v941 = vsub.f32 %v910, 1.0
  %v942 = vsub.f32 %v912, 1.0
  %v943 = vsub.f32 %v914, 1.0
  %v944 = vsub.f32 %v916, 1.0
  %v945 = vsub.f32 %v918, 1.0
  %v946 = vsub.f32 %v920, 1.0
  %v947 = vsub.f32 %v922, 1.0
  %v948 = vsub.f32 %v924, 1.0
  %v949 = vsub.f32 %v926, 1.0
  %v950 = vsub.f32 %v928, 1.0
  %v951 = vsub.f32 %v930, 1.0
  %v952 = vsub.f32 %v932, 1.0
  %v953 = vsub.f32 %v934, 1.0
  %v954 = vsub.f32 %v936, 1.0
  %v955 = vsub.f32 %v938, 1.0
  %v956 = vsub.f32 %v940, 1.0
  %v957 = vmul.f32 %v941, 1.6732632
  %v958 = vmul.f32 %v942, 1.6732632
  %v959 = vmul.f32 %v943, 1.6732632
  %v960 = vmul.f32 %v944, 1.6732632
  %v961 = vmul.f32 %v945, 1.6732632
  %v962 = vmul.f32 %v946, 1.6732632
  %v963 = vmul.f32 %v947, 1.6732632
  %v964 = vmul.f32 %v948, 1.6732632
  %v965 = vmul.f32 %v949, 1.6732632
  %v966 = vmul.f32 %v950, 1.6732632
  %v967 = vmul.f32 %v951, 1.6732632
  %v968 = vmul.f32 %v952, 1.6732632
  %v969 = vmul.f32 %v953, 1.6732632
  %v970 = vmul.f32 %v954, 1.6732632
  %v971 = vmul.f32 %v955, 1.6732632
  %v972 = vmul.f32 %v956, 1.6732632
  %vm973 = vcmp.gt.f32.partialorder %v877, 0.0
  %vm974 = vcmp.gt.f32.partialorder %v878, 0.0
  %vm975 = vcmp.gt.f32.partialorder %v879, 0.0
  %vm976 = vcmp.gt.f32.partialorder %v880, 0.0
  %vm977 = vcmp.gt.f32.partialorder %v881, 0.0
  %vm978 = vcmp.gt.f32.partialorder %v882, 0.0
  %vm979 = vcmp.gt.f32.partialorder %v883, 0.0
  %vm980 = vcmp.gt.f32.partialorder %v884, 0.0
  %vm981 = vcmp.gt.f32.partialorder %v885, 0.0
  %vm982 = vcmp.gt.f32.partialorder %v886, 0.0
  %vm983 = vcmp.gt.f32.partialorder %v887, 0.0
  %vm984 = vcmp.gt.f32.partialorder %v888, 0.0
  %vm985 = vcmp.gt.f32.partialorder %v889, 0.0
  %vm986 = vcmp.gt.f32.partialorder %v890, 0.0
  %vm987 = vcmp.gt.f32.partialorder %v891, 0.0
  %vm988 = vcmp.gt.f32.partialorder %v892, 0.0
  %v989 = vsel %vm973, %v877, %v957
  %v990 = vsel %vm974, %v878, %v958
  %v991 = vsel %vm975, %v879, %v959
  %v992 = vsel %vm976, %v880, %v960
  %v993 = vsel %vm977, %v881, %v961
  %v994 = vsel %vm978, %v882, %v962
  %v995 = vsel %vm979, %v883, %v963
  %v996 = vsel %vm980, %v884, %v964
  %v997 = vsel %vm981, %v885, %v965
  %v998 = vsel %vm982, %v886, %v966
  %v999 = vsel %vm983, %v887, %v967
  %v1000 = vsel %vm984, %v888, %v968
  %v1001 = vsel %vm985, %v889, %v969
  %v1002 = vsel %vm986, %v890, %v970
  %v1003 = vsel %vm987, %v891, %v971
  %v1004 = vsel %vm988, %v892, %v972
  %v1005 = vmul.f32 %v989, 1.050701
  %v1006 = vmul.f32 %v990, 1.050701
  %v1007 = vmul.f32 %v991, 1.050701
  %v1008 = vmul.f32 %v992, 1.050701
  %v1009 = vmul.f32 %v993, 1.050701
  %v1010 = vmul.f32 %v994, 1.050701
  %v1011 = vmul.f32 %v995, 1.050701
  %v1012 = vmul.f32 %v996, 1.050701
  %v1013 = vmul.f32 %v997, 1.050701
  %v1014 = vmul.f32 %v998, 1.050701
  %v1015 = vmul.f32 %v999, 1.050701
  %v1016 = vmul.f32 %v1000, 1.050701
  %v1017 = vmul.f32 %v1001, 1.050701
  %v1018 = vmul.f32 %v1002, 1.050701
  %v1019 = vmul.f32 %v1003, 1.050701
  %v1020 = vmul.f32 %v1004, 1.050701
  %v1021 = vld [vmem:[%s4] sm:$0x1]
  %v1022 = vlaneseq
  %v1023 = vshrl.u32 %v1022, 7
  %v1024 = vsub.s32 0, %v1023
  %v1025 = vrot.slane %v1021, %v1024
  %1027 = vbcast.lane.b32.xlu0 %v1025, 256
  %v1028 = vpop.permute.xlu0 %1027
  %v1029 = vmul.f32 %v1028, %v1005
  %v1030 = vmul.f32 %v1028, %v1006
  %v1031 = vmul.f32 %v1028, %v1007
  %v1032 = vmul.f32 %v1028, %v1008
  %v1033 = vmul.f32 %v1028, %v1009
  %v1034 = vmul.f32 %v1028, %v1010
  %v1035 = vmul.f32 %v1028, %v1011
  %v1036 = vmul.f32 %v1028, %v1012
  %v1037 = vmul.f32 %v1028, %v1013
  %v1038 = vmul.f32 %v1028, %v1014
  %v1039 = vmul.f32 %v1028, %v1015
  %v1040 = vmul.f32 %v1028, %v1016
  %v1041 = vmul.f32 %v1028, %v1017
  %v1042 = vmul.f32 %v1028, %v1018
  %v1043 = vmul.f32 %v1028, %v1019
  %v1044 = vmul.f32 %v1028, %v1020
  %v1045 = vrot.slane %v1029, 4
  %v1046 = vadd.f32 %v1029, %v1045
  %v1047 = vrot.slane %v1046, 2
  %v1048 = vadd.f32 %v1046, %v1047
  %v1049 = vrot.slane %v1048, 1
  %v1050 = vadd.f32 %v1048, %v1049
  %v1051 = vrot.slane %v1030, 4
  %v1052 = vadd.f32 %v1030, %v1051
  %v1053 = vrot.slane %v1052, 2
  %v1054 = vadd.f32 %v1052, %v1053
  %v1055 = vrot.slane %v1054, 1
  %v1056 = vadd.f32 %v1054, %v1055
  %v1057 = vrot.slane %v1031, 4
  %v1058 = vadd.f32 %v1031, %v1057
  %v1059 = vrot.slane %v1058, 2
  %v1060 = vadd.f32 %v1058, %v1059
  %v1061 = vrot.slane %v1060, 1
  %v1062 = vadd.f32 %v1060, %v1061
  %v1063 = vrot.slane %v1032, 4
  %v1064 = vadd.f32 %v1032, %v1063
  %v1065 = vrot.slane %v1064, 2
  %v1066 = vadd.f32 %v1064, %v1065
  %v1067 = vrot.slane %v1066, 1
  %v1068 = vadd.f32 %v1066, %v1067
  %v1069 = vrot.slane %v1033, 4
  %v1070 = vadd.f32 %v1033, %v1069
  %v1071 = vrot.slane %v1070, 2
  %v1072 = vadd.f32 %v1070, %v1071
  %v1073 = vrot.slane %v1072, 1
  %v1074 = vadd.f32 %v1072, %v1073
  %v1075 = vrot.slane %v1034, 4
  %v1076 = vadd.f32 %v1034, %v1075
  %v1077 = vrot.slane %v1076, 2
  %v1078 = vadd.f32 %v1076, %v1077
  %v1079 = vrot.slane %v1078, 1
  %v1080 = vadd.f32 %v1078, %v1079
  %v1081 = vrot.slane %v1035, 4
  %v1082 = vadd.f32 %v1035, %v1081
  %v1083 = vrot.slane %v1082, 2
  %v1084 = vadd.f32 %v1082, %v1083
  %v1085 = vrot.slane %v1084, 1
  %v1086 = vadd.f32 %v1084, %v1085
  %v1087 = vrot.slane %v1036, 4
  %v1088 = vadd.f32 %v1036, %v1087
  %v1089 = vrot.slane %v1088, 2
  %v1090 = vadd.f32 %v1088, %v1089
  %v1091 = vrot.slane %v1090, 1
  %v1092 = vadd.f32 %v1090, %v1091
  %v1093 = vrot.slane %v1037, 4
  %v1094 = vadd.f32 %v1037, %v1093
  %v1095 = vrot.slane %v1094, 2
  %v1096 = vadd.f32 %v1094, %v1095
  %v1097 = vrot.slane %v1096, 1
  %v1098 = vadd.f32 %v1096, %v1097
  %v1099 = vrot.slane %v1038, 4
  %v1100 = vadd.f32 %v1038, %v1099
  %v1101 = vrot.slane %v1100, 2
  %v1102 = vadd.f32 %v1100, %v1101
  %v1103 = vrot.slane %v1102, 1
  %v1104 = vadd.f32 %v1102, %v1103
  %v1105 = vrot.slane %v1039, 4
  %v1106 = vadd.f32 %v1039, %v1105
  %v1107 = vrot.slane %v1106, 2
  %v1108 = vadd.f32 %v1106, %v1107
  %v1109 = vrot.slane %v1108, 1
  %v1110 = vadd.f32 %v1108, %v1109
  %v1111 = vrot.slane %v1040, 4
  %v1112 = vadd.f32 %v1040, %v1111
  %v1113 = vrot.slane %v1112, 2
  %v1114 = vadd.f32 %v1112, %v1113
  %v1115 = vrot.slane %v1114, 1
  %v1116 = vadd.f32 %v1114, %v1115
  %v1117 = vrot.slane %v1041, 4
  %v1118 = vadd.f32 %v1041, %v1117
  %v1119 = vrot.slane %v1118, 2
  %v1120 = vadd.f32 %v1118, %v1119
  %v1121 = vrot.slane %v1120, 1
  %v1122 = vadd.f32 %v1120, %v1121
  %v1123 = vrot.slane %v1042, 4
  %v1124 = vadd.f32 %v1042, %v1123
  %v1125 = vrot.slane %v1124, 2
  %v1126 = vadd.f32 %v1124, %v1125
  %v1127 = vrot.slane %v1126, 1
  %v1128 = vadd.f32 %v1126, %v1127
  %v1129 = vrot.slane %v1043, 4
  %v1130 = vadd.f32 %v1043, %v1129
  %v1131 = vrot.slane %v1130, 2
  %v1132 = vadd.f32 %v1130, %v1131
  %v1133 = vrot.slane %v1132, 1
  %v1134 = vadd.f32 %v1132, %v1133
  %v1135 = vrot.slane %v1044, 4
  %v1136 = vadd.f32 %v1044, %v1135
  %v1137 = vrot.slane %v1136, 2
  %v1138 = vadd.f32 %v1136, %v1137
  %v1139 = vrot.slane %v1138, 1
  %v1140 = vadd.f32 %v1138, %v1139
  %v1141 = vtanh.pop %v1050
  %v1142 = vtanh.pop %v1056
  %v1143 = vtanh.pop %v1062
  %v1144 = vtanh.pop %v1068
  %v1145 = vtanh.pop %v1074
  %v1146 = vtanh.pop %v1080
  %v1147 = vtanh.pop %v1086
  %v1148 = vtanh.pop %v1092
  %v1149 = vtanh.pop %v1098
  %v1150 = vtanh.pop %v1104
  %v1151 = vtanh.pop %v1110
  %v1152 = vtanh.pop %v1116
  %v1153 = vtanh.pop %v1122
  %v1154 = vtanh.pop %v1128
  %v1155 = vtanh.pop %v1134
  %v1156 = vtanh.pop %v1140
  %v1173 = vcombine.low %v1141, %v1142
  %v1174 = vcombine.low %v1143, %v1144
  %v1176 = vunpack.c.l.s4 1966171168
  %v1177 = vunpack.c.0.s8 %v1176
  %v1178 = vlaneseq
  %v1179 = vshrl.u32 %v1178, 7
  %v1180 = vsub.s32 %v1177, %v1179
  %v1181 = vrot.slane %v1173, %v1180
  %v1183 = vunpack.c.l.s4 1966171168
  %v1184 = vunpack.c.0.s8 %v1183
  %v1185 = vlaneseq
  %v1186 = vshrl.u32 %v1185, 7
  %v1187 = vsub.s32 %v1184, %v1186
  %v1188 = vrot.slane %v1174, %v1187
  %v1189 = vcombine.low %v1181, %v1188
  %v1191 = vunpack.c.l.s4 1966171168
  %v1192 = vunpack.c.0.s8 %v1191
  %v1193 = vlaneseq
  %v1194 = vshrl.u32 %v1193, 7
  %v1195 = vsub.s32 %v1192, %v1194
  %v1196 = vrot.slane %v1189, %v1195
  %v1197 = vcombine.low %v1145, %v1146
  %v1198 = vcombine.low %v1147, %v1148
  %v1200 = vunpack.c.l.s4 1966171168
  %v1201 = vunpack.c.0.s8 %v1200
  %v1202 = vlaneseq
  %v1203 = vshrl.u32 %v1202, 7
  %v1204 = vsub.s32 %v1201, %v1203
  %v1205 = vrot.slane %v1197, %v1204
  %v1207 = vunpack.c.l.s4 1966171168
  %v1208 = vunpack.c.0.s8 %v1207
  %v1209 = vlaneseq
  %v1210 = vshrl.u32 %v1209, 7
  %v1211 = vsub.s32 %v1208, %v1210
  %v1212 = vrot.slane %v1198, %v1211
  %v1213 = vcombine.low %v1205, %v1212
  %v1215 = vunpack.c.l.s4 1966171168
  %v1216 = vunpack.c.0.s8 %v1215
  %v1217 = vlaneseq
  %v1218 = vshrl.u32 %v1217, 7
  %v1219 = vsub.s32 %v1216, %v1218
  %v1220 = vrot.slane %v1213, %v1219
  %v1221 = vcombine.low %v1149, %v1150
  %v1222 = vcombine.low %v1151, %v1152
  %v1224 = vunpack.c.l.s4 1966171168
  %v1225 = vunpack.c.0.s8 %v1224
  %v1226 = vlaneseq
  %v1227 = vshrl.u32 %v1226, 7
  %v1228 = vsub.s32 %v1225, %v1227
  %v1229 = vrot.slane %v1221, %v1228
  %v1231 = vunpack.c.l.s4 1966171168
  %v1232 = vunpack.c.0.s8 %v1231
  %v1233 = vlaneseq
  %v1234 = vshrl.u32 %v1233, 7
  %v1235 = vsub.s32 %v1232, %v1234
  %v1236 = vrot.slane %v1222, %v1235
  %v1237 = vcombine.low %v1229, %v1236
  %v1239 = vunpack.c.l.s4 1966171168
  %v1240 = vunpack.c.0.s8 %v1239
  %v1241 = vlaneseq
  %v1242 = vshrl.u32 %v1241, 7
  %v1243 = vsub.s32 %v1240, %v1242
  %v1244 = vrot.slane %v1237, %v1243
  %v1245 = vcombine.low %v1153, %v1154
  %v1246 = vcombine.low %v1155, %v1156
  %v1248 = vunpack.c.l.s4 1966171168
  %v1249 = vunpack.c.0.s8 %v1248
  %v1250 = vlaneseq
  %v1251 = vshrl.u32 %v1250, 7
  %v1252 = vsub.s32 %v1249, %v1251
  %v1253 = vrot.slane %v1245, %v1252
  %v1255 = vunpack.c.l.s4 1966171168
  %v1256 = vunpack.c.0.s8 %v1255
  %v1257 = vlaneseq
  %v1258 = vshrl.u32 %v1257, 7
  %v1259 = vsub.s32 %v1256, %v1258
  %v1260 = vrot.slane %v1246, %v1259
  %v1261 = vcombine.low %v1253, %v1260
  %v1263 = vunpack.c.l.s4 1966171168
  %v1264 = vunpack.c.0.s8 %v1263
  %v1265 = vlaneseq
  %v1266 = vshrl.u32 %v1265, 7
  %v1267 = vsub.s32 %v1264, %v1266
  %v1268 = vrot.slane %v1261, %v1267
  %v1273 = vlaneseq
  %vm1274 = vcmp.ge.s32.totalorder %v1273, 0
  %vm1275 = vcmp.lt.s32.totalorder %v1273, 512
  %vm1276 = vmand %vm1274, %vm1275
  %1277 = vst.msk [vmem:[%s5] sm:$0xf] %vm1276, %v1196
  %1278 = vst.msk [vmem:[%s5 + $0x4] sm:$0xf] %vm1276, %v1220
  %1279 = vst.msk [vmem:[%s5 + $0x8] sm:$0xf] %vm1276, %v1244
  %1280 = vst.msk [vmem:[%s5 + $0xc] sm:$0xf] %vm1276, %v1268
  // Predicated region
  $region22: #{dcgan_generator_forward.7} parent=0 // pred_check
    _
  $region23: #{dcgan_generator_forward.7} parent=0 // pred_check_branch
    %1282 = sbr.rel (0) target = $region25
  $region24: #{dcgan_generator_forward.7} parent=0 // pred_region
    _
  $region25: #{dcgan_generator_forward.7} parent=0 // pred_fallthru
    _
  // Predicated region
  $region26: #{dcgan_generator_forward.7} parent=0 // pred_check
    _
  $region27: #{dcgan_generator_forward.7} parent=0 // pred_check_branch
    %1284 = sbr.rel (0) target = $region29
  $region28: #{dcgan_generator_forward.7} parent=0 // pred_region
    _
  $region29: #{dcgan_generator_forward.7} parent=0 // pred_fallthru
    _

</llo_original>
